<compile_context>
chip_gen: v7x
topology: tpu7x:2x2x1
jax: 0.10.0
libtpu: 0.0.40
codegen_flags: <defaults>
</compile_context>

<pallas_src>
import functools

import jax
import jax.numpy as jnp
import numpy as np
from jax.experimental import pallas as pl
from jax.experimental.pallas import tpu as pltpu

N_RES = 9        # residual dilated conv blocks, dilation = 2**(i+1)
STEM_K = 25      # stem / profile-head kernel size
RES_K = 3        # residual conv kernel size
C_IN = 4
C_HID = 64
C_OUT = 2
STEM_HALF = (STEM_K - 1) // 2   # 12
UPAD = 16                       # padding rows for the profile-head scratch (>= 12)
KC = 128                        # stem im2col width, 25*4 = 100 padded to 128 lanes
WPC_W = 64                      # fused profile+count head width, 25*2+2 = 52 -> 64


def _round_up(x, m):
    return ((x + m - 1) // m) * m


def _pick_bb(batch, length):
    """Batch elements per grid step: amortize per-step overhead, cap M rows."""
    cap = max(1, 2048 // max(length, 1))
    best = 1
    for cand in range(1, batch + 1):
        if batch % cand == 0 and cand <= cap:
            best = cand
    return best


def _bpnet_kernel(L, BB, maxpad, write_upto,
                  xim_ref, w0_ref, b0_ref, wres_ref, bres_ref,
                  wpc_ref, bprof_ref, blin_ref,
                  xout_ref, prof_ref, tc_ref,
                  pad_ref, u_ref):
    f32 = jnp.float32
    bf16 = jnp.bfloat16
    padl = pad_ref.shape[1]
    u_padl = u_ref.shape[1]

    # ---- zero only the padding rows of the scratch buffers -----------------
    # (valid rows are always fully overwritten before they are read)
    for e in range(BB):
        if write_upto >= 0:
            pad_ref[e, 0:maxpad, :] = jnp.zeros((maxpad, C_HID), f32)
            pad_ref[e, maxpad + L:padl, :] = jnp.zeros(
                (padl - maxpad - L, C_HID), f32)
        u_ref[e, 0:UPAD, :] = jnp.zeros((UPAD, C_HID), f32)
        u_ref[e, UPAD + L:u_padl, :] = jnp.zeros(
            (u_padl - UPAD - L, C_HID), f32)

    def write_h(h):
        # keep the activation resident in the padded scratch so the following
        # blocks can read shifted windows directly from it
        for e in range(BB):
            pad_ref[e, maxpad:maxpad + L, :] = h[e * L:(e + 1) * L, :]

    def shifted(off):
        # stacked (BB*L, C_HID) window of the resident activation at row offset
        parts = [pad_ref[e, maxpad + off:maxpad + off + L, :]
                 for e in range(BB)]
        return parts[0] if BB == 1 else jnp.concatenate(parts, axis=0)

    # ---- stem: one fused im2col matmul (BB*L, 128) @ (128, 64) -------------
    h = jnp.maximum(
        jnp.dot(xim_ref[...], w0_ref[...], preferred_element_type=f32)
        + b0_ref[...],
        0.0)                                            # (BB*L, 64) f32
    if write_upto >= 0:
        write_h(h)

    # ---- 9 residual dilated conv blocks: h = h + relu(conv_d(h)) -----------
    for i in range(N_RES):
        d = 2 ** (i + 1)
        acc = jnp.dot(h.astype(bf16), wres_ref[i, 1],
                      preferred_element_type=f32)       # centre tap (carried h)
        if d < L:  # off-centre taps read only zero padding once d >= L
            acc = acc + jnp.dot(shifted(-d).astype(bf16), wres_ref[i, 0],
                                preferred_element_type=f32)
            acc = acc + jnp.dot(shifted(d).astype(bf16), wres_ref[i, 2],
                                preferred_element_type=f32)
        h = h + jnp.maximum(acc + bres_ref[i], 0.0)
        if i < write_upto:   # only needed while later blocks still read it
            write_h(h)

    xout_ref[...] = h

    # ---- fused profile + total-count heads ---------------------------------
    #   U[:, 2k+c] = h . Wprof[k, :, c]   (25 transposed-conv taps)
    #   U[:, 50+c] = h . Wlin[c, :]       (total-count projection)
    U = jnp.dot(h.astype(bf16), wpc_ref[...], preferred_element_type=f32)
    for e in range(BB):
        u_ref[e, UPAD:UPAD + L, :] = U[e * L:(e + 1) * L, :]

    lane = jax.lax.broadcasted_iota(jnp.int32, (1, WPC_W), 1)
    col_masks = [
        jnp.logical_and(lane >= 2 * k, lane < 2 * (k + 1)).astype(f32)
        for k in range(STEM_K)
    ]
    ridx = jax.lax.broadcasted_iota(jnp.int32, (WPC_W, C_OUT), 0)
    cidx = jax.lax.broadcasted_iota(jnp.int32, (WPC_W, C_OUT), 1)
    # msel folds column 2k+c of the masked tap-sum onto profile channel c
    msel = jnp.logical_and((ridx & 1) == cidx, ridx < 2 * STEM_K).astype(f32)
    # csel picks the two total-count columns (50, 51)
    csel = (ridx == 2 * STEM_K + cidx).astype(f32)

    t_parts = []
    for e in range(BB):
        t_e = (u_ref[e, UPAD - STEM_HALF:UPAD - STEM_HALF + L, :]
               * col_masks[0])
        for k in range(1, STEM_K):
            off = k - STEM_HALF
            t_e = t_e + u_ref[e, UPAD + off:UPAD + off + L, :] * col_masks[k]
        t_parts.append(t_e)
        row_sum = jnp.sum(u_ref[e, UPAD:UPAD + L, :], axis=0, keepdims=True)
        tc_ref[e] = (jnp.dot(row_sum, csel, preferred_element_type=f32)
                     * (1.0 / L) + blin_ref[...])
    taps = t_parts[0] if BB == 1 else jnp.concatenate(t_parts, axis=0)
    prof_ref[...] = (jnp.dot(taps, msel, preferred_element_type=f32)
                     + bprof_ref[...])


def init_params(key):
    ks = jax.random.split(key, 8)
    s = 0.05
    return {
        # PyTorch parameter shapes
        'w0': s * jax.random.normal(ks[0], (C_HID, C_IN, STEM_K), jnp.float32),
        'b0': s * jax.random.normal(ks[1], (C_HID,), jnp.float32),
        'wres': s * jax.random.normal(ks[2], (N_RES, C_HID, C_HID, RES_K), jnp.float32),
        'bres': s * jax.random.normal(ks[3], (N_RES, C_HID), jnp.float32),
        'wprof_t': s * jax.random.normal(ks[4], (C_HID, C_OUT, STEM_K), jnp.float32),
        'bprof': s * jax.random.normal(ks[5], (C_OUT,), jnp.float32),
        'wlin': s * jax.random.normal(ks[6], (C_OUT, C_HID), jnp.float32),
        'blin': s * jax.random.normal(ks[7], (C_OUT,), jnp.float32),
    }


def bpnet_forward(x_ncl, p):
    B, cin, L = x_ncl.shape
    assert cin == C_IN
    assert L % 8 == 0, "sequence length must be a multiple of 8"
    BB = _pick_bb(B, L)
    f32, bf16 = jnp.float32, jnp.bfloat16

    # ---- input: build the stem im2col in the wrapper (layout plumbing) -----
    xb = jnp.transpose(x_ncl, (0, 2, 1))                         # (B, L, 4)
    xp = jnp.pad(xb, ((0, 0), (STEM_HALF, STEM_HALF), (0, 0)))   # (B, L+24, 4)
    xim = jnp.concatenate([xp[:, k:k + L, :] for k in range(STEM_K)], axis=-1)
    xim = jnp.pad(xim, ((0, 0), (0, 0), (0, KC - STEM_K * C_IN)))
    xim = xim.reshape(B * L, KC).astype(bf16)                    # (B*L, 128)

    # ---- weights -> kernel-friendly layouts ---------------------------------
    w0 = jnp.transpose(p['w0'], (2, 1, 0)).reshape(STEM_K * C_IN, C_HID)
    w0 = jnp.pad(w0, ((0, KC - STEM_K * C_IN), (0, 0))).astype(bf16)   # (128, 64)
    b0 = p['b0'].reshape(1, C_HID).astype(f32)
    wres = jnp.transpose(p['wres'], (0, 3, 2, 1)).astype(bf16)         # (9, 3, 64, 64)
    bres = p['bres'].reshape(N_RES, 1, C_HID).astype(f32)
    # ConvTranspose1d(stride=1, padding=12) == 'same' Conv1d with flipped,
    # in/out-swapped weight.  Flatten its taps into columns (col 2k+c) and
    # append the total-count Linear weights as two extra columns (50, 51).
    wprof = jnp.transpose(jnp.flip(p['wprof_t'], axis=2), (2, 0, 1))   # (25, 64, 2)
    wpc = jnp.transpose(wprof, (1, 0, 2)).reshape(C_HID, STEM_K * C_OUT)
    wpc = jnp.concatenate([wpc, jnp.transpose(p['wlin'], (1, 0))], axis=1)
    wpc = jnp.pad(wpc, ((0, 0), (0, WPC_W - wpc.shape[1]))).astype(bf16)  # (64, 64)
    bprof = p['bprof'].reshape(1, C_OUT).astype(f32)
    blin = p['blin'].reshape(1, C_OUT).astype(f32)

    # ---- residual-block padding bookkeeping ---------------------------------
    readers = [i for i in range(N_RES) if 2 ** (i + 1) < L]
    write_upto = max(readers) if readers else -1
    maxpad = _round_up(max([2 ** (i + 1) for i in readers], default=8), 8)
    padl = L + 2 * maxpad
    u_padl = L + 2 * UPAD

    kernel = functools.partial(_bpnet_kernel, L, BB, maxpad, write_upto)
    nsteps = B // BB

    grid_spec = pltpu.PrefetchScalarGridSpec(
        num_scalar_prefetch=0,
        grid=(nsteps,),
        in_specs=[
            pl.BlockSpec((BB * L, KC), lambda b: (b, 0)),                 # xim
            pl.BlockSpec((KC, C_HID), lambda b: (0, 0)),                  # w0
            pl.BlockSpec((1, C_HID), lambda b: (0, 0)),                   # b0
            pl.BlockSpec((N_RES, RES_K, C_HID, C_HID), lambda b: (0, 0, 0, 0)),
            pl.BlockSpec((N_RES, 1, C_HID), lambda b: (0, 0, 0)),         # bres
            pl.BlockSpec((C_HID, WPC_W), lambda b: (0, 0)),               # wpc
            pl.BlockSpec((1, C_OUT), lambda b: (0, 0)),                   # bprof
            pl.BlockSpec((1, C_OUT), lambda b: (0, 0)),                   # blin
        ],
        out_specs=[
            pl.BlockSpec((BB * L, C_HID), lambda b: (b, 0)),              # x
            pl.BlockSpec((BB * L, C_OUT), lambda b: (b, 0)),              # profile
            pl.BlockSpec((BB, 1, C_OUT), lambda b: (b, 0, 0)),            # count
        ],
        scratch_shapes=[
            pltpu.VMEM((BB, padl, C_HID), jnp.float32),   # resident padded h
            pltpu.VMEM((BB, u_padl, C_HID), jnp.float32),  # padded head matrix U
        ],
    )

    out_shapes = (
        jax.ShapeDtypeStruct((B * L, C_HID), jnp.float32),
        jax.ShapeDtypeStruct((B * L, C_OUT), jnp.float32),
        jax.ShapeDtypeStruct((B, 1, C_OUT), jnp.float32),
    )

    xout2, prof2, tc3 = pl.pallas_call(
        kernel,
        out_shape=out_shapes,
        grid_spec=grid_spec,
        compiler_params=pltpu.CompilerParams(
            dimension_semantics=("parallel",)),
    )(xim, w0, b0, wres, bres, wpc, bprof, blin)

    return {
        'x': jnp.transpose(xout2.reshape(B, L, C_HID), (0, 2, 1)),  # (B, 64, L)
        'profile': prof2.reshape(B, L, C_OUT),                       # (B, L, 2)
        'total_count': tc3[:, 0, :],                                 # (B, 2)
    }


def ref_forward(x_ncl, p):
    """Pure-JAX reference matching the PyTorch module semantics."""
    prec = jax.lax.Precision.HIGHEST

    def conv1d_same(x, w, b, dilation=1):
        y = jax.lax.conv_general_dilated(
            x, w, window_strides=(1,), padding='SAME',
            rhs_dilation=(dilation,),
            dimension_numbers=('NCH', 'OIH', 'NCH'),
            precision=prec)
        return y + b[None, :, None]

    h = jax.nn.relu(conv1d_same(x_ncl, p['w0'], p['b0']))
    for i in range(N_RES):
        h = h + jax.nn.relu(conv1d_same(h, p['wres'][i], p['bres'][i],
                                        dilation=2 ** (i + 1)))
    w_eq = jnp.transpose(jnp.flip(p['wprof_t'], axis=2), (1, 0, 2))  # (2, 64, 25)
    prof = jnp.transpose(conv1d_same(h, w_eq, p['bprof']), (0, 2, 1))
    tc = jnp.mean(h, axis=2) @ p['wlin'].T + p['blin']
    return {'x': h, 'profile': prof, 'total_count': tc}


if __name__ == "__main__":
    key = jax.random.PRNGKey(0)
    kp, kx = jax.random.split(key)
    params = init_params(kp)

    B, L = 2, 64
    x = jax.random.normal(kx, (B, C_IN, L), jnp.float32)

    out = bpnet_forward(x, params)
    jax.block_until_ready(out)

    ref = ref_forward(x, params)
    for name in ('x', 'profile', 'total_count'):
        np.testing.assert_allclose(np.asarray(out[name]), np.asarray(ref[name]),
                                   rtol=5e-2, atol=5e-2)

    print("KERNEL_OK")
</pallas_src>

<mosaic_0001>
module attributes {stable_mosaic.version = 11 : i64} {
  func.func @_bpnet_kernel(%arg0: i32, %arg1: memref<128x128xbf16, #tpu.memory_space<vmem>>, %arg2: memref<128x64xbf16, #tpu.memory_space<vmem>>, %arg3: memref<1x64xf32, #tpu.memory_space<vmem>>, %arg4: memref<9x3x64x64xbf16, #tpu.memory_space<vmem>>, %arg5: memref<9x1x64xf32, #tpu.memory_space<vmem>>, %arg6: memref<64x64xbf16, #tpu.memory_space<vmem>>, %arg7: memref<1x2xf32, #tpu.memory_space<vmem>>, %arg8: memref<1x2xf32, #tpu.memory_space<vmem>>, %arg9: memref<128x64xf32, #tpu.memory_space<vmem>>, %arg10: memref<128x2xf32, #tpu.memory_space<vmem>>, %arg11: memref<2x1x2xf32, #tpu.memory_space<vmem>>, %arg12: memref<2x128x64xf32, #tpu.memory_space<vmem>>, %arg13: memref<2x96x64xf32, #tpu.memory_space<vmem>>) attributes {dimension_semantics = [#tpu.dimension_semantics<parallel>], iteration_bounds = array<i64: 1>, scalar_prefetch = 0 : i64, scratch_operands = 2 : i64, tpu.core_type = #tpu.core_type<tc>, window_params = [{transform_indices = @transform_0, window_bounds = array<i64: 128, 128>}, {pipeline_mode = #tpu.pipeline_mode<synchronous>, transform_indices = @transform_1, window_bounds = array<i64: 128, 64>}, {pipeline_mode = #tpu.pipeline_mode<synchronous>, transform_indices = @transform_2, window_bounds = array<i64: 1, 64>}, {pipeline_mode = #tpu.pipeline_mode<synchronous>, transform_indices = @transform_3, window_bounds = array<i64: 9, 3, 64, 64>}, {pipeline_mode = #tpu.pipeline_mode<synchronous>, transform_indices = @transform_4, window_bounds = array<i64: 9, 1, 64>}, {pipeline_mode = #tpu.pipeline_mode<synchronous>, transform_indices = @transform_5, window_bounds = array<i64: 64, 64>}, {pipeline_mode = #tpu.pipeline_mode<synchronous>, transform_indices = @transform_6, window_bounds = array<i64: 1, 2>}, {pipeline_mode = #tpu.pipeline_mode<synchronous>, transform_indices = @transform_7, window_bounds = array<i64: 1, 2>}, {transform_indices = @transform_8, window_bounds = array<i64: 128, 64>}, {transform_indices = @transform_9, window_bounds = array<i64: 128, 2>}, {transform_indices = @transform_10, window_bounds = array<i64: 2, 1, 2>}]} {
    %cst = arith.constant 0.000000e+00 : f32
    %0 = vector.broadcast %cst : f32 to vector<32x64xf32>
    %c0 = arith.constant 0 : index
    %c0_0 = arith.constant 0 : index
    %c0_1 = arith.constant 0 : index
    %1 = vector.load %arg12[%c0, %c0_0, %c0_1] : memref<2x128x64xf32, #tpu.memory_space<vmem>>, vector<1x32x64xf32>
    %2 = vector.shape_cast %1 : vector<1x32x64xf32> to vector<32x64xf32>
    %3 = vector.shape_cast %0 : vector<32x64xf32> to vector<1x32x64xf32>
    tpu.vector_store %arg12[%c0, %c0_0, %c0_1], %3 {strides = array<i32>} : memref<2x128x64xf32, #tpu.memory_space<vmem>>, vector<1x32x64xf32>,
    %cst_2 = arith.constant 0.000000e+00 : f32
    %4 = vector.broadcast %cst_2 : f32 to vector<32x64xf32>
    %c0_3 = arith.constant 0 : index
    %c96 = arith.constant 96 : index
    %c0_4 = arith.constant 0 : index
    %5 = vector.load %arg12[%c0_3, %c96, %c0_4] : memref<2x128x64xf32, #tpu.memory_space<vmem>>, vector<1x32x64xf32>
    %6 = vector.shape_cast %5 : vector<1x32x64xf32> to vector<32x64xf32>
    %7 = vector.shape_cast %4 : vector<32x64xf32> to vector<1x32x64xf32>
    tpu.vector_store %arg12[%c0_3, %c96, %c0_4], %7 {strides = array<i32>} : memref<2x128x64xf32, #tpu.memory_space<vmem>>, vector<1x32x64xf32>,
    %cst_5 = arith.constant 0.000000e+00 : f32
    %8 = vector.broadcast %cst_5 : f32 to vector<16x64xf32>
    %c0_6 = arith.constant 0 : index
    %c0_7 = arith.constant 0 : index
    %c0_8 = arith.constant 0 : index
    %9 = vector.load %arg13[%c0_6, %c0_7, %c0_8] : memref<2x96x64xf32, #tpu.memory_space<vmem>>, vector<1x16x64xf32>
    %10 = vector.shape_cast %9 : vector<1x16x64xf32> to vector<16x64xf32>
    %11 = vector.shape_cast %8 : vector<16x64xf32> to vector<1x16x64xf32>
    tpu.vector_store %arg13[%c0_6, %c0_7, %c0_8], %11 {strides = array<i32>} : memref<2x96x64xf32, #tpu.memory_space<vmem>>, vector<1x16x64xf32>,
    %cst_9 = arith.constant 0.000000e+00 : f32
    %12 = vector.broadcast %cst_9 : f32 to vector<16x64xf32>
    %c0_10 = arith.constant 0 : index
    %c80 = arith.constant 80 : index
    %c0_11 = arith.constant 0 : index
    %13 = vector.load %arg13[%c0_10, %c80, %c0_11] : memref<2x96x64xf32, #tpu.memory_space<vmem>>, vector<1x16x64xf32>
    %14 = vector.shape_cast %13 : vector<1x16x64xf32> to vector<16x64xf32>
    %15 = vector.shape_cast %12 : vector<16x64xf32> to vector<1x16x64xf32>
    tpu.vector_store %arg13[%c0_10, %c80, %c0_11], %15 {strides = array<i32>} : memref<2x96x64xf32, #tpu.memory_space<vmem>>, vector<1x16x64xf32>,
    %cst_12 = arith.constant 0.000000e+00 : f32
    %16 = vector.broadcast %cst_12 : f32 to vector<32x64xf32>
    %c1 = arith.constant 1 : index
    %c0_13 = arith.constant 0 : index
    %c0_14 = arith.constant 0 : index
    %17 = vector.load %arg12[%c1, %c0_13, %c0_14] : memref<2x128x64xf32, #tpu.memory_space<vmem>>, vector<1x32x64xf32>
    %18 = vector.shape_cast %17 : vector<1x32x64xf32> to vector<32x64xf32>
    %19 = vector.shape_cast %16 : vector<32x64xf32> to vector<1x32x64xf32>
    tpu.vector_store %arg12[%c1, %c0_13, %c0_14], %19 {strides = array<i32>} : memref<2x128x64xf32, #tpu.memory_space<vmem>>, vector<1x32x64xf32>,
    %cst_15 = arith.constant 0.000000e+00 : f32
    %20 = vector.broadcast %cst_15 : f32 to vector<32x64xf32>
    %c1_16 = arith.constant 1 : index
    %c96_17 = arith.constant 96 : index
    %c0_18 = arith.constant 0 : index
    %21 = vector.load %arg12[%c1_16, %c96_17, %c0_18] : memref<2x128x64xf32, #tpu.memory_space<vmem>>, vector<1x32x64xf32>
    %22 = vector.shape_cast %21 : vector<1x32x64xf32> to vector<32x64xf32>
    %23 = vector.shape_cast %20 : vector<32x64xf32> to vector<1x32x64xf32>
    tpu.vector_store %arg12[%c1_16, %c96_17, %c0_18], %23 {strides = array<i32>} : memref<2x128x64xf32, #tpu.memory_space<vmem>>, vector<1x32x64xf32>,
    %cst_19 = arith.constant 0.000000e+00 : f32
    %24 = vector.broadcast %cst_19 : f32 to vector<16x64xf32>
    %c1_20 = arith.constant 1 : index
    %c0_21 = arith.constant 0 : index
    %c0_22 = arith.constant 0 : index
    %25 = vector.load %arg13[%c1_20, %c0_21, %c0_22] : memref<2x96x64xf32, #tpu.memory_space<vmem>>, vector<1x16x64xf32>
    %26 = vector.shape_cast %25 : vector<1x16x64xf32> to vector<16x64xf32>
    %27 = vector.shape_cast %24 : vector<16x64xf32> to vector<1x16x64xf32>
    tpu.vector_store %arg13[%c1_20, %c0_21, %c0_22], %27 {strides = array<i32>} : memref<2x96x64xf32, #tpu.memory_space<vmem>>, vector<1x16x64xf32>,
    %cst_23 = arith.constant 0.000000e+00 : f32
    %28 = vector.broadcast %cst_23 : f32 to vector<16x64xf32>
    %c1_24 = arith.constant 1 : index
    %c80_25 = arith.constant 80 : index
    %c0_26 = arith.constant 0 : index
    %29 = vector.load %arg13[%c1_24, %c80_25, %c0_26] : memref<2x96x64xf32, #tpu.memory_space<vmem>>, vector<1x16x64xf32>
    %30 = vector.shape_cast %29 : vector<1x16x64xf32> to vector<16x64xf32>
    %31 = vector.shape_cast %28 : vector<16x64xf32> to vector<1x16x64xf32>
    tpu.vector_store %arg13[%c1_24, %c80_25, %c0_26], %31 {strides = array<i32>} : memref<2x96x64xf32, #tpu.memory_space<vmem>>, vector<1x16x64xf32>,
    %c0_27 = arith.constant 0 : index
    %c0_28 = arith.constant 0 : index
    %32 = vector.load %arg1[%c0_27, %c0_28] : memref<128x128xbf16, #tpu.memory_space<vmem>>, vector<128x128xbf16>
    %c0_29 = arith.constant 0 : index
    %c0_30 = arith.constant 0 : index
    %33 = vector.load %arg2[%c0_29, %c0_30] : memref<128x64xbf16, #tpu.memory_space<vmem>>, vector<128x64xbf16>
    %cst_31 = arith.constant dense<0.000000e+00> : vector<128x64xf32>
    %34 = tpu.matmul %32, %33, %cst_31 {dimension_numbers = #tpu.dot_dimension_numbers<[1], [0], [0], [1], [0, 0, 1, 1], [], []>} : vector<128x128xbf16>, vector<128x64xbf16>, vector<128x64xf32> -> vector<128x64xf32>
    %c0_32 = arith.constant 0 : index
    %c0_33 = arith.constant 0 : index
    %35 = vector.load %arg3[%c0_32, %c0_33] : memref<1x64xf32, #tpu.memory_space<vmem>>, vector<1x64xf32>
    %36 = vector.broadcast %35 : vector<1x64xf32> to vector<128x64xf32>
    %37 = arith.addf %34, %36 : vector<128x64xf32>
    %cst_34 = arith.constant 0.000000e+00 : f32
    %38 = vector.broadcast %cst_34 : f32 to vector<128x64xf32>
    %39 = arith.maximumf %37, %38 : vector<128x64xf32>
    %40 = vector.extract_strided_slice %39 {offsets = [0, 0], sizes = [64, 64], strides = [1, 1]} : vector<128x64xf32> to vector<64x64xf32>
    %c0_35 = arith.constant 0 : index
    %c32 = arith.constant 32 : index
    %c0_36 = arith.constant 0 : index
    %41 = vector.load %arg12[%c0_35, %c32, %c0_36] : memref<2x128x64xf32, #tpu.memory_space<vmem>>, vector<1x64x64xf32>
    %42 = vector.shape_cast %41 : vector<1x64x64xf32> to vector<64x64xf32>
    %43 = vector.shape_cast %40 : vector<64x64xf32> to vector<1x64x64xf32>
    tpu.vector_store %arg12[%c0_35, %c32, %c0_36], %43 {strides = array<i32>} : memref<2x128x64xf32, #tpu.memory_space<vmem>>, vector<1x64x64xf32>,
    %44 = vector.extract_strided_slice %39 {offsets = [64, 0], sizes = [64, 64], strides = [1, 1]} : vector<128x64xf32> to vector<64x64xf32>
    %c1_37 = arith.constant 1 : index
    %c32_38 = arith.constant 32 : index
    %c0_39 = arith.constant 0 : index
    %45 = vector.load %arg12[%c1_37, %c32_38, %c0_39] : memref<2x128x64xf32, #tpu.memory_space<vmem>>, vector<1x64x64xf32>
    %46 = vector.shape_cast %45 : vector<1x64x64xf32> to vector<64x64xf32>
    %47 = vector.shape_cast %44 : vector<64x64xf32> to vector<1x64x64xf32>
    tpu.vector_store %arg12[%c1_37, %c32_38, %c0_39], %47 {strides = array<i32>} : memref<2x128x64xf32, #tpu.memory_space<vmem>>, vector<1x64x64xf32>,
    %48 = arith.truncf %39 : vector<128x64xf32> to vector<128x64xbf16>
    %c0_40 = arith.constant 0 : index
    %c1_41 = arith.constant 1 : index
    %c0_42 = arith.constant 0 : index
    %c0_43 = arith.constant 0 : index
    %49 = vector.load %arg4[%c0_40, %c1_41, %c0_42, %c0_43] : memref<9x3x64x64xbf16, #tpu.memory_space<vmem>>, vector<1x1x64x64xbf16>
    %50 = vector.shape_cast %49 : vector<1x1x64x64xbf16> to vector<64x64xbf16>
    %cst_44 = arith.constant dense<0.000000e+00> : vector<128x64xf32>
    %51 = tpu.matmul %48, %50, %cst_44 {dimension_numbers = #tpu.dot_dimension_numbers<[1], [0], [0], [1], [0, 0, 1, 1], [], []>} : vector<128x64xbf16>, vector<64x64xbf16>, vector<128x64xf32> -> vector<128x64xf32>
    %c0_45 = arith.constant 0 : index
    %c30 = arith.constant 30 : index
    %c0_46 = arith.constant 0 : index
    %52 = vector.load %arg12[%c0_45, %c30, %c0_46] : memref<2x128x64xf32, #tpu.memory_space<vmem>>, vector<1x64x64xf32>
    %53 = vector.shape_cast %52 : vector<1x64x64xf32> to vector<64x64xf32>
    %c1_47 = arith.constant 1 : index
    %c30_48 = arith.constant 30 : index
    %c0_49 = arith.constant 0 : index
    %54 = vector.load %arg12[%c1_47, %c30_48, %c0_49] : memref<2x128x64xf32, #tpu.memory_space<vmem>>, vector<1x64x64xf32>
    %55 = vector.shape_cast %54 : vector<1x64x64xf32> to vector<64x64xf32>
    %56 = tpu.concatenate %53, %55 in 0 : vector<64x64xf32>, vector<64x64xf32> -> vector<128x64xf32>
    %57 = arith.truncf %56 : vector<128x64xf32> to vector<128x64xbf16>
    %c0_50 = arith.constant 0 : index
    %c0_51 = arith.constant 0 : index
    %c0_52 = arith.constant 0 : index
    %c0_53 = arith.constant 0 : index
    %58 = vector.load %arg4[%c0_50, %c0_51, %c0_52, %c0_53] : memref<9x3x64x64xbf16, #tpu.memory_space<vmem>>, vector<1x1x64x64xbf16>
    %59 = vector.shape_cast %58 : vector<1x1x64x64xbf16> to vector<64x64xbf16>
    %cst_54 = arith.constant dense<0.000000e+00> : vector<128x64xf32>
    %60 = tpu.matmul %57, %59, %cst_54 {dimension_numbers = #tpu.dot_dimension_numbers<[1], [0], [0], [1], [0, 0, 1, 1], [], []>} : vector<128x64xbf16>, vector<64x64xbf16>, vector<128x64xf32> -> vector<128x64xf32>
    %61 = arith.addf %51, %60 : vector<128x64xf32>
    %c0_55 = arith.constant 0 : index
    %c34 = arith.constant 34 : index
    %c0_56 = arith.constant 0 : index
    %62 = vector.load %arg12[%c0_55, %c34, %c0_56] : memref<2x128x64xf32, #tpu.memory_space<vmem>>, vector<1x64x64xf32>
    %63 = vector.shape_cast %62 : vector<1x64x64xf32> to vector<64x64xf32>
    %c1_57 = arith.constant 1 : index
    %c34_58 = arith.constant 34 : index
    %c0_59 = arith.constant 0 : index
    %64 = vector.load %arg12[%c1_57, %c34_58, %c0_59] : memref<2x128x64xf32, #tpu.memory_space<vmem>>, vector<1x64x64xf32>
    %65 = vector.shape_cast %64 : vector<1x64x64xf32> to vector<64x64xf32>
    %66 = tpu.concatenate %63, %65 in 0 : vector<64x64xf32>, vector<64x64xf32> -> vector<128x64xf32>
    %67 = arith.truncf %66 : vector<128x64xf32> to vector<128x64xbf16>
    %c0_60 = arith.constant 0 : index
    %c2 = arith.constant 2 : index
    %c0_61 = arith.constant 0 : index
    %c0_62 = arith.constant 0 : index
    %68 = vector.load %arg4[%c0_60, %c2, %c0_61, %c0_62] : memref<9x3x64x64xbf16, #tpu.memory_space<vmem>>, vector<1x1x64x64xbf16>
    %69 = vector.shape_cast %68 : vector<1x1x64x64xbf16> to vector<64x64xbf16>
    %cst_63 = arith.constant dense<0.000000e+00> : vector<128x64xf32>
    %70 = tpu.matmul %67, %69, %cst_63 {dimension_numbers = #tpu.dot_dimension_numbers<[1], [0], [0], [1], [0, 0, 1, 1], [], []>} : vector<128x64xbf16>, vector<64x64xbf16>, vector<128x64xf32> -> vector<128x64xf32>
    %71 = arith.addf %61, %70 : vector<128x64xf32>
    %c0_64 = arith.constant 0 : index
    %c0_65 = arith.constant 0 : index
    %c0_66 = arith.constant 0 : index
    %72 = vector.load %arg5[%c0_64, %c0_65, %c0_66] : memref<9x1x64xf32, #tpu.memory_space<vmem>>, vector<1x1x64xf32>
    %73 = vector.shape_cast %72 : vector<1x1x64xf32> to vector<1x64xf32>
    %74 = vector.broadcast %73 : vector<1x64xf32> to vector<128x64xf32>
    %75 = arith.addf %71, %74 : vector<128x64xf32>
    %cst_67 = arith.constant 0.000000e+00 : f32
    %76 = vector.broadcast %cst_67 : f32 to vector<128x64xf32>
    %77 = arith.maximumf %75, %76 : vector<128x64xf32>
    %78 = arith.addf %39, %77 : vector<128x64xf32>
    %79 = vector.extract_strided_slice %78 {offsets = [0, 0], sizes = [64, 64], strides = [1, 1]} : vector<128x64xf32> to vector<64x64xf32>
    %c0_68 = arith.constant 0 : index
    %c32_69 = arith.constant 32 : index
    %c0_70 = arith.constant 0 : index
    %80 = vector.load %arg12[%c0_68, %c32_69, %c0_70] : memref<2x128x64xf32, #tpu.memory_space<vmem>>, vector<1x64x64xf32>
    %81 = vector.shape_cast %80 : vector<1x64x64xf32> to vector<64x64xf32>
    %82 = vector.shape_cast %79 : vector<64x64xf32> to vector<1x64x64xf32>
    tpu.vector_store %arg12[%c0_68, %c32_69, %c0_70], %82 {strides = array<i32>} : memref<2x128x64xf32, #tpu.memory_space<vmem>>, vector<1x64x64xf32>,
    %83 = vector.extract_strided_slice %78 {offsets = [64, 0], sizes = [64, 64], strides = [1, 1]} : vector<128x64xf32> to vector<64x64xf32>
    %c1_71 = arith.constant 1 : index
    %c32_72 = arith.constant 32 : index
    %c0_73 = arith.constant 0 : index
    %84 = vector.load %arg12[%c1_71, %c32_72, %c0_73] : memref<2x128x64xf32, #tpu.memory_space<vmem>>, vector<1x64x64xf32>
    %85 = vector.shape_cast %84 : vector<1x64x64xf32> to vector<64x64xf32>
    %86 = vector.shape_cast %83 : vector<64x64xf32> to vector<1x64x64xf32>
    tpu.vector_store %arg12[%c1_71, %c32_72, %c0_73], %86 {strides = array<i32>} : memref<2x128x64xf32, #tpu.memory_space<vmem>>, vector<1x64x64xf32>,
    %87 = arith.truncf %78 : vector<128x64xf32> to vector<128x64xbf16>
    %c1_74 = arith.constant 1 : index
    %c1_75 = arith.constant 1 : index
    %c0_76 = arith.constant 0 : index
    %c0_77 = arith.constant 0 : index
    %88 = vector.load %arg4[%c1_74, %c1_75, %c0_76, %c0_77] : memref<9x3x64x64xbf16, #tpu.memory_space<vmem>>, vector<1x1x64x64xbf16>
    %89 = vector.shape_cast %88 : vector<1x1x64x64xbf16> to vector<64x64xbf16>
    %cst_78 = arith.constant dense<0.000000e+00> : vector<128x64xf32>
    %90 = tpu.matmul %87, %89, %cst_78 {dimension_numbers = #tpu.dot_dimension_numbers<[1], [0], [0], [1], [0, 0, 1, 1], [], []>} : vector<128x64xbf16>, vector<64x64xbf16>, vector<128x64xf32> -> vector<128x64xf32>
    %c0_79 = arith.constant 0 : index
    %c28 = arith.constant 28 : index
    %c0_80 = arith.constant 0 : index
    %91 = vector.load %arg12[%c0_79, %c28, %c0_80] : memref<2x128x64xf32, #tpu.memory_space<vmem>>, vector<1x64x64xf32>
    %92 = vector.shape_cast %91 : vector<1x64x64xf32> to vector<64x64xf32>
    %c1_81 = arith.constant 1 : index
    %c28_82 = arith.constant 28 : index
    %c0_83 = arith.constant 0 : index
    %93 = vector.load %arg12[%c1_81, %c28_82, %c0_83] : memref<2x128x64xf32, #tpu.memory_space<vmem>>, vector<1x64x64xf32>
    %94 = vector.shape_cast %93 : vector<1x64x64xf32> to vector<64x64xf32>
    %95 = tpu.concatenate %92, %94 in 0 : vector<64x64xf32>, vector<64x64xf32> -> vector<128x64xf32>
    %96 = arith.truncf %95 : vector<128x64xf32> to vector<128x64xbf16>
    %c1_84 = arith.constant 1 : index
    %c0_85 = arith.constant 0 : index
    %c0_86 = arith.constant 0 : index
    %c0_87 = arith.constant 0 : index
    %97 = vector.load %arg4[%c1_84, %c0_85, %c0_86, %c0_87] : memref<9x3x64x64xbf16, #tpu.memory_space<vmem>>, vector<1x1x64x64xbf16>
    %98 = vector.shape_cast %97 : vector<1x1x64x64xbf16> to vector<64x64xbf16>
    %cst_88 = arith.constant dense<0.000000e+00> : vector<128x64xf32>
    %99 = tpu.matmul %96, %98, %cst_88 {dimension_numbers = #tpu.dot_dimension_numbers<[1], [0], [0], [1], [0, 0, 1, 1], [], []>} : vector<128x64xbf16>, vector<64x64xbf16>, vector<128x64xf32> -> vector<128x64xf32>
    %100 = arith.addf %90, %99 : vector<128x64xf32>
    %c0_89 = arith.constant 0 : index
    %c36 = arith.constant 36 : index
    %c0_90 = arith.constant 0 : index
    %101 = vector.load %arg12[%c0_89, %c36, %c0_90] : memref<2x128x64xf32, #tpu.memory_space<vmem>>, vector<1x64x64xf32>
    %102 = vector.shape_cast %101 : vector<1x64x64xf32> to vector<64x64xf32>
    %c1_91 = arith.constant 1 : index
    %c36_92 = arith.constant 36 : index
    %c0_93 = arith.constant 0 : index
    %103 = vector.load %arg12[%c1_91, %c36_92, %c0_93] : memref<2x128x64xf32, #tpu.memory_space<vmem>>, vector<1x64x64xf32>
    %104 = vector.shape_cast %103 : vector<1x64x64xf32> to vector<64x64xf32>
    %105 = tpu.concatenate %102, %104 in 0 : vector<64x64xf32>, vector<64x64xf32> -> vector<128x64xf32>
    %106 = arith.truncf %105 : vector<128x64xf32> to vector<128x64xbf16>
    %c1_94 = arith.constant 1 : index
    %c2_95 = arith.constant 2 : index
    %c0_96 = arith.constant 0 : index
    %c0_97 = arith.constant 0 : index
    %107 = vector.load %arg4[%c1_94, %c2_95, %c0_96, %c0_97] : memref<9x3x64x64xbf16, #tpu.memory_space<vmem>>, vector<1x1x64x64xbf16>
    %108 = vector.shape_cast %107 : vector<1x1x64x64xbf16> to vector<64x64xbf16>
    %cst_98 = arith.constant dense<0.000000e+00> : vector<128x64xf32>
    %109 = tpu.matmul %106, %108, %cst_98 {dimension_numbers = #tpu.dot_dimension_numbers<[1], [0], [0], [1], [0, 0, 1, 1], [], []>} : vector<128x64xbf16>, vector<64x64xbf16>, vector<128x64xf32> -> vector<128x64xf32>
    %110 = arith.addf %100, %109 : vector<128x64xf32>
    %c1_99 = arith.constant 1 : index
    %c0_100 = arith.constant 0 : index
    %c0_101 = arith.constant 0 : index
    %111 = vector.load %arg5[%c1_99, %c0_100, %c0_101] : memref<9x1x64xf32, #tpu.memory_space<vmem>>, vector<1x1x64xf32>
    %112 = vector.shape_cast %111 : vector<1x1x64xf32> to vector<1x64xf32>
    %113 = vector.broadcast %112 : vector<1x64xf32> to vector<128x64xf32>
    %114 = arith.addf %110, %113 : vector<128x64xf32>
    %cst_102 = arith.constant 0.000000e+00 : f32
    %115 = vector.broadcast %cst_102 : f32 to vector<128x64xf32>
    %116 = arith.maximumf %114, %115 : vector<128x64xf32>
    %117 = arith.addf %78, %116 : vector<128x64xf32>
    %118 = vector.extract_strided_slice %117 {offsets = [0, 0], sizes = [64, 64], strides = [1, 1]} : vector<128x64xf32> to vector<64x64xf32>
    %c0_103 = arith.constant 0 : index
    %c32_104 = arith.constant 32 : index
    %c0_105 = arith.constant 0 : index
    %119 = vector.load %arg12[%c0_103, %c32_104, %c0_105] : memref<2x128x64xf32, #tpu.memory_space<vmem>>, vector<1x64x64xf32>
    %120 = vector.shape_cast %119 : vector<1x64x64xf32> to vector<64x64xf32>
    %121 = vector.shape_cast %118 : vector<64x64xf32> to vector<1x64x64xf32>
    tpu.vector_store %arg12[%c0_103, %c32_104, %c0_105], %121 {strides = array<i32>} : memref<2x128x64xf32, #tpu.memory_space<vmem>>, vector<1x64x64xf32>,
    %122 = vector.extract_strided_slice %117 {offsets = [64, 0], sizes = [64, 64], strides = [1, 1]} : vector<128x64xf32> to vector<64x64xf32>
    %c1_106 = arith.constant 1 : index
    %c32_107 = arith.constant 32 : index
    %c0_108 = arith.constant 0 : index
    %123 = vector.load %arg12[%c1_106, %c32_107, %c0_108] : memref<2x128x64xf32, #tpu.memory_space<vmem>>, vector<1x64x64xf32>
    %124 = vector.shape_cast %123 : vector<1x64x64xf32> to vector<64x64xf32>
    %125 = vector.shape_cast %122 : vector<64x64xf32> to vector<1x64x64xf32>
    tpu.vector_store %arg12[%c1_106, %c32_107, %c0_108], %125 {strides = array<i32>} : memref<2x128x64xf32, #tpu.memory_space<vmem>>, vector<1x64x64xf32>,
    %126 = arith.truncf %117 : vector<128x64xf32> to vector<128x64xbf16>
    %c2_109 = arith.constant 2 : index
    %c1_110 = arith.constant 1 : index
    %c0_111 = arith.constant 0 : index
    %c0_112 = arith.constant 0 : index
    %127 = vector.load %arg4[%c2_109, %c1_110, %c0_111, %c0_112] : memref<9x3x64x64xbf16, #tpu.memory_space<vmem>>, vector<1x1x64x64xbf16>
    %128 = vector.shape_cast %127 : vector<1x1x64x64xbf16> to vector<64x64xbf16>
    %cst_113 = arith.constant dense<0.000000e+00> : vector<128x64xf32>
    %129 = tpu.matmul %126, %128, %cst_113 {dimension_numbers = #tpu.dot_dimension_numbers<[1], [0], [0], [1], [0, 0, 1, 1], [], []>} : vector<128x64xbf16>, vector<64x64xbf16>, vector<128x64xf32> -> vector<128x64xf32>
    %c0_114 = arith.constant 0 : index
    %c24 = arith.constant 24 : index
    %c0_115 = arith.constant 0 : index
    %130 = vector.load %arg12[%c0_114, %c24, %c0_115] : memref<2x128x64xf32, #tpu.memory_space<vmem>>, vector<1x64x64xf32>
    %131 = vector.shape_cast %130 : vector<1x64x64xf32> to vector<64x64xf32>
    %c1_116 = arith.constant 1 : index
    %c24_117 = arith.constant 24 : index
    %c0_118 = arith.constant 0 : index
    %132 = vector.load %arg12[%c1_116, %c24_117, %c0_118] : memref<2x128x64xf32, #tpu.memory_space<vmem>>, vector<1x64x64xf32>
    %133 = vector.shape_cast %132 : vector<1x64x64xf32> to vector<64x64xf32>
    %134 = tpu.concatenate %131, %133 in 0 : vector<64x64xf32>, vector<64x64xf32> -> vector<128x64xf32>
    %135 = arith.truncf %134 : vector<128x64xf32> to vector<128x64xbf16>
    %c2_119 = arith.constant 2 : index
    %c0_120 = arith.constant 0 : index
    %c0_121 = arith.constant 0 : index
    %c0_122 = arith.constant 0 : index
    %136 = vector.load %arg4[%c2_119, %c0_120, %c0_121, %c0_122] : memref<9x3x64x64xbf16, #tpu.memory_space<vmem>>, vector<1x1x64x64xbf16>
    %137 = vector.shape_cast %136 : vector<1x1x64x64xbf16> to vector<64x64xbf16>
    %cst_123 = arith.constant dense<0.000000e+00> : vector<128x64xf32>
    %138 = tpu.matmul %135, %137, %cst_123 {dimension_numbers = #tpu.dot_dimension_numbers<[1], [0], [0], [1], [0, 0, 1, 1], [], []>} : vector<128x64xbf16>, vector<64x64xbf16>, vector<128x64xf32> -> vector<128x64xf32>
    %139 = arith.addf %129, %138 : vector<128x64xf32>
    %c0_124 = arith.constant 0 : index
    %c40 = arith.constant 40 : index
    %c0_125 = arith.constant 0 : index
    %140 = vector.load %arg12[%c0_124, %c40, %c0_125] : memref<2x128x64xf32, #tpu.memory_space<vmem>>, vector<1x64x64xf32>
    %141 = vector.shape_cast %140 : vector<1x64x64xf32> to vector<64x64xf32>
    %c1_126 = arith.constant 1 : index
    %c40_127 = arith.constant 40 : index
    %c0_128 = arith.constant 0 : index
    %142 = vector.load %arg12[%c1_126, %c40_127, %c0_128] : memref<2x128x64xf32, #tpu.memory_space<vmem>>, vector<1x64x64xf32>
    %143 = vector.shape_cast %142 : vector<1x64x64xf32> to vector<64x64xf32>
    %144 = tpu.concatenate %141, %143 in 0 : vector<64x64xf32>, vector<64x64xf32> -> vector<128x64xf32>
    %145 = arith.truncf %144 : vector<128x64xf32> to vector<128x64xbf16>
    %c2_129 = arith.constant 2 : index
    %c2_130 = arith.constant 2 : index
    %c0_131 = arith.constant 0 : index
    %c0_132 = arith.constant 0 : index
    %146 = vector.load %arg4[%c2_129, %c2_130, %c0_131, %c0_132] : memref<9x3x64x64xbf16, #tpu.memory_space<vmem>>, vector<1x1x64x64xbf16>
    %147 = vector.shape_cast %146 : vector<1x1x64x64xbf16> to vector<64x64xbf16>
    %cst_133 = arith.constant dense<0.000000e+00> : vector<128x64xf32>
    %148 = tpu.matmul %145, %147, %cst_133 {dimension_numbers = #tpu.dot_dimension_numbers<[1], [0], [0], [1], [0, 0, 1, 1], [], []>} : vector<128x64xbf16>, vector<64x64xbf16>, vector<128x64xf32> -> vector<128x64xf32>
    %149 = arith.addf %139, %148 : vector<128x64xf32>
    %c2_134 = arith.constant 2 : index
    %c0_135 = arith.constant 0 : index
    %c0_136 = arith.constant 0 : index
    %150 = vector.load %arg5[%c2_134, %c0_135, %c0_136] : memref<9x1x64xf32, #tpu.memory_space<vmem>>, vector<1x1x64xf32>
    %151 = vector.shape_cast %150 : vector<1x1x64xf32> to vector<1x64xf32>
    %152 = vector.broadcast %151 : vector<1x64xf32> to vector<128x64xf32>
    %153 = arith.addf %149, %152 : vector<128x64xf32>
    %cst_137 = arith.constant 0.000000e+00 : f32
    %154 = vector.broadcast %cst_137 : f32 to vector<128x64xf32>
    %155 = arith.maximumf %153, %154 : vector<128x64xf32>
    %156 = arith.addf %117, %155 : vector<128x64xf32>
    %157 = vector.extract_strided_slice %156 {offsets = [0, 0], sizes = [64, 64], strides = [1, 1]} : vector<128x64xf32> to vector<64x64xf32>
    %c0_138 = arith.constant 0 : index
    %c32_139 = arith.constant 32 : index
    %c0_140 = arith.constant 0 : index
    %158 = vector.load %arg12[%c0_138, %c32_139, %c0_140] : memref<2x128x64xf32, #tpu.memory_space<vmem>>, vector<1x64x64xf32>
    %159 = vector.shape_cast %158 : vector<1x64x64xf32> to vector<64x64xf32>
    %160 = vector.shape_cast %157 : vector<64x64xf32> to vector<1x64x64xf32>
    tpu.vector_store %arg12[%c0_138, %c32_139, %c0_140], %160 {strides = array<i32>} : memref<2x128x64xf32, #tpu.memory_space<vmem>>, vector<1x64x64xf32>,
    %161 = vector.extract_strided_slice %156 {offsets = [64, 0], sizes = [64, 64], strides = [1, 1]} : vector<128x64xf32> to vector<64x64xf32>
    %c1_141 = arith.constant 1 : index
    %c32_142 = arith.constant 32 : index
    %c0_143 = arith.constant 0 : index
    %162 = vector.load %arg12[%c1_141, %c32_142, %c0_143] : memref<2x128x64xf32, #tpu.memory_space<vmem>>, vector<1x64x64xf32>
    %163 = vector.shape_cast %162 : vector<1x64x64xf32> to vector<64x64xf32>
    %164 = vector.shape_cast %161 : vector<64x64xf32> to vector<1x64x64xf32>
    tpu.vector_store %arg12[%c1_141, %c32_142, %c0_143], %164 {strides = array<i32>} : memref<2x128x64xf32, #tpu.memory_space<vmem>>, vector<1x64x64xf32>,
    %165 = arith.truncf %156 : vector<128x64xf32> to vector<128x64xbf16>
    %c3 = arith.constant 3 : index
    %c1_144 = arith.constant 1 : index
    %c0_145 = arith.constant 0 : index
    %c0_146 = arith.constant 0 : index
    %166 = vector.load %arg4[%c3, %c1_144, %c0_145, %c0_146] : memref<9x3x64x64xbf16, #tpu.memory_space<vmem>>, vector<1x1x64x64xbf16>
    %167 = vector.shape_cast %166 : vector<1x1x64x64xbf16> to vector<64x64xbf16>
    %cst_147 = arith.constant dense<0.000000e+00> : vector<128x64xf32>
    %168 = tpu.matmul %165, %167, %cst_147 {dimension_numbers = #tpu.dot_dimension_numbers<[1], [0], [0], [1], [0, 0, 1, 1], [], []>} : vector<128x64xbf16>, vector<64x64xbf16>, vector<128x64xf32> -> vector<128x64xf32>
    %c0_148 = arith.constant 0 : index
    %c16 = arith.constant 16 : index
    %c0_149 = arith.constant 0 : index
    %169 = vector.load %arg12[%c0_148, %c16, %c0_149] : memref<2x128x64xf32, #tpu.memory_space<vmem>>, vector<1x64x64xf32>
    %170 = vector.shape_cast %169 : vector<1x64x64xf32> to vector<64x64xf32>
    %c1_150 = arith.constant 1 : index
    %c16_151 = arith.constant 16 : index
    %c0_152 = arith.constant 0 : index
    %171 = vector.load %arg12[%c1_150, %c16_151, %c0_152] : memref<2x128x64xf32, #tpu.memory_space<vmem>>, vector<1x64x64xf32>
    %172 = vector.shape_cast %171 : vector<1x64x64xf32> to vector<64x64xf32>
    %173 = tpu.concatenate %170, %172 in 0 : vector<64x64xf32>, vector<64x64xf32> -> vector<128x64xf32>
    %174 = arith.truncf %173 : vector<128x64xf32> to vector<128x64xbf16>
    %c3_153 = arith.constant 3 : index
    %c0_154 = arith.constant 0 : index
    %c0_155 = arith.constant 0 : index
    %c0_156 = arith.constant 0 : index
    %175 = vector.load %arg4[%c3_153, %c0_154, %c0_155, %c0_156] : memref<9x3x64x64xbf16, #tpu.memory_space<vmem>>, vector<1x1x64x64xbf16>
    %176 = vector.shape_cast %175 : vector<1x1x64x64xbf16> to vector<64x64xbf16>
    %cst_157 = arith.constant dense<0.000000e+00> : vector<128x64xf32>
    %177 = tpu.matmul %174, %176, %cst_157 {dimension_numbers = #tpu.dot_dimension_numbers<[1], [0], [0], [1], [0, 0, 1, 1], [], []>} : vector<128x64xbf16>, vector<64x64xbf16>, vector<128x64xf32> -> vector<128x64xf32>
    %178 = arith.addf %168, %177 : vector<128x64xf32>
    %c0_158 = arith.constant 0 : index
    %c48 = arith.constant 48 : index
    %c0_159 = arith.constant 0 : index
    %179 = vector.load %arg12[%c0_158, %c48, %c0_159] : memref<2x128x64xf32, #tpu.memory_space<vmem>>, vector<1x64x64xf32>
    %180 = vector.shape_cast %179 : vector<1x64x64xf32> to vector<64x64xf32>
    %c1_160 = arith.constant 1 : index
    %c48_161 = arith.constant 48 : index
    %c0_162 = arith.constant 0 : index
    %181 = vector.load %arg12[%c1_160, %c48_161, %c0_162] : memref<2x128x64xf32, #tpu.memory_space<vmem>>, vector<1x64x64xf32>
    %182 = vector.shape_cast %181 : vector<1x64x64xf32> to vector<64x64xf32>
    %183 = tpu.concatenate %180, %182 in 0 : vector<64x64xf32>, vector<64x64xf32> -> vector<128x64xf32>
    %184 = arith.truncf %183 : vector<128x64xf32> to vector<128x64xbf16>
    %c3_163 = arith.constant 3 : index
    %c2_164 = arith.constant 2 : index
    %c0_165 = arith.constant 0 : index
    %c0_166 = arith.constant 0 : index
    %185 = vector.load %arg4[%c3_163, %c2_164, %c0_165, %c0_166] : memref<9x3x64x64xbf16, #tpu.memory_space<vmem>>, vector<1x1x64x64xbf16>
    %186 = vector.shape_cast %185 : vector<1x1x64x64xbf16> to vector<64x64xbf16>
    %cst_167 = arith.constant dense<0.000000e+00> : vector<128x64xf32>
    %187 = tpu.matmul %184, %186, %cst_167 {dimension_numbers = #tpu.dot_dimension_numbers<[1], [0], [0], [1], [0, 0, 1, 1], [], []>} : vector<128x64xbf16>, vector<64x64xbf16>, vector<128x64xf32> -> vector<128x64xf32>
    %188 = arith.addf %178, %187 : vector<128x64xf32>
    %c3_168 = arith.constant 3 : index
    %c0_169 = arith.constant 0 : index
    %c0_170 = arith.constant 0 : index
    %189 = vector.load %arg5[%c3_168, %c0_169, %c0_170] : memref<9x1x64xf32, #tpu.memory_space<vmem>>, vector<1x1x64xf32>
    %190 = vector.shape_cast %189 : vector<1x1x64xf32> to vector<1x64xf32>
    %191 = vector.broadcast %190 : vector<1x64xf32> to vector<128x64xf32>
    %192 = arith.addf %188, %191 : vector<128x64xf32>
    %cst_171 = arith.constant 0.000000e+00 : f32
    %193 = vector.broadcast %cst_171 : f32 to vector<128x64xf32>
    %194 = arith.maximumf %192, %193 : vector<128x64xf32>
    %195 = arith.addf %156, %194 : vector<128x64xf32>
    %196 = vector.extract_strided_slice %195 {offsets = [0, 0], sizes = [64, 64], strides = [1, 1]} : vector<128x64xf32> to vector<64x64xf32>
    %c0_172 = arith.constant 0 : index
    %c32_173 = arith.constant 32 : index
    %c0_174 = arith.constant 0 : index
    %197 = vector.load %arg12[%c0_172, %c32_173, %c0_174] : memref<2x128x64xf32, #tpu.memory_space<vmem>>, vector<1x64x64xf32>
    %198 = vector.shape_cast %197 : vector<1x64x64xf32> to vector<64x64xf32>
    %199 = vector.shape_cast %196 : vector<64x64xf32> to vector<1x64x64xf32>
    tpu.vector_store %arg12[%c0_172, %c32_173, %c0_174], %199 {strides = array<i32>} : memref<2x128x64xf32, #tpu.memory_space<vmem>>, vector<1x64x64xf32>,
    %200 = vector.extract_strided_slice %195 {offsets = [64, 0], sizes = [64, 64], strides = [1, 1]} : vector<128x64xf32> to vector<64x64xf32>
    %c1_175 = arith.constant 1 : index
    %c32_176 = arith.constant 32 : index
    %c0_177 = arith.constant 0 : index
    %201 = vector.load %arg12[%c1_175, %c32_176, %c0_177] : memref<2x128x64xf32, #tpu.memory_space<vmem>>, vector<1x64x64xf32>
    %202 = vector.shape_cast %201 : vector<1x64x64xf32> to vector<64x64xf32>
    %203 = vector.shape_cast %200 : vector<64x64xf32> to vector<1x64x64xf32>
    tpu.vector_store %arg12[%c1_175, %c32_176, %c0_177], %203 {strides = array<i32>} : memref<2x128x64xf32, #tpu.memory_space<vmem>>, vector<1x64x64xf32>,
    %204 = arith.truncf %195 : vector<128x64xf32> to vector<128x64xbf16>
    %c4 = arith.constant 4 : index
    %c1_178 = arith.constant 1 : index
    %c0_179 = arith.constant 0 : index
    %c0_180 = arith.constant 0 : index
    %205 = vector.load %arg4[%c4, %c1_178, %c0_179, %c0_180] : memref<9x3x64x64xbf16, #tpu.memory_space<vmem>>, vector<1x1x64x64xbf16>
    %206 = vector.shape_cast %205 : vector<1x1x64x64xbf16> to vector<64x64xbf16>
    %cst_181 = arith.constant dense<0.000000e+00> : vector<128x64xf32>
    %207 = tpu.matmul %204, %206, %cst_181 {dimension_numbers = #tpu.dot_dimension_numbers<[1], [0], [0], [1], [0, 0, 1, 1], [], []>} : vector<128x64xbf16>, vector<64x64xbf16>, vector<128x64xf32> -> vector<128x64xf32>
    %c0_182 = arith.constant 0 : index
    %c0_183 = arith.constant 0 : index
    %c0_184 = arith.constant 0 : index
    %208 = vector.load %arg12[%c0_182, %c0_183, %c0_184] : memref<2x128x64xf32, #tpu.memory_space<vmem>>, vector<1x64x64xf32>
    %209 = vector.shape_cast %208 : vector<1x64x64xf32> to vector<64x64xf32>
    %c1_185 = arith.constant 1 : index
    %c0_186 = arith.constant 0 : index
    %c0_187 = arith.constant 0 : index
    %210 = vector.load %arg12[%c1_185, %c0_186, %c0_187] : memref<2x128x64xf32, #tpu.memory_space<vmem>>, vector<1x64x64xf32>
    %211 = vector.shape_cast %210 : vector<1x64x64xf32> to vector<64x64xf32>
    %212 = tpu.concatenate %209, %211 in 0 : vector<64x64xf32>, vector<64x64xf32> -> vector<128x64xf32>
    %213 = arith.truncf %212 : vector<128x64xf32> to vector<128x64xbf16>
    %c4_188 = arith.constant 4 : index
    %c0_189 = arith.constant 0 : index
    %c0_190 = arith.constant 0 : index
    %c0_191 = arith.constant 0 : index
    %214 = vector.load %arg4[%c4_188, %c0_189, %c0_190, %c0_191] : memref<9x3x64x64xbf16, #tpu.memory_space<vmem>>, vector<1x1x64x64xbf16>
    %215 = vector.shape_cast %214 : vector<1x1x64x64xbf16> to vector<64x64xbf16>
    %cst_192 = arith.constant dense<0.000000e+00> : vector<128x64xf32>
    %216 = tpu.matmul %213, %215, %cst_192 {dimension_numbers = #tpu.dot_dimension_numbers<[1], [0], [0], [1], [0, 0, 1, 1], [], []>} : vector<128x64xbf16>, vector<64x64xbf16>, vector<128x64xf32> -> vector<128x64xf32>
    %217 = arith.addf %207, %216 : vector<128x64xf32>
    %c0_193 = arith.constant 0 : index
    %c64 = arith.constant 64 : index
    %c0_194 = arith.constant 0 : index
    %218 = vector.load %arg12[%c0_193, %c64, %c0_194] : memref<2x128x64xf32, #tpu.memory_space<vmem>>, vector<1x64x64xf32>
    %219 = vector.shape_cast %218 : vector<1x64x64xf32> to vector<64x64xf32>
    %c1_195 = arith.constant 1 : index
    %c64_196 = arith.constant 64 : index
    %c0_197 = arith.constant 0 : index
    %220 = vector.load %arg12[%c1_195, %c64_196, %c0_197] : memref<2x128x64xf32, #tpu.memory_space<vmem>>, vector<1x64x64xf32>
    %221 = vector.shape_cast %220 : vector<1x64x64xf32> to vector<64x64xf32>
    %222 = tpu.concatenate %219, %221 in 0 : vector<64x64xf32>, vector<64x64xf32> -> vector<128x64xf32>
    %223 = arith.truncf %222 : vector<128x64xf32> to vector<128x64xbf16>
    %c4_198 = arith.constant 4 : index
    %c2_199 = arith.constant 2 : index
    %c0_200 = arith.constant 0 : index
    %c0_201 = arith.constant 0 : index
    %224 = vector.load %arg4[%c4_198, %c2_199, %c0_200, %c0_201] : memref<9x3x64x64xbf16, #tpu.memory_space<vmem>>, vector<1x1x64x64xbf16>
    %225 = vector.shape_cast %224 : vector<1x1x64x64xbf16> to vector<64x64xbf16>
    %cst_202 = arith.constant dense<0.000000e+00> : vector<128x64xf32>
    %226 = tpu.matmul %223, %225, %cst_202 {dimension_numbers = #tpu.dot_dimension_numbers<[1], [0], [0], [1], [0, 0, 1, 1], [], []>} : vector<128x64xbf16>, vector<64x64xbf16>, vector<128x64xf32> -> vector<128x64xf32>
    %227 = arith.addf %217, %226 : vector<128x64xf32>
    %c4_203 = arith.constant 4 : index
    %c0_204 = arith.constant 0 : index
    %c0_205 = arith.constant 0 : index
    %228 = vector.load %arg5[%c4_203, %c0_204, %c0_205] : memref<9x1x64xf32, #tpu.memory_space<vmem>>, vector<1x1x64xf32>
    %229 = vector.shape_cast %228 : vector<1x1x64xf32> to vector<1x64xf32>
    %230 = vector.broadcast %229 : vector<1x64xf32> to vector<128x64xf32>
    %231 = arith.addf %227, %230 : vector<128x64xf32>
    %cst_206 = arith.constant 0.000000e+00 : f32
    %232 = vector.broadcast %cst_206 : f32 to vector<128x64xf32>
    %233 = arith.maximumf %231, %232 : vector<128x64xf32>
    %234 = arith.addf %195, %233 : vector<128x64xf32>
    %235 = arith.truncf %234 : vector<128x64xf32> to vector<128x64xbf16>
    %c5 = arith.constant 5 : index
    %c1_207 = arith.constant 1 : index
    %c0_208 = arith.constant 0 : index
    %c0_209 = arith.constant 0 : index
    %236 = vector.load %arg4[%c5, %c1_207, %c0_208, %c0_209] : memref<9x3x64x64xbf16, #tpu.memory_space<vmem>>, vector<1x1x64x64xbf16>
    %237 = vector.shape_cast %236 : vector<1x1x64x64xbf16> to vector<64x64xbf16>
    %cst_210 = arith.constant dense<0.000000e+00> : vector<128x64xf32>
    %238 = tpu.matmul %235, %237, %cst_210 {dimension_numbers = #tpu.dot_dimension_numbers<[1], [0], [0], [1], [0, 0, 1, 1], [], []>} : vector<128x64xbf16>, vector<64x64xbf16>, vector<128x64xf32> -> vector<128x64xf32>
    %c5_211 = arith.constant 5 : index
    %c0_212 = arith.constant 0 : index
    %c0_213 = arith.constant 0 : index
    %239 = vector.load %arg5[%c5_211, %c0_212, %c0_213] : memref<9x1x64xf32, #tpu.memory_space<vmem>>, vector<1x1x64xf32>
    %240 = vector.shape_cast %239 : vector<1x1x64xf32> to vector<1x64xf32>
    %241 = vector.broadcast %240 : vector<1x64xf32> to vector<128x64xf32>
    %242 = arith.addf %238, %241 : vector<128x64xf32>
    %cst_214 = arith.constant 0.000000e+00 : f32
    %243 = vector.broadcast %cst_214 : f32 to vector<128x64xf32>
    %244 = arith.maximumf %242, %243 : vector<128x64xf32>
    %245 = arith.addf %234, %244 : vector<128x64xf32>
    %246 = arith.truncf %245 : vector<128x64xf32> to vector<128x64xbf16>
    %c6 = arith.constant 6 : index
    %c1_215 = arith.constant 1 : index
    %c0_216 = arith.constant 0 : index
    %c0_217 = arith.constant 0 : index
    %247 = vector.load %arg4[%c6, %c1_215, %c0_216, %c0_217] : memref<9x3x64x64xbf16, #tpu.memory_space<vmem>>, vector<1x1x64x64xbf16>
    %248 = vector.shape_cast %247 : vector<1x1x64x64xbf16> to vector<64x64xbf16>
    %cst_218 = arith.constant dense<0.000000e+00> : vector<128x64xf32>
    %249 = tpu.matmul %246, %248, %cst_218 {dimension_numbers = #tpu.dot_dimension_numbers<[1], [0], [0], [1], [0, 0, 1, 1], [], []>} : vector<128x64xbf16>, vector<64x64xbf16>, vector<128x64xf32> -> vector<128x64xf32>
    %c6_219 = arith.constant 6 : index
    %c0_220 = arith.constant 0 : index
    %c0_221 = arith.constant 0 : index
    %250 = vector.load %arg5[%c6_219, %c0_220, %c0_221] : memref<9x1x64xf32, #tpu.memory_space<vmem>>, vector<1x1x64xf32>
    %251 = vector.shape_cast %250 : vector<1x1x64xf32> to vector<1x64xf32>
    %252 = vector.broadcast %251 : vector<1x64xf32> to vector<128x64xf32>
    %253 = arith.addf %249, %252 : vector<128x64xf32>
    %cst_222 = arith.constant 0.000000e+00 : f32
    %254 = vector.broadcast %cst_222 : f32 to vector<128x64xf32>
    %255 = arith.maximumf %253, %254 : vector<128x64xf32>
    %256 = arith.addf %245, %255 : vector<128x64xf32>
    %257 = arith.truncf %256 : vector<128x64xf32> to vector<128x64xbf16>
    %c7 = arith.constant 7 : index
    %c1_223 = arith.constant 1 : index
    %c0_224 = arith.constant 0 : index
    %c0_225 = arith.constant 0 : index
    %258 = vector.load %arg4[%c7, %c1_223, %c0_224, %c0_225] : memref<9x3x64x64xbf16, #tpu.memory_space<vmem>>, vector<1x1x64x64xbf16>
    %259 = vector.shape_cast %258 : vector<1x1x64x64xbf16> to vector<64x64xbf16>
    %cst_226 = arith.constant dense<0.000000e+00> : vector<128x64xf32>
    %260 = tpu.matmul %257, %259, %cst_226 {dimension_numbers = #tpu.dot_dimension_numbers<[1], [0], [0], [1], [0, 0, 1, 1], [], []>} : vector<128x64xbf16>, vector<64x64xbf16>, vector<128x64xf32> -> vector<128x64xf32>
    %c7_227 = arith.constant 7 : index
    %c0_228 = arith.constant 0 : index
    %c0_229 = arith.constant 0 : index
    %261 = vector.load %arg5[%c7_227, %c0_228, %c0_229] : memref<9x1x64xf32, #tpu.memory_space<vmem>>, vector<1x1x64xf32>
    %262 = vector.shape_cast %261 : vector<1x1x64xf32> to vector<1x64xf32>
    %263 = vector.broadcast %262 : vector<1x64xf32> to vector<128x64xf32>
    %264 = arith.addf %260, %263 : vector<128x64xf32>
    %cst_230 = arith.constant 0.000000e+00 : f32
    %265 = vector.broadcast %cst_230 : f32 to vector<128x64xf32>
    %266 = arith.maximumf %264, %265 : vector<128x64xf32>
    %267 = arith.addf %256, %266 : vector<128x64xf32>
    %268 = arith.truncf %267 : vector<128x64xf32> to vector<128x64xbf16>
    %c8 = arith.constant 8 : index
    %c1_231 = arith.constant 1 : index
    %c0_232 = arith.constant 0 : index
    %c0_233 = arith.constant 0 : index
    %269 = vector.load %arg4[%c8, %c1_231, %c0_232, %c0_233] : memref<9x3x64x64xbf16, #tpu.memory_space<vmem>>, vector<1x1x64x64xbf16>
    %270 = vector.shape_cast %269 : vector<1x1x64x64xbf16> to vector<64x64xbf16>
    %cst_234 = arith.constant dense<0.000000e+00> : vector<128x64xf32>
    %271 = tpu.matmul %268, %270, %cst_234 {dimension_numbers = #tpu.dot_dimension_numbers<[1], [0], [0], [1], [0, 0, 1, 1], [], []>} : vector<128x64xbf16>, vector<64x64xbf16>, vector<128x64xf32> -> vector<128x64xf32>
    %c8_235 = arith.constant 8 : index
    %c0_236 = arith.constant 0 : index
    %c0_237 = arith.constant 0 : index
    %272 = vector.load %arg5[%c8_235, %c0_236, %c0_237] : memref<9x1x64xf32, #tpu.memory_space<vmem>>, vector<1x1x64xf32>
    %273 = vector.shape_cast %272 : vector<1x1x64xf32> to vector<1x64xf32>
    %274 = vector.broadcast %273 : vector<1x64xf32> to vector<128x64xf32>
    %275 = arith.addf %271, %274 : vector<128x64xf32>
    %cst_238 = arith.constant 0.000000e+00 : f32
    %276 = vector.broadcast %cst_238 : f32 to vector<128x64xf32>
    %277 = arith.maximumf %275, %276 : vector<128x64xf32>
    %278 = arith.addf %267, %277 : vector<128x64xf32>
    %c0_239 = arith.constant 0 : index
    %c0_240 = arith.constant 0 : index
    %279 = vector.load %arg9[%c0_239, %c0_240] : memref<128x64xf32, #tpu.memory_space<vmem>>, vector<128x64xf32>
    tpu.vector_store %arg9[%c0_239, %c0_240], %278 {strides = array<i32>} : memref<128x64xf32, #tpu.memory_space<vmem>>, vector<128x64xf32>,
    %280 = arith.truncf %278 : vector<128x64xf32> to vector<128x64xbf16>
    %c0_241 = arith.constant 0 : index
    %c0_242 = arith.constant 0 : index
    %281 = vector.load %arg6[%c0_241, %c0_242] : memref<64x64xbf16, #tpu.memory_space<vmem>>, vector<64x64xbf16>
    %cst_243 = arith.constant dense<0.000000e+00> : vector<128x64xf32>
    %282 = tpu.matmul %280, %281, %cst_243 {dimension_numbers = #tpu.dot_dimension_numbers<[1], [0], [0], [1], [0, 0, 1, 1], [], []>} : vector<128x64xbf16>, vector<64x64xbf16>, vector<128x64xf32> -> vector<128x64xf32>
    %283 = vector.extract_strided_slice %282 {offsets = [0, 0], sizes = [64, 64], strides = [1, 1]} : vector<128x64xf32> to vector<64x64xf32>
    %c0_244 = arith.constant 0 : index
    %c16_245 = arith.constant 16 : index
    %c0_246 = arith.constant 0 : index
    %284 = vector.load %arg13[%c0_244, %c16_245, %c0_246] : memref<2x96x64xf32, #tpu.memory_space<vmem>>, vector<1x64x64xf32>
    %285 = vector.shape_cast %284 : vector<1x64x64xf32> to vector<64x64xf32>
    %286 = vector.shape_cast %283 : vector<64x64xf32> to vector<1x64x64xf32>
    tpu.vector_store %arg13[%c0_244, %c16_245, %c0_246], %286 {strides = array<i32>} : memref<2x96x64xf32, #tpu.memory_space<vmem>>, vector<1x64x64xf32>,
    %287 = vector.extract_strided_slice %282 {offsets = [64, 0], sizes = [64, 64], strides = [1, 1]} : vector<128x64xf32> to vector<64x64xf32>
    %c1_247 = arith.constant 1 : index
    %c16_248 = arith.constant 16 : index
    %c0_249 = arith.constant 0 : index
    %288 = vector.load %arg13[%c1_247, %c16_248, %c0_249] : memref<2x96x64xf32, #tpu.memory_space<vmem>>, vector<1x64x64xf32>
    %289 = vector.shape_cast %288 : vector<1x64x64xf32> to vector<64x64xf32>
    %290 = vector.shape_cast %287 : vector<64x64xf32> to vector<1x64x64xf32>
    tpu.vector_store %arg13[%c1_247, %c16_248, %c0_249], %290 {strides = array<i32>} : memref<2x96x64xf32, #tpu.memory_space<vmem>>, vector<1x64x64xf32>,
    %291 = tpu.iota {dimensions = array<i32: 1>} : vector<1x64xi32>
    %c0_i32 = arith.constant 0 : i32
    %292 = vector.broadcast %c0_i32 : i32 to vector<1x64xi32>
    %293 = arith.cmpi sge, %291, %292 : vector<1x64xi32>
    %c2_i32 = arith.constant 2 : i32
    %294 = vector.broadcast %c2_i32 : i32 to vector<1x64xi32>
    %295 = arith.cmpi slt, %291, %294 : vector<1x64xi32>
    %296 = arith.andi %293, %295 : vector<1x64xi1>
    %297 = arith.extui %296 : vector<1x64xi1> to vector<1x64xi32>
    %298 = arith.sitofp %297 : vector<1x64xi32> to vector<1x64xf32>
    %c2_i32_250 = arith.constant 2 : i32
    %299 = vector.broadcast %c2_i32_250 : i32 to vector<1x64xi32>
    %300 = arith.cmpi sge, %291, %299 : vector<1x64xi32>
    %c4_i32 = arith.constant 4 : i32
    %301 = vector.broadcast %c4_i32 : i32 to vector<1x64xi32>
    %302 = arith.cmpi slt, %291, %301 : vector<1x64xi32>
    %303 = arith.andi %300, %302 : vector<1x64xi1>
    %304 = arith.extui %303 : vector<1x64xi1> to vector<1x64xi32>
    %305 = arith.sitofp %304 : vector<1x64xi32> to vector<1x64xf32>
    %c4_i32_251 = arith.constant 4 : i32
    %306 = vector.broadcast %c4_i32_251 : i32 to vector<1x64xi32>
    %307 = arith.cmpi sge, %291, %306 : vector<1x64xi32>
    %c6_i32 = arith.constant 6 : i32
    %308 = vector.broadcast %c6_i32 : i32 to vector<1x64xi32>
    %309 = arith.cmpi slt, %291, %308 : vector<1x64xi32>
    %310 = arith.andi %307, %309 : vector<1x64xi1>
    %311 = arith.extui %310 : vector<1x64xi1> to vector<1x64xi32>
    %312 = arith.sitofp %311 : vector<1x64xi32> to vector<1x64xf32>
    %c6_i32_252 = arith.constant 6 : i32
    %313 = vector.broadcast %c6_i32_252 : i32 to vector<1x64xi32>
    %314 = arith.cmpi sge, %291, %313 : vector<1x64xi32>
    %c8_i32 = arith.constant 8 : i32
    %315 = vector.broadcast %c8_i32 : i32 to vector<1x64xi32>
    %316 = arith.cmpi slt, %291, %315 : vector<1x64xi32>
    %317 = arith.andi %314, %316 : vector<1x64xi1>
    %318 = arith.extui %317 : vector<1x64xi1> to vector<1x64xi32>
    %319 = arith.sitofp %318 : vector<1x64xi32> to vector<1x64xf32>
    %c8_i32_253 = arith.constant 8 : i32
    %320 = vector.broadcast %c8_i32_253 : i32 to vector<1x64xi32>
    %321 = arith.cmpi sge, %291, %320 : vector<1x64xi32>
    %c10_i32 = arith.constant 10 : i32
    %322 = vector.broadcast %c10_i32 : i32 to vector<1x64xi32>
    %323 = arith.cmpi slt, %291, %322 : vector<1x64xi32>
    %324 = arith.andi %321, %323 : vector<1x64xi1>
    %325 = arith.extui %324 : vector<1x64xi1> to vector<1x64xi32>
    %326 = arith.sitofp %325 : vector<1x64xi32> to vector<1x64xf32>
    %c10_i32_254 = arith.constant 10 : i32
    %327 = vector.broadcast %c10_i32_254 : i32 to vector<1x64xi32>
    %328 = arith.cmpi sge, %291, %327 : vector<1x64xi32>
    %c12_i32 = arith.constant 12 : i32
    %329 = vector.broadcast %c12_i32 : i32 to vector<1x64xi32>
    %330 = arith.cmpi slt, %291, %329 : vector<1x64xi32>
    %331 = arith.andi %328, %330 : vector<1x64xi1>
    %332 = arith.extui %331 : vector<1x64xi1> to vector<1x64xi32>
    %333 = arith.sitofp %332 : vector<1x64xi32> to vector<1x64xf32>
    %c12_i32_255 = arith.constant 12 : i32
    %334 = vector.broadcast %c12_i32_255 : i32 to vector<1x64xi32>
    %335 = arith.cmpi sge, %291, %334 : vector<1x64xi32>
    %c14_i32 = arith.constant 14 : i32
    %336 = vector.broadcast %c14_i32 : i32 to vector<1x64xi32>
    %337 = arith.cmpi slt, %291, %336 : vector<1x64xi32>
    %338 = arith.andi %335, %337 : vector<1x64xi1>
    %339 = arith.extui %338 : vector<1x64xi1> to vector<1x64xi32>
    %340 = arith.sitofp %339 : vector<1x64xi32> to vector<1x64xf32>
    %c14_i32_256 = arith.constant 14 : i32
    %341 = vector.broadcast %c14_i32_256 : i32 to vector<1x64xi32>
    %342 = arith.cmpi sge, %291, %341 : vector<1x64xi32>
    %c16_i32 = arith.constant 16 : i32
    %343 = vector.broadcast %c16_i32 : i32 to vector<1x64xi32>
    %344 = arith.cmpi slt, %291, %343 : vector<1x64xi32>
    %345 = arith.andi %342, %344 : vector<1x64xi1>
    %346 = arith.extui %345 : vector<1x64xi1> to vector<1x64xi32>
    %347 = arith.sitofp %346 : vector<1x64xi32> to vector<1x64xf32>
    %c16_i32_257 = arith.constant 16 : i32
    %348 = vector.broadcast %c16_i32_257 : i32 to vector<1x64xi32>
    %349 = arith.cmpi sge, %291, %348 : vector<1x64xi32>
    %c18_i32 = arith.constant 18 : i32
    %350 = vector.broadcast %c18_i32 : i32 to vector<1x64xi32>
    %351 = arith.cmpi slt, %291, %350 : vector<1x64xi32>
    %352 = arith.andi %349, %351 : vector<1x64xi1>
    %353 = arith.extui %352 : vector<1x64xi1> to vector<1x64xi32>
    %354 = arith.sitofp %353 : vector<1x64xi32> to vector<1x64xf32>
    %c18_i32_258 = arith.constant 18 : i32
    %355 = vector.broadcast %c18_i32_258 : i32 to vector<1x64xi32>
    %356 = arith.cmpi sge, %291, %355 : vector<1x64xi32>
    %c20_i32 = arith.constant 20 : i32
    %357 = vector.broadcast %c20_i32 : i32 to vector<1x64xi32>
    %358 = arith.cmpi slt, %291, %357 : vector<1x64xi32>
    %359 = arith.andi %356, %358 : vector<1x64xi1>
    %360 = arith.extui %359 : vector<1x64xi1> to vector<1x64xi32>
    %361 = arith.sitofp %360 : vector<1x64xi32> to vector<1x64xf32>
    %c20_i32_259 = arith.constant 20 : i32
    %362 = vector.broadcast %c20_i32_259 : i32 to vector<1x64xi32>
    %363 = arith.cmpi sge, %291, %362 : vector<1x64xi32>
    %c22_i32 = arith.constant 22 : i32
    %364 = vector.broadcast %c22_i32 : i32 to vector<1x64xi32>
    %365 = arith.cmpi slt, %291, %364 : vector<1x64xi32>
    %366 = arith.andi %363, %365 : vector<1x64xi1>
    %367 = arith.extui %366 : vector<1x64xi1> to vector<1x64xi32>
    %368 = arith.sitofp %367 : vector<1x64xi32> to vector<1x64xf32>
    %c22_i32_260 = arith.constant 22 : i32
    %369 = vector.broadcast %c22_i32_260 : i32 to vector<1x64xi32>
    %370 = arith.cmpi sge, %291, %369 : vector<1x64xi32>
    %c24_i32 = arith.constant 24 : i32
    %371 = vector.broadcast %c24_i32 : i32 to vector<1x64xi32>
    %372 = arith.cmpi slt, %291, %371 : vector<1x64xi32>
    %373 = arith.andi %370, %372 : vector<1x64xi1>
    %374 = arith.extui %373 : vector<1x64xi1> to vector<1x64xi32>
    %375 = arith.sitofp %374 : vector<1x64xi32> to vector<1x64xf32>
    %c24_i32_261 = arith.constant 24 : i32
    %376 = vector.broadcast %c24_i32_261 : i32 to vector<1x64xi32>
    %377 = arith.cmpi sge, %291, %376 : vector<1x64xi32>
    %c26_i32 = arith.constant 26 : i32
    %378 = vector.broadcast %c26_i32 : i32 to vector<1x64xi32>
    %379 = arith.cmpi slt, %291, %378 : vector<1x64xi32>
    %380 = arith.andi %377, %379 : vector<1x64xi1>
    %381 = arith.extui %380 : vector<1x64xi1> to vector<1x64xi32>
    %382 = arith.sitofp %381 : vector<1x64xi32> to vector<1x64xf32>
    %c26_i32_262 = arith.constant 26 : i32
    %383 = vector.broadcast %c26_i32_262 : i32 to vector<1x64xi32>
    %384 = arith.cmpi sge, %291, %383 : vector<1x64xi32>
    %c28_i32 = arith.constant 28 : i32
    %385 = vector.broadcast %c28_i32 : i32 to vector<1x64xi32>
    %386 = arith.cmpi slt, %291, %385 : vector<1x64xi32>
    %387 = arith.andi %384, %386 : vector<1x64xi1>
    %388 = arith.extui %387 : vector<1x64xi1> to vector<1x64xi32>
    %389 = arith.sitofp %388 : vector<1x64xi32> to vector<1x64xf32>
    %c28_i32_263 = arith.constant 28 : i32
    %390 = vector.broadcast %c28_i32_263 : i32 to vector<1x64xi32>
    %391 = arith.cmpi sge, %291, %390 : vector<1x64xi32>
    %c30_i32 = arith.constant 30 : i32
    %392 = vector.broadcast %c30_i32 : i32 to vector<1x64xi32>
    %393 = arith.cmpi slt, %291, %392 : vector<1x64xi32>
    %394 = arith.andi %391, %393 : vector<1x64xi1>
    %395 = arith.extui %394 : vector<1x64xi1> to vector<1x64xi32>
    %396 = arith.sitofp %395 : vector<1x64xi32> to vector<1x64xf32>
    %c30_i32_264 = arith.constant 30 : i32
    %397 = vector.broadcast %c30_i32_264 : i32 to vector<1x64xi32>
    %398 = arith.cmpi sge, %291, %397 : vector<1x64xi32>
    %c32_i32 = arith.constant 32 : i32
    %399 = vector.broadcast %c32_i32 : i32 to vector<1x64xi32>
    %400 = arith.cmpi slt, %291, %399 : vector<1x64xi32>
    %401 = arith.andi %398, %400 : vector<1x64xi1>
    %402 = arith.extui %401 : vector<1x64xi1> to vector<1x64xi32>
    %403 = arith.sitofp %402 : vector<1x64xi32> to vector<1x64xf32>
    %c32_i32_265 = arith.constant 32 : i32
    %404 = vector.broadcast %c32_i32_265 : i32 to vector<1x64xi32>
    %405 = arith.cmpi sge, %291, %404 : vector<1x64xi32>
    %c34_i32 = arith.constant 34 : i32
    %406 = vector.broadcast %c34_i32 : i32 to vector<1x64xi32>
    %407 = arith.cmpi slt, %291, %406 : vector<1x64xi32>
    %408 = arith.andi %405, %407 : vector<1x64xi1>
    %409 = arith.extui %408 : vector<1x64xi1> to vector<1x64xi32>
    %410 = arith.sitofp %409 : vector<1x64xi32> to vector<1x64xf32>
    %c34_i32_266 = arith.constant 34 : i32
    %411 = vector.broadcast %c34_i32_266 : i32 to vector<1x64xi32>
    %412 = arith.cmpi sge, %291, %411 : vector<1x64xi32>
    %c36_i32 = arith.constant 36 : i32
    %413 = vector.broadcast %c36_i32 : i32 to vector<1x64xi32>
    %414 = arith.cmpi slt, %291, %413 : vector<1x64xi32>
    %415 = arith.andi %412, %414 : vector<1x64xi1>
    %416 = arith.extui %415 : vector<1x64xi1> to vector<1x64xi32>
    %417 = arith.sitofp %416 : vector<1x64xi32> to vector<1x64xf32>
    %c36_i32_267 = arith.constant 36 : i32
    %418 = vector.broadcast %c36_i32_267 : i32 to vector<1x64xi32>
    %419 = arith.cmpi sge, %291, %418 : vector<1x64xi32>
    %c38_i32 = arith.constant 38 : i32
    %420 = vector.broadcast %c38_i32 : i32 to vector<1x64xi32>
    %421 = arith.cmpi slt, %291, %420 : vector<1x64xi32>
    %422 = arith.andi %419, %421 : vector<1x64xi1>
    %423 = arith.extui %422 : vector<1x64xi1> to vector<1x64xi32>
    %424 = arith.sitofp %423 : vector<1x64xi32> to vector<1x64xf32>
    %c38_i32_268 = arith.constant 38 : i32
    %425 = vector.broadcast %c38_i32_268 : i32 to vector<1x64xi32>
    %426 = arith.cmpi sge, %291, %425 : vector<1x64xi32>
    %c40_i32 = arith.constant 40 : i32
    %427 = vector.broadcast %c40_i32 : i32 to vector<1x64xi32>
    %428 = arith.cmpi slt, %291, %427 : vector<1x64xi32>
    %429 = arith.andi %426, %428 : vector<1x64xi1>
    %430 = arith.extui %429 : vector<1x64xi1> to vector<1x64xi32>
    %431 = arith.sitofp %430 : vector<1x64xi32> to vector<1x64xf32>
    %c40_i32_269 = arith.constant 40 : i32
    %432 = vector.broadcast %c40_i32_269 : i32 to vector<1x64xi32>
    %433 = arith.cmpi sge, %291, %432 : vector<1x64xi32>
    %c42_i32 = arith.constant 42 : i32
    %434 = vector.broadcast %c42_i32 : i32 to vector<1x64xi32>
    %435 = arith.cmpi slt, %291, %434 : vector<1x64xi32>
    %436 = arith.andi %433, %435 : vector<1x64xi1>
    %437 = arith.extui %436 : vector<1x64xi1> to vector<1x64xi32>
    %438 = arith.sitofp %437 : vector<1x64xi32> to vector<1x64xf32>
    %c42_i32_270 = arith.constant 42 : i32
    %439 = vector.broadcast %c42_i32_270 : i32 to vector<1x64xi32>
    %440 = arith.cmpi sge, %291, %439 : vector<1x64xi32>
    %c44_i32 = arith.constant 44 : i32
    %441 = vector.broadcast %c44_i32 : i32 to vector<1x64xi32>
    %442 = arith.cmpi slt, %291, %441 : vector<1x64xi32>
    %443 = arith.andi %440, %442 : vector<1x64xi1>
    %444 = arith.extui %443 : vector<1x64xi1> to vector<1x64xi32>
    %445 = arith.sitofp %444 : vector<1x64xi32> to vector<1x64xf32>
    %c44_i32_271 = arith.constant 44 : i32
    %446 = vector.broadcast %c44_i32_271 : i32 to vector<1x64xi32>
    %447 = arith.cmpi sge, %291, %446 : vector<1x64xi32>
    %c46_i32 = arith.constant 46 : i32
    %448 = vector.broadcast %c46_i32 : i32 to vector<1x64xi32>
    %449 = arith.cmpi slt, %291, %448 : vector<1x64xi32>
    %450 = arith.andi %447, %449 : vector<1x64xi1>
    %451 = arith.extui %450 : vector<1x64xi1> to vector<1x64xi32>
    %452 = arith.sitofp %451 : vector<1x64xi32> to vector<1x64xf32>
    %c46_i32_272 = arith.constant 46 : i32
    %453 = vector.broadcast %c46_i32_272 : i32 to vector<1x64xi32>
    %454 = arith.cmpi sge, %291, %453 : vector<1x64xi32>
    %c48_i32 = arith.constant 48 : i32
    %455 = vector.broadcast %c48_i32 : i32 to vector<1x64xi32>
    %456 = arith.cmpi slt, %291, %455 : vector<1x64xi32>
    %457 = arith.andi %454, %456 : vector<1x64xi1>
    %458 = arith.extui %457 : vector<1x64xi1> to vector<1x64xi32>
    %459 = arith.sitofp %458 : vector<1x64xi32> to vector<1x64xf32>
    %c48_i32_273 = arith.constant 48 : i32
    %460 = vector.broadcast %c48_i32_273 : i32 to vector<1x64xi32>
    %461 = arith.cmpi sge, %291, %460 : vector<1x64xi32>
    %c50_i32 = arith.constant 50 : i32
    %462 = vector.broadcast %c50_i32 : i32 to vector<1x64xi32>
    %463 = arith.cmpi slt, %291, %462 : vector<1x64xi32>
    %464 = arith.andi %461, %463 : vector<1x64xi1>
    %465 = arith.extui %464 : vector<1x64xi1> to vector<1x64xi32>
    %466 = arith.sitofp %465 : vector<1x64xi32> to vector<1x64xf32>
    %467 = tpu.iota {dimensions = array<i32: 0>} : vector<64x2xi32>
    %468 = tpu.iota {dimensions = array<i32: 1>} : vector<64x2xi32>
    %c1_i32 = arith.constant 1 : i32
    %469 = vector.broadcast %c1_i32 : i32 to vector<64x2xi32>
    %470 = arith.andi %467, %469 : vector<64x2xi32>
    %471 = arith.cmpi eq, %470, %468 : vector<64x2xi32>
    %c50_i32_274 = arith.constant 50 : i32
    %472 = vector.broadcast %c50_i32_274 : i32 to vector<64x2xi32>
    %473 = arith.cmpi slt, %467, %472 : vector<64x2xi32>
    %474 = arith.andi %471, %473 : vector<64x2xi1>
    %475 = arith.extui %474 : vector<64x2xi1> to vector<64x2xi32>
    %476 = arith.sitofp %475 : vector<64x2xi32> to vector<64x2xf32>
    %c50_i32_275 = arith.constant 50 : i32
    %477 = vector.broadcast %c50_i32_275 : i32 to vector<64x2xi32>
    %478 = arith.addi %477, %468 : vector<64x2xi32>
    %479 = arith.cmpi eq, %467, %478 : vector<64x2xi32>
    %480 = arith.extui %479 : vector<64x2xi1> to vector<64x2xi32>
    %481 = arith.sitofp %480 : vector<64x2xi32> to vector<64x2xf32>
    %c0_276 = arith.constant 0 : index
    %c4_277 = arith.constant 4 : index
    %c0_278 = arith.constant 0 : index
    %482 = vector.load %arg13[%c0_276, %c4_277, %c0_278] : memref<2x96x64xf32, #tpu.memory_space<vmem>>, vector<1x64x64xf32>
    %483 = vector.shape_cast %482 : vector<1x64x64xf32> to vector<64x64xf32>
    %484 = vector.broadcast %298 : vector<1x64xf32> to vector<64x64xf32>
    %485 = arith.mulf %483, %484 : vector<64x64xf32>
    %c0_279 = arith.constant 0 : index
    %c5_280 = arith.constant 5 : index
    %c0_281 = arith.constant 0 : index
    %486 = vector.load %arg13[%c0_279, %c5_280, %c0_281] : memref<2x96x64xf32, #tpu.memory_space<vmem>>, vector<1x64x64xf32>
    %487 = vector.shape_cast %486 : vector<1x64x64xf32> to vector<64x64xf32>
    %488 = vector.broadcast %305 : vector<1x64xf32> to vector<64x64xf32>
    %489 = arith.mulf %487, %488 : vector<64x64xf32>
    %490 = arith.addf %485, %489 : vector<64x64xf32>
    %c0_282 = arith.constant 0 : index
    %c6_283 = arith.constant 6 : index
    %c0_284 = arith.constant 0 : index
    %491 = vector.load %arg13[%c0_282, %c6_283, %c0_284] : memref<2x96x64xf32, #tpu.memory_space<vmem>>, vector<1x64x64xf32>
    %492 = vector.shape_cast %491 : vector<1x64x64xf32> to vector<64x64xf32>
    %493 = vector.broadcast %312 : vector<1x64xf32> to vector<64x64xf32>
    %494 = arith.mulf %492, %493 : vector<64x64xf32>
    %495 = arith.addf %490, %494 : vector<64x64xf32>
    %c0_285 = arith.constant 0 : index
    %c7_286 = arith.constant 7 : index
    %c0_287 = arith.constant 0 : index
    %496 = vector.load %arg13[%c0_285, %c7_286, %c0_287] : memref<2x96x64xf32, #tpu.memory_space<vmem>>, vector<1x64x64xf32>
    %497 = vector.shape_cast %496 : vector<1x64x64xf32> to vector<64x64xf32>
    %498 = vector.broadcast %319 : vector<1x64xf32> to vector<64x64xf32>
    %499 = arith.mulf %497, %498 : vector<64x64xf32>
    %500 = arith.addf %495, %499 : vector<64x64xf32>
    %c0_288 = arith.constant 0 : index
    %c8_289 = arith.constant 8 : index
    %c0_290 = arith.constant 0 : index
    %501 = vector.load %arg13[%c0_288, %c8_289, %c0_290] : memref<2x96x64xf32, #tpu.memory_space<vmem>>, vector<1x64x64xf32>
    %502 = vector.shape_cast %501 : vector<1x64x64xf32> to vector<64x64xf32>
    %503 = vector.broadcast %326 : vector<1x64xf32> to vector<64x64xf32>
    %504 = arith.mulf %502, %503 : vector<64x64xf32>
    %505 = arith.addf %500, %504 : vector<64x64xf32>
    %c0_291 = arith.constant 0 : index
    %c9 = arith.constant 9 : index
    %c0_292 = arith.constant 0 : index
    %506 = vector.load %arg13[%c0_291, %c9, %c0_292] : memref<2x96x64xf32, #tpu.memory_space<vmem>>, vector<1x64x64xf32>
    %507 = vector.shape_cast %506 : vector<1x64x64xf32> to vector<64x64xf32>
    %508 = vector.broadcast %333 : vector<1x64xf32> to vector<64x64xf32>
    %509 = arith.mulf %507, %508 : vector<64x64xf32>
    %510 = arith.addf %505, %509 : vector<64x64xf32>
    %c0_293 = arith.constant 0 : index
    %c10 = arith.constant 10 : index
    %c0_294 = arith.constant 0 : index
    %511 = vector.load %arg13[%c0_293, %c10, %c0_294] : memref<2x96x64xf32, #tpu.memory_space<vmem>>, vector<1x64x64xf32>
    %512 = vector.shape_cast %511 : vector<1x64x64xf32> to vector<64x64xf32>
    %513 = vector.broadcast %340 : vector<1x64xf32> to vector<64x64xf32>
    %514 = arith.mulf %512, %513 : vector<64x64xf32>
    %515 = arith.addf %510, %514 : vector<64x64xf32>
    %c0_295 = arith.constant 0 : index
    %c11 = arith.constant 11 : index
    %c0_296 = arith.constant 0 : index
    %516 = vector.load %arg13[%c0_295, %c11, %c0_296] : memref<2x96x64xf32, #tpu.memory_space<vmem>>, vector<1x64x64xf32>
    %517 = vector.shape_cast %516 : vector<1x64x64xf32> to vector<64x64xf32>
    %518 = vector.broadcast %347 : vector<1x64xf32> to vector<64x64xf32>
    %519 = arith.mulf %517, %518 : vector<64x64xf32>
    %520 = arith.addf %515, %519 : vector<64x64xf32>
    %c0_297 = arith.constant 0 : index
    %c12 = arith.constant 12 : index
    %c0_298 = arith.constant 0 : index
    %521 = vector.load %arg13[%c0_297, %c12, %c0_298] : memref<2x96x64xf32, #tpu.memory_space<vmem>>, vector<1x64x64xf32>
    %522 = vector.shape_cast %521 : vector<1x64x64xf32> to vector<64x64xf32>
    %523 = vector.broadcast %354 : vector<1x64xf32> to vector<64x64xf32>
    %524 = arith.mulf %522, %523 : vector<64x64xf32>
    %525 = arith.addf %520, %524 : vector<64x64xf32>
    %c0_299 = arith.constant 0 : index
    %c13 = arith.constant 13 : index
    %c0_300 = arith.constant 0 : index
    %526 = vector.load %arg13[%c0_299, %c13, %c0_300] : memref<2x96x64xf32, #tpu.memory_space<vmem>>, vector<1x64x64xf32>
    %527 = vector.shape_cast %526 : vector<1x64x64xf32> to vector<64x64xf32>
    %528 = vector.broadcast %361 : vector<1x64xf32> to vector<64x64xf32>
    %529 = arith.mulf %527, %528 : vector<64x64xf32>
    %530 = arith.addf %525, %529 : vector<64x64xf32>
    %c0_301 = arith.constant 0 : index
    %c14 = arith.constant 14 : index
    %c0_302 = arith.constant 0 : index
    %531 = vector.load %arg13[%c0_301, %c14, %c0_302] : memref<2x96x64xf32, #tpu.memory_space<vmem>>, vector<1x64x64xf32>
    %532 = vector.shape_cast %531 : vector<1x64x64xf32> to vector<64x64xf32>
    %533 = vector.broadcast %368 : vector<1x64xf32> to vector<64x64xf32>
    %534 = arith.mulf %532, %533 : vector<64x64xf32>
    %535 = arith.addf %530, %534 : vector<64x64xf32>
    %c0_303 = arith.constant 0 : index
    %c15 = arith.constant 15 : index
    %c0_304 = arith.constant 0 : index
    %536 = vector.load %arg13[%c0_303, %c15, %c0_304] : memref<2x96x64xf32, #tpu.memory_space<vmem>>, vector<1x64x64xf32>
    %537 = vector.shape_cast %536 : vector<1x64x64xf32> to vector<64x64xf32>
    %538 = vector.broadcast %375 : vector<1x64xf32> to vector<64x64xf32>
    %539 = arith.mulf %537, %538 : vector<64x64xf32>
    %540 = arith.addf %535, %539 : vector<64x64xf32>
    %c0_305 = arith.constant 0 : index
    %c16_306 = arith.constant 16 : index
    %c0_307 = arith.constant 0 : index
    %541 = vector.load %arg13[%c0_305, %c16_306, %c0_307] : memref<2x96x64xf32, #tpu.memory_space<vmem>>, vector<1x64x64xf32>
    %542 = vector.shape_cast %541 : vector<1x64x64xf32> to vector<64x64xf32>
    %543 = vector.broadcast %382 : vector<1x64xf32> to vector<64x64xf32>
    %544 = arith.mulf %542, %543 : vector<64x64xf32>
    %545 = arith.addf %540, %544 : vector<64x64xf32>
    %c0_308 = arith.constant 0 : index
    %c17 = arith.constant 17 : index
    %c0_309 = arith.constant 0 : index
    %546 = vector.load %arg13[%c0_308, %c17, %c0_309] : memref<2x96x64xf32, #tpu.memory_space<vmem>>, vector<1x64x64xf32>
    %547 = vector.shape_cast %546 : vector<1x64x64xf32> to vector<64x64xf32>
    %548 = vector.broadcast %389 : vector<1x64xf32> to vector<64x64xf32>
    %549 = arith.mulf %547, %548 : vector<64x64xf32>
    %550 = arith.addf %545, %549 : vector<64x64xf32>
    %c0_310 = arith.constant 0 : index
    %c18 = arith.constant 18 : index
    %c0_311 = arith.constant 0 : index
    %551 = vector.load %arg13[%c0_310, %c18, %c0_311] : memref<2x96x64xf32, #tpu.memory_space<vmem>>, vector<1x64x64xf32>
    %552 = vector.shape_cast %551 : vector<1x64x64xf32> to vector<64x64xf32>
    %553 = vector.broadcast %396 : vector<1x64xf32> to vector<64x64xf32>
    %554 = arith.mulf %552, %553 : vector<64x64xf32>
    %555 = arith.addf %550, %554 : vector<64x64xf32>
    %c0_312 = arith.constant 0 : index
    %c19 = arith.constant 19 : index
    %c0_313 = arith.constant 0 : index
    %556 = vector.load %arg13[%c0_312, %c19, %c0_313] : memref<2x96x64xf32, #tpu.memory_space<vmem>>, vector<1x64x64xf32>
    %557 = vector.shape_cast %556 : vector<1x64x64xf32> to vector<64x64xf32>
    %558 = vector.broadcast %403 : vector<1x64xf32> to vector<64x64xf32>
    %559 = arith.mulf %557, %558 : vector<64x64xf32>
    %560 = arith.addf %555, %559 : vector<64x64xf32>
    %c0_314 = arith.constant 0 : index
    %c20 = arith.constant 20 : index
    %c0_315 = arith.constant 0 : index
    %561 = vector.load %arg13[%c0_314, %c20, %c0_315] : memref<2x96x64xf32, #tpu.memory_space<vmem>>, vector<1x64x64xf32>
    %562 = vector.shape_cast %561 : vector<1x64x64xf32> to vector<64x64xf32>
    %563 = vector.broadcast %410 : vector<1x64xf32> to vector<64x64xf32>
    %564 = arith.mulf %562, %563 : vector<64x64xf32>
    %565 = arith.addf %560, %564 : vector<64x64xf32>
    %c0_316 = arith.constant 0 : index
    %c21 = arith.constant 21 : index
    %c0_317 = arith.constant 0 : index
    %566 = vector.load %arg13[%c0_316, %c21, %c0_317] : memref<2x96x64xf32, #tpu.memory_space<vmem>>, vector<1x64x64xf32>
    %567 = vector.shape_cast %566 : vector<1x64x64xf32> to vector<64x64xf32>
    %568 = vector.broadcast %417 : vector<1x64xf32> to vector<64x64xf32>
    %569 = arith.mulf %567, %568 : vector<64x64xf32>
    %570 = arith.addf %565, %569 : vector<64x64xf32>
    %c0_318 = arith.constant 0 : index
    %c22 = arith.constant 22 : index
    %c0_319 = arith.constant 0 : index
    %571 = vector.load %arg13[%c0_318, %c22, %c0_319] : memref<2x96x64xf32, #tpu.memory_space<vmem>>, vector<1x64x64xf32>
    %572 = vector.shape_cast %571 : vector<1x64x64xf32> to vector<64x64xf32>
    %573 = vector.broadcast %424 : vector<1x64xf32> to vector<64x64xf32>
    %574 = arith.mulf %572, %573 : vector<64x64xf32>
    %575 = arith.addf %570, %574 : vector<64x64xf32>
    %c0_320 = arith.constant 0 : index
    %c23 = arith.constant 23 : index
    %c0_321 = arith.constant 0 : index
    %576 = vector.load %arg13[%c0_320, %c23, %c0_321] : memref<2x96x64xf32, #tpu.memory_space<vmem>>, vector<1x64x64xf32>
    %577 = vector.shape_cast %576 : vector<1x64x64xf32> to vector<64x64xf32>
    %578 = vector.broadcast %431 : vector<1x64xf32> to vector<64x64xf32>
    %579 = arith.mulf %577, %578 : vector<64x64xf32>
    %580 = arith.addf %575, %579 : vector<64x64xf32>
    %c0_322 = arith.constant 0 : index
    %c24_323 = arith.constant 24 : index
    %c0_324 = arith.constant 0 : index
    %581 = vector.load %arg13[%c0_322, %c24_323, %c0_324] : memref<2x96x64xf32, #tpu.memory_space<vmem>>, vector<1x64x64xf32>
    %582 = vector.shape_cast %581 : vector<1x64x64xf32> to vector<64x64xf32>
    %583 = vector.broadcast %438 : vector<1x64xf32> to vector<64x64xf32>
    %584 = arith.mulf %582, %583 : vector<64x64xf32>
    %585 = arith.addf %580, %584 : vector<64x64xf32>
    %c0_325 = arith.constant 0 : index
    %c25 = arith.constant 25 : index
    %c0_326 = arith.constant 0 : index
    %586 = vector.load %arg13[%c0_325, %c25, %c0_326] : memref<2x96x64xf32, #tpu.memory_space<vmem>>, vector<1x64x64xf32>
    %587 = vector.shape_cast %586 : vector<1x64x64xf32> to vector<64x64xf32>
    %588 = vector.broadcast %445 : vector<1x64xf32> to vector<64x64xf32>
    %589 = arith.mulf %587, %588 : vector<64x64xf32>
    %590 = arith.addf %585, %589 : vector<64x64xf32>
    %c0_327 = arith.constant 0 : index
    %c26 = arith.constant 26 : index
    %c0_328 = arith.constant 0 : index
    %591 = vector.load %arg13[%c0_327, %c26, %c0_328] : memref<2x96x64xf32, #tpu.memory_space<vmem>>, vector<1x64x64xf32>
    %592 = vector.shape_cast %591 : vector<1x64x64xf32> to vector<64x64xf32>
    %593 = vector.broadcast %452 : vector<1x64xf32> to vector<64x64xf32>
    %594 = arith.mulf %592, %593 : vector<64x64xf32>
    %595 = arith.addf %590, %594 : vector<64x64xf32>
    %c0_329 = arith.constant 0 : index
    %c27 = arith.constant 27 : index
    %c0_330 = arith.constant 0 : index
    %596 = vector.load %arg13[%c0_329, %c27, %c0_330] : memref<2x96x64xf32, #tpu.memory_space<vmem>>, vector<1x64x64xf32>
    %597 = vector.shape_cast %596 : vector<1x64x64xf32> to vector<64x64xf32>
    %598 = vector.broadcast %459 : vector<1x64xf32> to vector<64x64xf32>
    %599 = arith.mulf %597, %598 : vector<64x64xf32>
    %600 = arith.addf %595, %599 : vector<64x64xf32>
    %c0_331 = arith.constant 0 : index
    %c28_332 = arith.constant 28 : index
    %c0_333 = arith.constant 0 : index
    %601 = vector.load %arg13[%c0_331, %c28_332, %c0_333] : memref<2x96x64xf32, #tpu.memory_space<vmem>>, vector<1x64x64xf32>
    %602 = vector.shape_cast %601 : vector<1x64x64xf32> to vector<64x64xf32>
    %603 = vector.broadcast %466 : vector<1x64xf32> to vector<64x64xf32>
    %604 = arith.mulf %602, %603 : vector<64x64xf32>
    %605 = arith.addf %600, %604 : vector<64x64xf32>
    %c0_334 = arith.constant 0 : index
    %c16_335 = arith.constant 16 : index
    %c0_336 = arith.constant 0 : index
    %606 = vector.load %arg13[%c0_334, %c16_335, %c0_336] : memref<2x96x64xf32, #tpu.memory_space<vmem>>, vector<1x64x64xf32>
    %607 = vector.shape_cast %606 : vector<1x64x64xf32> to vector<64x64xf32>
    %cst_337 = arith.constant dense<0.000000e+00> : vector<64xf32>
    %608 = vector.multi_reduction <add>, %607, %cst_337 [0] : vector<64x64xf32> to vector<64xf32>
    %609 = vector.shape_cast %608 : vector<64xf32> to vector<1x64xf32>
    %cst_338 = arith.constant dense<0.000000e+00> : vector<1x2xf32>
    %610 = tpu.matmul %609, %481, %cst_338 {dimension_numbers = #tpu.dot_dimension_numbers<[1], [0], [0], [1], [0, 0, 1, 1], [], []>} : vector<1x64xf32>, vector<64x2xf32>, vector<1x2xf32> -> vector<1x2xf32>
    %cst_339 = arith.constant 1.562500e-02 : f32
    %611 = vector.broadcast %cst_339 : f32 to vector<1x2xf32>
    %612 = arith.mulf %610, %611 : vector<1x2xf32>
    %c0_340 = arith.constant 0 : index
    %c0_341 = arith.constant 0 : index
    %613 = vector.load %arg8[%c0_340, %c0_341] : memref<1x2xf32, #tpu.memory_space<vmem>>, vector<1x2xf32>
    %614 = arith.addf %612, %613 : vector<1x2xf32>
    %c0_342 = arith.constant 0 : index
    %c0_343 = arith.constant 0 : index
    %c0_344 = arith.constant 0 : index
    %615 = vector.load %arg11[%c0_342, %c0_343, %c0_344] : memref<2x1x2xf32, #tpu.memory_space<vmem>>, vector<1x1x2xf32>
    %616 = vector.shape_cast %615 : vector<1x1x2xf32> to vector<1x2xf32>
    %617 = vector.shape_cast %614 : vector<1x2xf32> to vector<1x1x2xf32>
    tpu.vector_store %arg11[%c0_342, %c0_343, %c0_344], %617 {strides = array<i32>} : memref<2x1x2xf32, #tpu.memory_space<vmem>>, vector<1x1x2xf32>,
    %c1_345 = arith.constant 1 : index
    %c4_346 = arith.constant 4 : index
    %c0_347 = arith.constant 0 : index
    %618 = vector.load %arg13[%c1_345, %c4_346, %c0_347] : memref<2x96x64xf32, #tpu.memory_space<vmem>>, vector<1x64x64xf32>
    %619 = vector.shape_cast %618 : vector<1x64x64xf32> to vector<64x64xf32>
    %620 = vector.broadcast %298 : vector<1x64xf32> to vector<64x64xf32>
    %621 = arith.mulf %619, %620 : vector<64x64xf32>
    %c1_348 = arith.constant 1 : index
    %c5_349 = arith.constant 5 : index
    %c0_350 = arith.constant 0 : index
    %622 = vector.load %arg13[%c1_348, %c5_349, %c0_350] : memref<2x96x64xf32, #tpu.memory_space<vmem>>, vector<1x64x64xf32>
    %623 = vector.shape_cast %622 : vector<1x64x64xf32> to vector<64x64xf32>
    %624 = vector.broadcast %305 : vector<1x64xf32> to vector<64x64xf32>
    %625 = arith.mulf %623, %624 : vector<64x64xf32>
    %626 = arith.addf %621, %625 : vector<64x64xf32>
    %c1_351 = arith.constant 1 : index
    %c6_352 = arith.constant 6 : index
    %c0_353 = arith.constant 0 : index
    %627 = vector.load %arg13[%c1_351, %c6_352, %c0_353] : memref<2x96x64xf32, #tpu.memory_space<vmem>>, vector<1x64x64xf32>
    %628 = vector.shape_cast %627 : vector<1x64x64xf32> to vector<64x64xf32>
    %629 = vector.broadcast %312 : vector<1x64xf32> to vector<64x64xf32>
    %630 = arith.mulf %628, %629 : vector<64x64xf32>
    %631 = arith.addf %626, %630 : vector<64x64xf32>
    %c1_354 = arith.constant 1 : index
    %c7_355 = arith.constant 7 : index
    %c0_356 = arith.constant 0 : index
    %632 = vector.load %arg13[%c1_354, %c7_355, %c0_356] : memref<2x96x64xf32, #tpu.memory_space<vmem>>, vector<1x64x64xf32>
    %633 = vector.shape_cast %632 : vector<1x64x64xf32> to vector<64x64xf32>
    %634 = vector.broadcast %319 : vector<1x64xf32> to vector<64x64xf32>
    %635 = arith.mulf %633, %634 : vector<64x64xf32>
    %636 = arith.addf %631, %635 : vector<64x64xf32>
    %c1_357 = arith.constant 1 : index
    %c8_358 = arith.constant 8 : index
    %c0_359 = arith.constant 0 : index
    %637 = vector.load %arg13[%c1_357, %c8_358, %c0_359] : memref<2x96x64xf32, #tpu.memory_space<vmem>>, vector<1x64x64xf32>
    %638 = vector.shape_cast %637 : vector<1x64x64xf32> to vector<64x64xf32>
    %639 = vector.broadcast %326 : vector<1x64xf32> to vector<64x64xf32>
    %640 = arith.mulf %638, %639 : vector<64x64xf32>
    %641 = arith.addf %636, %640 : vector<64x64xf32>
    %c1_360 = arith.constant 1 : index
    %c9_361 = arith.constant 9 : index
    %c0_362 = arith.constant 0 : index
    %642 = vector.load %arg13[%c1_360, %c9_361, %c0_362] : memref<2x96x64xf32, #tpu.memory_space<vmem>>, vector<1x64x64xf32>
    %643 = vector.shape_cast %642 : vector<1x64x64xf32> to vector<64x64xf32>
    %644 = vector.broadcast %333 : vector<1x64xf32> to vector<64x64xf32>
    %645 = arith.mulf %643, %644 : vector<64x64xf32>
    %646 = arith.addf %641, %645 : vector<64x64xf32>
    %c1_363 = arith.constant 1 : index
    %c10_364 = arith.constant 10 : index
    %c0_365 = arith.constant 0 : index
    %647 = vector.load %arg13[%c1_363, %c10_364, %c0_365] : memref<2x96x64xf32, #tpu.memory_space<vmem>>, vector<1x64x64xf32>
    %648 = vector.shape_cast %647 : vector<1x64x64xf32> to vector<64x64xf32>
    %649 = vector.broadcast %340 : vector<1x64xf32> to vector<64x64xf32>
    %650 = arith.mulf %648, %649 : vector<64x64xf32>
    %651 = arith.addf %646, %650 : vector<64x64xf32>
    %c1_366 = arith.constant 1 : index
    %c11_367 = arith.constant 11 : index
    %c0_368 = arith.constant 0 : index
    %652 = vector.load %arg13[%c1_366, %c11_367, %c0_368] : memref<2x96x64xf32, #tpu.memory_space<vmem>>, vector<1x64x64xf32>
    %653 = vector.shape_cast %652 : vector<1x64x64xf32> to vector<64x64xf32>
    %654 = vector.broadcast %347 : vector<1x64xf32> to vector<64x64xf32>
    %655 = arith.mulf %653, %654 : vector<64x64xf32>
    %656 = arith.addf %651, %655 : vector<64x64xf32>
    %c1_369 = arith.constant 1 : index
    %c12_370 = arith.constant 12 : index
    %c0_371 = arith.constant 0 : index
    %657 = vector.load %arg13[%c1_369, %c12_370, %c0_371] : memref<2x96x64xf32, #tpu.memory_space<vmem>>, vector<1x64x64xf32>
    %658 = vector.shape_cast %657 : vector<1x64x64xf32> to vector<64x64xf32>
    %659 = vector.broadcast %354 : vector<1x64xf32> to vector<64x64xf32>
    %660 = arith.mulf %658, %659 : vector<64x64xf32>
    %661 = arith.addf %656, %660 : vector<64x64xf32>
    %c1_372 = arith.constant 1 : index
    %c13_373 = arith.constant 13 : index
    %c0_374 = arith.constant 0 : index
    %662 = vector.load %arg13[%c1_372, %c13_373, %c0_374] : memref<2x96x64xf32, #tpu.memory_space<vmem>>, vector<1x64x64xf32>
    %663 = vector.shape_cast %662 : vector<1x64x64xf32> to vector<64x64xf32>
    %664 = vector.broadcast %361 : vector<1x64xf32> to vector<64x64xf32>
    %665 = arith.mulf %663, %664 : vector<64x64xf32>
    %666 = arith.addf %661, %665 : vector<64x64xf32>
    %c1_375 = arith.constant 1 : index
    %c14_376 = arith.constant 14 : index
    %c0_377 = arith.constant 0 : index
    %667 = vector.load %arg13[%c1_375, %c14_376, %c0_377] : memref<2x96x64xf32, #tpu.memory_space<vmem>>, vector<1x64x64xf32>
    %668 = vector.shape_cast %667 : vector<1x64x64xf32> to vector<64x64xf32>
    %669 = vector.broadcast %368 : vector<1x64xf32> to vector<64x64xf32>
    %670 = arith.mulf %668, %669 : vector<64x64xf32>
    %671 = arith.addf %666, %670 : vector<64x64xf32>
    %c1_378 = arith.constant 1 : index
    %c15_379 = arith.constant 15 : index
    %c0_380 = arith.constant 0 : index
    %672 = vector.load %arg13[%c1_378, %c15_379, %c0_380] : memref<2x96x64xf32, #tpu.memory_space<vmem>>, vector<1x64x64xf32>
    %673 = vector.shape_cast %672 : vector<1x64x64xf32> to vector<64x64xf32>
    %674 = vector.broadcast %375 : vector<1x64xf32> to vector<64x64xf32>
    %675 = arith.mulf %673, %674 : vector<64x64xf32>
    %676 = arith.addf %671, %675 : vector<64x64xf32>
    %c1_381 = arith.constant 1 : index
    %c16_382 = arith.constant 16 : index
    %c0_383 = arith.constant 0 : index
    %677 = vector.load %arg13[%c1_381, %c16_382, %c0_383] : memref<2x96x64xf32, #tpu.memory_space<vmem>>, vector<1x64x64xf32>
    %678 = vector.shape_cast %677 : vector<1x64x64xf32> to vector<64x64xf32>
    %679 = vector.broadcast %382 : vector<1x64xf32> to vector<64x64xf32>
    %680 = arith.mulf %678, %679 : vector<64x64xf32>
    %681 = arith.addf %676, %680 : vector<64x64xf32>
    %c1_384 = arith.constant 1 : index
    %c17_385 = arith.constant 17 : index
    %c0_386 = arith.constant 0 : index
    %682 = vector.load %arg13[%c1_384, %c17_385, %c0_386] : memref<2x96x64xf32, #tpu.memory_space<vmem>>, vector<1x64x64xf32>
    %683 = vector.shape_cast %682 : vector<1x64x64xf32> to vector<64x64xf32>
    %684 = vector.broadcast %389 : vector<1x64xf32> to vector<64x64xf32>
    %685 = arith.mulf %683, %684 : vector<64x64xf32>
    %686 = arith.addf %681, %685 : vector<64x64xf32>
    %c1_387 = arith.constant 1 : index
    %c18_388 = arith.constant 18 : index
    %c0_389 = arith.constant 0 : index
    %687 = vector.load %arg13[%c1_387, %c18_388, %c0_389] : memref<2x96x64xf32, #tpu.memory_space<vmem>>, vector<1x64x64xf32>
    %688 = vector.shape_cast %687 : vector<1x64x64xf32> to vector<64x64xf32>
    %689 = vector.broadcast %396 : vector<1x64xf32> to vector<64x64xf32>
    %690 = arith.mulf %688, %689 : vector<64x64xf32>
    %691 = arith.addf %686, %690 : vector<64x64xf32>
    %c1_390 = arith.constant 1 : index
    %c19_391 = arith.constant 19 : index
    %c0_392 = arith.constant 0 : index
    %692 = vector.load %arg13[%c1_390, %c19_391, %c0_392] : memref<2x96x64xf32, #tpu.memory_space<vmem>>, vector<1x64x64xf32>
    %693 = vector.shape_cast %692 : vector<1x64x64xf32> to vector<64x64xf32>
    %694 = vector.broadcast %403 : vector<1x64xf32> to vector<64x64xf32>
    %695 = arith.mulf %693, %694 : vector<64x64xf32>
    %696 = arith.addf %691, %695 : vector<64x64xf32>
    %c1_393 = arith.constant 1 : index
    %c20_394 = arith.constant 20 : index
    %c0_395 = arith.constant 0 : index
    %697 = vector.load %arg13[%c1_393, %c20_394, %c0_395] : memref<2x96x64xf32, #tpu.memory_space<vmem>>, vector<1x64x64xf32>
    %698 = vector.shape_cast %697 : vector<1x64x64xf32> to vector<64x64xf32>
    %699 = vector.broadcast %410 : vector<1x64xf32> to vector<64x64xf32>
    %700 = arith.mulf %698, %699 : vector<64x64xf32>
    %701 = arith.addf %696, %700 : vector<64x64xf32>
    %c1_396 = arith.constant 1 : index
    %c21_397 = arith.constant 21 : index
    %c0_398 = arith.constant 0 : index
    %702 = vector.load %arg13[%c1_396, %c21_397, %c0_398] : memref<2x96x64xf32, #tpu.memory_space<vmem>>, vector<1x64x64xf32>
    %703 = vector.shape_cast %702 : vector<1x64x64xf32> to vector<64x64xf32>
    %704 = vector.broadcast %417 : vector<1x64xf32> to vector<64x64xf32>
    %705 = arith.mulf %703, %704 : vector<64x64xf32>
    %706 = arith.addf %701, %705 : vector<64x64xf32>
    %c1_399 = arith.constant 1 : index
    %c22_400 = arith.constant 22 : index
    %c0_401 = arith.constant 0 : index
    %707 = vector.load %arg13[%c1_399, %c22_400, %c0_401] : memref<2x96x64xf32, #tpu.memory_space<vmem>>, vector<1x64x64xf32>
    %708 = vector.shape_cast %707 : vector<1x64x64xf32> to vector<64x64xf32>
    %709 = vector.broadcast %424 : vector<1x64xf32> to vector<64x64xf32>
    %710 = arith.mulf %708, %709 : vector<64x64xf32>
    %711 = arith.addf %706, %710 : vector<64x64xf32>
    %c1_402 = arith.constant 1 : index
    %c23_403 = arith.constant 23 : index
    %c0_404 = arith.constant 0 : index
    %712 = vector.load %arg13[%c1_402, %c23_403, %c0_404] : memref<2x96x64xf32, #tpu.memory_space<vmem>>, vector<1x64x64xf32>
    %713 = vector.shape_cast %712 : vector<1x64x64xf32> to vector<64x64xf32>
    %714 = vector.broadcast %431 : vector<1x64xf32> to vector<64x64xf32>
    %715 = arith.mulf %713, %714 : vector<64x64xf32>
    %716 = arith.addf %711, %715 : vector<64x64xf32>
    %c1_405 = arith.constant 1 : index
    %c24_406 = arith.constant 24 : index
    %c0_407 = arith.constant 0 : index
    %717 = vector.load %arg13[%c1_405, %c24_406, %c0_407] : memref<2x96x64xf32, #tpu.memory_space<vmem>>, vector<1x64x64xf32>
    %718 = vector.shape_cast %717 : vector<1x64x64xf32> to vector<64x64xf32>
    %719 = vector.broadcast %438 : vector<1x64xf32> to vector<64x64xf32>
    %720 = arith.mulf %718, %719 : vector<64x64xf32>
    %721 = arith.addf %716, %720 : vector<64x64xf32>
    %c1_408 = arith.constant 1 : index
    %c25_409 = arith.constant 25 : index
    %c0_410 = arith.constant 0 : index
    %722 = vector.load %arg13[%c1_408, %c25_409, %c0_410] : memref<2x96x64xf32, #tpu.memory_space<vmem>>, vector<1x64x64xf32>
    %723 = vector.shape_cast %722 : vector<1x64x64xf32> to vector<64x64xf32>
    %724 = vector.broadcast %445 : vector<1x64xf32> to vector<64x64xf32>
    %725 = arith.mulf %723, %724 : vector<64x64xf32>
    %726 = arith.addf %721, %725 : vector<64x64xf32>
    %c1_411 = arith.constant 1 : index
    %c26_412 = arith.constant 26 : index
    %c0_413 = arith.constant 0 : index
    %727 = vector.load %arg13[%c1_411, %c26_412, %c0_413] : memref<2x96x64xf32, #tpu.memory_space<vmem>>, vector<1x64x64xf32>
    %728 = vector.shape_cast %727 : vector<1x64x64xf32> to vector<64x64xf32>
    %729 = vector.broadcast %452 : vector<1x64xf32> to vector<64x64xf32>
    %730 = arith.mulf %728, %729 : vector<64x64xf32>
    %731 = arith.addf %726, %730 : vector<64x64xf32>
    %c1_414 = arith.constant 1 : index
    %c27_415 = arith.constant 27 : index
    %c0_416 = arith.constant 0 : index
    %732 = vector.load %arg13[%c1_414, %c27_415, %c0_416] : memref<2x96x64xf32, #tpu.memory_space<vmem>>, vector<1x64x64xf32>
    %733 = vector.shape_cast %732 : vector<1x64x64xf32> to vector<64x64xf32>
    %734 = vector.broadcast %459 : vector<1x64xf32> to vector<64x64xf32>
    %735 = arith.mulf %733, %734 : vector<64x64xf32>
    %736 = arith.addf %731, %735 : vector<64x64xf32>
    %c1_417 = arith.constant 1 : index
    %c28_418 = arith.constant 28 : index
    %c0_419 = arith.constant 0 : index
    %737 = vector.load %arg13[%c1_417, %c28_418, %c0_419] : memref<2x96x64xf32, #tpu.memory_space<vmem>>, vector<1x64x64xf32>
    %738 = vector.shape_cast %737 : vector<1x64x64xf32> to vector<64x64xf32>
    %739 = vector.broadcast %466 : vector<1x64xf32> to vector<64x64xf32>
    %740 = arith.mulf %738, %739 : vector<64x64xf32>
    %741 = arith.addf %736, %740 : vector<64x64xf32>
    %c1_420 = arith.constant 1 : index
    %c16_421 = arith.constant 16 : index
    %c0_422 = arith.constant 0 : index
    %742 = vector.load %arg13[%c1_420, %c16_421, %c0_422] : memref<2x96x64xf32, #tpu.memory_space<vmem>>, vector<1x64x64xf32>
    %743 = vector.shape_cast %742 : vector<1x64x64xf32> to vector<64x64xf32>
    %cst_423 = arith.constant dense<0.000000e+00> : vector<64xf32>
    %744 = vector.multi_reduction <add>, %743, %cst_423 [0] : vector<64x64xf32> to vector<64xf32>
    %745 = vector.shape_cast %744 : vector<64xf32> to vector<1x64xf32>
    %cst_424 = arith.constant dense<0.000000e+00> : vector<1x2xf32>
    %746 = tpu.matmul %745, %481, %cst_424 {dimension_numbers = #tpu.dot_dimension_numbers<[1], [0], [0], [1], [0, 0, 1, 1], [], []>} : vector<1x64xf32>, vector<64x2xf32>, vector<1x2xf32> -> vector<1x2xf32>
    %cst_425 = arith.constant 1.562500e-02 : f32
    %747 = vector.broadcast %cst_425 : f32 to vector<1x2xf32>
    %748 = arith.mulf %746, %747 : vector<1x2xf32>
    %c0_426 = arith.constant 0 : index
    %c0_427 = arith.constant 0 : index
    %749 = vector.load %arg8[%c0_426, %c0_427] : memref<1x2xf32, #tpu.memory_space<vmem>>, vector<1x2xf32>
    %750 = arith.addf %748, %749 : vector<1x2xf32>
    %c1_428 = arith.constant 1 : index
    %c0_429 = arith.constant 0 : index
    %c0_430 = arith.constant 0 : index
    %751 = vector.load %arg11[%c1_428, %c0_429, %c0_430] : memref<2x1x2xf32, #tpu.memory_space<vmem>>, vector<1x1x2xf32>
    %752 = vector.shape_cast %751 : vector<1x1x2xf32> to vector<1x2xf32>
    %753 = vector.shape_cast %750 : vector<1x2xf32> to vector<1x1x2xf32>
    tpu.vector_store %arg11[%c1_428, %c0_429, %c0_430], %753 {strides = array<i32>} : memref<2x1x2xf32, #tpu.memory_space<vmem>>, vector<1x1x2xf32>,
    %754 = tpu.concatenate %605, %741 in 0 : vector<64x64xf32>, vector<64x64xf32> -> vector<128x64xf32>
    %cst_431 = arith.constant dense<0.000000e+00> : vector<128x2xf32>
    %755 = tpu.matmul %754, %476, %cst_431 {dimension_numbers = #tpu.dot_dimension_numbers<[1], [0], [0], [1], [0, 0, 1, 1], [], []>} : vector<128x64xf32>, vector<64x2xf32>, vector<128x2xf32> -> vector<128x2xf32>
    %c0_432 = arith.constant 0 : index
    %c0_433 = arith.constant 0 : index
    %756 = vector.load %arg7[%c0_432, %c0_433] : memref<1x2xf32, #tpu.memory_space<vmem>>, vector<1x2xf32>
    %757 = vector.broadcast %756 : vector<1x2xf32> to vector<128x2xf32>
    %758 = arith.addf %755, %757 : vector<128x2xf32>
    %c0_434 = arith.constant 0 : index
    %c0_435 = arith.constant 0 : index
    %759 = vector.load %arg10[%c0_434, %c0_435] : memref<128x2xf32, #tpu.memory_space<vmem>>, vector<128x2xf32>
    tpu.vector_store %arg10[%c0_434, %c0_435], %758 {strides = array<i32>} : memref<128x2xf32, #tpu.memory_space<vmem>>, vector<128x2xf32>,
    return
  }
  func.func @transform_0(%arg0: i32) -> (i32, i32) {
    %c0_i32 = arith.constant 0 : i32
    %c0_i32_0 = arith.constant 0 : i32
    return %arg0, %c0_i32 : i32, i32
  }
  func.func @transform_1(%arg0: i32) -> (i32, i32) {
    %c0_i32 = arith.constant 0 : i32
    %c0_i32_0 = arith.constant 0 : i32
    %c0_i32_1 = arith.constant 0 : i32
    return %c0_i32, %c0_i32_0 : i32, i32
  }
  func.func @transform_2(%arg0: i32) -> (i32, i32) {
    %c0_i32 = arith.constant 0 : i32
    %c0_i32_0 = arith.constant 0 : i32
    %c0_i32_1 = arith.constant 0 : i32
    return %c0_i32, %c0_i32_0 : i32, i32
  }
  func.func @transform_3(%arg0: i32) -> (i32, i32, i32, i32) {
    %c0_i32 = arith.constant 0 : i32
    %c0_i32_0 = arith.constant 0 : i32
    %c0_i32_1 = arith.constant 0 : i32
    %c0_i32_2 = arith.constant 0 : i32
    %c0_i32_3 = arith.constant 0 : i32
    return %c0_i32, %c0_i32_0, %c0_i32_1, %c0_i32_2 : i32, i32, i32, i32
  }
  func.func @transform_4(%arg0: i32) -> (i32, i32, i32) {
    %c0_i32 = arith.constant 0 : i32
    %c0_i32_0 = arith.constant 0 : i32
    %c0_i32_1 = arith.constant 0 : i32
    %c0_i32_2 = arith.constant 0 : i32
    return %c0_i32, %c0_i32_0, %c0_i32_1 : i32, i32, i32
  }
  func.func @transform_5(%arg0: i32) -> (i32, i32) {
    %c0_i32 = arith.constant 0 : i32
    %c0_i32_0 = arith.constant 0 : i32
    %c0_i32_1 = arith.constant 0 : i32
    return %c0_i32, %c0_i32_0 : i32, i32
  }
  func.func @transform_6(%arg0: i32) -> (i32, i32) {
    %c0_i32 = arith.constant 0 : i32
    %c0_i32_0 = arith.constant 0 : i32
    %c0_i32_1 = arith.constant 0 : i32
    return %c0_i32, %c0_i32_0 : i32, i32
  }
  func.func @transform_7(%arg0: i32) -> (i32, i32) {
    %c0_i32 = arith.constant 0 : i32
    %c0_i32_0 = arith.constant 0 : i32
    %c0_i32_1 = arith.constant 0 : i32
    return %c0_i32, %c0_i32_0 : i32, i32
  }
  func.func @transform_8(%arg0: i32) -> (i32, i32) {
    %c0_i32 = arith.constant 0 : i32
    %c0_i32_0 = arith.constant 0 : i32
    return %arg0, %c0_i32 : i32, i32
  }
  func.func @transform_9(%arg0: i32) -> (i32, i32) {
    %c0_i32 = arith.constant 0 : i32
    %c0_i32_0 = arith.constant 0 : i32
    return %arg0, %c0_i32 : i32, i32
  }
  func.func @transform_10(%arg0: i32) -> (i32, i32, i32) {
    %c0_i32 = arith.constant 0 : i32
    %c0_i32_0 = arith.constant 0 : i32
    %c0_i32_1 = arith.constant 0 : i32
    return %arg0, %c0_i32, %c0_i32_0 : i32, i32, i32
  }
}

</mosaic_0001>

<llo_original>
// kernel: tpu_custom_call.1
$region0: #{tpu_custom_call.1}
  #allocation0 [shape = 'u32[]', space=smem, size = 0x4, offset = 0x4, fixed_abs, tag = 'smem constant byte address 0x4 - core index']
  #allocation1 [shape = 'u32[144,128]{1,0:T(1,128)}', space=vmem, size = 0x12000, scoped, tag = 'internal scratch']
  #allocation2 [shape = 'f32[2,128,64]{2,1,0:T(8,128)}', space=vmem, size = 0x20000, scoped, tag = 'scratch operand']
  #allocation3 [shape = 'f32[2,96,64]{2,1,0:T(8,128)}', space=vmem, size = 0x18000, scoped, tag = 'scratch operand']
  %s0 = inlined_call_operand.vmem [shape: bf16[128,128], index: 0, kind: input, shape index: {}]
  %s1 = inlined_call_operand.vmem [shape: bf16[128,64], index: 1, kind: input, shape index: {}]
  %s2 = inlined_call_operand.vmem [shape: f32[1,64], index: 2, kind: input, shape index: {}]
  %s3 = inlined_call_operand.hbm [shape: bf16[9,3,64,64], index: 3, kind: input, shape index: {}]
  %s4 = inlined_call_operand.vmem [shape: f32[9,1,64], index: 4, kind: input, shape index: {}]
  %s5 = inlined_call_operand.vmem [shape: bf16[64,64], index: 5, kind: input, shape index: {}]
  %s6 = inlined_call_operand.vmem [shape: f32[1,2], index: 6, kind: input, shape index: {}]
  %s7 = inlined_call_operand.vmem [shape: f32[1,2], index: 7, kind: input, shape index: {}]
  %s8 = inlined_call_operand.vmem [shape: f32[128,64], index: 8, kind: output, shape index: {0}]
  %s9 = inlined_call_operand.vmem [shape: f32[128,2], index: 9, kind: output, shape index: {1}]
  %s10 = inlined_call_operand.hbm [shape: f32[2,1,2], index: 10, kind: output, shape index: {2}]
  %11 = xla_tuple %s8, %s9, %s10
  %s12 = sld [smem:[#allocation0]]
  $region62: #{tpu_custom_call.1} parent=0
    _
  %s14 = ssub.s32 1, %s12
  %s15 = scalar_select 0, %s14, %s12
  $region1: #{tpu_custom_call.1} parent=0
    #allocation4 [shape = 'u8[442368]{0}', space=vmem, size = 0x6c000, scoped, tag = 'input window, operand 3, single buffered']
    #allocation5 [shape = 's32[1]{0}', space=sflag, size = 0x4, scoped, tag = 'scoped memory for tpu_custom_call.1']
    #allocation6 [shape = 's32[1]{0}', space=sflag, size = 0x4, scoped, tag = 'scoped memory for tpu_custom_call.1']
    #allocation7 [shape = 'u8[1024]{0}', space=vmem, size = 0x400, scoped, tag = 'output window, operand 2, single buffered']
    %16 = vsyncpa [#allocation5], 0
    %17 = vsyncpa [#allocation6], 0
    // Predicated region
    $region2: #{tpu_custom_call.1} parent=1 // pred_check
      _
    $region3: #{tpu_custom_call.1} parent=1 // pred_check_branch
      %19 = sbr.rel (0) target = $region5
    $region4: #{tpu_custom_call.1} parent=1 // pred_region
      _
    $region5: #{tpu_custom_call.1} parent=1 // pred_fallthru
      _
    // Predicated region
    $region6: #{tpu_custom_call.1} parent=1 // pred_check
      _
    $region7: #{tpu_custom_call.1} parent=1 // pred_check_branch
      %21 = sbr.rel (0) target = $region9
    $region8: #{tpu_custom_call.1} parent=1 // pred_region
      _
    $region9: #{tpu_custom_call.1} parent=1 // pred_fallthru
      _
    // Predicated region
    $region10: #{tpu_custom_call.1} parent=1 // pred_check
      _
    $region11: #{tpu_custom_call.1} parent=1 // pred_check_branch
      %23 = sbr.rel (0) target = $region13
    $region12: #{tpu_custom_call.1} parent=1 // pred_region
      _
    $region13: #{tpu_custom_call.1} parent=1 // pred_fallthru
      _
    // Predicated region
    $region14: #{tpu_custom_call.1} parent=1 // pred_check
      _
    $region15: #{tpu_custom_call.1} parent=1 // pred_check_branch
      %25 = sbr.rel (0) target = $region17
    $region16: #{tpu_custom_call.1} parent=1 // pred_region
      %s27 = ssub.s32 13824, 13824
      %28 = vsyncadd [#allocation5], %s27
      %s29 = sshll.u32 [#allocation4], 4
      %s30 = int_to_ptr.vmem [resolvable:$true] %s29
      %35 = dma.hbm_to_vmem [thread:$0]  %s3, 13824, %s30, [#allocation5], 64, 64, 4
    $region17: #{tpu_custom_call.1} parent=1 // pred_fallthru
      _
    // Predicated region
    $region18: #{tpu_custom_call.1} parent=1 // pred_check
      _
    $region19: #{tpu_custom_call.1} parent=1 // pred_check_branch
      %37 = sbr.rel (0) target = $region21
    $region20: #{tpu_custom_call.1} parent=1 // pred_region
      _
    $region21: #{tpu_custom_call.1} parent=1 // pred_fallthru
      _
    // Predicated region
    $region22: #{tpu_custom_call.1} parent=1 // pred_check
      _
    $region23: #{tpu_custom_call.1} parent=1 // pred_check_branch
      %39 = sbr.rel (0) target = $region25
    $region24: #{tpu_custom_call.1} parent=1 // pred_region
      _
    $region25: #{tpu_custom_call.1} parent=1 // pred_fallthru
      _
    // Predicated region
    $region26: #{tpu_custom_call.1} parent=1 // pred_check
      _
    $region27: #{tpu_custom_call.1} parent=1 // pred_check_branch
      %41 = sbr.rel (0) target = $region29
    $region28: #{tpu_custom_call.1} parent=1 // pred_region
      _
    $region29: #{tpu_custom_call.1} parent=1 // pred_fallthru
      _
    // Predicated region
    $region30: #{tpu_custom_call.1} parent=1 // pred_check
      _
    $region31: #{tpu_custom_call.1} parent=1 // pred_check_branch
      %43 = sbr.rel (0) target = $region33
    $region32: #{tpu_custom_call.1} parent=1 // pred_region
      _
    $region33: #{tpu_custom_call.1} parent=1 // pred_fallthru
      _
    // Predicated region
    $region34: #{tpu_custom_call.1} parent=1 // pred_check
      _
    $region35: #{tpu_custom_call.1} parent=1 // pred_check_branch
      %45 = sbr.rel (0) target = $region37
    $region36: #{tpu_custom_call.1} parent=1 // pred_region
      %46 = dma.done [#allocation5], 13824
    $region37: #{tpu_custom_call.1} parent=1 // pred_fallthru
      _
    %vm48 = vcmask 523264
    %49 = vst.msk [vmem:[#allocation2] sm:$0xff] %vm48, 0.0
    %50 = vst.msk [vmem:[#allocation2 + $0x8] sm:$0xff] %vm48, 0.0
    %51 = vst.msk [vmem:[#allocation2 + $0x10] sm:$0xff] %vm48, 0.0
    %52 = vst.msk [vmem:[#allocation2 + $0x18] sm:$0xff] %vm48, 0.0
    %53 = vst.msk [vmem:[#allocation2 + $0x60] sm:$0xff] %vm48, 0.0
    %54 = vst.msk [vmem:[#allocation2 + $0x68] sm:$0xff] %vm48, 0.0
    %55 = vst.msk [vmem:[#allocation2 + $0x70] sm:$0xff] %vm48, 0.0
    %56 = vst.msk [vmem:[#allocation2 + $0x78] sm:$0xff] %vm48, 0.0
    %57 = vst.msk [vmem:[#allocation3] sm:$0xff] %vm48, 0.0
    %58 = vst.msk [vmem:[#allocation3 + $0x8] sm:$0xff] %vm48, 0.0
    %59 = vst.msk [vmem:[#allocation3 + $0x50] sm:$0xff] %vm48, 0.0
    %60 = vst.msk [vmem:[#allocation3 + $0x58] sm:$0xff] %vm48, 0.0
    %s61 = scalar_lea.vmem [#allocation2], 128
    %62 = vst.msk [vmem:[%s61] sm:$0xff] %vm48, 0.0
    %63 = vst.msk [vmem:[%s61 + $0x8] sm:$0xff] %vm48, 0.0
    %64 = vst.msk [vmem:[%s61 + $0x10] sm:$0xff] %vm48, 0.0
    %65 = vst.msk [vmem:[%s61 + $0x18] sm:$0xff] %vm48, 0.0
    %66 = vst.msk [vmem:[%s61 + $0x60] sm:$0xff] %vm48, 0.0
    %67 = vst.msk [vmem:[%s61 + $0x68] sm:$0xff] %vm48, 0.0
    %68 = vst.msk [vmem:[%s61 + $0x70] sm:$0xff] %vm48, 0.0
    %69 = vst.msk [vmem:[%s61 + $0x78] sm:$0xff] %vm48, 0.0
    %s70 = scalar_lea.vmem [#allocation3], 96
    %71 = vst.msk [vmem:[%s70] sm:$0xff] %vm48, 0.0
    %72 = vst.msk [vmem:[%s70 + $0x8] sm:$0xff] %vm48, 0.0
    %73 = vst.msk [vmem:[%s70 + $0x50] sm:$0xff] %vm48, 0.0
    %74 = vst.msk [vmem:[%s70 + $0x58] sm:$0xff] %vm48, 0.0
    %v75 = vld [vmem:[%s0] sm:$0xf]
    %v76 = vld [vmem:[%s0 + $0x4] sm:$0xf]
    %v77 = vld [vmem:[%s0 + $0x8] sm:$0xf]
    %v78 = vld [vmem:[%s0 + $0xc] sm:$0xf]
    %v79 = vld [vmem:[%s0 + $0x10] sm:$0xf]
    %v80 = vld [vmem:[%s0 + $0x14] sm:$0xf]
    %v81 = vld [vmem:[%s0 + $0x18] sm:$0xf]
    %v82 = vld [vmem:[%s0 + $0x1c] sm:$0xf]
    %v83 = vld [vmem:[%s0 + $0x20] sm:$0xf]
    %v84 = vld [vmem:[%s0 + $0x24] sm:$0xf]
    %v85 = vld [vmem:[%s0 + $0x28] sm:$0xf]
    %v86 = vld [vmem:[%s0 + $0x2c] sm:$0xf]
    %v87 = vld [vmem:[%s0 + $0x30] sm:$0xf]
    %v88 = vld [vmem:[%s0 + $0x34] sm:$0xf]
    %v89 = vld [vmem:[%s0 + $0x38] sm:$0xf]
    %v90 = vld [vmem:[%s0 + $0x3c] sm:$0xf]
    %v91 = vld [vmem:[%s1] sm:$0xf]
    %v92 = vld [vmem:[%s1 + $0x4] sm:$0xf]
    %v93 = vld [vmem:[%s1 + $0x8] sm:$0xf]
    %v94 = vld [vmem:[%s1 + $0xc] sm:$0xf]
    %v95 = vld [vmem:[%s1 + $0x10] sm:$0xf]
    %v96 = vld [vmem:[%s1 + $0x14] sm:$0xf]
    %v97 = vld [vmem:[%s1 + $0x18] sm:$0xf]
    %v98 = vld [vmem:[%s1 + $0x1c] sm:$0xf]
    %v99 = vld [vmem:[%s1 + $0x20] sm:$0xf]
    %v100 = vld [vmem:[%s1 + $0x24] sm:$0xf]
    %v101 = vld [vmem:[%s1 + $0x28] sm:$0xf]
    %v102 = vld [vmem:[%s1 + $0x2c] sm:$0xf]
    %v103 = vld [vmem:[%s1 + $0x30] sm:$0xf]
    %v104 = vld [vmem:[%s1 + $0x34] sm:$0xf]
    %v105 = vld [vmem:[%s1 + $0x38] sm:$0xf]
    %v106 = vld [vmem:[%s1 + $0x3c] sm:$0xf]
    %v107 = vld [vmem:[%s2] sm:$0x1]
    %v109 = vlaneseq
    %v110 = vshrl.u32 %v109, 7
    %v111 = vsub.s32 0, %v110
    %v112 = vrot.slane %v107, %v111
    %v130 = vunpack.c.l.b16 %v75
    %v131 = vunpack.c.l.b16 %v76
    %v132 = vunpack.c.l.b16 %v77
    %v133 = vunpack.c.l.b16 %v78
    %v134 = vunpack.c.l.b16 %v79
    %v135 = vunpack.c.l.b16 %v80
    %v136 = vunpack.c.l.b16 %v81
    %v137 = vunpack.c.l.b16 %v82
    %v138 = vunpack.c.l.b16 %v83
    %v139 = vunpack.c.l.b16 %v84
    %v140 = vunpack.c.l.b16 %v85
    %v141 = vunpack.c.l.b16 %v86
    %v142 = vunpack.c.l.b16 %v87
    %v143 = vunpack.c.l.b16 %v88
    %v144 = vunpack.c.l.b16 %v89
    %v145 = vunpack.c.l.b16 %v90
    %v146 = vpack.c.b16 %v131, %v130
    %v147 = vpack.c.b16 %v133, %v132
    %v148 = vpack.c.b16 %v135, %v134
    %v149 = vpack.c.b16 %v137, %v136
    %v150 = vpack.c.b16 %v139, %v138
    %v151 = vpack.c.b16 %v141, %v140
    %v152 = vpack.c.b16 %v143, %v142
    %v153 = vpack.c.b16 %v145, %v144
    %v178 = vunpack.c.l.b16 %v91
    %v179 = vunpack.c.l.b16 %v92
    %v180 = vunpack.c.l.b16 %v93
    %v181 = vunpack.c.l.b16 %v94
    %v182 = vunpack.c.l.b16 %v95
    %v183 = vunpack.c.l.b16 %v96
    %v184 = vunpack.c.l.b16 %v97
    %v185 = vunpack.c.l.b16 %v98
    %v186 = vunpack.c.l.b16 %v99
    %v187 = vunpack.c.l.b16 %v100
    %v188 = vunpack.c.l.b16 %v101
    %v189 = vunpack.c.l.b16 %v102
    %v190 = vunpack.c.l.b16 %v103
    %v191 = vunpack.c.l.b16 %v104
    %v192 = vunpack.c.l.b16 %v105
    %v193 = vunpack.c.l.b16 %v106
    %v194 = vpack.c.b16 %v179, %v178
    %v195 = vpack.c.b16 %v181, %v180
    %v196 = vpack.c.b16 %v183, %v182
    %v197 = vpack.c.b16 %v185, %v184
    %v198 = vpack.c.b16 %v187, %v186
    %v199 = vpack.c.b16 %v189, %v188
    %v200 = vpack.c.b16 %v191, %v190
    %v201 = vpack.c.b16 %v193, %v192
    %210 = vmatprep.subr.bf16.mxu0 0
    %211 = vmatpush1.bf16.msra.mxu0 %v194
    %212 = vmatprep.subr.bf16.mxu0 0
    %213 = vmatpush1.bf16.msra.mxu0 %v195
    %214 = vmatprep.subr.bf16.mxu0 0
    %215 = vmatpush1.bf16.msra.mxu0 %v196
    %216 = vmatprep.subr.bf16.mxu0 0
    %217 = vmatpush1.bf16.msra.mxu0 %v197
    %218 = vmatprep.subr.bf16.mxu0 0
    %219 = vmatpush1.bf16.msra.mxu0 %v198
    %220 = vmatprep.subr.bf16.mxu0 0
    %221 = vmatpush1.bf16.msra.mxu0 %v199
    %222 = vmatprep.subr.bf16.mxu0 0
    %223 = vmatpush1.bf16.msra.mxu0 %v200
    %224 = vmatprep.subr.bf16.mxu0 0
    %225 = vmatpush1.bf16.msra.mxu0 %v201
    %226 = vmatprep.subr.bf16.mxu0 0
    %227 = vmatpush1.bf16.msra.mxu0 0
    %228 = vmatprep.subr.bf16.mxu0 0
    %229 = vmatpush1.bf16.msra.mxu0 0
    %230 = vmatprep.subr.bf16.mxu0 0
    %231 = vmatpush1.bf16.msra.mxu0 0
    %232 = vmatprep.subr.bf16.mxu0 0
    %233 = vmatpush1.bf16.msra.mxu0 0
    %234 = vmatprep.subr.bf16.mxu0 0
    %235 = vmatpush1.bf16.msra.mxu0 0
    %236 = vmatprep.subr.bf16.mxu0 0
    %237 = vmatpush1.bf16.msra.mxu0 0
    %238 = vmatprep.subr.bf16.mxu0 0
    %239 = vmatpush1.bf16.msra.mxu0 0
    %240 = vmatprep.subr.bf16.mxu0 0
    %241 = vmatpush1.bf16.msra.mxu0 0
    %242 = vmatprep.mubr.bf16.mxu0 0
    %243 = vmatmul.mubr.bf16.gmra.mrb[0].mxu0 %v146
    %v244 = vpop.f32.mrb[0].mxu0
    %v245 = vadd.f32 %v112, %v244
    %v246 = vpop.f32.mrb[0].mxu0
    %v247 = vpop.f32.mrb[0].mxu0
    %v248 = vadd.f32 %v112, %v247
    %v249 = vpop.f32.mrb[0].mxu0
    %250 = vmatprep.mubr.bf16.mxu0 0
    %251 = vmatmul.mubr.bf16.gmra.mrb[0].mxu0 %v147
    %v252 = vpop.f32.mrb[0].mxu0
    %v253 = vadd.f32 %v112, %v252
    %v254 = vpop.f32.mrb[0].mxu0
    %v255 = vpop.f32.mrb[0].mxu0
    %v256 = vadd.f32 %v112, %v255
    %v257 = vpop.f32.mrb[0].mxu0
    %258 = vmatprep.mubr.bf16.mxu0 0
    %259 = vmatmul.mubr.bf16.gmra.mrb[0].mxu0 %v148
    %v260 = vpop.f32.mrb[0].mxu0
    %v261 = vadd.f32 %v112, %v260
    %v262 = vpop.f32.mrb[0].mxu0
    %v263 = vpop.f32.mrb[0].mxu0
    %v264 = vadd.f32 %v112, %v263
    %v265 = vpop.f32.mrb[0].mxu0
    %266 = vmatprep.mubr.bf16.mxu0 0
    %267 = vmatmul.mubr.bf16.gmra.mrb[0].mxu0 %v149
    %v268 = vpop.f32.mrb[0].mxu0
    %v269 = vadd.f32 %v112, %v268
    %v270 = vpop.f32.mrb[0].mxu0
    %v271 = vpop.f32.mrb[0].mxu0
    %v272 = vadd.f32 %v112, %v271
    %v273 = vpop.f32.mrb[0].mxu0
    %274 = vmatprep.mubr.bf16.mxu0 0
    %275 = vmatmul.mubr.bf16.gmra.mrb[0].mxu0 %v150
    %v276 = vpop.f32.mrb[0].mxu0
    %v277 = vadd.f32 %v112, %v276
    %v278 = vpop.f32.mrb[0].mxu0
    %v279 = vpop.f32.mrb[0].mxu0
    %v280 = vadd.f32 %v112, %v279
    %v281 = vpop.f32.mrb[0].mxu0
    %282 = vmatprep.mubr.bf16.mxu0 0
    %283 = vmatmul.mubr.bf16.gmra.mrb[0].mxu0 %v151
    %v284 = vpop.f32.mrb[0].mxu0
    %v285 = vadd.f32 %v112, %v284
    %v286 = vpop.f32.mrb[0].mxu0
    %v287 = vpop.f32.mrb[0].mxu0
    %v288 = vadd.f32 %v112, %v287
    %v289 = vpop.f32.mrb[0].mxu0
    %290 = vmatprep.mubr.bf16.mxu0 0
    %291 = vmatmul.mubr.bf16.gmra.mrb[0].mxu0 %v152
    %v292 = vpop.f32.mrb[0].mxu0
    %v293 = vadd.f32 %v112, %v292
    %v294 = vpop.f32.mrb[0].mxu0
    %v295 = vpop.f32.mrb[0].mxu0
    %v296 = vadd.f32 %v112, %v295
    %v297 = vpop.f32.mrb[0].mxu0
    %298 = vmatprep.mubr.bf16.mxu0 0
    %299 = vmatmul.mubr.bf16.gmra.mrb[0].mxu0 %v153
    %v300 = vpop.f32.mrb[0].mxu0
    %v301 = vadd.f32 %v112, %v300
    %v302 = vpop.f32.mrb[0].mxu0
    %v303 = vpop.f32.mrb[0].mxu0
    %v304 = vadd.f32 %v112, %v303
    %v305 = vpop.f32.mrb[0].mxu0
    %306 = vdwg.mxu0
    %v307 = vmax.f32 %v245, 0.0
    %v308 = vmax.f32 %v248, 0.0
    %v309 = vmax.f32 %v253, 0.0
    %v310 = vmax.f32 %v256, 0.0
    %v311 = vmax.f32 %v261, 0.0
    %v312 = vmax.f32 %v264, 0.0
    %v313 = vmax.f32 %v269, 0.0
    %v314 = vmax.f32 %v272, 0.0
    %v315 = vmax.f32 %v277, 0.0
    %v316 = vmax.f32 %v280, 0.0
    %v317 = vmax.f32 %v285, 0.0
    %v318 = vmax.f32 %v288, 0.0
    %v319 = vmax.f32 %v293, 0.0
    %v320 = vmax.f32 %v296, 0.0
    %v321 = vmax.f32 %v301, 0.0
    %v322 = vmax.f32 %v304, 0.0
    %323 = vst.msk [vmem:[#allocation2 + $0x20] sm:$0xff] %vm48, %v307
    %324 = vst.msk [vmem:[#allocation2 + $0x28] sm:$0xff] %vm48, %v308
    %325 = vst.msk [vmem:[#allocation2 + $0x30] sm:$0xff] %vm48, %v309
    %326 = vst.msk [vmem:[#allocation2 + $0x38] sm:$0xff] %vm48, %v310
    %327 = vst.msk [vmem:[#allocation2 + $0x40] sm:$0xff] %vm48, %v311
    %328 = vst.msk [vmem:[#allocation2 + $0x48] sm:$0xff] %vm48, %v312
    %329 = vst.msk [vmem:[#allocation2 + $0x50] sm:$0xff] %vm48, %v313
    %330 = vst.msk [vmem:[#allocation2 + $0x58] sm:$0xff] %vm48, %v314
    %331 = vst.msk [vmem:[%s61 + $0x20] sm:$0xff] %vm48, %v315
    %332 = vst.msk [vmem:[%s61 + $0x28] sm:$0xff] %vm48, %v316
    %333 = vst.msk [vmem:[%s61 + $0x30] sm:$0xff] %vm48, %v317
    %334 = vst.msk [vmem:[%s61 + $0x38] sm:$0xff] %vm48, %v318
    %335 = vst.msk [vmem:[%s61 + $0x40] sm:$0xff] %vm48, %v319
    %336 = vst.msk [vmem:[%s61 + $0x48] sm:$0xff] %vm48, %v320
    %337 = vst.msk [vmem:[%s61 + $0x50] sm:$0xff] %vm48, %v321
    %338 = vst.msk [vmem:[%s61 + $0x58] sm:$0xff] %vm48, %v322
    %v339 = vpack.c.bf16 %v308, %v307
    %v340 = vpack.c.bf16 %v310, %v309
    %v341 = vpack.c.bf16 %v312, %v311
    %v342 = vpack.c.bf16 %v314, %v313
    %v343 = vpack.c.bf16 %v316, %v315
    %v344 = vpack.c.bf16 %v318, %v317
    %v345 = vpack.c.bf16 %v320, %v319
    %v346 = vpack.c.bf16 %v322, %v321
    %s347 = scalar_lea.vmem [#allocation4], 32
    %v348 = vld [vmem:[%s347] sm:$0xf]
    %v349 = vld [vmem:[%s347 + $0x4] sm:$0xf]
    %v350 = vld [vmem:[%s347 + $0x8] sm:$0xf]
    %v351 = vld [vmem:[%s347 + $0xc] sm:$0xf]
    %v352 = vld [vmem:[%s347 + $0x10] sm:$0xf]
    %v353 = vld [vmem:[%s347 + $0x14] sm:$0xf]
    %v354 = vld [vmem:[%s347 + $0x18] sm:$0xf]
    %v355 = vld [vmem:[%s347 + $0x1c] sm:$0xf]
    %v356 = vld [vmem:[#allocation2 + $0x1e] sm:$0xff]
    %v357 = vld [vmem:[#allocation2 + $0x26] sm:$0xff]
    %v358 = vld [vmem:[#allocation2 + $0x2e] sm:$0xff]
    %v359 = vld [vmem:[#allocation2 + $0x36] sm:$0xff]
    %v360 = vld [vmem:[#allocation2 + $0x3e] sm:$0xff]
    %v361 = vld [vmem:[#allocation2 + $0x46] sm:$0xff]
    %v362 = vld [vmem:[#allocation2 + $0x4e] sm:$0xff]
    %v363 = vld [vmem:[#allocation2 + $0x56] sm:$0xff]
    %v364 = vld [vmem:[%s61 + $0x1e] sm:$0xff]
    %v365 = vld [vmem:[%s61 + $0x26] sm:$0xff]
    %v366 = vld [vmem:[%s61 + $0x2e] sm:$0xff]
    %v367 = vld [vmem:[%s61 + $0x36] sm:$0xff]
    %v368 = vld [vmem:[%s61 + $0x3e] sm:$0xff]
    %v369 = vld [vmem:[%s61 + $0x46] sm:$0xff]
    %v370 = vld [vmem:[%s61 + $0x4e] sm:$0xff]
    %v371 = vld [vmem:[%s61 + $0x56] sm:$0xff]
    %v372 = vpack.c.bf16 %v357, %v356
    %v373 = vpack.c.bf16 %v359, %v358
    %v374 = vpack.c.bf16 %v361, %v360
    %v375 = vpack.c.bf16 %v363, %v362
    %v376 = vpack.c.bf16 %v365, %v364
    %v377 = vpack.c.bf16 %v367, %v366
    %v378 = vpack.c.bf16 %v369, %v368
    %v379 = vpack.c.bf16 %v371, %v370
    %v380 = vld [vmem:[#allocation4] sm:$0xf]
    %v381 = vld [vmem:[#allocation4 + $0x4] sm:$0xf]
    %v382 = vld [vmem:[#allocation4 + $0x8] sm:$0xf]
    %v383 = vld [vmem:[#allocation4 + $0xc] sm:$0xf]
    %v384 = vld [vmem:[#allocation4 + $0x10] sm:$0xf]
    %v385 = vld [vmem:[#allocation4 + $0x14] sm:$0xf]
    %v386 = vld [vmem:[#allocation4 + $0x18] sm:$0xf]
    %v387 = vld [vmem:[#allocation4 + $0x1c] sm:$0xf]
    %v396 = vunpack.c.l.b16 %v380
    %v397 = vunpack.c.l.b16 %v381
    %v398 = vunpack.c.l.b16 %v382
    %v399 = vunpack.c.l.b16 %v383
    %v400 = vunpack.c.l.b16 %v384
    %v401 = vunpack.c.l.b16 %v385
    %v402 = vunpack.c.l.b16 %v386
    %v403 = vunpack.c.l.b16 %v387
    %v404 = vpack.c.b16 %v397, %v396
    %v405 = vpack.c.b16 %v399, %v398
    %v406 = vpack.c.b16 %v401, %v400
    %v407 = vpack.c.b16 %v403, %v402
    %v413 = vsel %vm48, %v372, 0
    %v416 = vsel %vm48, %v373, 0
    %v419 = vsel %vm48, %v374, 0
    %v422 = vsel %vm48, %v375, 0
    %v425 = vsel %vm48, %v376, 0
    %v428 = vsel %vm48, %v377, 0
    %v431 = vsel %vm48, %v378, 0
    %v434 = vsel %vm48, %v379, 0
    %436 = vmatprep.subr.bf16.mxu0 0
    %437 = vmatpush1.bf16.msra.mxu0 %v404
    %438 = vmatprep.subr.bf16.mxu0 0
    %439 = vmatpush1.bf16.msra.mxu0 %v405
    %440 = vmatprep.subr.bf16.mxu0 0
    %441 = vmatpush1.bf16.msra.mxu0 %v406
    %442 = vmatprep.subr.bf16.mxu0 0
    %443 = vmatpush1.bf16.msra.mxu0 %v407
    %444 = vmatprep.subr.bf16.mxu0 0
    %445 = vmatpush1.bf16.msra.mxu0 0
    %446 = vmatprep.subr.bf16.mxu0 0
    %447 = vmatpush1.bf16.msra.mxu0 0
    %448 = vmatprep.subr.bf16.mxu0 0
    %449 = vmatpush1.bf16.msra.mxu0 0
    %450 = vmatprep.subr.bf16.mxu0 0
    %451 = vmatpush1.bf16.msra.mxu0 0
    %452 = vmatprep.subr.bf16.mxu0 0
    %453 = vmatpush1.bf16.msra.mxu0 0
    %454 = vmatprep.subr.bf16.mxu0 0
    %455 = vmatpush1.bf16.msra.mxu0 0
    %456 = vmatprep.subr.bf16.mxu0 0
    %457 = vmatpush1.bf16.msra.mxu0 0
    %458 = vmatprep.subr.bf16.mxu0 0
    %459 = vmatpush1.bf16.msra.mxu0 0
    %460 = vmatprep.subr.bf16.mxu0 0
    %461 = vmatpush1.bf16.msra.mxu0 0
    %462 = vmatprep.subr.bf16.mxu0 0
    %463 = vmatpush1.bf16.msra.mxu0 0
    %464 = vmatprep.subr.bf16.mxu0 0
    %465 = vmatpush1.bf16.msra.mxu0 0
    %466 = vmatprep.subr.bf16.mxu0 0
    %467 = vmatpush1.bf16.msra.mxu0 0
    %468 = vmatprep.mubr.bf16.mxu0 0
    %469 = vmatmul.mubr.bf16.gmra.mrb[0].mxu0 %v413
    %v470 = vpop.f32.mrb[0].mxu0
    %v471 = vadd.f32 0.0, %v470
    %v472 = vpop.f32.mrb[0].mxu0
    %v473 = vpop.f32.mrb[0].mxu0
    %v474 = vadd.f32 0.0, %v473
    %v475 = vpop.f32.mrb[0].mxu0
    %476 = vmatprep.mubr.bf16.mxu0 0
    %477 = vmatmul.mubr.bf16.gmra.mrb[0].mxu0 %v416
    %v478 = vpop.f32.mrb[0].mxu0
    %v479 = vadd.f32 0.0, %v478
    %v480 = vpop.f32.mrb[0].mxu0
    %v481 = vpop.f32.mrb[0].mxu0
    %v482 = vadd.f32 0.0, %v481
    %v483 = vpop.f32.mrb[0].mxu0
    %484 = vmatprep.mubr.bf16.mxu0 0
    %485 = vmatmul.mubr.bf16.gmra.mrb[0].mxu0 %v419
    %v486 = vpop.f32.mrb[0].mxu0
    %v487 = vadd.f32 0.0, %v486
    %v488 = vpop.f32.mrb[0].mxu0
    %v489 = vpop.f32.mrb[0].mxu0
    %v490 = vadd.f32 0.0, %v489
    %v491 = vpop.f32.mrb[0].mxu0
    %492 = vmatprep.mubr.bf16.mxu0 0
    %493 = vmatmul.mubr.bf16.gmra.mrb[0].mxu0 %v422
    %v494 = vpop.f32.mrb[0].mxu0
    %v495 = vadd.f32 0.0, %v494
    %v496 = vpop.f32.mrb[0].mxu0
    %v497 = vpop.f32.mrb[0].mxu0
    %v498 = vadd.f32 0.0, %v497
    %v499 = vpop.f32.mrb[0].mxu0
    %500 = vmatprep.mubr.bf16.mxu0 0
    %501 = vmatmul.mubr.bf16.gmra.mrb[0].mxu0 %v425
    %v502 = vpop.f32.mrb[0].mxu0
    %v503 = vadd.f32 0.0, %v502
    %v504 = vpop.f32.mrb[0].mxu0
    %v505 = vpop.f32.mrb[0].mxu0
    %v506 = vadd.f32 0.0, %v505
    %v507 = vpop.f32.mrb[0].mxu0
    %508 = vmatprep.mubr.bf16.mxu0 0
    %509 = vmatmul.mubr.bf16.gmra.mrb[0].mxu0 %v428
    %v510 = vpop.f32.mrb[0].mxu0
    %v511 = vadd.f32 0.0, %v510
    %v512 = vpop.f32.mrb[0].mxu0
    %v513 = vpop.f32.mrb[0].mxu0
    %v514 = vadd.f32 0.0, %v513
    %v515 = vpop.f32.mrb[0].mxu0
    %516 = vmatprep.mubr.bf16.mxu0 0
    %517 = vmatmul.mubr.bf16.gmra.mrb[0].mxu0 %v431
    %v518 = vpop.f32.mrb[0].mxu0
    %v519 = vadd.f32 0.0, %v518
    %v520 = vpop.f32.mrb[0].mxu0
    %v521 = vpop.f32.mrb[0].mxu0
    %v522 = vadd.f32 0.0, %v521
    %v523 = vpop.f32.mrb[0].mxu0
    %524 = vmatprep.mubr.bf16.mxu0 0
    %525 = vmatmul.mubr.bf16.gmra.mrb[0].mxu0 %v434
    %v526 = vpop.f32.mrb[0].mxu0
    %v527 = vadd.f32 0.0, %v526
    %v528 = vpop.f32.mrb[0].mxu0
    %v529 = vpop.f32.mrb[0].mxu0
    %v530 = vadd.f32 0.0, %v529
    %v531 = vpop.f32.mrb[0].mxu0
    %532 = vdwg.mxu0
    %v541 = vunpack.c.l.b16 %v348
    %v542 = vunpack.c.l.b16 %v349
    %v543 = vunpack.c.l.b16 %v350
    %v544 = vunpack.c.l.b16 %v351
    %v545 = vunpack.c.l.b16 %v352
    %v546 = vunpack.c.l.b16 %v353
    %v547 = vunpack.c.l.b16 %v354
    %v548 = vunpack.c.l.b16 %v355
    %v549 = vpack.c.b16 %v542, %v541
    %v550 = vpack.c.b16 %v544, %v543
    %v551 = vpack.c.b16 %v546, %v545
    %v552 = vpack.c.b16 %v548, %v547
    %v558 = vsel %vm48, %v339, 0
    %v561 = vsel %vm48, %v340, 0
    %v564 = vsel %vm48, %v341, 0
    %v567 = vsel %vm48, %v342, 0
    %v570 = vsel %vm48, %v343, 0
    %v573 = vsel %vm48, %v344, 0
    %v576 = vsel %vm48, %v345, 0
    %v579 = vsel %vm48, %v346, 0
    %581 = vmatprep.subr.bf16.mxu0 0
    %582 = vmatpush1.bf16.msra.mxu0 %v549
    %583 = vmatprep.subr.bf16.mxu0 0
    %584 = vmatpush1.bf16.msra.mxu0 %v550
    %585 = vmatprep.subr.bf16.mxu0 0
    %586 = vmatpush1.bf16.msra.mxu0 %v551
    %587 = vmatprep.subr.bf16.mxu0 0
    %588 = vmatpush1.bf16.msra.mxu0 %v552
    %589 = vmatprep.subr.bf16.mxu0 0
    %590 = vmatpush1.bf16.msra.mxu0 0
    %591 = vmatprep.subr.bf16.mxu0 0
    %592 = vmatpush1.bf16.msra.mxu0 0
    %593 = vmatprep.subr.bf16.mxu0 0
    %594 = vmatpush1.bf16.msra.mxu0 0
    %595 = vmatprep.subr.bf16.mxu0 0
    %596 = vmatpush1.bf16.msra.mxu0 0
    %597 = vmatprep.subr.bf16.mxu0 0
    %598 = vmatpush1.bf16.msra.mxu0 0
    %599 = vmatprep.subr.bf16.mxu0 0
    %600 = vmatpush1.bf16.msra.mxu0 0
    %601 = vmatprep.subr.bf16.mxu0 0
    %602 = vmatpush1.bf16.msra.mxu0 0
    %603 = vmatprep.subr.bf16.mxu0 0
    %604 = vmatpush1.bf16.msra.mxu0 0
    %605 = vmatprep.subr.bf16.mxu0 0
    %606 = vmatpush1.bf16.msra.mxu0 0
    %607 = vmatprep.subr.bf16.mxu0 0
    %608 = vmatpush1.bf16.msra.mxu0 0
    %609 = vmatprep.subr.bf16.mxu0 0
    %610 = vmatpush1.bf16.msra.mxu0 0
    %611 = vmatprep.subr.bf16.mxu0 0
    %612 = vmatpush1.bf16.msra.mxu0 0
    %613 = vmatprep.mubr.bf16.mxu0 0
    %614 = vmatmul.mubr.bf16.gmra.mrb[0].mxu0 %v558
    %v615 = vpop.f32.mrb[0].mxu0
    %v616 = vadd.f32 %v471, %v615
    %v617 = vpop.f32.mrb[0].mxu0
    %v618 = vpop.f32.mrb[0].mxu0
    %v619 = vadd.f32 %v474, %v618
    %v620 = vpop.f32.mrb[0].mxu0
    %621 = vmatprep.mubr.bf16.mxu0 0
    %622 = vmatmul.mubr.bf16.gmra.mrb[0].mxu0 %v561
    %v623 = vpop.f32.mrb[0].mxu0
    %v624 = vadd.f32 %v479, %v623
    %v625 = vpop.f32.mrb[0].mxu0
    %v626 = vpop.f32.mrb[0].mxu0
    %v627 = vadd.f32 %v482, %v626
    %v628 = vpop.f32.mrb[0].mxu0
    %629 = vmatprep.mubr.bf16.mxu0 0
    %630 = vmatmul.mubr.bf16.gmra.mrb[0].mxu0 %v564
    %v631 = vpop.f32.mrb[0].mxu0
    %v632 = vadd.f32 %v487, %v631
    %v633 = vpop.f32.mrb[0].mxu0
    %v634 = vpop.f32.mrb[0].mxu0
    %v635 = vadd.f32 %v490, %v634
    %v636 = vpop.f32.mrb[0].mxu0
    %637 = vmatprep.mubr.bf16.mxu0 0
    %638 = vmatmul.mubr.bf16.gmra.mrb[0].mxu0 %v567
    %v639 = vpop.f32.mrb[0].mxu0
    %v640 = vadd.f32 %v495, %v639
    %v641 = vpop.f32.mrb[0].mxu0
    %v642 = vpop.f32.mrb[0].mxu0
    %v643 = vadd.f32 %v498, %v642
    %v644 = vpop.f32.mrb[0].mxu0
    %645 = vmatprep.mubr.bf16.mxu0 0
    %646 = vmatmul.mubr.bf16.gmra.mrb[0].mxu0 %v570
    %v647 = vpop.f32.mrb[0].mxu0
    %v648 = vadd.f32 %v503, %v647
    %v649 = vpop.f32.mrb[0].mxu0
    %v650 = vpop.f32.mrb[0].mxu0
    %v651 = vadd.f32 %v506, %v650
    %v652 = vpop.f32.mrb[0].mxu0
    %653 = vmatprep.mubr.bf16.mxu0 0
    %654 = vmatmul.mubr.bf16.gmra.mrb[0].mxu0 %v573
    %v655 = vpop.f32.mrb[0].mxu0
    %v656 = vadd.f32 %v511, %v655
    %v657 = vpop.f32.mrb[0].mxu0
    %v658 = vpop.f32.mrb[0].mxu0
    %v659 = vadd.f32 %v514, %v658
    %v660 = vpop.f32.mrb[0].mxu0
    %661 = vmatprep.mubr.bf16.mxu0 0
    %662 = vmatmul.mubr.bf16.gmra.mrb[0].mxu0 %v576
    %v663 = vpop.f32.mrb[0].mxu0
    %v664 = vadd.f32 %v519, %v663
    %v665 = vpop.f32.mrb[0].mxu0
    %v666 = vpop.f32.mrb[0].mxu0
    %v667 = vadd.f32 %v522, %v666
    %v668 = vpop.f32.mrb[0].mxu0
    %669 = vmatprep.mubr.bf16.mxu0 0
    %670 = vmatmul.mubr.bf16.gmra.mrb[0].mxu0 %v579
    %v671 = vpop.f32.mrb[0].mxu0
    %v672 = vadd.f32 %v527, %v671
    %v673 = vpop.f32.mrb[0].mxu0
    %v674 = vpop.f32.mrb[0].mxu0
    %v675 = vadd.f32 %v530, %v674
    %v676 = vpop.f32.mrb[0].mxu0
    %677 = vdwg.mxu0
    %v678 = vld [vmem:[#allocation2 + $0x22] sm:$0xff]
    %v679 = vld [vmem:[#allocation2 + $0x2a] sm:$0xff]
    %v680 = vld [vmem:[#allocation2 + $0x32] sm:$0xff]
    %v681 = vld [vmem:[#allocation2 + $0x3a] sm:$0xff]
    %v682 = vld [vmem:[#allocation2 + $0x42] sm:$0xff]
    %v683 = vld [vmem:[#allocation2 + $0x4a] sm:$0xff]
    %v684 = vld [vmem:[#allocation2 + $0x52] sm:$0xff]
    %v685 = vld [vmem:[#allocation2 + $0x5a] sm:$0xff]
    %v686 = vld [vmem:[%s61 + $0x22] sm:$0xff]
    %v687 = vld [vmem:[%s61 + $0x2a] sm:$0xff]
    %v688 = vld [vmem:[%s61 + $0x32] sm:$0xff]
    %v689 = vld [vmem:[%s61 + $0x3a] sm:$0xff]
    %v690 = vld [vmem:[%s61 + $0x42] sm:$0xff]
    %v691 = vld [vmem:[%s61 + $0x4a] sm:$0xff]
    %v692 = vld [vmem:[%s61 + $0x52] sm:$0xff]
    %v693 = vld [vmem:[%s61 + $0x5a] sm:$0xff]
    %v694 = vpack.c.bf16 %v679, %v678
    %v695 = vpack.c.bf16 %v681, %v680
    %v696 = vpack.c.bf16 %v683, %v682
    %v697 = vpack.c.bf16 %v685, %v684
    %v698 = vpack.c.bf16 %v687, %v686
    %v699 = vpack.c.bf16 %v689, %v688
    %v700 = vpack.c.bf16 %v691, %v690
    %v701 = vpack.c.bf16 %v693, %v692
    %s702 = scalar_lea.vmem [#allocation4], 64
    %v703 = vld [vmem:[%s702] sm:$0xf]
    %v704 = vld [vmem:[%s702 + $0x4] sm:$0xf]
    %v705 = vld [vmem:[%s702 + $0x8] sm:$0xf]
    %v706 = vld [vmem:[%s702 + $0xc] sm:$0xf]
    %v707 = vld [vmem:[%s702 + $0x10] sm:$0xf]
    %v708 = vld [vmem:[%s702 + $0x14] sm:$0xf]
    %v709 = vld [vmem:[%s702 + $0x18] sm:$0xf]
    %v710 = vld [vmem:[%s702 + $0x1c] sm:$0xf]
    %v719 = vunpack.c.l.b16 %v703
    %v720 = vunpack.c.l.b16 %v704
    %v721 = vunpack.c.l.b16 %v705
    %v722 = vunpack.c.l.b16 %v706
    %v723 = vunpack.c.l.b16 %v707
    %v724 = vunpack.c.l.b16 %v708
    %v725 = vunpack.c.l.b16 %v709
    %v726 = vunpack.c.l.b16 %v710
    %v727 = vpack.c.b16 %v720, %v719
    %v728 = vpack.c.b16 %v722, %v721
    %v729 = vpack.c.b16 %v724, %v723
    %v730 = vpack.c.b16 %v726, %v725
    %v736 = vsel %vm48, %v694, 0
    %v739 = vsel %vm48, %v695, 0
    %v742 = vsel %vm48, %v696, 0
    %v745 = vsel %vm48, %v697, 0
    %v748 = vsel %vm48, %v698, 0
    %v751 = vsel %vm48, %v699, 0
    %v754 = vsel %vm48, %v700, 0
    %v757 = vsel %vm48, %v701, 0
    %759 = vmatprep.subr.bf16.mxu0 0
    %760 = vmatpush1.bf16.msra.mxu0 %v727
    %761 = vmatprep.subr.bf16.mxu0 0
    %762 = vmatpush1.bf16.msra.mxu0 %v728
    %763 = vmatprep.subr.bf16.mxu0 0
    %764 = vmatpush1.bf16.msra.mxu0 %v729
    %765 = vmatprep.subr.bf16.mxu0 0
    %766 = vmatpush1.bf16.msra.mxu0 %v730
    %767 = vmatprep.subr.bf16.mxu0 0
    %768 = vmatpush1.bf16.msra.mxu0 0
    %769 = vmatprep.subr.bf16.mxu0 0
    %770 = vmatpush1.bf16.msra.mxu0 0
    %771 = vmatprep.subr.bf16.mxu0 0
    %772 = vmatpush1.bf16.msra.mxu0 0
    %773 = vmatprep.subr.bf16.mxu0 0
    %774 = vmatpush1.bf16.msra.mxu0 0
    %775 = vmatprep.subr.bf16.mxu0 0
    %776 = vmatpush1.bf16.msra.mxu0 0
    %777 = vmatprep.subr.bf16.mxu0 0
    %778 = vmatpush1.bf16.msra.mxu0 0
    %779 = vmatprep.subr.bf16.mxu0 0
    %780 = vmatpush1.bf16.msra.mxu0 0
    %781 = vmatprep.subr.bf16.mxu0 0
    %782 = vmatpush1.bf16.msra.mxu0 0
    %783 = vmatprep.subr.bf16.mxu0 0
    %784 = vmatpush1.bf16.msra.mxu0 0
    %785 = vmatprep.subr.bf16.mxu0 0
    %786 = vmatpush1.bf16.msra.mxu0 0
    %787 = vmatprep.subr.bf16.mxu0 0
    %788 = vmatpush1.bf16.msra.mxu0 0
    %789 = vmatprep.subr.bf16.mxu0 0
    %790 = vmatpush1.bf16.msra.mxu0 0
    %791 = vmatprep.mubr.bf16.mxu0 0
    %792 = vmatmul.mubr.bf16.gmra.mrb[0].mxu0 %v736
    %v793 = vpop.f32.mrb[0].mxu0
    %v794 = vadd.f32 0.0, %v793
    %v795 = vpop.f32.mrb[0].mxu0
    %v796 = vpop.f32.mrb[0].mxu0
    %v797 = vadd.f32 0.0, %v796
    %v798 = vpop.f32.mrb[0].mxu0
    %799 = vmatprep.mubr.bf16.mxu0 0
    %800 = vmatmul.mubr.bf16.gmra.mrb[0].mxu0 %v739
    %v801 = vpop.f32.mrb[0].mxu0
    %v802 = vadd.f32 0.0, %v801
    %v803 = vpop.f32.mrb[0].mxu0
    %v804 = vpop.f32.mrb[0].mxu0
    %v805 = vadd.f32 0.0, %v804
    %v806 = vpop.f32.mrb[0].mxu0
    %807 = vmatprep.mubr.bf16.mxu0 0
    %808 = vmatmul.mubr.bf16.gmra.mrb[0].mxu0 %v742
    %v809 = vpop.f32.mrb[0].mxu0
    %v810 = vadd.f32 0.0, %v809
    %v811 = vpop.f32.mrb[0].mxu0
    %v812 = vpop.f32.mrb[0].mxu0
    %v813 = vadd.f32 0.0, %v812
    %v814 = vpop.f32.mrb[0].mxu0
    %815 = vmatprep.mubr.bf16.mxu0 0
    %816 = vmatmul.mubr.bf16.gmra.mrb[0].mxu0 %v745
    %v817 = vpop.f32.mrb[0].mxu0
    %v818 = vadd.f32 0.0, %v817
    %v819 = vpop.f32.mrb[0].mxu0
    %v820 = vpop.f32.mrb[0].mxu0
    %v821 = vadd.f32 0.0, %v820
    %v822 = vpop.f32.mrb[0].mxu0
    %823 = vmatprep.mubr.bf16.mxu0 0
    %824 = vmatmul.mubr.bf16.gmra.mrb[0].mxu0 %v748
    %v825 = vpop.f32.mrb[0].mxu0
    %v826 = vadd.f32 0.0, %v825
    %v827 = vpop.f32.mrb[0].mxu0
    %v828 = vpop.f32.mrb[0].mxu0
    %v829 = vadd.f32 0.0, %v828
    %v830 = vpop.f32.mrb[0].mxu0
    %831 = vmatprep.mubr.bf16.mxu0 0
    %832 = vmatmul.mubr.bf16.gmra.mrb[0].mxu0 %v751
    %v833 = vpop.f32.mrb[0].mxu0
    %v834 = vadd.f32 0.0, %v833
    %v835 = vpop.f32.mrb[0].mxu0
    %v836 = vpop.f32.mrb[0].mxu0
    %v837 = vadd.f32 0.0, %v836
    %v838 = vpop.f32.mrb[0].mxu0
    %839 = vmatprep.mubr.bf16.mxu0 0
    %840 = vmatmul.mubr.bf16.gmra.mrb[0].mxu0 %v754
    %v841 = vpop.f32.mrb[0].mxu0
    %v842 = vadd.f32 0.0, %v841
    %v843 = vpop.f32.mrb[0].mxu0
    %v844 = vpop.f32.mrb[0].mxu0
    %v845 = vadd.f32 0.0, %v844
    %v846 = vpop.f32.mrb[0].mxu0
    %847 = vmatprep.mubr.bf16.mxu0 0
    %848 = vmatmul.mubr.bf16.gmra.mrb[0].mxu0 %v757
    %v849 = vpop.f32.mrb[0].mxu0
    %v850 = vadd.f32 0.0, %v849
    %v851 = vpop.f32.mrb[0].mxu0
    %v852 = vpop.f32.mrb[0].mxu0
    %v853 = vadd.f32 0.0, %v852
    %v854 = vpop.f32.mrb[0].mxu0
    %855 = vdwg.mxu0
    %v856 = vadd.f32 %v616, %v794
    %v857 = vadd.f32 %v619, %v797
    %v858 = vadd.f32 %v624, %v802
    %v859 = vadd.f32 %v627, %v805
    %v860 = vadd.f32 %v632, %v810
    %v861 = vadd.f32 %v635, %v813
    %v862 = vadd.f32 %v640, %v818
    %v863 = vadd.f32 %v643, %v821
    %v864 = vadd.f32 %v648, %v826
    %v865 = vadd.f32 %v651, %v829
    %v866 = vadd.f32 %v656, %v834
    %v867 = vadd.f32 %v659, %v837
    %v868 = vadd.f32 %v664, %v842
    %v869 = vadd.f32 %v667, %v845
    %v870 = vadd.f32 %v672, %v850
    %v871 = vadd.f32 %v675, %v853
    %v872 = vld [vmem:[%s4] sm:$0x1]
    %v874 = vlaneseq
    %v875 = vshrl.u32 %v874, 7
    %v876 = vsub.s32 0, %v875
    %v877 = vrot.slane %v872, %v876
    %v879 = vadd.f32 %v856, %v877
    %v880 = vadd.f32 %v857, %v877
    %v881 = vadd.f32 %v858, %v877
    %v882 = vadd.f32 %v859, %v877
    %v883 = vadd.f32 %v860, %v877
    %v884 = vadd.f32 %v861, %v877
    %v885 = vadd.f32 %v862, %v877
    %v886 = vadd.f32 %v863, %v877
    %v887 = vadd.f32 %v864, %v877
    %v888 = vadd.f32 %v865, %v877
    %v889 = vadd.f32 %v866, %v877
    %v890 = vadd.f32 %v867, %v877
    %v891 = vadd.f32 %v868, %v877
    %v892 = vadd.f32 %v869, %v877
    %v893 = vadd.f32 %v870, %v877
    %v894 = vadd.f32 %v871, %v877
    %v895 = vmax.f32 %v879, 0.0
    %v896 = vmax.f32 %v880, 0.0
    %v897 = vmax.f32 %v881, 0.0
    %v898 = vmax.f32 %v882, 0.0
    %v899 = vmax.f32 %v883, 0.0
    %v900 = vmax.f32 %v884, 0.0
    %v901 = vmax.f32 %v885, 0.0
    %v902 = vmax.f32 %v886, 0.0
    %v903 = vmax.f32 %v887, 0.0
    %v904 = vmax.f32 %v888, 0.0
    %v905 = vmax.f32 %v889, 0.0
    %v906 = vmax.f32 %v890, 0.0
    %v907 = vmax.f32 %v891, 0.0
    %v908 = vmax.f32 %v892, 0.0
    %v909 = vmax.f32 %v893, 0.0
    %v910 = vmax.f32 %v894, 0.0
    %v911 = vadd.f32 %v307, %v895
    %v912 = vadd.f32 %v308, %v896
    %v913 = vadd.f32 %v309, %v897
    %v914 = vadd.f32 %v310, %v898
    %v915 = vadd.f32 %v311, %v899
    %v916 = vadd.f32 %v312, %v900
    %v917 = vadd.f32 %v313, %v901
    %v918 = vadd.f32 %v314, %v902
    %v919 = vadd.f32 %v315, %v903
    %v920 = vadd.f32 %v316, %v904
    %v921 = vadd.f32 %v317, %v905
    %v922 = vadd.f32 %v318, %v906
    %v923 = vadd.f32 %v319, %v907
    %v924 = vadd.f32 %v320, %v908
    %v925 = vadd.f32 %v321, %v909
    %v926 = vadd.f32 %v322, %v910
    %927 = vst.msk [vmem:[#allocation2 + $0x20] sm:$0xff] %vm48, %v911
    %928 = vst.msk [vmem:[#allocation2 + $0x28] sm:$0xff] %vm48, %v912
    %929 = vst.msk [vmem:[#allocation2 + $0x30] sm:$0xff] %vm48, %v913
    %930 = vst.msk [vmem:[#allocation2 + $0x38] sm:$0xff] %vm48, %v914
    %931 = vst.msk [vmem:[#allocation2 + $0x40] sm:$0xff] %vm48, %v915
    %932 = vst.msk [vmem:[#allocation2 + $0x48] sm:$0xff] %vm48, %v916
    %933 = vst.msk [vmem:[#allocation2 + $0x50] sm:$0xff] %vm48, %v917
    %934 = vst.msk [vmem:[#allocation2 + $0x58] sm:$0xff] %vm48, %v918
    %935 = vst.msk [vmem:[%s61 + $0x20] sm:$0xff] %vm48, %v919
    %936 = vst.msk [vmem:[%s61 + $0x28] sm:$0xff] %vm48, %v920
    %937 = vst.msk [vmem:[%s61 + $0x30] sm:$0xff] %vm48, %v921
    %938 = vst.msk [vmem:[%s61 + $0x38] sm:$0xff] %vm48, %v922
    %939 = vst.msk [vmem:[%s61 + $0x40] sm:$0xff] %vm48, %v923
    %940 = vst.msk [vmem:[%s61 + $0x48] sm:$0xff] %vm48, %v924
    %941 = vst.msk [vmem:[%s61 + $0x50] sm:$0xff] %vm48, %v925
    %942 = vst.msk [vmem:[%s61 + $0x58] sm:$0xff] %vm48, %v926
    %v943 = vpack.c.bf16 %v912, %v911
    %v944 = vpack.c.bf16 %v914, %v913
    %v945 = vpack.c.bf16 %v916, %v915
    %v946 = vpack.c.bf16 %v918, %v917
    %v947 = vpack.c.bf16 %v920, %v919
    %v948 = vpack.c.bf16 %v922, %v921
    %v949 = vpack.c.bf16 %v924, %v923
    %v950 = vpack.c.bf16 %v926, %v925
    %s951 = scalar_lea.vmem [#allocation4], 128
    %v952 = vld [vmem:[%s951] sm:$0xf]
    %v953 = vld [vmem:[%s951 + $0x4] sm:$0xf]
    %v954 = vld [vmem:[%s951 + $0x8] sm:$0xf]
    %v955 = vld [vmem:[%s951 + $0xc] sm:$0xf]
    %v956 = vld [vmem:[%s951 + $0x10] sm:$0xf]
    %v957 = vld [vmem:[%s951 + $0x14] sm:$0xf]
    %v958 = vld [vmem:[%s951 + $0x18] sm:$0xf]
    %v959 = vld [vmem:[%s951 + $0x1c] sm:$0xf]
    %v960 = vld [vmem:[#allocation2 + $0x1c] sm:$0xff]
    %v961 = vld [vmem:[#allocation2 + $0x24] sm:$0xff]
    %v962 = vld [vmem:[#allocation2 + $0x2c] sm:$0xff]
    %v963 = vld [vmem:[#allocation2 + $0x34] sm:$0xff]
    %v964 = vld [vmem:[#allocation2 + $0x3c] sm:$0xff]
    %v965 = vld [vmem:[#allocation2 + $0x44] sm:$0xff]
    %v966 = vld [vmem:[#allocation2 + $0x4c] sm:$0xff]
    %v967 = vld [vmem:[#allocation2 + $0x54] sm:$0xff]
    %v968 = vld [vmem:[%s61 + $0x1c] sm:$0xff]
    %v969 = vld [vmem:[%s61 + $0x24] sm:$0xff]
    %v970 = vld [vmem:[%s61 + $0x2c] sm:$0xff]
    %v971 = vld [vmem:[%s61 + $0x34] sm:$0xff]
    %v972 = vld [vmem:[%s61 + $0x3c] sm:$0xff]
    %v973 = vld [vmem:[%s61 + $0x44] sm:$0xff]
    %v974 = vld [vmem:[%s61 + $0x4c] sm:$0xff]
    %v975 = vld [vmem:[%s61 + $0x54] sm:$0xff]
    %v976 = vpack.c.bf16 %v961, %v960
    %v977 = vpack.c.bf16 %v963, %v962
    %v978 = vpack.c.bf16 %v965, %v964
    %v979 = vpack.c.bf16 %v967, %v966
    %v980 = vpack.c.bf16 %v969, %v968
    %v981 = vpack.c.bf16 %v971, %v970
    %v982 = vpack.c.bf16 %v973, %v972
    %v983 = vpack.c.bf16 %v975, %v974
    %s984 = scalar_lea.vmem [#allocation4], 96
    %v985 = vld [vmem:[%s984] sm:$0xf]
    %v986 = vld [vmem:[%s984 + $0x4] sm:$0xf]
    %v987 = vld [vmem:[%s984 + $0x8] sm:$0xf]
    %v988 = vld [vmem:[%s984 + $0xc] sm:$0xf]
    %v989 = vld [vmem:[%s984 + $0x10] sm:$0xf]
    %v990 = vld [vmem:[%s984 + $0x14] sm:$0xf]
    %v991 = vld [vmem:[%s984 + $0x18] sm:$0xf]
    %v992 = vld [vmem:[%s984 + $0x1c] sm:$0xf]
    %v1001 = vunpack.c.l.b16 %v985
    %v1002 = vunpack.c.l.b16 %v986
    %v1003 = vunpack.c.l.b16 %v987
    %v1004 = vunpack.c.l.b16 %v988
    %v1005 = vunpack.c.l.b16 %v989
    %v1006 = vunpack.c.l.b16 %v990
    %v1007 = vunpack.c.l.b16 %v991
    %v1008 = vunpack.c.l.b16 %v992
    %v1009 = vpack.c.b16 %v1002, %v1001
    %v1010 = vpack.c.b16 %v1004, %v1003
    %v1011 = vpack.c.b16 %v1006, %v1005
    %v1012 = vpack.c.b16 %v1008, %v1007
    %v1018 = vsel %vm48, %v976, 0
    %v1021 = vsel %vm48, %v977, 0
    %v1024 = vsel %vm48, %v978, 0
    %v1027 = vsel %vm48, %v979, 0
    %v1030 = vsel %vm48, %v980, 0
    %v1033 = vsel %vm48, %v981, 0
    %v1036 = vsel %vm48, %v982, 0
    %v1039 = vsel %vm48, %v983, 0
    %1041 = vmatprep.subr.bf16.mxu0 0
    %1042 = vmatpush1.bf16.msra.mxu0 %v1009
    %1043 = vmatprep.subr.bf16.mxu0 0
    %1044 = vmatpush1.bf16.msra.mxu0 %v1010
    %1045 = vmatprep.subr.bf16.mxu0 0
    %1046 = vmatpush1.bf16.msra.mxu0 %v1011
    %1047 = vmatprep.subr.bf16.mxu0 0
    %1048 = vmatpush1.bf16.msra.mxu0 %v1012
    %1049 = vmatprep.subr.bf16.mxu0 0
    %1050 = vmatpush1.bf16.msra.mxu0 0
    %1051 = vmatprep.subr.bf16.mxu0 0
    %1052 = vmatpush1.bf16.msra.mxu0 0
    %1053 = vmatprep.subr.bf16.mxu0 0
    %1054 = vmatpush1.bf16.msra.mxu0 0
    %1055 = vmatprep.subr.bf16.mxu0 0
    %1056 = vmatpush1.bf16.msra.mxu0 0
    %1057 = vmatprep.subr.bf16.mxu0 0
    %1058 = vmatpush1.bf16.msra.mxu0 0
    %1059 = vmatprep.subr.bf16.mxu0 0
    %1060 = vmatpush1.bf16.msra.mxu0 0
    %1061 = vmatprep.subr.bf16.mxu0 0
    %1062 = vmatpush1.bf16.msra.mxu0 0
    %1063 = vmatprep.subr.bf16.mxu0 0
    %1064 = vmatpush1.bf16.msra.mxu0 0
    %1065 = vmatprep.subr.bf16.mxu0 0
    %1066 = vmatpush1.bf16.msra.mxu0 0
    %1067 = vmatprep.subr.bf16.mxu0 0
    %1068 = vmatpush1.bf16.msra.mxu0 0
    %1069 = vmatprep.subr.bf16.mxu0 0
    %1070 = vmatpush1.bf16.msra.mxu0 0
    %1071 = vmatprep.subr.bf16.mxu0 0
    %1072 = vmatpush1.bf16.msra.mxu0 0
    %1073 = vmatprep.mubr.bf16.mxu0 0
    %1074 = vmatmul.mubr.bf16.gmra.mrb[0].mxu0 %v1018
    %v1075 = vpop.f32.mrb[0].mxu0
    %v1076 = vadd.f32 0.0, %v1075
    %v1077 = vpop.f32.mrb[0].mxu0
    %v1078 = vpop.f32.mrb[0].mxu0
    %v1079 = vadd.f32 0.0, %v1078
    %v1080 = vpop.f32.mrb[0].mxu0
    %1081 = vmatprep.mubr.bf16.mxu0 0
    %1082 = vmatmul.mubr.bf16.gmra.mrb[0].mxu0 %v1021
    %v1083 = vpop.f32.mrb[0].mxu0
    %v1084 = vadd.f32 0.0, %v1083
    %v1085 = vpop.f32.mrb[0].mxu0
    %v1086 = vpop.f32.mrb[0].mxu0
    %v1087 = vadd.f32 0.0, %v1086
    %v1088 = vpop.f32.mrb[0].mxu0
    %1089 = vmatprep.mubr.bf16.mxu0 0
    %1090 = vmatmul.mubr.bf16.gmra.mrb[0].mxu0 %v1024
    %v1091 = vpop.f32.mrb[0].mxu0
    %v1092 = vadd.f32 0.0, %v1091
    %v1093 = vpop.f32.mrb[0].mxu0
    %v1094 = vpop.f32.mrb[0].mxu0
    %v1095 = vadd.f32 0.0, %v1094
    %v1096 = vpop.f32.mrb[0].mxu0
    %1097 = vmatprep.mubr.bf16.mxu0 0
    %1098 = vmatmul.mubr.bf16.gmra.mrb[0].mxu0 %v1027
    %v1099 = vpop.f32.mrb[0].mxu0
    %v1100 = vadd.f32 0.0, %v1099
    %v1101 = vpop.f32.mrb[0].mxu0
    %v1102 = vpop.f32.mrb[0].mxu0
    %v1103 = vadd.f32 0.0, %v1102
    %v1104 = vpop.f32.mrb[0].mxu0
    %1105 = vmatprep.mubr.bf16.mxu0 0
    %1106 = vmatmul.mubr.bf16.gmra.mrb[0].mxu0 %v1030
    %v1107 = vpop.f32.mrb[0].mxu0
    %v1108 = vadd.f32 0.0, %v1107
    %v1109 = vpop.f32.mrb[0].mxu0
    %v1110 = vpop.f32.mrb[0].mxu0
    %v1111 = vadd.f32 0.0, %v1110
    %v1112 = vpop.f32.mrb[0].mxu0
    %1113 = vmatprep.mubr.bf16.mxu0 0
    %1114 = vmatmul.mubr.bf16.gmra.mrb[0].mxu0 %v1033
    %v1115 = vpop.f32.mrb[0].mxu0
    %v1116 = vadd.f32 0.0, %v1115
    %v1117 = vpop.f32.mrb[0].mxu0
    %v1118 = vpop.f32.mrb[0].mxu0
    %v1119 = vadd.f32 0.0, %v1118
    %v1120 = vpop.f32.mrb[0].mxu0
    %1121 = vmatprep.mubr.bf16.mxu0 0
    %1122 = vmatmul.mubr.bf16.gmra.mrb[0].mxu0 %v1036
    %v1123 = vpop.f32.mrb[0].mxu0
    %v1124 = vadd.f32 0.0, %v1123
    %v1125 = vpop.f32.mrb[0].mxu0
    %v1126 = vpop.f32.mrb[0].mxu0
    %v1127 = vadd.f32 0.0, %v1126
    %v1128 = vpop.f32.mrb[0].mxu0
    %1129 = vmatprep.mubr.bf16.mxu0 0
    %1130 = vmatmul.mubr.bf16.gmra.mrb[0].mxu0 %v1039
    %v1131 = vpop.f32.mrb[0].mxu0
    %v1132 = vadd.f32 0.0, %v1131
    %v1133 = vpop.f32.mrb[0].mxu0
    %v1134 = vpop.f32.mrb[0].mxu0
    %v1135 = vadd.f32 0.0, %v1134
    %v1136 = vpop.f32.mrb[0].mxu0
    %1137 = vdwg.mxu0
    %v1146 = vunpack.c.l.b16 %v952
    %v1147 = vunpack.c.l.b16 %v953
    %v1148 = vunpack.c.l.b16 %v954
    %v1149 = vunpack.c.l.b16 %v955
    %v1150 = vunpack.c.l.b16 %v956
    %v1151 = vunpack.c.l.b16 %v957
    %v1152 = vunpack.c.l.b16 %v958
    %v1153 = vunpack.c.l.b16 %v959
    %v1154 = vpack.c.b16 %v1147, %v1146
    %v1155 = vpack.c.b16 %v1149, %v1148
    %v1156 = vpack.c.b16 %v1151, %v1150
    %v1157 = vpack.c.b16 %v1153, %v1152
    %v1163 = vsel %vm48, %v943, 0
    %v1166 = vsel %vm48, %v944, 0
    %v1169 = vsel %vm48, %v945, 0
    %v1172 = vsel %vm48, %v946, 0
    %v1175 = vsel %vm48, %v947, 0
    %v1178 = vsel %vm48, %v948, 0
    %v1181 = vsel %vm48, %v949, 0
    %v1184 = vsel %vm48, %v950, 0
    %1186 = vmatprep.subr.bf16.mxu0 0
    %1187 = vmatpush1.bf16.msra.mxu0 %v1154
    %1188 = vmatprep.subr.bf16.mxu0 0
    %1189 = vmatpush1.bf16.msra.mxu0 %v1155
    %1190 = vmatprep.subr.bf16.mxu0 0
    %1191 = vmatpush1.bf16.msra.mxu0 %v1156
    %1192 = vmatprep.subr.bf16.mxu0 0
    %1193 = vmatpush1.bf16.msra.mxu0 %v1157
    %1194 = vmatprep.subr.bf16.mxu0 0
    %1195 = vmatpush1.bf16.msra.mxu0 0
    %1196 = vmatprep.subr.bf16.mxu0 0
    %1197 = vmatpush1.bf16.msra.mxu0 0
    %1198 = vmatprep.subr.bf16.mxu0 0
    %1199 = vmatpush1.bf16.msra.mxu0 0
    %1200 = vmatprep.subr.bf16.mxu0 0
    %1201 = vmatpush1.bf16.msra.mxu0 0
    %1202 = vmatprep.subr.bf16.mxu0 0
    %1203 = vmatpush1.bf16.msra.mxu0 0
    %1204 = vmatprep.subr.bf16.mxu0 0
    %1205 = vmatpush1.bf16.msra.mxu0 0
    %1206 = vmatprep.subr.bf16.mxu0 0
    %1207 = vmatpush1.bf16.msra.mxu0 0
    %1208 = vmatprep.subr.bf16.mxu0 0
    %1209 = vmatpush1.bf16.msra.mxu0 0
    %1210 = vmatprep.subr.bf16.mxu0 0
    %1211 = vmatpush1.bf16.msra.mxu0 0
    %1212 = vmatprep.subr.bf16.mxu0 0
    %1213 = vmatpush1.bf16.msra.mxu0 0
    %1214 = vmatprep.subr.bf16.mxu0 0
    %1215 = vmatpush1.bf16.msra.mxu0 0
    %1216 = vmatprep.subr.bf16.mxu0 0
    %1217 = vmatpush1.bf16.msra.mxu0 0
    %1218 = vmatprep.mubr.bf16.mxu0 0
    %1219 = vmatmul.mubr.bf16.gmra.mrb[0].mxu0 %v1163
    %v1220 = vpop.f32.mrb[0].mxu0
    %v1221 = vadd.f32 %v1076, %v1220
    %v1222 = vpop.f32.mrb[0].mxu0
    %v1223 = vpop.f32.mrb[0].mxu0
    %v1224 = vadd.f32 %v1079, %v1223
    %v1225 = vpop.f32.mrb[0].mxu0
    %1226 = vmatprep.mubr.bf16.mxu0 0
    %1227 = vmatmul.mubr.bf16.gmra.mrb[0].mxu0 %v1166
    %v1228 = vpop.f32.mrb[0].mxu0
    %v1229 = vadd.f32 %v1084, %v1228
    %v1230 = vpop.f32.mrb[0].mxu0
    %v1231 = vpop.f32.mrb[0].mxu0
    %v1232 = vadd.f32 %v1087, %v1231
    %v1233 = vpop.f32.mrb[0].mxu0
    %1234 = vmatprep.mubr.bf16.mxu0 0
    %1235 = vmatmul.mubr.bf16.gmra.mrb[0].mxu0 %v1169
    %v1236 = vpop.f32.mrb[0].mxu0
    %v1237 = vadd.f32 %v1092, %v1236
    %v1238 = vpop.f32.mrb[0].mxu0
    %v1239 = vpop.f32.mrb[0].mxu0
    %v1240 = vadd.f32 %v1095, %v1239
    %v1241 = vpop.f32.mrb[0].mxu0
    %1242 = vmatprep.mubr.bf16.mxu0 0
    %1243 = vmatmul.mubr.bf16.gmra.mrb[0].mxu0 %v1172
    %v1244 = vpop.f32.mrb[0].mxu0
    %v1245 = vadd.f32 %v1100, %v1244
    %v1246 = vpop.f32.mrb[0].mxu0
    %v1247 = vpop.f32.mrb[0].mxu0
    %v1248 = vadd.f32 %v1103, %v1247
    %v1249 = vpop.f32.mrb[0].mxu0
    %1250 = vmatprep.mubr.bf16.mxu0 0
    %1251 = vmatmul.mubr.bf16.gmra.mrb[0].mxu0 %v1175
    %v1252 = vpop.f32.mrb[0].mxu0
    %v1253 = vadd.f32 %v1108, %v1252
    %v1254 = vpop.f32.mrb[0].mxu0
    %v1255 = vpop.f32.mrb[0].mxu0
    %v1256 = vadd.f32 %v1111, %v1255
    %v1257 = vpop.f32.mrb[0].mxu0
    %1258 = vmatprep.mubr.bf16.mxu0 0
    %1259 = vmatmul.mubr.bf16.gmra.mrb[0].mxu0 %v1178
    %v1260 = vpop.f32.mrb[0].mxu0
    %v1261 = vadd.f32 %v1116, %v1260
    %v1262 = vpop.f32.mrb[0].mxu0
    %v1263 = vpop.f32.mrb[0].mxu0
    %v1264 = vadd.f32 %v1119, %v1263
    %v1265 = vpop.f32.mrb[0].mxu0
    %1266 = vmatprep.mubr.bf16.mxu0 0
    %1267 = vmatmul.mubr.bf16.gmra.mrb[0].mxu0 %v1181
    %v1268 = vpop.f32.mrb[0].mxu0
    %v1269 = vadd.f32 %v1124, %v1268
    %v1270 = vpop.f32.mrb[0].mxu0
    %v1271 = vpop.f32.mrb[0].mxu0
    %v1272 = vadd.f32 %v1127, %v1271
    %v1273 = vpop.f32.mrb[0].mxu0
    %1274 = vmatprep.mubr.bf16.mxu0 0
    %1275 = vmatmul.mubr.bf16.gmra.mrb[0].mxu0 %v1184
    %v1276 = vpop.f32.mrb[0].mxu0
    %v1277 = vadd.f32 %v1132, %v1276
    %v1278 = vpop.f32.mrb[0].mxu0
    %v1279 = vpop.f32.mrb[0].mxu0
    %v1280 = vadd.f32 %v1135, %v1279
    %v1281 = vpop.f32.mrb[0].mxu0
    %1282 = vdwg.mxu0
    %v1283 = vld [vmem:[#allocation2 + $0x24] sm:$0xff]
    %v1284 = vld [vmem:[#allocation2 + $0x2c] sm:$0xff]
    %v1285 = vld [vmem:[#allocation2 + $0x34] sm:$0xff]
    %v1286 = vld [vmem:[#allocation2 + $0x3c] sm:$0xff]
    %v1287 = vld [vmem:[#allocation2 + $0x44] sm:$0xff]
    %v1288 = vld [vmem:[#allocation2 + $0x4c] sm:$0xff]
    %v1289 = vld [vmem:[#allocation2 + $0x54] sm:$0xff]
    %v1290 = vld [vmem:[#allocation2 + $0x5c] sm:$0xff]
    %v1291 = vld [vmem:[%s61 + $0x24] sm:$0xff]
    %v1292 = vld [vmem:[%s61 + $0x2c] sm:$0xff]
    %v1293 = vld [vmem:[%s61 + $0x34] sm:$0xff]
    %v1294 = vld [vmem:[%s61 + $0x3c] sm:$0xff]
    %v1295 = vld [vmem:[%s61 + $0x44] sm:$0xff]
    %v1296 = vld [vmem:[%s61 + $0x4c] sm:$0xff]
    %v1297 = vld [vmem:[%s61 + $0x54] sm:$0xff]
    %v1298 = vld [vmem:[%s61 + $0x5c] sm:$0xff]
    %v1299 = vpack.c.bf16 %v1284, %v1283
    %v1300 = vpack.c.bf16 %v1286, %v1285
    %v1301 = vpack.c.bf16 %v1288, %v1287
    %v1302 = vpack.c.bf16 %v1290, %v1289
    %v1303 = vpack.c.bf16 %v1292, %v1291
    %v1304 = vpack.c.bf16 %v1294, %v1293
    %v1305 = vpack.c.bf16 %v1296, %v1295
    %v1306 = vpack.c.bf16 %v1298, %v1297
    %s1307 = scalar_lea.vmem [#allocation4], 160
    %v1308 = vld [vmem:[%s1307] sm:$0xf]
    %v1309 = vld [vmem:[%s1307 + $0x4] sm:$0xf]
    %v1310 = vld [vmem:[%s1307 + $0x8] sm:$0xf]
    %v1311 = vld [vmem:[%s1307 + $0xc] sm:$0xf]
    %v1312 = vld [vmem:[%s1307 + $0x10] sm:$0xf]
    %v1313 = vld [vmem:[%s1307 + $0x14] sm:$0xf]
    %v1314 = vld [vmem:[%s1307 + $0x18] sm:$0xf]
    %v1315 = vld [vmem:[%s1307 + $0x1c] sm:$0xf]
    %v1324 = vunpack.c.l.b16 %v1308
    %v1325 = vunpack.c.l.b16 %v1309
    %v1326 = vunpack.c.l.b16 %v1310
    %v1327 = vunpack.c.l.b16 %v1311
    %v1328 = vunpack.c.l.b16 %v1312
    %v1329 = vunpack.c.l.b16 %v1313
    %v1330 = vunpack.c.l.b16 %v1314
    %v1331 = vunpack.c.l.b16 %v1315
    %v1332 = vpack.c.b16 %v1325, %v1324
    %v1333 = vpack.c.b16 %v1327, %v1326
    %v1334 = vpack.c.b16 %v1329, %v1328
    %v1335 = vpack.c.b16 %v1331, %v1330
    %v1341 = vsel %vm48, %v1299, 0
    %v1344 = vsel %vm48, %v1300, 0
    %v1347 = vsel %vm48, %v1301, 0
    %v1350 = vsel %vm48, %v1302, 0
    %v1353 = vsel %vm48, %v1303, 0
    %v1356 = vsel %vm48, %v1304, 0
    %v1359 = vsel %vm48, %v1305, 0
    %v1362 = vsel %vm48, %v1306, 0
    %1364 = vmatprep.subr.bf16.mxu0 0
    %1365 = vmatpush1.bf16.msra.mxu0 %v1332
    %1366 = vmatprep.subr.bf16.mxu0 0
    %1367 = vmatpush1.bf16.msra.mxu0 %v1333
    %1368 = vmatprep.subr.bf16.mxu0 0
    %1369 = vmatpush1.bf16.msra.mxu0 %v1334
    %1370 = vmatprep.subr.bf16.mxu0 0
    %1371 = vmatpush1.bf16.msra.mxu0 %v1335
    %1372 = vmatprep.subr.bf16.mxu0 0
    %1373 = vmatpush1.bf16.msra.mxu0 0
    %1374 = vmatprep.subr.bf16.mxu0 0
    %1375 = vmatpush1.bf16.msra.mxu0 0
    %1376 = vmatprep.subr.bf16.mxu0 0
    %1377 = vmatpush1.bf16.msra.mxu0 0
    %1378 = vmatprep.subr.bf16.mxu0 0
    %1379 = vmatpush1.bf16.msra.mxu0 0
    %1380 = vmatprep.subr.bf16.mxu0 0
    %1381 = vmatpush1.bf16.msra.mxu0 0
    %1382 = vmatprep.subr.bf16.mxu0 0
    %1383 = vmatpush1.bf16.msra.mxu0 0
    %1384 = vmatprep.subr.bf16.mxu0 0
    %1385 = vmatpush1.bf16.msra.mxu0 0
    %1386 = vmatprep.subr.bf16.mxu0 0
    %1387 = vmatpush1.bf16.msra.mxu0 0
    %1388 = vmatprep.subr.bf16.mxu0 0
    %1389 = vmatpush1.bf16.msra.mxu0 0
    %1390 = vmatprep.subr.bf16.mxu0 0
    %1391 = vmatpush1.bf16.msra.mxu0 0
    %1392 = vmatprep.subr.bf16.mxu0 0
    %1393 = vmatpush1.bf16.msra.mxu0 0
    %1394 = vmatprep.subr.bf16.mxu0 0
    %1395 = vmatpush1.bf16.msra.mxu0 0
    %1396 = vmatprep.mubr.bf16.mxu0 0
    %1397 = vmatmul.mubr.bf16.gmra.mrb[0].mxu0 %v1341
    %v1398 = vpop.f32.mrb[0].mxu0
    %v1399 = vadd.f32 0.0, %v1398
    %v1400 = vpop.f32.mrb[0].mxu0
    %v1401 = vpop.f32.mrb[0].mxu0
    %v1402 = vadd.f32 0.0, %v1401
    %v1403 = vpop.f32.mrb[0].mxu0
    %1404 = vmatprep.mubr.bf16.mxu0 0
    %1405 = vmatmul.mubr.bf16.gmra.mrb[0].mxu0 %v1344
    %v1406 = vpop.f32.mrb[0].mxu0
    %v1407 = vadd.f32 0.0, %v1406
    %v1408 = vpop.f32.mrb[0].mxu0
    %v1409 = vpop.f32.mrb[0].mxu0
    %v1410 = vadd.f32 0.0, %v1409
    %v1411 = vpop.f32.mrb[0].mxu0
    %1412 = vmatprep.mubr.bf16.mxu0 0
    %1413 = vmatmul.mubr.bf16.gmra.mrb[0].mxu0 %v1347
    %v1414 = vpop.f32.mrb[0].mxu0
    %v1415 = vadd.f32 0.0, %v1414
    %v1416 = vpop.f32.mrb[0].mxu0
    %v1417 = vpop.f32.mrb[0].mxu0
    %v1418 = vadd.f32 0.0, %v1417
    %v1419 = vpop.f32.mrb[0].mxu0
    %1420 = vmatprep.mubr.bf16.mxu0 0
    %1421 = vmatmul.mubr.bf16.gmra.mrb[0].mxu0 %v1350
    %v1422 = vpop.f32.mrb[0].mxu0
    %v1423 = vadd.f32 0.0, %v1422
    %v1424 = vpop.f32.mrb[0].mxu0
    %v1425 = vpop.f32.mrb[0].mxu0
    %v1426 = vadd.f32 0.0, %v1425
    %v1427 = vpop.f32.mrb[0].mxu0
    %1428 = vmatprep.mubr.bf16.mxu0 0
    %1429 = vmatmul.mubr.bf16.gmra.mrb[0].mxu0 %v1353
    %v1430 = vpop.f32.mrb[0].mxu0
    %v1431 = vadd.f32 0.0, %v1430
    %v1432 = vpop.f32.mrb[0].mxu0
    %v1433 = vpop.f32.mrb[0].mxu0
    %v1434 = vadd.f32 0.0, %v1433
    %v1435 = vpop.f32.mrb[0].mxu0
    %1436 = vmatprep.mubr.bf16.mxu0 0
    %1437 = vmatmul.mubr.bf16.gmra.mrb[0].mxu0 %v1356
    %v1438 = vpop.f32.mrb[0].mxu0
    %v1439 = vadd.f32 0.0, %v1438
    %v1440 = vpop.f32.mrb[0].mxu0
    %v1441 = vpop.f32.mrb[0].mxu0
    %v1442 = vadd.f32 0.0, %v1441
    %v1443 = vpop.f32.mrb[0].mxu0
    %1444 = vmatprep.mubr.bf16.mxu0 0
    %1445 = vmatmul.mubr.bf16.gmra.mrb[0].mxu0 %v1359
    %v1446 = vpop.f32.mrb[0].mxu0
    %v1447 = vadd.f32 0.0, %v1446
    %v1448 = vpop.f32.mrb[0].mxu0
    %v1449 = vpop.f32.mrb[0].mxu0
    %v1450 = vadd.f32 0.0, %v1449
    %v1451 = vpop.f32.mrb[0].mxu0
    %1452 = vmatprep.mubr.bf16.mxu0 0
    %1453 = vmatmul.mubr.bf16.gmra.mrb[0].mxu0 %v1362
    %v1454 = vpop.f32.mrb[0].mxu0
    %v1455 = vadd.f32 0.0, %v1454
    %v1456 = vpop.f32.mrb[0].mxu0
    %v1457 = vpop.f32.mrb[0].mxu0
    %v1458 = vadd.f32 0.0, %v1457
    %v1459 = vpop.f32.mrb[0].mxu0
    %1460 = vdwg.mxu0
    %v1461 = vadd.f32 %v1221, %v1399
    %v1462 = vadd.f32 %v1224, %v1402
    %v1463 = vadd.f32 %v1229, %v1407
    %v1464 = vadd.f32 %v1232, %v1410
    %v1465 = vadd.f32 %v1237, %v1415
    %v1466 = vadd.f32 %v1240, %v1418
    %v1467 = vadd.f32 %v1245, %v1423
    %v1468 = vadd.f32 %v1248, %v1426
    %v1469 = vadd.f32 %v1253, %v1431
    %v1470 = vadd.f32 %v1256, %v1434
    %v1471 = vadd.f32 %v1261, %v1439
    %v1472 = vadd.f32 %v1264, %v1442
    %v1473 = vadd.f32 %v1269, %v1447
    %v1474 = vadd.f32 %v1272, %v1450
    %v1475 = vadd.f32 %v1277, %v1455
    %v1476 = vadd.f32 %v1280, %v1458
    %s1477 = scalar_lea.vmem %s4, 1
    %v1478 = vld [vmem:[%s1477] sm:$0x1]
    %v1480 = vlaneseq
    %v1481 = vshrl.u32 %v1480, 7
    %v1482 = vsub.s32 0, %v1481
    %v1483 = vrot.slane %v1478, %v1482
    %v1485 = vadd.f32 %v1461, %v1483
    %v1486 = vadd.f32 %v1462, %v1483
    %v1487 = vadd.f32 %v1463, %v1483
    %v1488 = vadd.f32 %v1464, %v1483
    %v1489 = vadd.f32 %v1465, %v1483
    %v1490 = vadd.f32 %v1466, %v1483
    %v1491 = vadd.f32 %v1467, %v1483
    %v1492 = vadd.f32 %v1468, %v1483
    %v1493 = vadd.f32 %v1469, %v1483
    %v1494 = vadd.f32 %v1470, %v1483
    %v1495 = vadd.f32 %v1471, %v1483
    %v1496 = vadd.f32 %v1472, %v1483
    %v1497 = vadd.f32 %v1473, %v1483
    %v1498 = vadd.f32 %v1474, %v1483
    %v1499 = vadd.f32 %v1475, %v1483
    %v1500 = vadd.f32 %v1476, %v1483
    %v1501 = vmax.f32 %v1485, 0.0
    %v1502 = vmax.f32 %v1486, 0.0
    %v1503 = vmax.f32 %v1487, 0.0
    %v1504 = vmax.f32 %v1488, 0.0
    %v1505 = vmax.f32 %v1489, 0.0
    %v1506 = vmax.f32 %v1490, 0.0
    %v1507 = vmax.f32 %v1491, 0.0
    %v1508 = vmax.f32 %v1492, 0.0
    %v1509 = vmax.f32 %v1493, 0.0
    %v1510 = vmax.f32 %v1494, 0.0
    %v1511 = vmax.f32 %v1495, 0.0
    %v1512 = vmax.f32 %v1496, 0.0
    %v1513 = vmax.f32 %v1497, 0.0
    %v1514 = vmax.f32 %v1498, 0.0
    %v1515 = vmax.f32 %v1499, 0.0
    %v1516 = vmax.f32 %v1500, 0.0
    %v1517 = vadd.f32 %v911, %v1501
    %v1518 = vadd.f32 %v912, %v1502
    %v1519 = vadd.f32 %v913, %v1503
    %v1520 = vadd.f32 %v914, %v1504
    %v1521 = vadd.f32 %v915, %v1505
    %v1522 = vadd.f32 %v916, %v1506
    %v1523 = vadd.f32 %v917, %v1507
    %v1524 = vadd.f32 %v918, %v1508
    %v1525 = vadd.f32 %v919, %v1509
    %v1526 = vadd.f32 %v920, %v1510
    %v1527 = vadd.f32 %v921, %v1511
    %v1528 = vadd.f32 %v922, %v1512
    %v1529 = vadd.f32 %v923, %v1513
    %v1530 = vadd.f32 %v924, %v1514
    %v1531 = vadd.f32 %v925, %v1515
    %v1532 = vadd.f32 %v926, %v1516
    %1533 = vst.msk [vmem:[#allocation2 + $0x20] sm:$0xff] %vm48, %v1517
    %1534 = vst.msk [vmem:[#allocation2 + $0x28] sm:$0xff] %vm48, %v1518
    %1535 = vst.msk [vmem:[#allocation2 + $0x30] sm:$0xff] %vm48, %v1519
    %1536 = vst.msk [vmem:[#allocation2 + $0x38] sm:$0xff] %vm48, %v1520
    %1537 = vst.msk [vmem:[#allocation2 + $0x40] sm:$0xff] %vm48, %v1521
    %1538 = vst.msk [vmem:[#allocation2 + $0x48] sm:$0xff] %vm48, %v1522
    %1539 = vst.msk [vmem:[#allocation2 + $0x50] sm:$0xff] %vm48, %v1523
    %1540 = vst.msk [vmem:[#allocation2 + $0x58] sm:$0xff] %vm48, %v1524
    %1541 = vst.msk [vmem:[%s61 + $0x20] sm:$0xff] %vm48, %v1525
    %1542 = vst.msk [vmem:[%s61 + $0x28] sm:$0xff] %vm48, %v1526
    %1543 = vst.msk [vmem:[%s61 + $0x30] sm:$0xff] %vm48, %v1527
    %1544 = vst.msk [vmem:[%s61 + $0x38] sm:$0xff] %vm48, %v1528
    %1545 = vst.msk [vmem:[%s61 + $0x40] sm:$0xff] %vm48, %v1529
    %1546 = vst.msk [vmem:[%s61 + $0x48] sm:$0xff] %vm48, %v1530
    %1547 = vst.msk [vmem:[%s61 + $0x50] sm:$0xff] %vm48, %v1531
    %1548 = vst.msk [vmem:[%s61 + $0x58] sm:$0xff] %vm48, %v1532
    %v1549 = vpack.c.bf16 %v1518, %v1517
    %v1550 = vpack.c.bf16 %v1520, %v1519
    %v1551 = vpack.c.bf16 %v1522, %v1521
    %v1552 = vpack.c.bf16 %v1524, %v1523
    %v1553 = vpack.c.bf16 %v1526, %v1525
    %v1554 = vpack.c.bf16 %v1528, %v1527
    %v1555 = vpack.c.bf16 %v1530, %v1529
    %v1556 = vpack.c.bf16 %v1532, %v1531
    %s1557 = scalar_lea.vmem [#allocation4], 224
    %v1558 = vld [vmem:[%s1557] sm:$0xf]
    %v1559 = vld [vmem:[%s1557 + $0x4] sm:$0xf]
    %v1560 = vld [vmem:[%s1557 + $0x8] sm:$0xf]
    %v1561 = vld [vmem:[%s1557 + $0xc] sm:$0xf]
    %v1562 = vld [vmem:[%s1557 + $0x10] sm:$0xf]
    %v1563 = vld [vmem:[%s1557 + $0x14] sm:$0xf]
    %v1564 = vld [vmem:[%s1557 + $0x18] sm:$0xf]
    %v1565 = vld [vmem:[%s1557 + $0x1c] sm:$0xf]
    %v1566 = vld [vmem:[#allocation2 + $0x18] sm:$0xff]
    %v1567 = vld [vmem:[#allocation2 + $0x20] sm:$0xff]
    %v1568 = vld [vmem:[#allocation2 + $0x28] sm:$0xff]
    %v1569 = vld [vmem:[#allocation2 + $0x30] sm:$0xff]
    %v1570 = vld [vmem:[#allocation2 + $0x38] sm:$0xff]
    %v1571 = vld [vmem:[#allocation2 + $0x40] sm:$0xff]
    %v1572 = vld [vmem:[#allocation2 + $0x48] sm:$0xff]
    %v1573 = vld [vmem:[#allocation2 + $0x50] sm:$0xff]
    %v1574 = vld [vmem:[%s61 + $0x18] sm:$0xff]
    %v1575 = vld [vmem:[%s61 + $0x20] sm:$0xff]
    %v1576 = vld [vmem:[%s61 + $0x28] sm:$0xff]
    %v1577 = vld [vmem:[%s61 + $0x30] sm:$0xff]
    %v1578 = vld [vmem:[%s61 + $0x38] sm:$0xff]
    %v1579 = vld [vmem:[%s61 + $0x40] sm:$0xff]
    %v1580 = vld [vmem:[%s61 + $0x48] sm:$0xff]
    %v1581 = vld [vmem:[%s61 + $0x50] sm:$0xff]
    %v1582 = vpack.c.bf16 %v1567, %v1566
    %v1583 = vpack.c.bf16 %v1569, %v1568
    %v1584 = vpack.c.bf16 %v1571, %v1570
    %v1585 = vpack.c.bf16 %v1573, %v1572
    %v1586 = vpack.c.bf16 %v1575, %v1574
    %v1587 = vpack.c.bf16 %v1577, %v1576
    %v1588 = vpack.c.bf16 %v1579, %v1578
    %v1589 = vpack.c.bf16 %v1581, %v1580
    %s1590 = scalar_lea.vmem [#allocation4], 192
    %v1591 = vld [vmem:[%s1590] sm:$0xf]
    %v1592 = vld [vmem:[%s1590 + $0x4] sm:$0xf]
    %v1593 = vld [vmem:[%s1590 + $0x8] sm:$0xf]
    %v1594 = vld [vmem:[%s1590 + $0xc] sm:$0xf]
    %v1595 = vld [vmem:[%s1590 + $0x10] sm:$0xf]
    %v1596 = vld [vmem:[%s1590 + $0x14] sm:$0xf]
    %v1597 = vld [vmem:[%s1590 + $0x18] sm:$0xf]
    %v1598 = vld [vmem:[%s1590 + $0x1c] sm:$0xf]
    %v1607 = vunpack.c.l.b16 %v1591
    %v1608 = vunpack.c.l.b16 %v1592
    %v1609 = vunpack.c.l.b16 %v1593
    %v1610 = vunpack.c.l.b16 %v1594
    %v1611 = vunpack.c.l.b16 %v1595
    %v1612 = vunpack.c.l.b16 %v1596
    %v1613 = vunpack.c.l.b16 %v1597
    %v1614 = vunpack.c.l.b16 %v1598
    %v1615 = vpack.c.b16 %v1608, %v1607
    %v1616 = vpack.c.b16 %v1610, %v1609
    %v1617 = vpack.c.b16 %v1612, %v1611
    %v1618 = vpack.c.b16 %v1614, %v1613
    %v1624 = vsel %vm48, %v1582, 0
    %v1627 = vsel %vm48, %v1583, 0
    %v1630 = vsel %vm48, %v1584, 0
    %v1633 = vsel %vm48, %v1585, 0
    %v1636 = vsel %vm48, %v1586, 0
    %v1639 = vsel %vm48, %v1587, 0
    %v1642 = vsel %vm48, %v1588, 0
    %v1645 = vsel %vm48, %v1589, 0
    %1647 = vmatprep.subr.bf16.mxu0 0
    %1648 = vmatpush1.bf16.msra.mxu0 %v1615
    %1649 = vmatprep.subr.bf16.mxu0 0
    %1650 = vmatpush1.bf16.msra.mxu0 %v1616
    %1651 = vmatprep.subr.bf16.mxu0 0
    %1652 = vmatpush1.bf16.msra.mxu0 %v1617
    %1653 = vmatprep.subr.bf16.mxu0 0
    %1654 = vmatpush1.bf16.msra.mxu0 %v1618
    %1655 = vmatprep.subr.bf16.mxu0 0
    %1656 = vmatpush1.bf16.msra.mxu0 0
    %1657 = vmatprep.subr.bf16.mxu0 0
    %1658 = vmatpush1.bf16.msra.mxu0 0
    %1659 = vmatprep.subr.bf16.mxu0 0
    %1660 = vmatpush1.bf16.msra.mxu0 0
    %1661 = vmatprep.subr.bf16.mxu0 0
    %1662 = vmatpush1.bf16.msra.mxu0 0
    %1663 = vmatprep.subr.bf16.mxu0 0
    %1664 = vmatpush1.bf16.msra.mxu0 0
    %1665 = vmatprep.subr.bf16.mxu0 0
    %1666 = vmatpush1.bf16.msra.mxu0 0
    %1667 = vmatprep.subr.bf16.mxu0 0
    %1668 = vmatpush1.bf16.msra.mxu0 0
    %1669 = vmatprep.subr.bf16.mxu0 0
    %1670 = vmatpush1.bf16.msra.mxu0 0
    %1671 = vmatprep.subr.bf16.mxu0 0
    %1672 = vmatpush1.bf16.msra.mxu0 0
    %1673 = vmatprep.subr.bf16.mxu0 0
    %1674 = vmatpush1.bf16.msra.mxu0 0
    %1675 = vmatprep.subr.bf16.mxu0 0
    %1676 = vmatpush1.bf16.msra.mxu0 0
    %1677 = vmatprep.subr.bf16.mxu0 0
    %1678 = vmatpush1.bf16.msra.mxu0 0
    %1679 = vmatprep.mubr.bf16.mxu0 0
    %1680 = vmatmul.mubr.bf16.gmra.mrb[0].mxu0 %v1624
    %v1681 = vpop.f32.mrb[0].mxu0
    %v1682 = vadd.f32 0.0, %v1681
    %v1683 = vpop.f32.mrb[0].mxu0
    %v1684 = vpop.f32.mrb[0].mxu0
    %v1685 = vadd.f32 0.0, %v1684
    %v1686 = vpop.f32.mrb[0].mxu0
    %1687 = vmatprep.mubr.bf16.mxu0 0
    %1688 = vmatmul.mubr.bf16.gmra.mrb[0].mxu0 %v1627
    %v1689 = vpop.f32.mrb[0].mxu0
    %v1690 = vadd.f32 0.0, %v1689
    %v1691 = vpop.f32.mrb[0].mxu0
    %v1692 = vpop.f32.mrb[0].mxu0
    %v1693 = vadd.f32 0.0, %v1692
    %v1694 = vpop.f32.mrb[0].mxu0
    %1695 = vmatprep.mubr.bf16.mxu0 0
    %1696 = vmatmul.mubr.bf16.gmra.mrb[0].mxu0 %v1630
    %v1697 = vpop.f32.mrb[0].mxu0
    %v1698 = vadd.f32 0.0, %v1697
    %v1699 = vpop.f32.mrb[0].mxu0
    %v1700 = vpop.f32.mrb[0].mxu0
    %v1701 = vadd.f32 0.0, %v1700
    %v1702 = vpop.f32.mrb[0].mxu0
    %1703 = vmatprep.mubr.bf16.mxu0 0
    %1704 = vmatmul.mubr.bf16.gmra.mrb[0].mxu0 %v1633
    %v1705 = vpop.f32.mrb[0].mxu0
    %v1706 = vadd.f32 0.0, %v1705
    %v1707 = vpop.f32.mrb[0].mxu0
    %v1708 = vpop.f32.mrb[0].mxu0
    %v1709 = vadd.f32 0.0, %v1708
    %v1710 = vpop.f32.mrb[0].mxu0
    %1711 = vmatprep.mubr.bf16.mxu0 0
    %1712 = vmatmul.mubr.bf16.gmra.mrb[0].mxu0 %v1636
    %v1713 = vpop.f32.mrb[0].mxu0
    %v1714 = vadd.f32 0.0, %v1713
    %v1715 = vpop.f32.mrb[0].mxu0
    %v1716 = vpop.f32.mrb[0].mxu0
    %v1717 = vadd.f32 0.0, %v1716
    %v1718 = vpop.f32.mrb[0].mxu0
    %1719 = vmatprep.mubr.bf16.mxu0 0
    %1720 = vmatmul.mubr.bf16.gmra.mrb[0].mxu0 %v1639
    %v1721 = vpop.f32.mrb[0].mxu0
    %v1722 = vadd.f32 0.0, %v1721
    %v1723 = vpop.f32.mrb[0].mxu0
    %v1724 = vpop.f32.mrb[0].mxu0
    %v1725 = vadd.f32 0.0, %v1724
    %v1726 = vpop.f32.mrb[0].mxu0
    %1727 = vmatprep.mubr.bf16.mxu0 0
    %1728 = vmatmul.mubr.bf16.gmra.mrb[0].mxu0 %v1642
    %v1729 = vpop.f32.mrb[0].mxu0
    %v1730 = vadd.f32 0.0, %v1729
    %v1731 = vpop.f32.mrb[0].mxu0
    %v1732 = vpop.f32.mrb[0].mxu0
    %v1733 = vadd.f32 0.0, %v1732
    %v1734 = vpop.f32.mrb[0].mxu0
    %1735 = vmatprep.mubr.bf16.mxu0 0
    %1736 = vmatmul.mubr.bf16.gmra.mrb[0].mxu0 %v1645
    %v1737 = vpop.f32.mrb[0].mxu0
    %v1738 = vadd.f32 0.0, %v1737
    %v1739 = vpop.f32.mrb[0].mxu0
    %v1740 = vpop.f32.mrb[0].mxu0
    %v1741 = vadd.f32 0.0, %v1740
    %v1742 = vpop.f32.mrb[0].mxu0
    %1743 = vdwg.mxu0
    %v1752 = vunpack.c.l.b16 %v1558
    %v1753 = vunpack.c.l.b16 %v1559
    %v1754 = vunpack.c.l.b16 %v1560
    %v1755 = vunpack.c.l.b16 %v1561
    %v1756 = vunpack.c.l.b16 %v1562
    %v1757 = vunpack.c.l.b16 %v1563
    %v1758 = vunpack.c.l.b16 %v1564
    %v1759 = vunpack.c.l.b16 %v1565
    %v1760 = vpack.c.b16 %v1753, %v1752
    %v1761 = vpack.c.b16 %v1755, %v1754
    %v1762 = vpack.c.b16 %v1757, %v1756
    %v1763 = vpack.c.b16 %v1759, %v1758
    %v1769 = vsel %vm48, %v1549, 0
    %v1772 = vsel %vm48, %v1550, 0
    %v1775 = vsel %vm48, %v1551, 0
    %v1778 = vsel %vm48, %v1552, 0
    %v1781 = vsel %vm48, %v1553, 0
    %v1784 = vsel %vm48, %v1554, 0
    %v1787 = vsel %vm48, %v1555, 0
    %v1790 = vsel %vm48, %v1556, 0
    %1792 = vmatprep.subr.bf16.mxu0 0
    %1793 = vmatpush1.bf16.msra.mxu0 %v1760
    %1794 = vmatprep.subr.bf16.mxu0 0
    %1795 = vmatpush1.bf16.msra.mxu0 %v1761
    %1796 = vmatprep.subr.bf16.mxu0 0
    %1797 = vmatpush1.bf16.msra.mxu0 %v1762
    %1798 = vmatprep.subr.bf16.mxu0 0
    %1799 = vmatpush1.bf16.msra.mxu0 %v1763
    %1800 = vmatprep.subr.bf16.mxu0 0
    %1801 = vmatpush1.bf16.msra.mxu0 0
    %1802 = vmatprep.subr.bf16.mxu0 0
    %1803 = vmatpush1.bf16.msra.mxu0 0
    %1804 = vmatprep.subr.bf16.mxu0 0
    %1805 = vmatpush1.bf16.msra.mxu0 0
    %1806 = vmatprep.subr.bf16.mxu0 0
    %1807 = vmatpush1.bf16.msra.mxu0 0
    %1808 = vmatprep.subr.bf16.mxu0 0
    %1809 = vmatpush1.bf16.msra.mxu0 0
    %1810 = vmatprep.subr.bf16.mxu0 0
    %1811 = vmatpush1.bf16.msra.mxu0 0
    %1812 = vmatprep.subr.bf16.mxu0 0
    %1813 = vmatpush1.bf16.msra.mxu0 0
    %1814 = vmatprep.subr.bf16.mxu0 0
    %1815 = vmatpush1.bf16.msra.mxu0 0
    %1816 = vmatprep.subr.bf16.mxu0 0
    %1817 = vmatpush1.bf16.msra.mxu0 0
    %1818 = vmatprep.subr.bf16.mxu0 0
    %1819 = vmatpush1.bf16.msra.mxu0 0
    %1820 = vmatprep.subr.bf16.mxu0 0
    %1821 = vmatpush1.bf16.msra.mxu0 0
    %1822 = vmatprep.subr.bf16.mxu0 0
    %1823 = vmatpush1.bf16.msra.mxu0 0
    %1824 = vmatprep.mubr.bf16.mxu0 0
    %1825 = vmatmul.mubr.bf16.gmra.mrb[0].mxu0 %v1769
    %v1826 = vpop.f32.mrb[0].mxu0
    %v1827 = vadd.f32 %v1682, %v1826
    %v1828 = vpop.f32.mrb[0].mxu0
    %v1829 = vpop.f32.mrb[0].mxu0
    %v1830 = vadd.f32 %v1685, %v1829
    %v1831 = vpop.f32.mrb[0].mxu0
    %1832 = vmatprep.mubr.bf16.mxu0 0
    %1833 = vmatmul.mubr.bf16.gmra.mrb[0].mxu0 %v1772
    %v1834 = vpop.f32.mrb[0].mxu0
    %v1835 = vadd.f32 %v1690, %v1834
    %v1836 = vpop.f32.mrb[0].mxu0
    %v1837 = vpop.f32.mrb[0].mxu0
    %v1838 = vadd.f32 %v1693, %v1837
    %v1839 = vpop.f32.mrb[0].mxu0
    %1840 = vmatprep.mubr.bf16.mxu0 0
    %1841 = vmatmul.mubr.bf16.gmra.mrb[0].mxu0 %v1775
    %v1842 = vpop.f32.mrb[0].mxu0
    %v1843 = vadd.f32 %v1698, %v1842
    %v1844 = vpop.f32.mrb[0].mxu0
    %v1845 = vpop.f32.mrb[0].mxu0
    %v1846 = vadd.f32 %v1701, %v1845
    %v1847 = vpop.f32.mrb[0].mxu0
    %1848 = vmatprep.mubr.bf16.mxu0 0
    %1849 = vmatmul.mubr.bf16.gmra.mrb[0].mxu0 %v1778
    %v1850 = vpop.f32.mrb[0].mxu0
    %v1851 = vadd.f32 %v1706, %v1850
    %v1852 = vpop.f32.mrb[0].mxu0
    %v1853 = vpop.f32.mrb[0].mxu0
    %v1854 = vadd.f32 %v1709, %v1853
    %v1855 = vpop.f32.mrb[0].mxu0
    %1856 = vmatprep.mubr.bf16.mxu0 0
    %1857 = vmatmul.mubr.bf16.gmra.mrb[0].mxu0 %v1781
    %v1858 = vpop.f32.mrb[0].mxu0
    %v1859 = vadd.f32 %v1714, %v1858
    %v1860 = vpop.f32.mrb[0].mxu0
    %v1861 = vpop.f32.mrb[0].mxu0
    %v1862 = vadd.f32 %v1717, %v1861
    %v1863 = vpop.f32.mrb[0].mxu0
    %1864 = vmatprep.mubr.bf16.mxu0 0
    %1865 = vmatmul.mubr.bf16.gmra.mrb[0].mxu0 %v1784
    %v1866 = vpop.f32.mrb[0].mxu0
    %v1867 = vadd.f32 %v1722, %v1866
    %v1868 = vpop.f32.mrb[0].mxu0
    %v1869 = vpop.f32.mrb[0].mxu0
    %v1870 = vadd.f32 %v1725, %v1869
    %v1871 = vpop.f32.mrb[0].mxu0
    %1872 = vmatprep.mubr.bf16.mxu0 0
    %1873 = vmatmul.mubr.bf16.gmra.mrb[0].mxu0 %v1787
    %v1874 = vpop.f32.mrb[0].mxu0
    %v1875 = vadd.f32 %v1730, %v1874
    %v1876 = vpop.f32.mrb[0].mxu0
    %v1877 = vpop.f32.mrb[0].mxu0
    %v1878 = vadd.f32 %v1733, %v1877
    %v1879 = vpop.f32.mrb[0].mxu0
    %1880 = vmatprep.mubr.bf16.mxu0 0
    %1881 = vmatmul.mubr.bf16.gmra.mrb[0].mxu0 %v1790
    %v1882 = vpop.f32.mrb[0].mxu0
    %v1883 = vadd.f32 %v1738, %v1882
    %v1884 = vpop.f32.mrb[0].mxu0
    %v1885 = vpop.f32.mrb[0].mxu0
    %v1886 = vadd.f32 %v1741, %v1885
    %v1887 = vpop.f32.mrb[0].mxu0
    %1888 = vdwg.mxu0
    %v1889 = vld [vmem:[#allocation2 + $0x28] sm:$0xff]
    %v1890 = vld [vmem:[#allocation2 + $0x30] sm:$0xff]
    %v1891 = vld [vmem:[#allocation2 + $0x38] sm:$0xff]
    %v1892 = vld [vmem:[#allocation2 + $0x40] sm:$0xff]
    %v1893 = vld [vmem:[#allocation2 + $0x48] sm:$0xff]
    %v1894 = vld [vmem:[#allocation2 + $0x50] sm:$0xff]
    %v1895 = vld [vmem:[#allocation2 + $0x58] sm:$0xff]
    %v1896 = vld [vmem:[#allocation2 + $0x60] sm:$0xff]
    %v1897 = vld [vmem:[%s61 + $0x28] sm:$0xff]
    %v1898 = vld [vmem:[%s61 + $0x30] sm:$0xff]
    %v1899 = vld [vmem:[%s61 + $0x38] sm:$0xff]
    %v1900 = vld [vmem:[%s61 + $0x40] sm:$0xff]
    %v1901 = vld [vmem:[%s61 + $0x48] sm:$0xff]
    %v1902 = vld [vmem:[%s61 + $0x50] sm:$0xff]
    %v1903 = vld [vmem:[%s61 + $0x58] sm:$0xff]
    %v1904 = vld [vmem:[%s61 + $0x60] sm:$0xff]
    %v1905 = vpack.c.bf16 %v1890, %v1889
    %v1906 = vpack.c.bf16 %v1892, %v1891
    %v1907 = vpack.c.bf16 %v1894, %v1893
    %v1908 = vpack.c.bf16 %v1896, %v1895
    %v1909 = vpack.c.bf16 %v1898, %v1897
    %v1910 = vpack.c.bf16 %v1900, %v1899
    %v1911 = vpack.c.bf16 %v1902, %v1901
    %v1912 = vpack.c.bf16 %v1904, %v1903
    %s1913 = scalar_lea.vmem [#allocation4], 256
    %v1914 = vld [vmem:[%s1913] sm:$0xf]
    %v1915 = vld [vmem:[%s1913 + $0x4] sm:$0xf]
    %v1916 = vld [vmem:[%s1913 + $0x8] sm:$0xf]
    %v1917 = vld [vmem:[%s1913 + $0xc] sm:$0xf]
    %v1918 = vld [vmem:[%s1913 + $0x10] sm:$0xf]
    %v1919 = vld [vmem:[%s1913 + $0x14] sm:$0xf]
    %v1920 = vld [vmem:[%s1913 + $0x18] sm:$0xf]
    %v1921 = vld [vmem:[%s1913 + $0x1c] sm:$0xf]
    %v1930 = vunpack.c.l.b16 %v1914
    %v1931 = vunpack.c.l.b16 %v1915
    %v1932 = vunpack.c.l.b16 %v1916
    %v1933 = vunpack.c.l.b16 %v1917
    %v1934 = vunpack.c.l.b16 %v1918
    %v1935 = vunpack.c.l.b16 %v1919
    %v1936 = vunpack.c.l.b16 %v1920
    %v1937 = vunpack.c.l.b16 %v1921
    %v1938 = vpack.c.b16 %v1931, %v1930
    %v1939 = vpack.c.b16 %v1933, %v1932
    %v1940 = vpack.c.b16 %v1935, %v1934
    %v1941 = vpack.c.b16 %v1937, %v1936
    %v1947 = vsel %vm48, %v1905, 0
    %v1950 = vsel %vm48, %v1906, 0
    %v1953 = vsel %vm48, %v1907, 0
    %v1956 = vsel %vm48, %v1908, 0
    %v1959 = vsel %vm48, %v1909, 0
    %v1962 = vsel %vm48, %v1910, 0
    %v1965 = vsel %vm48, %v1911, 0
    %v1968 = vsel %vm48, %v1912, 0
    %1970 = vmatprep.subr.bf16.mxu0 0
    %1971 = vmatpush1.bf16.msra.mxu0 %v1938
    %1972 = vmatprep.subr.bf16.mxu0 0
    %1973 = vmatpush1.bf16.msra.mxu0 %v1939
    %1974 = vmatprep.subr.bf16.mxu0 0
    %1975 = vmatpush1.bf16.msra.mxu0 %v1940
    %1976 = vmatprep.subr.bf16.mxu0 0
    %1977 = vmatpush1.bf16.msra.mxu0 %v1941
    %1978 = vmatprep.subr.bf16.mxu0 0
    %1979 = vmatpush1.bf16.msra.mxu0 0
    %1980 = vmatprep.subr.bf16.mxu0 0
    %1981 = vmatpush1.bf16.msra.mxu0 0
    %1982 = vmatprep.subr.bf16.mxu0 0
    %1983 = vmatpush1.bf16.msra.mxu0 0
    %1984 = vmatprep.subr.bf16.mxu0 0
    %1985 = vmatpush1.bf16.msra.mxu0 0
    %1986 = vmatprep.subr.bf16.mxu0 0
    %1987 = vmatpush1.bf16.msra.mxu0 0
    %1988 = vmatprep.subr.bf16.mxu0 0
    %1989 = vmatpush1.bf16.msra.mxu0 0
    %1990 = vmatprep.subr.bf16.mxu0 0
    %1991 = vmatpush1.bf16.msra.mxu0 0
    %1992 = vmatprep.subr.bf16.mxu0 0
    %1993 = vmatpush1.bf16.msra.mxu0 0
    %1994 = vmatprep.subr.bf16.mxu0 0
    %1995 = vmatpush1.bf16.msra.mxu0 0
    %1996 = vmatprep.subr.bf16.mxu0 0
    %1997 = vmatpush1.bf16.msra.mxu0 0
    %1998 = vmatprep.subr.bf16.mxu0 0
    %1999 = vmatpush1.bf16.msra.mxu0 0
    %2000 = vmatprep.subr.bf16.mxu0 0
    %2001 = vmatpush1.bf16.msra.mxu0 0
    %2002 = vmatprep.mubr.bf16.mxu0 0
    %2003 = vmatmul.mubr.bf16.gmra.mrb[0].mxu0 %v1947
    %v2004 = vpop.f32.mrb[0].mxu0
    %v2005 = vadd.f32 0.0, %v2004
    %v2006 = vpop.f32.mrb[0].mxu0
    %v2007 = vpop.f32.mrb[0].mxu0
    %v2008 = vadd.f32 0.0, %v2007
    %v2009 = vpop.f32.mrb[0].mxu0
    %2010 = vmatprep.mubr.bf16.mxu0 0
    %2011 = vmatmul.mubr.bf16.gmra.mrb[0].mxu0 %v1950
    %v2012 = vpop.f32.mrb[0].mxu0
    %v2013 = vadd.f32 0.0, %v2012
    %v2014 = vpop.f32.mrb[0].mxu0
    %v2015 = vpop.f32.mrb[0].mxu0
    %v2016 = vadd.f32 0.0, %v2015
    %v2017 = vpop.f32.mrb[0].mxu0
    %2018 = vmatprep.mubr.bf16.mxu0 0
    %2019 = vmatmul.mubr.bf16.gmra.mrb[0].mxu0 %v1953
    %v2020 = vpop.f32.mrb[0].mxu0
    %v2021 = vadd.f32 0.0, %v2020
    %v2022 = vpop.f32.mrb[0].mxu0
    %v2023 = vpop.f32.mrb[0].mxu0
    %v2024 = vadd.f32 0.0, %v2023
    %v2025 = vpop.f32.mrb[0].mxu0
    %2026 = vmatprep.mubr.bf16.mxu0 0
    %2027 = vmatmul.mubr.bf16.gmra.mrb[0].mxu0 %v1956
    %v2028 = vpop.f32.mrb[0].mxu0
    %v2029 = vadd.f32 0.0, %v2028
    %v2030 = vpop.f32.mrb[0].mxu0
    %v2031 = vpop.f32.mrb[0].mxu0
    %v2032 = vadd.f32 0.0, %v2031
    %v2033 = vpop.f32.mrb[0].mxu0
    %2034 = vmatprep.mubr.bf16.mxu0 0
    %2035 = vmatmul.mubr.bf16.gmra.mrb[0].mxu0 %v1959
    %v2036 = vpop.f32.mrb[0].mxu0
    %v2037 = vadd.f32 0.0, %v2036
    %v2038 = vpop.f32.mrb[0].mxu0
    %v2039 = vpop.f32.mrb[0].mxu0
    %v2040 = vadd.f32 0.0, %v2039
    %v2041 = vpop.f32.mrb[0].mxu0
    %2042 = vmatprep.mubr.bf16.mxu0 0
    %2043 = vmatmul.mubr.bf16.gmra.mrb[0].mxu0 %v1962
    %v2044 = vpop.f32.mrb[0].mxu0
    %v2045 = vadd.f32 0.0, %v2044
    %v2046 = vpop.f32.mrb[0].mxu0
    %v2047 = vpop.f32.mrb[0].mxu0
    %v2048 = vadd.f32 0.0, %v2047
    %v2049 = vpop.f32.mrb[0].mxu0
    %2050 = vmatprep.mubr.bf16.mxu0 0
    %2051 = vmatmul.mubr.bf16.gmra.mrb[0].mxu0 %v1965
    %v2052 = vpop.f32.mrb[0].mxu0
    %v2053 = vadd.f32 0.0, %v2052
    %v2054 = vpop.f32.mrb[0].mxu0
    %v2055 = vpop.f32.mrb[0].mxu0
    %v2056 = vadd.f32 0.0, %v2055
    %v2057 = vpop.f32.mrb[0].mxu0
    %2058 = vmatprep.mubr.bf16.mxu0 0
    %2059 = vmatmul.mubr.bf16.gmra.mrb[0].mxu0 %v1968
    %v2060 = vpop.f32.mrb[0].mxu0
    %v2061 = vadd.f32 0.0, %v2060
    %v2062 = vpop.f32.mrb[0].mxu0
    %v2063 = vpop.f32.mrb[0].mxu0
    %v2064 = vadd.f32 0.0, %v2063
    %v2065 = vpop.f32.mrb[0].mxu0
    %2066 = vdwg.mxu0
    %v2067 = vadd.f32 %v1827, %v2005
    %v2068 = vadd.f32 %v1830, %v2008
    %v2069 = vadd.f32 %v1835, %v2013
    %v2070 = vadd.f32 %v1838, %v2016
    %v2071 = vadd.f32 %v1843, %v2021
    %v2072 = vadd.f32 %v1846, %v2024
    %v2073 = vadd.f32 %v1851, %v2029
    %v2074 = vadd.f32 %v1854, %v2032
    %v2075 = vadd.f32 %v1859, %v2037
    %v2076 = vadd.f32 %v1862, %v2040
    %v2077 = vadd.f32 %v1867, %v2045
    %v2078 = vadd.f32 %v1870, %v2048
    %v2079 = vadd.f32 %v1875, %v2053
    %v2080 = vadd.f32 %v1878, %v2056
    %v2081 = vadd.f32 %v1883, %v2061
    %v2082 = vadd.f32 %v1886, %v2064
    %s2083 = scalar_lea.vmem %s4, 2
    %v2084 = vld [vmem:[%s2083] sm:$0x1]
    %v2086 = vlaneseq
    %v2087 = vshrl.u32 %v2086, 7
    %v2088 = vsub.s32 0, %v2087
    %v2089 = vrot.slane %v2084, %v2088
    %v2091 = vadd.f32 %v2067, %v2089
    %v2092 = vadd.f32 %v2068, %v2089
    %v2093 = vadd.f32 %v2069, %v2089
    %v2094 = vadd.f32 %v2070, %v2089
    %v2095 = vadd.f32 %v2071, %v2089
    %v2096 = vadd.f32 %v2072, %v2089
    %v2097 = vadd.f32 %v2073, %v2089
    %v2098 = vadd.f32 %v2074, %v2089
    %v2099 = vadd.f32 %v2075, %v2089
    %v2100 = vadd.f32 %v2076, %v2089
    %v2101 = vadd.f32 %v2077, %v2089
    %v2102 = vadd.f32 %v2078, %v2089
    %v2103 = vadd.f32 %v2079, %v2089
    %v2104 = vadd.f32 %v2080, %v2089
    %v2105 = vadd.f32 %v2081, %v2089
    %v2106 = vadd.f32 %v2082, %v2089
    %v2107 = vmax.f32 %v2091, 0.0
    %v2108 = vmax.f32 %v2092, 0.0
    %v2109 = vmax.f32 %v2093, 0.0
    %v2110 = vmax.f32 %v2094, 0.0
    %v2111 = vmax.f32 %v2095, 0.0
    %v2112 = vmax.f32 %v2096, 0.0
    %v2113 = vmax.f32 %v2097, 0.0
    %v2114 = vmax.f32 %v2098, 0.0
    %v2115 = vmax.f32 %v2099, 0.0
    %v2116 = vmax.f32 %v2100, 0.0
    %v2117 = vmax.f32 %v2101, 0.0
    %v2118 = vmax.f32 %v2102, 0.0
    %v2119 = vmax.f32 %v2103, 0.0
    %v2120 = vmax.f32 %v2104, 0.0
    %v2121 = vmax.f32 %v2105, 0.0
    %v2122 = vmax.f32 %v2106, 0.0
    %v2123 = vadd.f32 %v1517, %v2107
    %v2124 = vadd.f32 %v1518, %v2108
    %v2125 = vadd.f32 %v1519, %v2109
    %v2126 = vadd.f32 %v1520, %v2110
    %v2127 = vadd.f32 %v1521, %v2111
    %v2128 = vadd.f32 %v1522, %v2112
    %v2129 = vadd.f32 %v1523, %v2113
    %v2130 = vadd.f32 %v1524, %v2114
    %v2131 = vadd.f32 %v1525, %v2115
    %v2132 = vadd.f32 %v1526, %v2116
    %v2133 = vadd.f32 %v1527, %v2117
    %v2134 = vadd.f32 %v1528, %v2118
    %v2135 = vadd.f32 %v1529, %v2119
    %v2136 = vadd.f32 %v1530, %v2120
    %v2137 = vadd.f32 %v1531, %v2121
    %v2138 = vadd.f32 %v1532, %v2122
    %2139 = vst.msk [vmem:[#allocation2 + $0x20] sm:$0xff] %vm48, %v2123
    %2140 = vst.msk [vmem:[#allocation2 + $0x28] sm:$0xff] %vm48, %v2124
    %2141 = vst.msk [vmem:[#allocation2 + $0x30] sm:$0xff] %vm48, %v2125
    %2142 = vst.msk [vmem:[#allocation2 + $0x38] sm:$0xff] %vm48, %v2126
    %2143 = vst.msk [vmem:[#allocation2 + $0x40] sm:$0xff] %vm48, %v2127
    %2144 = vst.msk [vmem:[#allocation2 + $0x48] sm:$0xff] %vm48, %v2128
    %2145 = vst.msk [vmem:[#allocation2 + $0x50] sm:$0xff] %vm48, %v2129
    %2146 = vst.msk [vmem:[#allocation2 + $0x58] sm:$0xff] %vm48, %v2130
    %2147 = vst.msk [vmem:[%s61 + $0x20] sm:$0xff] %vm48, %v2131
    %2148 = vst.msk [vmem:[%s61 + $0x28] sm:$0xff] %vm48, %v2132
    %2149 = vst.msk [vmem:[%s61 + $0x30] sm:$0xff] %vm48, %v2133
    %2150 = vst.msk [vmem:[%s61 + $0x38] sm:$0xff] %vm48, %v2134
    %2151 = vst.msk [vmem:[%s61 + $0x40] sm:$0xff] %vm48, %v2135
    %2152 = vst.msk [vmem:[%s61 + $0x48] sm:$0xff] %vm48, %v2136
    %2153 = vst.msk [vmem:[%s61 + $0x50] sm:$0xff] %vm48, %v2137
    %2154 = vst.msk [vmem:[%s61 + $0x58] sm:$0xff] %vm48, %v2138
    %v2155 = vpack.c.bf16 %v2124, %v2123
    %v2156 = vpack.c.bf16 %v2126, %v2125
    %v2157 = vpack.c.bf16 %v2128, %v2127
    %v2158 = vpack.c.bf16 %v2130, %v2129
    %v2159 = vpack.c.bf16 %v2132, %v2131
    %v2160 = vpack.c.bf16 %v2134, %v2133
    %v2161 = vpack.c.bf16 %v2136, %v2135
    %v2162 = vpack.c.bf16 %v2138, %v2137
    %s2163 = scalar_lea.vmem [#allocation4], 320
    %v2164 = vld [vmem:[%s2163] sm:$0xf]
    %v2165 = vld [vmem:[%s2163 + $0x4] sm:$0xf]
    %v2166 = vld [vmem:[%s2163 + $0x8] sm:$0xf]
    %v2167 = vld [vmem:[%s2163 + $0xc] sm:$0xf]
    %v2168 = vld [vmem:[%s2163 + $0x10] sm:$0xf]
    %v2169 = vld [vmem:[%s2163 + $0x14] sm:$0xf]
    %v2170 = vld [vmem:[%s2163 + $0x18] sm:$0xf]
    %v2171 = vld [vmem:[%s2163 + $0x1c] sm:$0xf]
    %v2172 = vld [vmem:[#allocation2 + $0x10] sm:$0xff]
    %v2173 = vld [vmem:[#allocation2 + $0x18] sm:$0xff]
    %v2174 = vld [vmem:[#allocation2 + $0x20] sm:$0xff]
    %v2175 = vld [vmem:[#allocation2 + $0x28] sm:$0xff]
    %v2176 = vld [vmem:[#allocation2 + $0x30] sm:$0xff]
    %v2177 = vld [vmem:[#allocation2 + $0x38] sm:$0xff]
    %v2178 = vld [vmem:[#allocation2 + $0x40] sm:$0xff]
    %v2179 = vld [vmem:[#allocation2 + $0x48] sm:$0xff]
    %v2180 = vld [vmem:[%s61 + $0x10] sm:$0xff]
    %v2181 = vld [vmem:[%s61 + $0x18] sm:$0xff]
    %v2182 = vld [vmem:[%s61 + $0x20] sm:$0xff]
    %v2183 = vld [vmem:[%s61 + $0x28] sm:$0xff]
    %v2184 = vld [vmem:[%s61 + $0x30] sm:$0xff]
    %v2185 = vld [vmem:[%s61 + $0x38] sm:$0xff]
    %v2186 = vld [vmem:[%s61 + $0x40] sm:$0xff]
    %v2187 = vld [vmem:[%s61 + $0x48] sm:$0xff]
    %v2188 = vpack.c.bf16 %v2173, %v2172
    %v2189 = vpack.c.bf16 %v2175, %v2174
    %v2190 = vpack.c.bf16 %v2177, %v2176
    %v2191 = vpack.c.bf16 %v2179, %v2178
    %v2192 = vpack.c.bf16 %v2181, %v2180
    %v2193 = vpack.c.bf16 %v2183, %v2182
    %v2194 = vpack.c.bf16 %v2185, %v2184
    %v2195 = vpack.c.bf16 %v2187, %v2186
    %s2196 = scalar_lea.vmem [#allocation4], 288
    %v2197 = vld [vmem:[%s2196] sm:$0xf]
    %v2198 = vld [vmem:[%s2196 + $0x4] sm:$0xf]
    %v2199 = vld [vmem:[%s2196 + $0x8] sm:$0xf]
    %v2200 = vld [vmem:[%s2196 + $0xc] sm:$0xf]
    %v2201 = vld [vmem:[%s2196 + $0x10] sm:$0xf]
    %v2202 = vld [vmem:[%s2196 + $0x14] sm:$0xf]
    %v2203 = vld [vmem:[%s2196 + $0x18] sm:$0xf]
    %v2204 = vld [vmem:[%s2196 + $0x1c] sm:$0xf]
    %v2213 = vunpack.c.l.b16 %v2197
    %v2214 = vunpack.c.l.b16 %v2198
    %v2215 = vunpack.c.l.b16 %v2199
    %v2216 = vunpack.c.l.b16 %v2200
    %v2217 = vunpack.c.l.b16 %v2201
    %v2218 = vunpack.c.l.b16 %v2202
    %v2219 = vunpack.c.l.b16 %v2203
    %v2220 = vunpack.c.l.b16 %v2204
    %v2221 = vpack.c.b16 %v2214, %v2213
    %v2222 = vpack.c.b16 %v2216, %v2215
    %v2223 = vpack.c.b16 %v2218, %v2217
    %v2224 = vpack.c.b16 %v2220, %v2219
    %v2230 = vsel %vm48, %v2188, 0
    %v2233 = vsel %vm48, %v2189, 0
    %v2236 = vsel %vm48, %v2190, 0
    %v2239 = vsel %vm48, %v2191, 0
    %v2242 = vsel %vm48, %v2192, 0
    %v2245 = vsel %vm48, %v2193, 0
    %v2248 = vsel %vm48, %v2194, 0
    %v2251 = vsel %vm48, %v2195, 0
    %2253 = vmatprep.subr.bf16.mxu0 0
    %2254 = vmatpush1.bf16.msra.mxu0 %v2221
    %2255 = vmatprep.subr.bf16.mxu0 0
    %2256 = vmatpush1.bf16.msra.mxu0 %v2222
    %2257 = vmatprep.subr.bf16.mxu0 0
    %2258 = vmatpush1.bf16.msra.mxu0 %v2223
    %2259 = vmatprep.subr.bf16.mxu0 0
    %2260 = vmatpush1.bf16.msra.mxu0 %v2224
    %2261 = vmatprep.subr.bf16.mxu0 0
    %2262 = vmatpush1.bf16.msra.mxu0 0
    %2263 = vmatprep.subr.bf16.mxu0 0
    %2264 = vmatpush1.bf16.msra.mxu0 0
    %2265 = vmatprep.subr.bf16.mxu0 0
    %2266 = vmatpush1.bf16.msra.mxu0 0
    %2267 = vmatprep.subr.bf16.mxu0 0
    %2268 = vmatpush1.bf16.msra.mxu0 0
    %2269 = vmatprep.subr.bf16.mxu0 0
    %2270 = vmatpush1.bf16.msra.mxu0 0
    %2271 = vmatprep.subr.bf16.mxu0 0
    %2272 = vmatpush1.bf16.msra.mxu0 0
    %2273 = vmatprep.subr.bf16.mxu0 0
    %2274 = vmatpush1.bf16.msra.mxu0 0
    %2275 = vmatprep.subr.bf16.mxu0 0
    %2276 = vmatpush1.bf16.msra.mxu0 0
    %2277 = vmatprep.subr.bf16.mxu0 0
    %2278 = vmatpush1.bf16.msra.mxu0 0
    %2279 = vmatprep.subr.bf16.mxu0 0
    %2280 = vmatpush1.bf16.msra.mxu0 0
    %2281 = vmatprep.subr.bf16.mxu0 0
    %2282 = vmatpush1.bf16.msra.mxu0 0
    %2283 = vmatprep.subr.bf16.mxu0 0
    %2284 = vmatpush1.bf16.msra.mxu0 0
    %2285 = vmatprep.mubr.bf16.mxu0 0
    %2286 = vmatmul.mubr.bf16.gmra.mrb[0].mxu0 %v2230
    %v2287 = vpop.f32.mrb[0].mxu0
    %v2288 = vadd.f32 0.0, %v2287
    %v2289 = vpop.f32.mrb[0].mxu0
    %v2290 = vpop.f32.mrb[0].mxu0
    %v2291 = vadd.f32 0.0, %v2290
    %v2292 = vpop.f32.mrb[0].mxu0
    %2293 = vmatprep.mubr.bf16.mxu0 0
    %2294 = vmatmul.mubr.bf16.gmra.mrb[0].mxu0 %v2233
    %v2295 = vpop.f32.mrb[0].mxu0
    %v2296 = vadd.f32 0.0, %v2295
    %v2297 = vpop.f32.mrb[0].mxu0
    %v2298 = vpop.f32.mrb[0].mxu0
    %v2299 = vadd.f32 0.0, %v2298
    %v2300 = vpop.f32.mrb[0].mxu0
    %2301 = vmatprep.mubr.bf16.mxu0 0
    %2302 = vmatmul.mubr.bf16.gmra.mrb[0].mxu0 %v2236
    %v2303 = vpop.f32.mrb[0].mxu0
    %v2304 = vadd.f32 0.0, %v2303
    %v2305 = vpop.f32.mrb[0].mxu0
    %v2306 = vpop.f32.mrb[0].mxu0
    %v2307 = vadd.f32 0.0, %v2306
    %v2308 = vpop.f32.mrb[0].mxu0
    %2309 = vmatprep.mubr.bf16.mxu0 0
    %2310 = vmatmul.mubr.bf16.gmra.mrb[0].mxu0 %v2239
    %v2311 = vpop.f32.mrb[0].mxu0
    %v2312 = vadd.f32 0.0, %v2311
    %v2313 = vpop.f32.mrb[0].mxu0
    %v2314 = vpop.f32.mrb[0].mxu0
    %v2315 = vadd.f32 0.0, %v2314
    %v2316 = vpop.f32.mrb[0].mxu0
    %2317 = vmatprep.mubr.bf16.mxu0 0
    %2318 = vmatmul.mubr.bf16.gmra.mrb[0].mxu0 %v2242
    %v2319 = vpop.f32.mrb[0].mxu0
    %v2320 = vadd.f32 0.0, %v2319
    %v2321 = vpop.f32.mrb[0].mxu0
    %v2322 = vpop.f32.mrb[0].mxu0
    %v2323 = vadd.f32 0.0, %v2322
    %v2324 = vpop.f32.mrb[0].mxu0
    %2325 = vmatprep.mubr.bf16.mxu0 0
    %2326 = vmatmul.mubr.bf16.gmra.mrb[0].mxu0 %v2245
    %v2327 = vpop.f32.mrb[0].mxu0
    %v2328 = vadd.f32 0.0, %v2327
    %v2329 = vpop.f32.mrb[0].mxu0
    %v2330 = vpop.f32.mrb[0].mxu0
    %v2331 = vadd.f32 0.0, %v2330
    %v2332 = vpop.f32.mrb[0].mxu0
    %2333 = vmatprep.mubr.bf16.mxu0 0
    %2334 = vmatmul.mubr.bf16.gmra.mrb[0].mxu0 %v2248
    %v2335 = vpop.f32.mrb[0].mxu0
    %v2336 = vadd.f32 0.0, %v2335
    %v2337 = vpop.f32.mrb[0].mxu0
    %v2338 = vpop.f32.mrb[0].mxu0
    %v2339 = vadd.f32 0.0, %v2338
    %v2340 = vpop.f32.mrb[0].mxu0
    %2341 = vmatprep.mubr.bf16.mxu0 0
    %2342 = vmatmul.mubr.bf16.gmra.mrb[0].mxu0 %v2251
    %v2343 = vpop.f32.mrb[0].mxu0
    %v2344 = vadd.f32 0.0, %v2343
    %v2345 = vpop.f32.mrb[0].mxu0
    %v2346 = vpop.f32.mrb[0].mxu0
    %v2347 = vadd.f32 0.0, %v2346
    %v2348 = vpop.f32.mrb[0].mxu0
    %2349 = vdwg.mxu0
    %v2358 = vunpack.c.l.b16 %v2164
    %v2359 = vunpack.c.l.b16 %v2165
    %v2360 = vunpack.c.l.b16 %v2166
    %v2361 = vunpack.c.l.b16 %v2167
    %v2362 = vunpack.c.l.b16 %v2168
    %v2363 = vunpack.c.l.b16 %v2169
    %v2364 = vunpack.c.l.b16 %v2170
    %v2365 = vunpack.c.l.b16 %v2171
    %v2366 = vpack.c.b16 %v2359, %v2358
    %v2367 = vpack.c.b16 %v2361, %v2360
    %v2368 = vpack.c.b16 %v2363, %v2362
    %v2369 = vpack.c.b16 %v2365, %v2364
    %v2375 = vsel %vm48, %v2155, 0
    %v2378 = vsel %vm48, %v2156, 0
    %v2381 = vsel %vm48, %v2157, 0
    %v2384 = vsel %vm48, %v2158, 0
    %v2387 = vsel %vm48, %v2159, 0
    %v2390 = vsel %vm48, %v2160, 0
    %v2393 = vsel %vm48, %v2161, 0
    %v2396 = vsel %vm48, %v2162, 0
    %2398 = vmatprep.subr.bf16.mxu0 0
    %2399 = vmatpush1.bf16.msra.mxu0 %v2366
    %2400 = vmatprep.subr.bf16.mxu0 0
    %2401 = vmatpush1.bf16.msra.mxu0 %v2367
    %2402 = vmatprep.subr.bf16.mxu0 0
    %2403 = vmatpush1.bf16.msra.mxu0 %v2368
    %2404 = vmatprep.subr.bf16.mxu0 0
    %2405 = vmatpush1.bf16.msra.mxu0 %v2369
    %2406 = vmatprep.subr.bf16.mxu0 0
    %2407 = vmatpush1.bf16.msra.mxu0 0
    %2408 = vmatprep.subr.bf16.mxu0 0
    %2409 = vmatpush1.bf16.msra.mxu0 0
    %2410 = vmatprep.subr.bf16.mxu0 0
    %2411 = vmatpush1.bf16.msra.mxu0 0
    %2412 = vmatprep.subr.bf16.mxu0 0
    %2413 = vmatpush1.bf16.msra.mxu0 0
    %2414 = vmatprep.subr.bf16.mxu0 0
    %2415 = vmatpush1.bf16.msra.mxu0 0
    %2416 = vmatprep.subr.bf16.mxu0 0
    %2417 = vmatpush1.bf16.msra.mxu0 0
    %2418 = vmatprep.subr.bf16.mxu0 0
    %2419 = vmatpush1.bf16.msra.mxu0 0
    %2420 = vmatprep.subr.bf16.mxu0 0
    %2421 = vmatpush1.bf16.msra.mxu0 0
    %2422 = vmatprep.subr.bf16.mxu0 0
    %2423 = vmatpush1.bf16.msra.mxu0 0
    %2424 = vmatprep.subr.bf16.mxu0 0
    %2425 = vmatpush1.bf16.msra.mxu0 0
    %2426 = vmatprep.subr.bf16.mxu0 0
    %2427 = vmatpush1.bf16.msra.mxu0 0
    %2428 = vmatprep.subr.bf16.mxu0 0
    %2429 = vmatpush1.bf16.msra.mxu0 0
    %2430 = vmatprep.mubr.bf16.mxu0 0
    %2431 = vmatmul.mubr.bf16.gmra.mrb[0].mxu0 %v2375
    %v2432 = vpop.f32.mrb[0].mxu0
    %v2433 = vadd.f32 %v2288, %v2432
    %v2434 = vpop.f32.mrb[0].mxu0
    %v2435 = vpop.f32.mrb[0].mxu0
    %v2436 = vadd.f32 %v2291, %v2435
    %v2437 = vpop.f32.mrb[0].mxu0
    %2438 = vmatprep.mubr.bf16.mxu0 0
    %2439 = vmatmul.mubr.bf16.gmra.mrb[0].mxu0 %v2378
    %v2440 = vpop.f32.mrb[0].mxu0
    %v2441 = vadd.f32 %v2296, %v2440
    %v2442 = vpop.f32.mrb[0].mxu0
    %v2443 = vpop.f32.mrb[0].mxu0
    %v2444 = vadd.f32 %v2299, %v2443
    %v2445 = vpop.f32.mrb[0].mxu0
    %2446 = vmatprep.mubr.bf16.mxu0 0
    %2447 = vmatmul.mubr.bf16.gmra.mrb[0].mxu0 %v2381
    %v2448 = vpop.f32.mrb[0].mxu0
    %v2449 = vadd.f32 %v2304, %v2448
    %v2450 = vpop.f32.mrb[0].mxu0
    %v2451 = vpop.f32.mrb[0].mxu0
    %v2452 = vadd.f32 %v2307, %v2451
    %v2453 = vpop.f32.mrb[0].mxu0
    %2454 = vmatprep.mubr.bf16.mxu0 0
    %2455 = vmatmul.mubr.bf16.gmra.mrb[0].mxu0 %v2384
    %v2456 = vpop.f32.mrb[0].mxu0
    %v2457 = vadd.f32 %v2312, %v2456
    %v2458 = vpop.f32.mrb[0].mxu0
    %v2459 = vpop.f32.mrb[0].mxu0
    %v2460 = vadd.f32 %v2315, %v2459
    %v2461 = vpop.f32.mrb[0].mxu0
    %2462 = vmatprep.mubr.bf16.mxu0 0
    %2463 = vmatmul.mubr.bf16.gmra.mrb[0].mxu0 %v2387
    %v2464 = vpop.f32.mrb[0].mxu0
    %v2465 = vadd.f32 %v2320, %v2464
    %v2466 = vpop.f32.mrb[0].mxu0
    %v2467 = vpop.f32.mrb[0].mxu0
    %v2468 = vadd.f32 %v2323, %v2467
    %v2469 = vpop.f32.mrb[0].mxu0
    %2470 = vmatprep.mubr.bf16.mxu0 0
    %2471 = vmatmul.mubr.bf16.gmra.mrb[0].mxu0 %v2390
    %v2472 = vpop.f32.mrb[0].mxu0
    %v2473 = vadd.f32 %v2328, %v2472
    %v2474 = vpop.f32.mrb[0].mxu0
    %v2475 = vpop.f32.mrb[0].mxu0
    %v2476 = vadd.f32 %v2331, %v2475
    %v2477 = vpop.f32.mrb[0].mxu0
    %2478 = vmatprep.mubr.bf16.mxu0 0
    %2479 = vmatmul.mubr.bf16.gmra.mrb[0].mxu0 %v2393
    %v2480 = vpop.f32.mrb[0].mxu0
    %v2481 = vadd.f32 %v2336, %v2480
    %v2482 = vpop.f32.mrb[0].mxu0
    %v2483 = vpop.f32.mrb[0].mxu0
    %v2484 = vadd.f32 %v2339, %v2483
    %v2485 = vpop.f32.mrb[0].mxu0
    %2486 = vmatprep.mubr.bf16.mxu0 0
    %2487 = vmatmul.mubr.bf16.gmra.mrb[0].mxu0 %v2396
    %v2488 = vpop.f32.mrb[0].mxu0
    %v2489 = vadd.f32 %v2344, %v2488
    %v2490 = vpop.f32.mrb[0].mxu0
    %v2491 = vpop.f32.mrb[0].mxu0
    %v2492 = vadd.f32 %v2347, %v2491
    %v2493 = vpop.f32.mrb[0].mxu0
    %2494 = vdwg.mxu0
    %v2495 = vld [vmem:[#allocation2 + $0x30] sm:$0xff]
    %v2496 = vld [vmem:[#allocation2 + $0x38] sm:$0xff]
    %v2497 = vld [vmem:[#allocation2 + $0x40] sm:$0xff]
    %v2498 = vld [vmem:[#allocation2 + $0x48] sm:$0xff]
    %v2499 = vld [vmem:[#allocation2 + $0x50] sm:$0xff]
    %v2500 = vld [vmem:[#allocation2 + $0x58] sm:$0xff]
    %v2501 = vld [vmem:[#allocation2 + $0x60] sm:$0xff]
    %v2502 = vld [vmem:[#allocation2 + $0x68] sm:$0xff]
    %v2503 = vld [vmem:[%s61 + $0x30] sm:$0xff]
    %v2504 = vld [vmem:[%s61 + $0x38] sm:$0xff]
    %v2505 = vld [vmem:[%s61 + $0x40] sm:$0xff]
    %v2506 = vld [vmem:[%s61 + $0x48] sm:$0xff]
    %v2507 = vld [vmem:[%s61 + $0x50] sm:$0xff]
    %v2508 = vld [vmem:[%s61 + $0x58] sm:$0xff]
    %v2509 = vld [vmem:[%s61 + $0x60] sm:$0xff]
    %v2510 = vld [vmem:[%s61 + $0x68] sm:$0xff]
    %v2511 = vpack.c.bf16 %v2496, %v2495
    %v2512 = vpack.c.bf16 %v2498, %v2497
    %v2513 = vpack.c.bf16 %v2500, %v2499
    %v2514 = vpack.c.bf16 %v2502, %v2501
    %v2515 = vpack.c.bf16 %v2504, %v2503
    %v2516 = vpack.c.bf16 %v2506, %v2505
    %v2517 = vpack.c.bf16 %v2508, %v2507
    %v2518 = vpack.c.bf16 %v2510, %v2509
    %s2519 = scalar_lea.vmem [#allocation4], 352
    %v2520 = vld [vmem:[%s2519] sm:$0xf]
    %v2521 = vld [vmem:[%s2519 + $0x4] sm:$0xf]
    %v2522 = vld [vmem:[%s2519 + $0x8] sm:$0xf]
    %v2523 = vld [vmem:[%s2519 + $0xc] sm:$0xf]
    %v2524 = vld [vmem:[%s2519 + $0x10] sm:$0xf]
    %v2525 = vld [vmem:[%s2519 + $0x14] sm:$0xf]
    %v2526 = vld [vmem:[%s2519 + $0x18] sm:$0xf]
    %v2527 = vld [vmem:[%s2519 + $0x1c] sm:$0xf]
    %v2536 = vunpack.c.l.b16 %v2520
    %v2537 = vunpack.c.l.b16 %v2521
    %v2538 = vunpack.c.l.b16 %v2522
    %v2539 = vunpack.c.l.b16 %v2523
    %v2540 = vunpack.c.l.b16 %v2524
    %v2541 = vunpack.c.l.b16 %v2525
    %v2542 = vunpack.c.l.b16 %v2526
    %v2543 = vunpack.c.l.b16 %v2527
    %v2544 = vpack.c.b16 %v2537, %v2536
    %v2545 = vpack.c.b16 %v2539, %v2538
    %v2546 = vpack.c.b16 %v2541, %v2540
    %v2547 = vpack.c.b16 %v2543, %v2542
    %v2553 = vsel %vm48, %v2511, 0
    %v2556 = vsel %vm48, %v2512, 0
    %v2559 = vsel %vm48, %v2513, 0
    %v2562 = vsel %vm48, %v2514, 0
    %v2565 = vsel %vm48, %v2515, 0
    %v2568 = vsel %vm48, %v2516, 0
    %v2571 = vsel %vm48, %v2517, 0
    %v2574 = vsel %vm48, %v2518, 0
    %2576 = vmatprep.subr.bf16.mxu0 0
    %2577 = vmatpush1.bf16.msra.mxu0 %v2544
    %2578 = vmatprep.subr.bf16.mxu0 0
    %2579 = vmatpush1.bf16.msra.mxu0 %v2545
    %2580 = vmatprep.subr.bf16.mxu0 0
    %2581 = vmatpush1.bf16.msra.mxu0 %v2546
    %2582 = vmatprep.subr.bf16.mxu0 0
    %2583 = vmatpush1.bf16.msra.mxu0 %v2547
    %2584 = vmatprep.subr.bf16.mxu0 0
    %2585 = vmatpush1.bf16.msra.mxu0 0
    %2586 = vmatprep.subr.bf16.mxu0 0
    %2587 = vmatpush1.bf16.msra.mxu0 0
    %2588 = vmatprep.subr.bf16.mxu0 0
    %2589 = vmatpush1.bf16.msra.mxu0 0
    %2590 = vmatprep.subr.bf16.mxu0 0
    %2591 = vmatpush1.bf16.msra.mxu0 0
    %2592 = vmatprep.subr.bf16.mxu0 0
    %2593 = vmatpush1.bf16.msra.mxu0 0
    %2594 = vmatprep.subr.bf16.mxu0 0
    %2595 = vmatpush1.bf16.msra.mxu0 0
    %2596 = vmatprep.subr.bf16.mxu0 0
    %2597 = vmatpush1.bf16.msra.mxu0 0
    %2598 = vmatprep.subr.bf16.mxu0 0
    %2599 = vmatpush1.bf16.msra.mxu0 0
    %2600 = vmatprep.subr.bf16.mxu0 0
    %2601 = vmatpush1.bf16.msra.mxu0 0
    %2602 = vmatprep.subr.bf16.mxu0 0
    %2603 = vmatpush1.bf16.msra.mxu0 0
    %2604 = vmatprep.subr.bf16.mxu0 0
    %2605 = vmatpush1.bf16.msra.mxu0 0
    %2606 = vmatprep.subr.bf16.mxu0 0
    %2607 = vmatpush1.bf16.msra.mxu0 0
    %2608 = vmatprep.mubr.bf16.mxu0 0
    %2609 = vmatmul.mubr.bf16.gmra.mrb[0].mxu0 %v2553
    %v2610 = vpop.f32.mrb[0].mxu0
    %v2611 = vadd.f32 0.0, %v2610
    %v2612 = vpop.f32.mrb[0].mxu0
    %v2613 = vpop.f32.mrb[0].mxu0
    %v2614 = vadd.f32 0.0, %v2613
    %v2615 = vpop.f32.mrb[0].mxu0
    %2616 = vmatprep.mubr.bf16.mxu0 0
    %2617 = vmatmul.mubr.bf16.gmra.mrb[0].mxu0 %v2556
    %v2618 = vpop.f32.mrb[0].mxu0
    %v2619 = vadd.f32 0.0, %v2618
    %v2620 = vpop.f32.mrb[0].mxu0
    %v2621 = vpop.f32.mrb[0].mxu0
    %v2622 = vadd.f32 0.0, %v2621
    %v2623 = vpop.f32.mrb[0].mxu0
    %2624 = vmatprep.mubr.bf16.mxu0 0
    %2625 = vmatmul.mubr.bf16.gmra.mrb[0].mxu0 %v2559
    %v2626 = vpop.f32.mrb[0].mxu0
    %v2627 = vadd.f32 0.0, %v2626
    %v2628 = vpop.f32.mrb[0].mxu0
    %v2629 = vpop.f32.mrb[0].mxu0
    %v2630 = vadd.f32 0.0, %v2629
    %v2631 = vpop.f32.mrb[0].mxu0
    %2632 = vmatprep.mubr.bf16.mxu0 0
    %2633 = vmatmul.mubr.bf16.gmra.mrb[0].mxu0 %v2562
    %v2634 = vpop.f32.mrb[0].mxu0
    %v2635 = vadd.f32 0.0, %v2634
    %v2636 = vpop.f32.mrb[0].mxu0
    %v2637 = vpop.f32.mrb[0].mxu0
    %v2638 = vadd.f32 0.0, %v2637
    %v2639 = vpop.f32.mrb[0].mxu0
    %2640 = vmatprep.mubr.bf16.mxu0 0
    %2641 = vmatmul.mubr.bf16.gmra.mrb[0].mxu0 %v2565
    %v2642 = vpop.f32.mrb[0].mxu0
    %v2643 = vadd.f32 0.0, %v2642
    %v2644 = vpop.f32.mrb[0].mxu0
    %v2645 = vpop.f32.mrb[0].mxu0
    %v2646 = vadd.f32 0.0, %v2645
    %v2647 = vpop.f32.mrb[0].mxu0
    %2648 = vmatprep.mubr.bf16.mxu0 0
    %2649 = vmatmul.mubr.bf16.gmra.mrb[0].mxu0 %v2568
    %v2650 = vpop.f32.mrb[0].mxu0
    %v2651 = vadd.f32 0.0, %v2650
    %v2652 = vpop.f32.mrb[0].mxu0
    %v2653 = vpop.f32.mrb[0].mxu0
    %v2654 = vadd.f32 0.0, %v2653
    %v2655 = vpop.f32.mrb[0].mxu0
    %2656 = vmatprep.mubr.bf16.mxu0 0
    %2657 = vmatmul.mubr.bf16.gmra.mrb[0].mxu0 %v2571
    %v2658 = vpop.f32.mrb[0].mxu0
    %v2659 = vadd.f32 0.0, %v2658
    %v2660 = vpop.f32.mrb[0].mxu0
    %v2661 = vpop.f32.mrb[0].mxu0
    %v2662 = vadd.f32 0.0, %v2661
    %v2663 = vpop.f32.mrb[0].mxu0
    %2664 = vmatprep.mubr.bf16.mxu0 0
    %2665 = vmatmul.mubr.bf16.gmra.mrb[0].mxu0 %v2574
    %v2666 = vpop.f32.mrb[0].mxu0
    %v2667 = vadd.f32 0.0, %v2666
    %v2668 = vpop.f32.mrb[0].mxu0
    %v2669 = vpop.f32.mrb[0].mxu0
    %v2670 = vadd.f32 0.0, %v2669
    %v2671 = vpop.f32.mrb[0].mxu0
    %2672 = vdwg.mxu0
    %v2673 = vadd.f32 %v2433, %v2611
    %v2674 = vadd.f32 %v2436, %v2614
    %v2675 = vadd.f32 %v2441, %v2619
    %v2676 = vadd.f32 %v2444, %v2622
    %v2677 = vadd.f32 %v2449, %v2627
    %v2678 = vadd.f32 %v2452, %v2630
    %v2679 = vadd.f32 %v2457, %v2635
    %v2680 = vadd.f32 %v2460, %v2638
    %v2681 = vadd.f32 %v2465, %v2643
    %v2682 = vadd.f32 %v2468, %v2646
    %v2683 = vadd.f32 %v2473, %v2651
    %v2684 = vadd.f32 %v2476, %v2654
    %v2685 = vadd.f32 %v2481, %v2659
    %v2686 = vadd.f32 %v2484, %v2662
    %v2687 = vadd.f32 %v2489, %v2667
    %v2688 = vadd.f32 %v2492, %v2670
    %s2689 = scalar_lea.vmem %s4, 3
    %v2690 = vld [vmem:[%s2689] sm:$0x1]
    %v2692 = vlaneseq
    %v2693 = vshrl.u32 %v2692, 7
    %v2694 = vsub.s32 0, %v2693
    %v2695 = vrot.slane %v2690, %v2694
    %v2697 = vadd.f32 %v2673, %v2695
    %v2698 = vadd.f32 %v2674, %v2695
    %v2699 = vadd.f32 %v2675, %v2695
    %v2700 = vadd.f32 %v2676, %v2695
    %v2701 = vadd.f32 %v2677, %v2695
    %v2702 = vadd.f32 %v2678, %v2695
    %v2703 = vadd.f32 %v2679, %v2695
    %v2704 = vadd.f32 %v2680, %v2695
    %v2705 = vadd.f32 %v2681, %v2695
    %v2706 = vadd.f32 %v2682, %v2695
    %v2707 = vadd.f32 %v2683, %v2695
    %v2708 = vadd.f32 %v2684, %v2695
    %v2709 = vadd.f32 %v2685, %v2695
    %v2710 = vadd.f32 %v2686, %v2695
    %v2711 = vadd.f32 %v2687, %v2695
    %v2712 = vadd.f32 %v2688, %v2695
    %v2713 = vmax.f32 %v2697, 0.0
    %v2714 = vmax.f32 %v2698, 0.0
    %v2715 = vmax.f32 %v2699, 0.0
    %v2716 = vmax.f32 %v2700, 0.0
    %v2717 = vmax.f32 %v2701, 0.0
    %v2718 = vmax.f32 %v2702, 0.0
    %v2719 = vmax.f32 %v2703, 0.0
    %v2720 = vmax.f32 %v2704, 0.0
    %v2721 = vmax.f32 %v2705, 0.0
    %v2722 = vmax.f32 %v2706, 0.0
    %v2723 = vmax.f32 %v2707, 0.0
    %v2724 = vmax.f32 %v2708, 0.0
    %v2725 = vmax.f32 %v2709, 0.0
    %v2726 = vmax.f32 %v2710, 0.0
    %v2727 = vmax.f32 %v2711, 0.0
    %v2728 = vmax.f32 %v2712, 0.0
    %v2729 = vadd.f32 %v2123, %v2713
    %v2730 = vadd.f32 %v2124, %v2714
    %v2731 = vadd.f32 %v2125, %v2715
    %v2732 = vadd.f32 %v2126, %v2716
    %v2733 = vadd.f32 %v2127, %v2717
    %v2734 = vadd.f32 %v2128, %v2718
    %v2735 = vadd.f32 %v2129, %v2719
    %v2736 = vadd.f32 %v2130, %v2720
    %v2737 = vadd.f32 %v2131, %v2721
    %v2738 = vadd.f32 %v2132, %v2722
    %v2739 = vadd.f32 %v2133, %v2723
    %v2740 = vadd.f32 %v2134, %v2724
    %v2741 = vadd.f32 %v2135, %v2725
    %v2742 = vadd.f32 %v2136, %v2726
    %v2743 = vadd.f32 %v2137, %v2727
    %v2744 = vadd.f32 %v2138, %v2728
    %2745 = vst.msk [vmem:[#allocation2 + $0x20] sm:$0xff] %vm48, %v2729
    %2746 = vst.msk [vmem:[#allocation2 + $0x28] sm:$0xff] %vm48, %v2730
    %2747 = vst.msk [vmem:[#allocation2 + $0x30] sm:$0xff] %vm48, %v2731
    %2748 = vst.msk [vmem:[#allocation2 + $0x38] sm:$0xff] %vm48, %v2732
    %2749 = vst.msk [vmem:[#allocation2 + $0x40] sm:$0xff] %vm48, %v2733
    %2750 = vst.msk [vmem:[#allocation2 + $0x48] sm:$0xff] %vm48, %v2734
    %2751 = vst.msk [vmem:[#allocation2 + $0x50] sm:$0xff] %vm48, %v2735
    %2752 = vst.msk [vmem:[#allocation2 + $0x58] sm:$0xff] %vm48, %v2736
    %2753 = vst.msk [vmem:[%s61 + $0x20] sm:$0xff] %vm48, %v2737
    %2754 = vst.msk [vmem:[%s61 + $0x28] sm:$0xff] %vm48, %v2738
    %2755 = vst.msk [vmem:[%s61 + $0x30] sm:$0xff] %vm48, %v2739
    %2756 = vst.msk [vmem:[%s61 + $0x38] sm:$0xff] %vm48, %v2740
    %2757 = vst.msk [vmem:[%s61 + $0x40] sm:$0xff] %vm48, %v2741
    %2758 = vst.msk [vmem:[%s61 + $0x48] sm:$0xff] %vm48, %v2742
    %2759 = vst.msk [vmem:[%s61 + $0x50] sm:$0xff] %vm48, %v2743
    %2760 = vst.msk [vmem:[%s61 + $0x58] sm:$0xff] %vm48, %v2744
    %v2761 = vpack.c.bf16 %v2730, %v2729
    %v2762 = vpack.c.bf16 %v2732, %v2731
    %v2763 = vpack.c.bf16 %v2734, %v2733
    %v2764 = vpack.c.bf16 %v2736, %v2735
    %v2765 = vpack.c.bf16 %v2738, %v2737
    %v2766 = vpack.c.bf16 %v2740, %v2739
    %v2767 = vpack.c.bf16 %v2742, %v2741
    %v2768 = vpack.c.bf16 %v2744, %v2743
    %s2769 = scalar_lea.vmem [#allocation4], 416
    %v2770 = vld [vmem:[%s2769] sm:$0xf]
    %v2771 = vld [vmem:[%s2769 + $0x4] sm:$0xf]
    %v2772 = vld [vmem:[%s2769 + $0x8] sm:$0xf]
    %v2773 = vld [vmem:[%s2769 + $0xc] sm:$0xf]
    %v2774 = vld [vmem:[%s2769 + $0x10] sm:$0xf]
    %v2775 = vld [vmem:[%s2769 + $0x14] sm:$0xf]
    %v2776 = vld [vmem:[%s2769 + $0x18] sm:$0xf]
    %v2777 = vld [vmem:[%s2769 + $0x1c] sm:$0xf]
    %v2778 = vld [vmem:[#allocation2] sm:$0xff]
    %v2779 = vld [vmem:[#allocation2 + $0x8] sm:$0xff]
    %v2780 = vld [vmem:[#allocation2 + $0x10] sm:$0xff]
    %v2781 = vld [vmem:[#allocation2 + $0x18] sm:$0xff]
    %v2782 = vld [vmem:[#allocation2 + $0x20] sm:$0xff]
    %v2783 = vld [vmem:[#allocation2 + $0x28] sm:$0xff]
    %v2784 = vld [vmem:[#allocation2 + $0x30] sm:$0xff]
    %v2785 = vld [vmem:[#allocation2 + $0x38] sm:$0xff]
    %v2786 = vld [vmem:[%s61] sm:$0xff]
    %v2787 = vld [vmem:[%s61 + $0x8] sm:$0xff]
    %v2788 = vld [vmem:[%s61 + $0x10] sm:$0xff]
    %v2789 = vld [vmem:[%s61 + $0x18] sm:$0xff]
    %v2790 = vld [vmem:[%s61 + $0x20] sm:$0xff]
    %v2791 = vld [vmem:[%s61 + $0x28] sm:$0xff]
    %v2792 = vld [vmem:[%s61 + $0x30] sm:$0xff]
    %v2793 = vld [vmem:[%s61 + $0x38] sm:$0xff]
    %v2794 = vpack.c.bf16 %v2779, %v2778
    %v2795 = vpack.c.bf16 %v2781, %v2780
    %v2796 = vpack.c.bf16 %v2783, %v2782
    %v2797 = vpack.c.bf16 %v2785, %v2784
    %v2798 = vpack.c.bf16 %v2787, %v2786
    %v2799 = vpack.c.bf16 %v2789, %v2788
    %v2800 = vpack.c.bf16 %v2791, %v2790
    %v2801 = vpack.c.bf16 %v2793, %v2792
    %s2802 = scalar_lea.vmem [#allocation4], 384
    %v2803 = vld [vmem:[%s2802] sm:$0xf]
    %v2804 = vld [vmem:[%s2802 + $0x4] sm:$0xf]
    %v2805 = vld [vmem:[%s2802 + $0x8] sm:$0xf]
    %v2806 = vld [vmem:[%s2802 + $0xc] sm:$0xf]
    %v2807 = vld [vmem:[%s2802 + $0x10] sm:$0xf]
    %v2808 = vld [vmem:[%s2802 + $0x14] sm:$0xf]
    %v2809 = vld [vmem:[%s2802 + $0x18] sm:$0xf]
    %v2810 = vld [vmem:[%s2802 + $0x1c] sm:$0xf]
    %v2819 = vunpack.c.l.b16 %v2803
    %v2820 = vunpack.c.l.b16 %v2804
    %v2821 = vunpack.c.l.b16 %v2805
    %v2822 = vunpack.c.l.b16 %v2806
    %v2823 = vunpack.c.l.b16 %v2807
    %v2824 = vunpack.c.l.b16 %v2808
    %v2825 = vunpack.c.l.b16 %v2809
    %v2826 = vunpack.c.l.b16 %v2810
    %v2827 = vpack.c.b16 %v2820, %v2819
    %v2828 = vpack.c.b16 %v2822, %v2821
    %v2829 = vpack.c.b16 %v2824, %v2823
    %v2830 = vpack.c.b16 %v2826, %v2825
    %v2836 = vsel %vm48, %v2794, 0
    %v2839 = vsel %vm48, %v2795, 0
    %v2842 = vsel %vm48, %v2796, 0
    %v2845 = vsel %vm48, %v2797, 0
    %v2848 = vsel %vm48, %v2798, 0
    %v2851 = vsel %vm48, %v2799, 0
    %v2854 = vsel %vm48, %v2800, 0
    %v2857 = vsel %vm48, %v2801, 0
    %2859 = vmatprep.subr.bf16.mxu0 0
    %2860 = vmatpush1.bf16.msra.mxu0 %v2827
    %2861 = vmatprep.subr.bf16.mxu0 0
    %2862 = vmatpush1.bf16.msra.mxu0 %v2828
    %2863 = vmatprep.subr.bf16.mxu0 0
    %2864 = vmatpush1.bf16.msra.mxu0 %v2829
    %2865 = vmatprep.subr.bf16.mxu0 0
    %2866 = vmatpush1.bf16.msra.mxu0 %v2830
    %2867 = vmatprep.subr.bf16.mxu0 0
    %2868 = vmatpush1.bf16.msra.mxu0 0
    %2869 = vmatprep.subr.bf16.mxu0 0
    %2870 = vmatpush1.bf16.msra.mxu0 0
    %2871 = vmatprep.subr.bf16.mxu0 0
    %2872 = vmatpush1.bf16.msra.mxu0 0
    %2873 = vmatprep.subr.bf16.mxu0 0
    %2874 = vmatpush1.bf16.msra.mxu0 0
    %2875 = vmatprep.subr.bf16.mxu0 0
    %2876 = vmatpush1.bf16.msra.mxu0 0
    %2877 = vmatprep.subr.bf16.mxu0 0
    %2878 = vmatpush1.bf16.msra.mxu0 0
    %2879 = vmatprep.subr.bf16.mxu0 0
    %2880 = vmatpush1.bf16.msra.mxu0 0
    %2881 = vmatprep.subr.bf16.mxu0 0
    %2882 = vmatpush1.bf16.msra.mxu0 0
    %2883 = vmatprep.subr.bf16.mxu0 0
    %2884 = vmatpush1.bf16.msra.mxu0 0
    %2885 = vmatprep.subr.bf16.mxu0 0
    %2886 = vmatpush1.bf16.msra.mxu0 0
    %2887 = vmatprep.subr.bf16.mxu0 0
    %2888 = vmatpush1.bf16.msra.mxu0 0
    %2889 = vmatprep.subr.bf16.mxu0 0
    %2890 = vmatpush1.bf16.msra.mxu0 0
    %2891 = vmatprep.mubr.bf16.mxu0 0
    %2892 = vmatmul.mubr.bf16.gmra.mrb[0].mxu0 %v2836
    %v2893 = vpop.f32.mrb[0].mxu0
    %v2894 = vadd.f32 0.0, %v2893
    %v2895 = vpop.f32.mrb[0].mxu0
    %v2896 = vpop.f32.mrb[0].mxu0
    %v2897 = vadd.f32 0.0, %v2896
    %v2898 = vpop.f32.mrb[0].mxu0
    %2899 = vmatprep.mubr.bf16.mxu0 0
    %2900 = vmatmul.mubr.bf16.gmra.mrb[0].mxu0 %v2839
    %v2901 = vpop.f32.mrb[0].mxu0
    %v2902 = vadd.f32 0.0, %v2901
    %v2903 = vpop.f32.mrb[0].mxu0
    %v2904 = vpop.f32.mrb[0].mxu0
    %v2905 = vadd.f32 0.0, %v2904
    %v2906 = vpop.f32.mrb[0].mxu0
    %2907 = vmatprep.mubr.bf16.mxu0 0
    %2908 = vmatmul.mubr.bf16.gmra.mrb[0].mxu0 %v2842
    %v2909 = vpop.f32.mrb[0].mxu0
    %v2910 = vadd.f32 0.0, %v2909
    %v2911 = vpop.f32.mrb[0].mxu0
    %v2912 = vpop.f32.mrb[0].mxu0
    %v2913 = vadd.f32 0.0, %v2912
    %v2914 = vpop.f32.mrb[0].mxu0
    %2915 = vmatprep.mubr.bf16.mxu0 0
    %2916 = vmatmul.mubr.bf16.gmra.mrb[0].mxu0 %v2845
    %v2917 = vpop.f32.mrb[0].mxu0
    %v2918 = vadd.f32 0.0, %v2917
    %v2919 = vpop.f32.mrb[0].mxu0
    %v2920 = vpop.f32.mrb[0].mxu0
    %v2921 = vadd.f32 0.0, %v2920
    %v2922 = vpop.f32.mrb[0].mxu0
    %2923 = vmatprep.mubr.bf16.mxu0 0
    %2924 = vmatmul.mubr.bf16.gmra.mrb[0].mxu0 %v2848
    %v2925 = vpop.f32.mrb[0].mxu0
    %v2926 = vadd.f32 0.0, %v2925
    %v2927 = vpop.f32.mrb[0].mxu0
    %v2928 = vpop.f32.mrb[0].mxu0
    %v2929 = vadd.f32 0.0, %v2928
    %v2930 = vpop.f32.mrb[0].mxu0
    %2931 = vmatprep.mubr.bf16.mxu0 0
    %2932 = vmatmul.mubr.bf16.gmra.mrb[0].mxu0 %v2851
    %v2933 = vpop.f32.mrb[0].mxu0
    %v2934 = vadd.f32 0.0, %v2933
    %v2935 = vpop.f32.mrb[0].mxu0
    %v2936 = vpop.f32.mrb[0].mxu0
    %v2937 = vadd.f32 0.0, %v2936
    %v2938 = vpop.f32.mrb[0].mxu0
    %2939 = vmatprep.mubr.bf16.mxu0 0
    %2940 = vmatmul.mubr.bf16.gmra.mrb[0].mxu0 %v2854
    %v2941 = vpop.f32.mrb[0].mxu0
    %v2942 = vadd.f32 0.0, %v2941
    %v2943 = vpop.f32.mrb[0].mxu0
    %v2944 = vpop.f32.mrb[0].mxu0
    %v2945 = vadd.f32 0.0, %v2944
    %v2946 = vpop.f32.mrb[0].mxu0
    %2947 = vmatprep.mubr.bf16.mxu0 0
    %2948 = vmatmul.mubr.bf16.gmra.mrb[0].mxu0 %v2857
    %v2949 = vpop.f32.mrb[0].mxu0
    %v2950 = vadd.f32 0.0, %v2949
    %v2951 = vpop.f32.mrb[0].mxu0
    %v2952 = vpop.f32.mrb[0].mxu0
    %v2953 = vadd.f32 0.0, %v2952
    %v2954 = vpop.f32.mrb[0].mxu0
    %2955 = vdwg.mxu0
    %v2964 = vunpack.c.l.b16 %v2770
    %v2965 = vunpack.c.l.b16 %v2771
    %v2966 = vunpack.c.l.b16 %v2772
    %v2967 = vunpack.c.l.b16 %v2773
    %v2968 = vunpack.c.l.b16 %v2774
    %v2969 = vunpack.c.l.b16 %v2775
    %v2970 = vunpack.c.l.b16 %v2776
    %v2971 = vunpack.c.l.b16 %v2777
    %v2972 = vpack.c.b16 %v2965, %v2964
    %v2973 = vpack.c.b16 %v2967, %v2966
    %v2974 = vpack.c.b16 %v2969, %v2968
    %v2975 = vpack.c.b16 %v2971, %v2970
    %v2981 = vsel %vm48, %v2761, 0
    %v2984 = vsel %vm48, %v2762, 0
    %v2987 = vsel %vm48, %v2763, 0
    %v2990 = vsel %vm48, %v2764, 0
    %v2993 = vsel %vm48, %v2765, 0
    %v2996 = vsel %vm48, %v2766, 0
    %v2999 = vsel %vm48, %v2767, 0
    %v3002 = vsel %vm48, %v2768, 0
    %3004 = vmatprep.subr.bf16.mxu0 0
    %3005 = vmatpush1.bf16.msra.mxu0 %v2972
    %3006 = vmatprep.subr.bf16.mxu0 0
    %3007 = vmatpush1.bf16.msra.mxu0 %v2973
    %3008 = vmatprep.subr.bf16.mxu0 0
    %3009 = vmatpush1.bf16.msra.mxu0 %v2974
    %3010 = vmatprep.subr.bf16.mxu0 0
    %3011 = vmatpush1.bf16.msra.mxu0 %v2975
    %3012 = vmatprep.subr.bf16.mxu0 0
    %3013 = vmatpush1.bf16.msra.mxu0 0
    %3014 = vmatprep.subr.bf16.mxu0 0
    %3015 = vmatpush1.bf16.msra.mxu0 0
    %3016 = vmatprep.subr.bf16.mxu0 0
    %3017 = vmatpush1.bf16.msra.mxu0 0
    %3018 = vmatprep.subr.bf16.mxu0 0
    %3019 = vmatpush1.bf16.msra.mxu0 0
    %3020 = vmatprep.subr.bf16.mxu0 0
    %3021 = vmatpush1.bf16.msra.mxu0 0
    %3022 = vmatprep.subr.bf16.mxu0 0
    %3023 = vmatpush1.bf16.msra.mxu0 0
    %3024 = vmatprep.subr.bf16.mxu0 0
    %3025 = vmatpush1.bf16.msra.mxu0 0
    %3026 = vmatprep.subr.bf16.mxu0 0
    %3027 = vmatpush1.bf16.msra.mxu0 0
    %3028 = vmatprep.subr.bf16.mxu0 0
    %3029 = vmatpush1.bf16.msra.mxu0 0
    %3030 = vmatprep.subr.bf16.mxu0 0
    %3031 = vmatpush1.bf16.msra.mxu0 0
    %3032 = vmatprep.subr.bf16.mxu0 0
    %3033 = vmatpush1.bf16.msra.mxu0 0
    %3034 = vmatprep.subr.bf16.mxu0 0
    %3035 = vmatpush1.bf16.msra.mxu0 0
    %3036 = vmatprep.mubr.bf16.mxu0 0
    %3037 = vmatmul.mubr.bf16.gmra.mrb[0].mxu0 %v2981
    %v3038 = vpop.f32.mrb[0].mxu0
    %v3039 = vadd.f32 %v2894, %v3038
    %v3040 = vpop.f32.mrb[0].mxu0
    %v3041 = vpop.f32.mrb[0].mxu0
    %v3042 = vadd.f32 %v2897, %v3041
    %v3043 = vpop.f32.mrb[0].mxu0
    %3044 = vmatprep.mubr.bf16.mxu0 0
    %3045 = vmatmul.mubr.bf16.gmra.mrb[0].mxu0 %v2984
    %v3046 = vpop.f32.mrb[0].mxu0
    %v3047 = vadd.f32 %v2902, %v3046
    %v3048 = vpop.f32.mrb[0].mxu0
    %v3049 = vpop.f32.mrb[0].mxu0
    %v3050 = vadd.f32 %v2905, %v3049
    %v3051 = vpop.f32.mrb[0].mxu0
    %3052 = vmatprep.mubr.bf16.mxu0 0
    %3053 = vmatmul.mubr.bf16.gmra.mrb[0].mxu0 %v2987
    %v3054 = vpop.f32.mrb[0].mxu0
    %v3055 = vadd.f32 %v2910, %v3054
    %v3056 = vpop.f32.mrb[0].mxu0
    %v3057 = vpop.f32.mrb[0].mxu0
    %v3058 = vadd.f32 %v2913, %v3057
    %v3059 = vpop.f32.mrb[0].mxu0
    %3060 = vmatprep.mubr.bf16.mxu0 0
    %3061 = vmatmul.mubr.bf16.gmra.mrb[0].mxu0 %v2990
    %v3062 = vpop.f32.mrb[0].mxu0
    %v3063 = vadd.f32 %v2918, %v3062
    %v3064 = vpop.f32.mrb[0].mxu0
    %v3065 = vpop.f32.mrb[0].mxu0
    %v3066 = vadd.f32 %v2921, %v3065
    %v3067 = vpop.f32.mrb[0].mxu0
    %3068 = vmatprep.mubr.bf16.mxu0 0
    %3069 = vmatmul.mubr.bf16.gmra.mrb[0].mxu0 %v2993
    %v3070 = vpop.f32.mrb[0].mxu0
    %v3071 = vadd.f32 %v2926, %v3070
    %v3072 = vpop.f32.mrb[0].mxu0
    %v3073 = vpop.f32.mrb[0].mxu0
    %v3074 = vadd.f32 %v2929, %v3073
    %v3075 = vpop.f32.mrb[0].mxu0
    %3076 = vmatprep.mubr.bf16.mxu0 0
    %3077 = vmatmul.mubr.bf16.gmra.mrb[0].mxu0 %v2996
    %v3078 = vpop.f32.mrb[0].mxu0
    %v3079 = vadd.f32 %v2934, %v3078
    %v3080 = vpop.f32.mrb[0].mxu0
    %v3081 = vpop.f32.mrb[0].mxu0
    %v3082 = vadd.f32 %v2937, %v3081
    %v3083 = vpop.f32.mrb[0].mxu0
    %3084 = vmatprep.mubr.bf16.mxu0 0
    %3085 = vmatmul.mubr.bf16.gmra.mrb[0].mxu0 %v2999
    %v3086 = vpop.f32.mrb[0].mxu0
    %v3087 = vadd.f32 %v2942, %v3086
    %v3088 = vpop.f32.mrb[0].mxu0
    %v3089 = vpop.f32.mrb[0].mxu0
    %v3090 = vadd.f32 %v2945, %v3089
    %v3091 = vpop.f32.mrb[0].mxu0
    %3092 = vmatprep.mubr.bf16.mxu0 0
    %3093 = vmatmul.mubr.bf16.gmra.mrb[0].mxu0 %v3002
    %v3094 = vpop.f32.mrb[0].mxu0
    %v3095 = vadd.f32 %v2950, %v3094
    %v3096 = vpop.f32.mrb[0].mxu0
    %v3097 = vpop.f32.mrb[0].mxu0
    %v3098 = vadd.f32 %v2953, %v3097
    %v3099 = vpop.f32.mrb[0].mxu0
    %3100 = vdwg.mxu0
    %v3101 = vld [vmem:[#allocation2 + $0x40] sm:$0xff]
    %v3102 = vld [vmem:[#allocation2 + $0x48] sm:$0xff]
    %v3103 = vld [vmem:[#allocation2 + $0x50] sm:$0xff]
    %v3104 = vld [vmem:[#allocation2 + $0x58] sm:$0xff]
    %v3105 = vld [vmem:[#allocation2 + $0x60] sm:$0xff]
    %v3106 = vld [vmem:[#allocation2 + $0x68] sm:$0xff]
    %v3107 = vld [vmem:[#allocation2 + $0x70] sm:$0xff]
    %v3108 = vld [vmem:[#allocation2 + $0x78] sm:$0xff]
    %v3109 = vld [vmem:[%s61 + $0x40] sm:$0xff]
    %v3110 = vld [vmem:[%s61 + $0x48] sm:$0xff]
    %v3111 = vld [vmem:[%s61 + $0x50] sm:$0xff]
    %v3112 = vld [vmem:[%s61 + $0x58] sm:$0xff]
    %v3113 = vld [vmem:[%s61 + $0x60] sm:$0xff]
    %v3114 = vld [vmem:[%s61 + $0x68] sm:$0xff]
    %v3115 = vld [vmem:[%s61 + $0x70] sm:$0xff]
    %v3116 = vld [vmem:[%s61 + $0x78] sm:$0xff]
    %v3117 = vpack.c.bf16 %v3102, %v3101
    %v3118 = vpack.c.bf16 %v3104, %v3103
    %v3119 = vpack.c.bf16 %v3106, %v3105
    %v3120 = vpack.c.bf16 %v3108, %v3107
    %v3121 = vpack.c.bf16 %v3110, %v3109
    %v3122 = vpack.c.bf16 %v3112, %v3111
    %v3123 = vpack.c.bf16 %v3114, %v3113
    %v3124 = vpack.c.bf16 %v3116, %v3115
    %s3125 = scalar_lea.vmem [#allocation4], 448
    %v3126 = vld [vmem:[%s3125] sm:$0xf]
    %v3127 = vld [vmem:[%s3125 + $0x4] sm:$0xf]
    %v3128 = vld [vmem:[%s3125 + $0x8] sm:$0xf]
    %v3129 = vld [vmem:[%s3125 + $0xc] sm:$0xf]
    %v3130 = vld [vmem:[%s3125 + $0x10] sm:$0xf]
    %v3131 = vld [vmem:[%s3125 + $0x14] sm:$0xf]
    %v3132 = vld [vmem:[%s3125 + $0x18] sm:$0xf]
    %v3133 = vld [vmem:[%s3125 + $0x1c] sm:$0xf]
    %v3142 = vunpack.c.l.b16 %v3126
    %v3143 = vunpack.c.l.b16 %v3127
    %v3144 = vunpack.c.l.b16 %v3128
    %v3145 = vunpack.c.l.b16 %v3129
    %v3146 = vunpack.c.l.b16 %v3130
    %v3147 = vunpack.c.l.b16 %v3131
    %v3148 = vunpack.c.l.b16 %v3132
    %v3149 = vunpack.c.l.b16 %v3133
    %v3150 = vpack.c.b16 %v3143, %v3142
    %v3151 = vpack.c.b16 %v3145, %v3144
    %v3152 = vpack.c.b16 %v3147, %v3146
    %v3153 = vpack.c.b16 %v3149, %v3148
    %v3159 = vsel %vm48, %v3117, 0
    %v3162 = vsel %vm48, %v3118, 0
    %v3165 = vsel %vm48, %v3119, 0
    %v3168 = vsel %vm48, %v3120, 0
    %v3171 = vsel %vm48, %v3121, 0
    %v3174 = vsel %vm48, %v3122, 0
    %v3177 = vsel %vm48, %v3123, 0
    %v3180 = vsel %vm48, %v3124, 0
    %3182 = vmatprep.subr.bf16.mxu0 0
    %3183 = vmatpush1.bf16.msra.mxu0 %v3150
    %3184 = vmatprep.subr.bf16.mxu0 0
    %3185 = vmatpush1.bf16.msra.mxu0 %v3151
    %3186 = vmatprep.subr.bf16.mxu0 0
    %3187 = vmatpush1.bf16.msra.mxu0 %v3152
    %3188 = vmatprep.subr.bf16.mxu0 0
    %3189 = vmatpush1.bf16.msra.mxu0 %v3153
    %3190 = vmatprep.subr.bf16.mxu0 0
    %3191 = vmatpush1.bf16.msra.mxu0 0
    %3192 = vmatprep.subr.bf16.mxu0 0
    %3193 = vmatpush1.bf16.msra.mxu0 0
    %3194 = vmatprep.subr.bf16.mxu0 0
    %3195 = vmatpush1.bf16.msra.mxu0 0
    %3196 = vmatprep.subr.bf16.mxu0 0
    %3197 = vmatpush1.bf16.msra.mxu0 0
    %3198 = vmatprep.subr.bf16.mxu0 0
    %3199 = vmatpush1.bf16.msra.mxu0 0
    %3200 = vmatprep.subr.bf16.mxu0 0
    %3201 = vmatpush1.bf16.msra.mxu0 0
    %3202 = vmatprep.subr.bf16.mxu0 0
    %3203 = vmatpush1.bf16.msra.mxu0 0
    %3204 = vmatprep.subr.bf16.mxu0 0
    %3205 = vmatpush1.bf16.msra.mxu0 0
    %3206 = vmatprep.subr.bf16.mxu0 0
    %3207 = vmatpush1.bf16.msra.mxu0 0
    %3208 = vmatprep.subr.bf16.mxu0 0
    %3209 = vmatpush1.bf16.msra.mxu0 0
    %3210 = vmatprep.subr.bf16.mxu0 0
    %3211 = vmatpush1.bf16.msra.mxu0 0
    %3212 = vmatprep.subr.bf16.mxu0 0
    %3213 = vmatpush1.bf16.msra.mxu0 0
    %3214 = vmatprep.mubr.bf16.mxu0 0
    %3215 = vmatmul.mubr.bf16.gmra.mrb[0].mxu0 %v3159
    %v3216 = vpop.f32.mrb[0].mxu0
    %v3217 = vadd.f32 0.0, %v3216
    %v3218 = vpop.f32.mrb[0].mxu0
    %v3219 = vpop.f32.mrb[0].mxu0
    %v3220 = vadd.f32 0.0, %v3219
    %v3221 = vpop.f32.mrb[0].mxu0
    %3222 = vmatprep.mubr.bf16.mxu0 0
    %3223 = vmatmul.mubr.bf16.gmra.mrb[0].mxu0 %v3162
    %v3224 = vpop.f32.mrb[0].mxu0
    %v3225 = vadd.f32 0.0, %v3224
    %v3226 = vpop.f32.mrb[0].mxu0
    %v3227 = vpop.f32.mrb[0].mxu0
    %v3228 = vadd.f32 0.0, %v3227
    %v3229 = vpop.f32.mrb[0].mxu0
    %3230 = vmatprep.mubr.bf16.mxu0 0
    %3231 = vmatmul.mubr.bf16.gmra.mrb[0].mxu0 %v3165
    %v3232 = vpop.f32.mrb[0].mxu0
    %v3233 = vadd.f32 0.0, %v3232
    %v3234 = vpop.f32.mrb[0].mxu0
    %v3235 = vpop.f32.mrb[0].mxu0
    %v3236 = vadd.f32 0.0, %v3235
    %v3237 = vpop.f32.mrb[0].mxu0
    %3238 = vmatprep.mubr.bf16.mxu0 0
    %3239 = vmatmul.mubr.bf16.gmra.mrb[0].mxu0 %v3168
    %v3240 = vpop.f32.mrb[0].mxu0
    %v3241 = vadd.f32 0.0, %v3240
    %v3242 = vpop.f32.mrb[0].mxu0
    %v3243 = vpop.f32.mrb[0].mxu0
    %v3244 = vadd.f32 0.0, %v3243
    %v3245 = vpop.f32.mrb[0].mxu0
    %3246 = vmatprep.mubr.bf16.mxu0 0
    %3247 = vmatmul.mubr.bf16.gmra.mrb[0].mxu0 %v3171
    %v3248 = vpop.f32.mrb[0].mxu0
    %v3249 = vadd.f32 0.0, %v3248
    %v3250 = vpop.f32.mrb[0].mxu0
    %v3251 = vpop.f32.mrb[0].mxu0
    %v3252 = vadd.f32 0.0, %v3251
    %v3253 = vpop.f32.mrb[0].mxu0
    %3254 = vmatprep.mubr.bf16.mxu0 0
    %3255 = vmatmul.mubr.bf16.gmra.mrb[0].mxu0 %v3174
    %v3256 = vpop.f32.mrb[0].mxu0
    %v3257 = vadd.f32 0.0, %v3256
    %v3258 = vpop.f32.mrb[0].mxu0
    %v3259 = vpop.f32.mrb[0].mxu0
    %v3260 = vadd.f32 0.0, %v3259
    %v3261 = vpop.f32.mrb[0].mxu0
    %3262 = vmatprep.mubr.bf16.mxu0 0
    %3263 = vmatmul.mubr.bf16.gmra.mrb[0].mxu0 %v3177
    %v3264 = vpop.f32.mrb[0].mxu0
    %v3265 = vadd.f32 0.0, %v3264
    %v3266 = vpop.f32.mrb[0].mxu0
    %v3267 = vpop.f32.mrb[0].mxu0
    %v3268 = vadd.f32 0.0, %v3267
    %v3269 = vpop.f32.mrb[0].mxu0
    %3270 = vmatprep.mubr.bf16.mxu0 0
    %3271 = vmatmul.mubr.bf16.gmra.mrb[0].mxu0 %v3180
    %v3272 = vpop.f32.mrb[0].mxu0
    %v3273 = vadd.f32 0.0, %v3272
    %v3274 = vpop.f32.mrb[0].mxu0
    %v3275 = vpop.f32.mrb[0].mxu0
    %v3276 = vadd.f32 0.0, %v3275
    %v3277 = vpop.f32.mrb[0].mxu0
    %3278 = vdwg.mxu0
    %v3279 = vadd.f32 %v3039, %v3217
    %v3280 = vadd.f32 %v3042, %v3220
    %v3281 = vadd.f32 %v3047, %v3225
    %v3282 = vadd.f32 %v3050, %v3228
    %v3283 = vadd.f32 %v3055, %v3233
    %v3284 = vadd.f32 %v3058, %v3236
    %v3285 = vadd.f32 %v3063, %v3241
    %v3286 = vadd.f32 %v3066, %v3244
    %v3287 = vadd.f32 %v3071, %v3249
    %v3288 = vadd.f32 %v3074, %v3252
    %v3289 = vadd.f32 %v3079, %v3257
    %v3290 = vadd.f32 %v3082, %v3260
    %v3291 = vadd.f32 %v3087, %v3265
    %v3292 = vadd.f32 %v3090, %v3268
    %v3293 = vadd.f32 %v3095, %v3273
    %v3294 = vadd.f32 %v3098, %v3276
    %s3295 = scalar_lea.vmem %s4, 4
    %v3296 = vld [vmem:[%s3295] sm:$0x1]
    %v3298 = vlaneseq
    %v3299 = vshrl.u32 %v3298, 7
    %v3300 = vsub.s32 0, %v3299
    %v3301 = vrot.slane %v3296, %v3300
    %v3303 = vadd.f32 %v3279, %v3301
    %v3304 = vadd.f32 %v3280, %v3301
    %v3305 = vadd.f32 %v3281, %v3301
    %v3306 = vadd.f32 %v3282, %v3301
    %v3307 = vadd.f32 %v3283, %v3301
    %v3308 = vadd.f32 %v3284, %v3301
    %v3309 = vadd.f32 %v3285, %v3301
    %v3310 = vadd.f32 %v3286, %v3301
    %v3311 = vadd.f32 %v3287, %v3301
    %v3312 = vadd.f32 %v3288, %v3301
    %v3313 = vadd.f32 %v3289, %v3301
    %v3314 = vadd.f32 %v3290, %v3301
    %v3315 = vadd.f32 %v3291, %v3301
    %v3316 = vadd.f32 %v3292, %v3301
    %v3317 = vadd.f32 %v3293, %v3301
    %v3318 = vadd.f32 %v3294, %v3301
    %v3319 = vmax.f32 %v3303, 0.0
    %v3320 = vmax.f32 %v3304, 0.0
    %v3321 = vmax.f32 %v3305, 0.0
    %v3322 = vmax.f32 %v3306, 0.0
    %v3323 = vmax.f32 %v3307, 0.0
    %v3324 = vmax.f32 %v3308, 0.0
    %v3325 = vmax.f32 %v3309, 0.0
    %v3326 = vmax.f32 %v3310, 0.0
    %v3327 = vmax.f32 %v3311, 0.0
    %v3328 = vmax.f32 %v3312, 0.0
    %v3329 = vmax.f32 %v3313, 0.0
    %v3330 = vmax.f32 %v3314, 0.0
    %v3331 = vmax.f32 %v3315, 0.0
    %v3332 = vmax.f32 %v3316, 0.0
    %v3333 = vmax.f32 %v3317, 0.0
    %v3334 = vmax.f32 %v3318, 0.0
    %v3335 = vadd.f32 %v2729, %v3319
    %v3336 = vadd.f32 %v2730, %v3320
    %v3337 = vadd.f32 %v2731, %v3321
    %v3338 = vadd.f32 %v2732, %v3322
    %v3339 = vadd.f32 %v2733, %v3323
    %v3340 = vadd.f32 %v2734, %v3324
    %v3341 = vadd.f32 %v2735, %v3325
    %v3342 = vadd.f32 %v2736, %v3326
    %v3343 = vadd.f32 %v2737, %v3327
    %v3344 = vadd.f32 %v2738, %v3328
    %v3345 = vadd.f32 %v2739, %v3329
    %v3346 = vadd.f32 %v2740, %v3330
    %v3347 = vadd.f32 %v2741, %v3331
    %v3348 = vadd.f32 %v2742, %v3332
    %v3349 = vadd.f32 %v2743, %v3333
    %v3350 = vadd.f32 %v2744, %v3334
    %v3351 = vpack.c.bf16 %v3336, %v3335
    %v3352 = vpack.c.bf16 %v3338, %v3337
    %v3353 = vpack.c.bf16 %v3340, %v3339
    %v3354 = vpack.c.bf16 %v3342, %v3341
    %v3355 = vpack.c.bf16 %v3344, %v3343
    %v3356 = vpack.c.bf16 %v3346, %v3345
    %v3357 = vpack.c.bf16 %v3348, %v3347
    %v3358 = vpack.c.bf16 %v3350, %v3349
    %s3359 = scalar_lea.vmem [#allocation4], 512
    %v3360 = vld [vmem:[%s3359] sm:$0xf]
    %v3361 = vld [vmem:[%s3359 + $0x4] sm:$0xf]
    %v3362 = vld [vmem:[%s3359 + $0x8] sm:$0xf]
    %v3363 = vld [vmem:[%s3359 + $0xc] sm:$0xf]
    %v3364 = vld [vmem:[%s3359 + $0x10] sm:$0xf]
    %v3365 = vld [vmem:[%s3359 + $0x14] sm:$0xf]
    %v3366 = vld [vmem:[%s3359 + $0x18] sm:$0xf]
    %v3367 = vld [vmem:[%s3359 + $0x1c] sm:$0xf]
    %s3368 = scalar_lea.vmem %s4, 5
    %v3369 = vld [vmem:[%s3368] sm:$0x1]
    %v3371 = vlaneseq
    %v3372 = vshrl.u32 %v3371, 7
    %v3373 = vsub.s32 0, %v3372
    %v3374 = vrot.slane %v3369, %v3373
    %v3384 = vunpack.c.l.b16 %v3360
    %v3385 = vunpack.c.l.b16 %v3361
    %v3386 = vunpack.c.l.b16 %v3362
    %v3387 = vunpack.c.l.b16 %v3363
    %v3388 = vunpack.c.l.b16 %v3364
    %v3389 = vunpack.c.l.b16 %v3365
    %v3390 = vunpack.c.l.b16 %v3366
    %v3391 = vunpack.c.l.b16 %v3367
    %v3392 = vpack.c.b16 %v3385, %v3384
    %v3393 = vpack.c.b16 %v3387, %v3386
    %v3394 = vpack.c.b16 %v3389, %v3388
    %v3395 = vpack.c.b16 %v3391, %v3390
    %v3401 = vsel %vm48, %v3351, 0
    %v3404 = vsel %vm48, %v3352, 0
    %v3407 = vsel %vm48, %v3353, 0
    %v3410 = vsel %vm48, %v3354, 0
    %v3413 = vsel %vm48, %v3355, 0
    %v3416 = vsel %vm48, %v3356, 0
    %v3419 = vsel %vm48, %v3357, 0
    %v3422 = vsel %vm48, %v3358, 0
    %3424 = vmatprep.subr.bf16.mxu0 0
    %3425 = vmatpush1.bf16.msra.mxu0 %v3392
    %3426 = vmatprep.subr.bf16.mxu0 0
    %3427 = vmatpush1.bf16.msra.mxu0 %v3393
    %3428 = vmatprep.subr.bf16.mxu0 0
    %3429 = vmatpush1.bf16.msra.mxu0 %v3394
    %3430 = vmatprep.subr.bf16.mxu0 0
    %3431 = vmatpush1.bf16.msra.mxu0 %v3395
    %3432 = vmatprep.subr.bf16.mxu0 0
    %3433 = vmatpush1.bf16.msra.mxu0 0
    %3434 = vmatprep.subr.bf16.mxu0 0
    %3435 = vmatpush1.bf16.msra.mxu0 0
    %3436 = vmatprep.subr.bf16.mxu0 0
    %3437 = vmatpush1.bf16.msra.mxu0 0
    %3438 = vmatprep.subr.bf16.mxu0 0
    %3439 = vmatpush1.bf16.msra.mxu0 0
    %3440 = vmatprep.subr.bf16.mxu0 0
    %3441 = vmatpush1.bf16.msra.mxu0 0
    %3442 = vmatprep.subr.bf16.mxu0 0
    %3443 = vmatpush1.bf16.msra.mxu0 0
    %3444 = vmatprep.subr.bf16.mxu0 0
    %3445 = vmatpush1.bf16.msra.mxu0 0
    %3446 = vmatprep.subr.bf16.mxu0 0
    %3447 = vmatpush1.bf16.msra.mxu0 0
    %3448 = vmatprep.subr.bf16.mxu0 0
    %3449 = vmatpush1.bf16.msra.mxu0 0
    %3450 = vmatprep.subr.bf16.mxu0 0
    %3451 = vmatpush1.bf16.msra.mxu0 0
    %3452 = vmatprep.subr.bf16.mxu0 0
    %3453 = vmatpush1.bf16.msra.mxu0 0
    %3454 = vmatprep.subr.bf16.mxu0 0
    %3455 = vmatpush1.bf16.msra.mxu0 0
    %3456 = vmatprep.mubr.bf16.mxu0 0
    %3457 = vmatmul.mubr.bf16.gmra.mrb[0].mxu0 %v3401
    %v3458 = vpop.f32.mrb[0].mxu0
    %v3459 = vadd.f32 %v3374, %v3458
    %v3460 = vpop.f32.mrb[0].mxu0
    %v3461 = vpop.f32.mrb[0].mxu0
    %v3462 = vadd.f32 %v3374, %v3461
    %v3463 = vpop.f32.mrb[0].mxu0
    %3464 = vmatprep.mubr.bf16.mxu0 0
    %3465 = vmatmul.mubr.bf16.gmra.mrb[0].mxu0 %v3404
    %v3466 = vpop.f32.mrb[0].mxu0
    %v3467 = vadd.f32 %v3374, %v3466
    %v3468 = vpop.f32.mrb[0].mxu0
    %v3469 = vpop.f32.mrb[0].mxu0
    %v3470 = vadd.f32 %v3374, %v3469
    %v3471 = vpop.f32.mrb[0].mxu0
    %3472 = vmatprep.mubr.bf16.mxu0 0
    %3473 = vmatmul.mubr.bf16.gmra.mrb[0].mxu0 %v3407
    %v3474 = vpop.f32.mrb[0].mxu0
    %v3475 = vadd.f32 %v3374, %v3474
    %v3476 = vpop.f32.mrb[0].mxu0
    %v3477 = vpop.f32.mrb[0].mxu0
    %v3478 = vadd.f32 %v3374, %v3477
    %v3479 = vpop.f32.mrb[0].mxu0
    %3480 = vmatprep.mubr.bf16.mxu0 0
    %3481 = vmatmul.mubr.bf16.gmra.mrb[0].mxu0 %v3410
    %v3482 = vpop.f32.mrb[0].mxu0
    %v3483 = vadd.f32 %v3374, %v3482
    %v3484 = vpop.f32.mrb[0].mxu0
    %v3485 = vpop.f32.mrb[0].mxu0
    %v3486 = vadd.f32 %v3374, %v3485
    %v3487 = vpop.f32.mrb[0].mxu0
    %3488 = vmatprep.mubr.bf16.mxu0 0
    %3489 = vmatmul.mubr.bf16.gmra.mrb[0].mxu0 %v3413
    %v3490 = vpop.f32.mrb[0].mxu0
    %v3491 = vadd.f32 %v3374, %v3490
    %v3492 = vpop.f32.mrb[0].mxu0
    %v3493 = vpop.f32.mrb[0].mxu0
    %v3494 = vadd.f32 %v3374, %v3493
    %v3495 = vpop.f32.mrb[0].mxu0
    %3496 = vmatprep.mubr.bf16.mxu0 0
    %3497 = vmatmul.mubr.bf16.gmra.mrb[0].mxu0 %v3416
    %v3498 = vpop.f32.mrb[0].mxu0
    %v3499 = vadd.f32 %v3374, %v3498
    %v3500 = vpop.f32.mrb[0].mxu0
    %v3501 = vpop.f32.mrb[0].mxu0
    %v3502 = vadd.f32 %v3374, %v3501
    %v3503 = vpop.f32.mrb[0].mxu0
    %3504 = vmatprep.mubr.bf16.mxu0 0
    %3505 = vmatmul.mubr.bf16.gmra.mrb[0].mxu0 %v3419
    %v3506 = vpop.f32.mrb[0].mxu0
    %v3507 = vadd.f32 %v3374, %v3506
    %v3508 = vpop.f32.mrb[0].mxu0
    %v3509 = vpop.f32.mrb[0].mxu0
    %v3510 = vadd.f32 %v3374, %v3509
    %v3511 = vpop.f32.mrb[0].mxu0
    %3512 = vmatprep.mubr.bf16.mxu0 0
    %3513 = vmatmul.mubr.bf16.gmra.mrb[0].mxu0 %v3422
    %v3514 = vpop.f32.mrb[0].mxu0
    %v3515 = vadd.f32 %v3374, %v3514
    %v3516 = vpop.f32.mrb[0].mxu0
    %v3517 = vpop.f32.mrb[0].mxu0
    %v3518 = vadd.f32 %v3374, %v3517
    %v3519 = vpop.f32.mrb[0].mxu0
    %3520 = vdwg.mxu0
    %v3521 = vmax.f32 %v3459, 0.0
    %v3522 = vmax.f32 %v3462, 0.0
    %v3523 = vmax.f32 %v3467, 0.0
    %v3524 = vmax.f32 %v3470, 0.0
    %v3525 = vmax.f32 %v3475, 0.0
    %v3526 = vmax.f32 %v3478, 0.0
    %v3527 = vmax.f32 %v3483, 0.0
    %v3528 = vmax.f32 %v3486, 0.0
    %v3529 = vmax.f32 %v3491, 0.0
    %v3530 = vmax.f32 %v3494, 0.0
    %v3531 = vmax.f32 %v3499, 0.0
    %v3532 = vmax.f32 %v3502, 0.0
    %v3533 = vmax.f32 %v3507, 0.0
    %v3534 = vmax.f32 %v3510, 0.0
    %v3535 = vmax.f32 %v3515, 0.0
    %v3536 = vmax.f32 %v3518, 0.0
    %v3537 = vadd.f32 %v3335, %v3521
    %v3538 = vadd.f32 %v3336, %v3522
    %v3539 = vadd.f32 %v3337, %v3523
    %v3540 = vadd.f32 %v3338, %v3524
    %v3541 = vadd.f32 %v3339, %v3525
    %v3542 = vadd.f32 %v3340, %v3526
    %v3543 = vadd.f32 %v3341, %v3527
    %v3544 = vadd.f32 %v3342, %v3528
    %v3545 = vadd.f32 %v3343, %v3529
    %v3546 = vadd.f32 %v3344, %v3530
    %v3547 = vadd.f32 %v3345, %v3531
    %v3548 = vadd.f32 %v3346, %v3532
    %v3549 = vadd.f32 %v3347, %v3533
    %v3550 = vadd.f32 %v3348, %v3534
    %v3551 = vadd.f32 %v3349, %v3535
    %v3552 = vadd.f32 %v3350, %v3536
    %v3553 = vpack.c.bf16 %v3538, %v3537
    %v3554 = vpack.c.bf16 %v3540, %v3539
    %v3555 = vpack.c.bf16 %v3542, %v3541
    %v3556 = vpack.c.bf16 %v3544, %v3543
    %v3557 = vpack.c.bf16 %v3546, %v3545
    %v3558 = vpack.c.bf16 %v3548, %v3547
    %v3559 = vpack.c.bf16 %v3550, %v3549
    %v3560 = vpack.c.bf16 %v3552, %v3551
    %s3561 = scalar_lea.vmem [#allocation4], 608
    %v3562 = vld [vmem:[%s3561] sm:$0xf]
    %v3563 = vld [vmem:[%s3561 + $0x4] sm:$0xf]
    %v3564 = vld [vmem:[%s3561 + $0x8] sm:$0xf]
    %v3565 = vld [vmem:[%s3561 + $0xc] sm:$0xf]
    %v3566 = vld [vmem:[%s3561 + $0x10] sm:$0xf]
    %v3567 = vld [vmem:[%s3561 + $0x14] sm:$0xf]
    %v3568 = vld [vmem:[%s3561 + $0x18] sm:$0xf]
    %v3569 = vld [vmem:[%s3561 + $0x1c] sm:$0xf]
    %s3570 = scalar_lea.vmem %s4, 6
    %v3571 = vld [vmem:[%s3570] sm:$0x1]
    %v3573 = vlaneseq
    %v3574 = vshrl.u32 %v3573, 7
    %v3575 = vsub.s32 0, %v3574
    %v3576 = vrot.slane %v3571, %v3575
    %v3586 = vunpack.c.l.b16 %v3562
    %v3587 = vunpack.c.l.b16 %v3563
    %v3588 = vunpack.c.l.b16 %v3564
    %v3589 = vunpack.c.l.b16 %v3565
    %v3590 = vunpack.c.l.b16 %v3566
    %v3591 = vunpack.c.l.b16 %v3567
    %v3592 = vunpack.c.l.b16 %v3568
    %v3593 = vunpack.c.l.b16 %v3569
    %v3594 = vpack.c.b16 %v3587, %v3586
    %v3595 = vpack.c.b16 %v3589, %v3588
    %v3596 = vpack.c.b16 %v3591, %v3590
    %v3597 = vpack.c.b16 %v3593, %v3592
    %v3603 = vsel %vm48, %v3553, 0
    %v3606 = vsel %vm48, %v3554, 0
    %v3609 = vsel %vm48, %v3555, 0
    %v3612 = vsel %vm48, %v3556, 0
    %v3615 = vsel %vm48, %v3557, 0
    %v3618 = vsel %vm48, %v3558, 0
    %v3621 = vsel %vm48, %v3559, 0
    %v3624 = vsel %vm48, %v3560, 0
    %3626 = vmatprep.subr.bf16.mxu0 0
    %3627 = vmatpush1.bf16.msra.mxu0 %v3594
    %3628 = vmatprep.subr.bf16.mxu0 0
    %3629 = vmatpush1.bf16.msra.mxu0 %v3595
    %3630 = vmatprep.subr.bf16.mxu0 0
    %3631 = vmatpush1.bf16.msra.mxu0 %v3596
    %3632 = vmatprep.subr.bf16.mxu0 0
    %3633 = vmatpush1.bf16.msra.mxu0 %v3597
    %3634 = vmatprep.subr.bf16.mxu0 0
    %3635 = vmatpush1.bf16.msra.mxu0 0
    %3636 = vmatprep.subr.bf16.mxu0 0
    %3637 = vmatpush1.bf16.msra.mxu0 0
    %3638 = vmatprep.subr.bf16.mxu0 0
    %3639 = vmatpush1.bf16.msra.mxu0 0
    %3640 = vmatprep.subr.bf16.mxu0 0
    %3641 = vmatpush1.bf16.msra.mxu0 0
    %3642 = vmatprep.subr.bf16.mxu0 0
    %3643 = vmatpush1.bf16.msra.mxu0 0
    %3644 = vmatprep.subr.bf16.mxu0 0
    %3645 = vmatpush1.bf16.msra.mxu0 0
    %3646 = vmatprep.subr.bf16.mxu0 0
    %3647 = vmatpush1.bf16.msra.mxu0 0
    %3648 = vmatprep.subr.bf16.mxu0 0
    %3649 = vmatpush1.bf16.msra.mxu0 0
    %3650 = vmatprep.subr.bf16.mxu0 0
    %3651 = vmatpush1.bf16.msra.mxu0 0
    %3652 = vmatprep.subr.bf16.mxu0 0
    %3653 = vmatpush1.bf16.msra.mxu0 0
    %3654 = vmatprep.subr.bf16.mxu0 0
    %3655 = vmatpush1.bf16.msra.mxu0 0
    %3656 = vmatprep.subr.bf16.mxu0 0
    %3657 = vmatpush1.bf16.msra.mxu0 0
    %3658 = vmatprep.mubr.bf16.mxu0 0
    %3659 = vmatmul.mubr.bf16.gmra.mrb[0].mxu0 %v3603
    %v3660 = vpop.f32.mrb[0].mxu0
    %v3661 = vadd.f32 %v3576, %v3660
    %v3662 = vpop.f32.mrb[0].mxu0
    %v3663 = vpop.f32.mrb[0].mxu0
    %v3664 = vadd.f32 %v3576, %v3663
    %v3665 = vpop.f32.mrb[0].mxu0
    %3666 = vmatprep.mubr.bf16.mxu0 0
    %3667 = vmatmul.mubr.bf16.gmra.mrb[0].mxu0 %v3606
    %v3668 = vpop.f32.mrb[0].mxu0
    %v3669 = vadd.f32 %v3576, %v3668
    %v3670 = vpop.f32.mrb[0].mxu0
    %v3671 = vpop.f32.mrb[0].mxu0
    %v3672 = vadd.f32 %v3576, %v3671
    %v3673 = vpop.f32.mrb[0].mxu0
    %3674 = vmatprep.mubr.bf16.mxu0 0
    %3675 = vmatmul.mubr.bf16.gmra.mrb[0].mxu0 %v3609
    %v3676 = vpop.f32.mrb[0].mxu0
    %v3677 = vadd.f32 %v3576, %v3676
    %v3678 = vpop.f32.mrb[0].mxu0
    %v3679 = vpop.f32.mrb[0].mxu0
    %v3680 = vadd.f32 %v3576, %v3679
    %v3681 = vpop.f32.mrb[0].mxu0
    %3682 = vmatprep.mubr.bf16.mxu0 0
    %3683 = vmatmul.mubr.bf16.gmra.mrb[0].mxu0 %v3612
    %v3684 = vpop.f32.mrb[0].mxu0
    %v3685 = vadd.f32 %v3576, %v3684
    %v3686 = vpop.f32.mrb[0].mxu0
    %v3687 = vpop.f32.mrb[0].mxu0
    %v3688 = vadd.f32 %v3576, %v3687
    %v3689 = vpop.f32.mrb[0].mxu0
    %3690 = vmatprep.mubr.bf16.mxu0 0
    %3691 = vmatmul.mubr.bf16.gmra.mrb[0].mxu0 %v3615
    %v3692 = vpop.f32.mrb[0].mxu0
    %v3693 = vadd.f32 %v3576, %v3692
    %v3694 = vpop.f32.mrb[0].mxu0
    %v3695 = vpop.f32.mrb[0].mxu0
    %v3696 = vadd.f32 %v3576, %v3695
    %v3697 = vpop.f32.mrb[0].mxu0
    %3698 = vmatprep.mubr.bf16.mxu0 0
    %3699 = vmatmul.mubr.bf16.gmra.mrb[0].mxu0 %v3618
    %v3700 = vpop.f32.mrb[0].mxu0
    %v3701 = vadd.f32 %v3576, %v3700
    %v3702 = vpop.f32.mrb[0].mxu0
    %v3703 = vpop.f32.mrb[0].mxu0
    %v3704 = vadd.f32 %v3576, %v3703
    %v3705 = vpop.f32.mrb[0].mxu0
    %3706 = vmatprep.mubr.bf16.mxu0 0
    %3707 = vmatmul.mubr.bf16.gmra.mrb[0].mxu0 %v3621
    %v3708 = vpop.f32.mrb[0].mxu0
    %v3709 = vadd.f32 %v3576, %v3708
    %v3710 = vpop.f32.mrb[0].mxu0
    %v3711 = vpop.f32.mrb[0].mxu0
    %v3712 = vadd.f32 %v3576, %v3711
    %v3713 = vpop.f32.mrb[0].mxu0
    %3714 = vmatprep.mubr.bf16.mxu0 0
    %3715 = vmatmul.mubr.bf16.gmra.mrb[0].mxu0 %v3624
    %v3716 = vpop.f32.mrb[0].mxu0
    %v3717 = vadd.f32 %v3576, %v3716
    %v3718 = vpop.f32.mrb[0].mxu0
    %v3719 = vpop.f32.mrb[0].mxu0
    %v3720 = vadd.f32 %v3576, %v3719
    %v3721 = vpop.f32.mrb[0].mxu0
    %3722 = vdwg.mxu0
    %v3723 = vmax.f32 %v3661, 0.0
    %v3724 = vmax.f32 %v3664, 0.0
    %v3725 = vmax.f32 %v3669, 0.0
    %v3726 = vmax.f32 %v3672, 0.0
    %v3727 = vmax.f32 %v3677, 0.0
    %v3728 = vmax.f32 %v3680, 0.0
    %v3729 = vmax.f32 %v3685, 0.0
    %v3730 = vmax.f32 %v3688, 0.0
    %v3731 = vmax.f32 %v3693, 0.0
    %v3732 = vmax.f32 %v3696, 0.0
    %v3733 = vmax.f32 %v3701, 0.0
    %v3734 = vmax.f32 %v3704, 0.0
    %v3735 = vmax.f32 %v3709, 0.0
    %v3736 = vmax.f32 %v3712, 0.0
    %v3737 = vmax.f32 %v3717, 0.0
    %v3738 = vmax.f32 %v3720, 0.0
    %v3739 = vadd.f32 %v3537, %v3723
    %v3740 = vadd.f32 %v3538, %v3724
    %v3741 = vadd.f32 %v3539, %v3725
    %v3742 = vadd.f32 %v3540, %v3726
    %v3743 = vadd.f32 %v3541, %v3727
    %v3744 = vadd.f32 %v3542, %v3728
    %v3745 = vadd.f32 %v3543, %v3729
    %v3746 = vadd.f32 %v3544, %v3730
    %v3747 = vadd.f32 %v3545, %v3731
    %v3748 = vadd.f32 %v3546, %v3732
    %v3749 = vadd.f32 %v3547, %v3733
    %v3750 = vadd.f32 %v3548, %v3734
    %v3751 = vadd.f32 %v3549, %v3735
    %v3752 = vadd.f32 %v3550, %v3736
    %v3753 = vadd.f32 %v3551, %v3737
    %v3754 = vadd.f32 %v3552, %v3738
    %v3755 = vpack.c.bf16 %v3740, %v3739
    %v3756 = vpack.c.bf16 %v3742, %v3741
    %v3757 = vpack.c.bf16 %v3744, %v3743
    %v3758 = vpack.c.bf16 %v3746, %v3745
    %v3759 = vpack.c.bf16 %v3748, %v3747
    %v3760 = vpack.c.bf16 %v3750, %v3749
    %v3761 = vpack.c.bf16 %v3752, %v3751
    %v3762 = vpack.c.bf16 %v3754, %v3753
    %s3763 = scalar_lea.vmem [#allocation4], 704
    %v3764 = vld [vmem:[%s3763] sm:$0xf]
    %v3765 = vld [vmem:[%s3763 + $0x4] sm:$0xf]
    %v3766 = vld [vmem:[%s3763 + $0x8] sm:$0xf]
    %v3767 = vld [vmem:[%s3763 + $0xc] sm:$0xf]
    %v3768 = vld [vmem:[%s3763 + $0x10] sm:$0xf]
    %v3769 = vld [vmem:[%s3763 + $0x14] sm:$0xf]
    %v3770 = vld [vmem:[%s3763 + $0x18] sm:$0xf]
    %v3771 = vld [vmem:[%s3763 + $0x1c] sm:$0xf]
    %s3772 = scalar_lea.vmem %s4, 7
    %v3773 = vld [vmem:[%s3772] sm:$0x1]
    %v3775 = vlaneseq
    %v3776 = vshrl.u32 %v3775, 7
    %v3777 = vsub.s32 0, %v3776
    %v3778 = vrot.slane %v3773, %v3777
    %v3788 = vunpack.c.l.b16 %v3764
    %v3789 = vunpack.c.l.b16 %v3765
    %v3790 = vunpack.c.l.b16 %v3766
    %v3791 = vunpack.c.l.b16 %v3767
    %v3792 = vunpack.c.l.b16 %v3768
    %v3793 = vunpack.c.l.b16 %v3769
    %v3794 = vunpack.c.l.b16 %v3770
    %v3795 = vunpack.c.l.b16 %v3771
    %v3796 = vpack.c.b16 %v3789, %v3788
    %v3797 = vpack.c.b16 %v3791, %v3790
    %v3798 = vpack.c.b16 %v3793, %v3792
    %v3799 = vpack.c.b16 %v3795, %v3794
    %v3805 = vsel %vm48, %v3755, 0
    %v3808 = vsel %vm48, %v3756, 0
    %v3811 = vsel %vm48, %v3757, 0
    %v3814 = vsel %vm48, %v3758, 0
    %v3817 = vsel %vm48, %v3759, 0
    %v3820 = vsel %vm48, %v3760, 0
    %v3823 = vsel %vm48, %v3761, 0
    %v3826 = vsel %vm48, %v3762, 0
    %3828 = vmatprep.subr.bf16.mxu0 0
    %3829 = vmatpush1.bf16.msra.mxu0 %v3796
    %3830 = vmatprep.subr.bf16.mxu0 0
    %3831 = vmatpush1.bf16.msra.mxu0 %v3797
    %3832 = vmatprep.subr.bf16.mxu0 0
    %3833 = vmatpush1.bf16.msra.mxu0 %v3798
    %3834 = vmatprep.subr.bf16.mxu0 0
    %3835 = vmatpush1.bf16.msra.mxu0 %v3799
    %3836 = vmatprep.subr.bf16.mxu0 0
    %3837 = vmatpush1.bf16.msra.mxu0 0
    %3838 = vmatprep.subr.bf16.mxu0 0
    %3839 = vmatpush1.bf16.msra.mxu0 0
    %3840 = vmatprep.subr.bf16.mxu0 0
    %3841 = vmatpush1.bf16.msra.mxu0 0
    %3842 = vmatprep.subr.bf16.mxu0 0
    %3843 = vmatpush1.bf16.msra.mxu0 0
    %3844 = vmatprep.subr.bf16.mxu0 0
    %3845 = vmatpush1.bf16.msra.mxu0 0
    %3846 = vmatprep.subr.bf16.mxu0 0
    %3847 = vmatpush1.bf16.msra.mxu0 0
    %3848 = vmatprep.subr.bf16.mxu0 0
    %3849 = vmatpush1.bf16.msra.mxu0 0
    %3850 = vmatprep.subr.bf16.mxu0 0
    %3851 = vmatpush1.bf16.msra.mxu0 0
    %3852 = vmatprep.subr.bf16.mxu0 0
    %3853 = vmatpush1.bf16.msra.mxu0 0
    %3854 = vmatprep.subr.bf16.mxu0 0
    %3855 = vmatpush1.bf16.msra.mxu0 0
    %3856 = vmatprep.subr.bf16.mxu0 0
    %3857 = vmatpush1.bf16.msra.mxu0 0
    %3858 = vmatprep.subr.bf16.mxu0 0
    %3859 = vmatpush1.bf16.msra.mxu0 0
    %3860 = vmatprep.mubr.bf16.mxu0 0
    %3861 = vmatmul.mubr.bf16.gmra.mrb[0].mxu0 %v3805
    %v3862 = vpop.f32.mrb[0].mxu0
    %v3863 = vadd.f32 %v3778, %v3862
    %v3864 = vpop.f32.mrb[0].mxu0
    %v3865 = vpop.f32.mrb[0].mxu0
    %v3866 = vadd.f32 %v3778, %v3865
    %v3867 = vpop.f32.mrb[0].mxu0
    %3868 = vmatprep.mubr.bf16.mxu0 0
    %3869 = vmatmul.mubr.bf16.gmra.mrb[0].mxu0 %v3808
    %v3870 = vpop.f32.mrb[0].mxu0
    %v3871 = vadd.f32 %v3778, %v3870
    %v3872 = vpop.f32.mrb[0].mxu0
    %v3873 = vpop.f32.mrb[0].mxu0
    %v3874 = vadd.f32 %v3778, %v3873
    %v3875 = vpop.f32.mrb[0].mxu0
    %3876 = vmatprep.mubr.bf16.mxu0 0
    %3877 = vmatmul.mubr.bf16.gmra.mrb[0].mxu0 %v3811
    %v3878 = vpop.f32.mrb[0].mxu0
    %v3879 = vadd.f32 %v3778, %v3878
    %v3880 = vpop.f32.mrb[0].mxu0
    %v3881 = vpop.f32.mrb[0].mxu0
    %v3882 = vadd.f32 %v3778, %v3881
    %v3883 = vpop.f32.mrb[0].mxu0
    %3884 = vmatprep.mubr.bf16.mxu0 0
    %3885 = vmatmul.mubr.bf16.gmra.mrb[0].mxu0 %v3814
    %v3886 = vpop.f32.mrb[0].mxu0
    %v3887 = vadd.f32 %v3778, %v3886
    %v3888 = vpop.f32.mrb[0].mxu0
    %v3889 = vpop.f32.mrb[0].mxu0
    %v3890 = vadd.f32 %v3778, %v3889
    %v3891 = vpop.f32.mrb[0].mxu0
    %3892 = vmatprep.mubr.bf16.mxu0 0
    %3893 = vmatmul.mubr.bf16.gmra.mrb[0].mxu0 %v3817
    %v3894 = vpop.f32.mrb[0].mxu0
    %v3895 = vadd.f32 %v3778, %v3894
    %v3896 = vpop.f32.mrb[0].mxu0
    %v3897 = vpop.f32.mrb[0].mxu0
    %v3898 = vadd.f32 %v3778, %v3897
    %v3899 = vpop.f32.mrb[0].mxu0
    %3900 = vmatprep.mubr.bf16.mxu0 0
    %3901 = vmatmul.mubr.bf16.gmra.mrb[0].mxu0 %v3820
    %v3902 = vpop.f32.mrb[0].mxu0
    %v3903 = vadd.f32 %v3778, %v3902
    %v3904 = vpop.f32.mrb[0].mxu0
    %v3905 = vpop.f32.mrb[0].mxu0
    %v3906 = vadd.f32 %v3778, %v3905
    %v3907 = vpop.f32.mrb[0].mxu0
    %3908 = vmatprep.mubr.bf16.mxu0 0
    %3909 = vmatmul.mubr.bf16.gmra.mrb[0].mxu0 %v3823
    %v3910 = vpop.f32.mrb[0].mxu0
    %v3911 = vadd.f32 %v3778, %v3910
    %v3912 = vpop.f32.mrb[0].mxu0
    %v3913 = vpop.f32.mrb[0].mxu0
    %v3914 = vadd.f32 %v3778, %v3913
    %v3915 = vpop.f32.mrb[0].mxu0
    %3916 = vmatprep.mubr.bf16.mxu0 0
    %3917 = vmatmul.mubr.bf16.gmra.mrb[0].mxu0 %v3826
    %v3918 = vpop.f32.mrb[0].mxu0
    %v3919 = vadd.f32 %v3778, %v3918
    %v3920 = vpop.f32.mrb[0].mxu0
    %v3921 = vpop.f32.mrb[0].mxu0
    %v3922 = vadd.f32 %v3778, %v3921
    %v3923 = vpop.f32.mrb[0].mxu0
    %3924 = vdwg.mxu0
    %v3925 = vmax.f32 %v3863, 0.0
    %v3926 = vmax.f32 %v3866, 0.0
    %v3927 = vmax.f32 %v3871, 0.0
    %v3928 = vmax.f32 %v3874, 0.0
    %v3929 = vmax.f32 %v3879, 0.0
    %v3930 = vmax.f32 %v3882, 0.0
    %v3931 = vmax.f32 %v3887, 0.0
    %v3932 = vmax.f32 %v3890, 0.0
    %v3933 = vmax.f32 %v3895, 0.0
    %v3934 = vmax.f32 %v3898, 0.0
    %v3935 = vmax.f32 %v3903, 0.0
    %v3936 = vmax.f32 %v3906, 0.0
    %v3937 = vmax.f32 %v3911, 0.0
    %v3938 = vmax.f32 %v3914, 0.0
    %v3939 = vmax.f32 %v3919, 0.0
    %v3940 = vmax.f32 %v3922, 0.0
    %v3941 = vadd.f32 %v3739, %v3925
    %v3942 = vadd.f32 %v3740, %v3926
    %v3943 = vadd.f32 %v3741, %v3927
    %v3944 = vadd.f32 %v3742, %v3928
    %v3945 = vadd.f32 %v3743, %v3929
    %v3946 = vadd.f32 %v3744, %v3930
    %v3947 = vadd.f32 %v3745, %v3931
    %v3948 = vadd.f32 %v3746, %v3932
    %v3949 = vadd.f32 %v3747, %v3933
    %v3950 = vadd.f32 %v3748, %v3934
    %v3951 = vadd.f32 %v3749, %v3935
    %v3952 = vadd.f32 %v3750, %v3936
    %v3953 = vadd.f32 %v3751, %v3937
    %v3954 = vadd.f32 %v3752, %v3938
    %v3955 = vadd.f32 %v3753, %v3939
    %v3956 = vadd.f32 %v3754, %v3940
    %v3957 = vpack.c.bf16 %v3942, %v3941
    %v3958 = vpack.c.bf16 %v3944, %v3943
    %v3959 = vpack.c.bf16 %v3946, %v3945
    %v3960 = vpack.c.bf16 %v3948, %v3947
    %v3961 = vpack.c.bf16 %v3950, %v3949
    %v3962 = vpack.c.bf16 %v3952, %v3951
    %v3963 = vpack.c.bf16 %v3954, %v3953
    %v3964 = vpack.c.bf16 %v3956, %v3955
    %s3965 = scalar_lea.vmem [#allocation4], 800
    %v3966 = vld [vmem:[%s3965] sm:$0xf]
    %v3967 = vld [vmem:[%s3965 + $0x4] sm:$0xf]
    %v3968 = vld [vmem:[%s3965 + $0x8] sm:$0xf]
    %v3969 = vld [vmem:[%s3965 + $0xc] sm:$0xf]
    %v3970 = vld [vmem:[%s3965 + $0x10] sm:$0xf]
    %v3971 = vld [vmem:[%s3965 + $0x14] sm:$0xf]
    %v3972 = vld [vmem:[%s3965 + $0x18] sm:$0xf]
    %v3973 = vld [vmem:[%s3965 + $0x1c] sm:$0xf]
    %s3974 = scalar_lea.vmem %s4, 8
    %v3975 = vld [vmem:[%s3974] sm:$0x1]
    %v3977 = vlaneseq
    %v3978 = vshrl.u32 %v3977, 7
    %v3979 = vsub.s32 0, %v3978
    %v3980 = vrot.slane %v3975, %v3979
    %v3990 = vunpack.c.l.b16 %v3966
    %v3991 = vunpack.c.l.b16 %v3967
    %v3992 = vunpack.c.l.b16 %v3968
    %v3993 = vunpack.c.l.b16 %v3969
    %v3994 = vunpack.c.l.b16 %v3970
    %v3995 = vunpack.c.l.b16 %v3971
    %v3996 = vunpack.c.l.b16 %v3972
    %v3997 = vunpack.c.l.b16 %v3973
    %v3998 = vpack.c.b16 %v3991, %v3990
    %v3999 = vpack.c.b16 %v3993, %v3992
    %v4000 = vpack.c.b16 %v3995, %v3994
    %v4001 = vpack.c.b16 %v3997, %v3996
    %v4007 = vsel %vm48, %v3957, 0
    %v4010 = vsel %vm48, %v3958, 0
    %v4013 = vsel %vm48, %v3959, 0
    %v4016 = vsel %vm48, %v3960, 0
    %v4019 = vsel %vm48, %v3961, 0
    %v4022 = vsel %vm48, %v3962, 0
    %v4025 = vsel %vm48, %v3963, 0
    %v4028 = vsel %vm48, %v3964, 0
    %4030 = vmatprep.subr.bf16.mxu0 0
    %4031 = vmatpush1.bf16.msra.mxu0 %v3998
    %4032 = vmatprep.subr.bf16.mxu0 0
    %4033 = vmatpush1.bf16.msra.mxu0 %v3999
    %4034 = vmatprep.subr.bf16.mxu0 0
    %4035 = vmatpush1.bf16.msra.mxu0 %v4000
    %4036 = vmatprep.subr.bf16.mxu0 0
    %4037 = vmatpush1.bf16.msra.mxu0 %v4001
    %4038 = vmatprep.subr.bf16.mxu0 0
    %4039 = vmatpush1.bf16.msra.mxu0 0
    %4040 = vmatprep.subr.bf16.mxu0 0
    %4041 = vmatpush1.bf16.msra.mxu0 0
    %4042 = vmatprep.subr.bf16.mxu0 0
    %4043 = vmatpush1.bf16.msra.mxu0 0
    %4044 = vmatprep.subr.bf16.mxu0 0
    %4045 = vmatpush1.bf16.msra.mxu0 0
    %4046 = vmatprep.subr.bf16.mxu0 0
    %4047 = vmatpush1.bf16.msra.mxu0 0
    %4048 = vmatprep.subr.bf16.mxu0 0
    %4049 = vmatpush1.bf16.msra.mxu0 0
    %4050 = vmatprep.subr.bf16.mxu0 0
    %4051 = vmatpush1.bf16.msra.mxu0 0
    %4052 = vmatprep.subr.bf16.mxu0 0
    %4053 = vmatpush1.bf16.msra.mxu0 0
    %4054 = vmatprep.subr.bf16.mxu0 0
    %4055 = vmatpush1.bf16.msra.mxu0 0
    %4056 = vmatprep.subr.bf16.mxu0 0
    %4057 = vmatpush1.bf16.msra.mxu0 0
    %4058 = vmatprep.subr.bf16.mxu0 0
    %4059 = vmatpush1.bf16.msra.mxu0 0
    %4060 = vmatprep.subr.bf16.mxu0 0
    %4061 = vmatpush1.bf16.msra.mxu0 0
    %4062 = vmatprep.mubr.bf16.mxu0 0
    %4063 = vmatmul.mubr.bf16.gmra.mrb[0].mxu0 %v4007
    %v4064 = vpop.f32.mrb[0].mxu0
    %v4065 = vadd.f32 %v3980, %v4064
    %v4066 = vpop.f32.mrb[0].mxu0
    %v4067 = vpop.f32.mrb[0].mxu0
    %v4068 = vadd.f32 %v3980, %v4067
    %v4069 = vpop.f32.mrb[0].mxu0
    %4070 = vmatprep.mubr.bf16.mxu0 0
    %4071 = vmatmul.mubr.bf16.gmra.mrb[0].mxu0 %v4010
    %v4072 = vpop.f32.mrb[0].mxu0
    %v4073 = vadd.f32 %v3980, %v4072
    %v4074 = vpop.f32.mrb[0].mxu0
    %v4075 = vpop.f32.mrb[0].mxu0
    %v4076 = vadd.f32 %v3980, %v4075
    %v4077 = vpop.f32.mrb[0].mxu0
    %4078 = vmatprep.mubr.bf16.mxu0 0
    %4079 = vmatmul.mubr.bf16.gmra.mrb[0].mxu0 %v4013
    %v4080 = vpop.f32.mrb[0].mxu0
    %v4081 = vadd.f32 %v3980, %v4080
    %v4082 = vpop.f32.mrb[0].mxu0
    %v4083 = vpop.f32.mrb[0].mxu0
    %v4084 = vadd.f32 %v3980, %v4083
    %v4085 = vpop.f32.mrb[0].mxu0
    %4086 = vmatprep.mubr.bf16.mxu0 0
    %4087 = vmatmul.mubr.bf16.gmra.mrb[0].mxu0 %v4016
    %v4088 = vpop.f32.mrb[0].mxu0
    %v4089 = vadd.f32 %v3980, %v4088
    %v4090 = vpop.f32.mrb[0].mxu0
    %v4091 = vpop.f32.mrb[0].mxu0
    %v4092 = vadd.f32 %v3980, %v4091
    %v4093 = vpop.f32.mrb[0].mxu0
    %4094 = vmatprep.mubr.bf16.mxu0 0
    %4095 = vmatmul.mubr.bf16.gmra.mrb[0].mxu0 %v4019
    %v4096 = vpop.f32.mrb[0].mxu0
    %v4097 = vadd.f32 %v3980, %v4096
    %v4098 = vpop.f32.mrb[0].mxu0
    %v4099 = vpop.f32.mrb[0].mxu0
    %v4100 = vadd.f32 %v3980, %v4099
    %v4101 = vpop.f32.mrb[0].mxu0
    %4102 = vmatprep.mubr.bf16.mxu0 0
    %4103 = vmatmul.mubr.bf16.gmra.mrb[0].mxu0 %v4022
    %v4104 = vpop.f32.mrb[0].mxu0
    %v4105 = vadd.f32 %v3980, %v4104
    %v4106 = vpop.f32.mrb[0].mxu0
    %v4107 = vpop.f32.mrb[0].mxu0
    %v4108 = vadd.f32 %v3980, %v4107
    %v4109 = vpop.f32.mrb[0].mxu0
    %4110 = vmatprep.mubr.bf16.mxu0 0
    %4111 = vmatmul.mubr.bf16.gmra.mrb[0].mxu0 %v4025
    %v4112 = vpop.f32.mrb[0].mxu0
    %v4113 = vadd.f32 %v3980, %v4112
    %v4114 = vpop.f32.mrb[0].mxu0
    %v4115 = vpop.f32.mrb[0].mxu0
    %v4116 = vadd.f32 %v3980, %v4115
    %v4117 = vpop.f32.mrb[0].mxu0
    %4118 = vmatprep.mubr.bf16.mxu0 0
    %4119 = vmatmul.mubr.bf16.gmra.mrb[0].mxu0 %v4028
    %v4120 = vpop.f32.mrb[0].mxu0
    %v4121 = vadd.f32 %v3980, %v4120
    %v4122 = vpop.f32.mrb[0].mxu0
    %v4123 = vpop.f32.mrb[0].mxu0
    %v4124 = vadd.f32 %v3980, %v4123
    %v4125 = vpop.f32.mrb[0].mxu0
    %4126 = vdwg.mxu0
    %v4127 = vmax.f32 %v4065, 0.0
    %v4128 = vmax.f32 %v4068, 0.0
    %v4129 = vmax.f32 %v4073, 0.0
    %v4130 = vmax.f32 %v4076, 0.0
    %v4131 = vmax.f32 %v4081, 0.0
    %v4132 = vmax.f32 %v4084, 0.0
    %v4133 = vmax.f32 %v4089, 0.0
    %v4134 = vmax.f32 %v4092, 0.0
    %v4135 = vmax.f32 %v4097, 0.0
    %v4136 = vmax.f32 %v4100, 0.0
    %v4137 = vmax.f32 %v4105, 0.0
    %v4138 = vmax.f32 %v4108, 0.0
    %v4139 = vmax.f32 %v4113, 0.0
    %v4140 = vmax.f32 %v4116, 0.0
    %v4141 = vmax.f32 %v4121, 0.0
    %v4142 = vmax.f32 %v4124, 0.0
    %v4143 = vadd.f32 %v3941, %v4127
    %v4144 = vadd.f32 %v3942, %v4128
    %v4145 = vadd.f32 %v3943, %v4129
    %v4146 = vadd.f32 %v3944, %v4130
    %v4147 = vadd.f32 %v3945, %v4131
    %v4148 = vadd.f32 %v3946, %v4132
    %v4149 = vadd.f32 %v3947, %v4133
    %v4150 = vadd.f32 %v3948, %v4134
    %v4151 = vadd.f32 %v3949, %v4135
    %v4152 = vadd.f32 %v3950, %v4136
    %v4153 = vadd.f32 %v3951, %v4137
    %v4154 = vadd.f32 %v3952, %v4138
    %v4155 = vadd.f32 %v3953, %v4139
    %v4156 = vadd.f32 %v3954, %v4140
    %v4157 = vadd.f32 %v3955, %v4141
    %v4158 = vadd.f32 %v3956, %v4142
    %4159 = vst.msk [vmem:[%s8] sm:$0xff] %vm48, %v4143
    %4160 = vst.msk [vmem:[%s8 + $0x8] sm:$0xff] %vm48, %v4144
    %4161 = vst.msk [vmem:[%s8 + $0x10] sm:$0xff] %vm48, %v4145
    %4162 = vst.msk [vmem:[%s8 + $0x18] sm:$0xff] %vm48, %v4146
    %4163 = vst.msk [vmem:[%s8 + $0x20] sm:$0xff] %vm48, %v4147
    %4164 = vst.msk [vmem:[%s8 + $0x28] sm:$0xff] %vm48, %v4148
    %4165 = vst.msk [vmem:[%s8 + $0x30] sm:$0xff] %vm48, %v4149
    %4166 = vst.msk [vmem:[%s8 + $0x38] sm:$0xff] %vm48, %v4150
    %4167 = vst.msk [vmem:[%s8 + $0x40] sm:$0xff] %vm48, %v4151
    %4168 = vst.msk [vmem:[%s8 + $0x48] sm:$0xff] %vm48, %v4152
    %4169 = vst.msk [vmem:[%s8 + $0x50] sm:$0xff] %vm48, %v4153
    %4170 = vst.msk [vmem:[%s8 + $0x58] sm:$0xff] %vm48, %v4154
    %4171 = vst.msk [vmem:[%s8 + $0x60] sm:$0xff] %vm48, %v4155
    %4172 = vst.msk [vmem:[%s8 + $0x68] sm:$0xff] %vm48, %v4156
    %4173 = vst.msk [vmem:[%s8 + $0x70] sm:$0xff] %vm48, %v4157
    %4174 = vst.msk [vmem:[%s8 + $0x78] sm:$0xff] %vm48, %v4158
    %v4175 = vpack.c.bf16 %v4144, %v4143
    %v4176 = vpack.c.bf16 %v4146, %v4145
    %v4177 = vpack.c.bf16 %v4148, %v4147
    %v4178 = vpack.c.bf16 %v4150, %v4149
    %v4179 = vpack.c.bf16 %v4152, %v4151
    %v4180 = vpack.c.bf16 %v4154, %v4153
    %v4181 = vpack.c.bf16 %v4156, %v4155
    %v4182 = vpack.c.bf16 %v4158, %v4157
    %v4183 = vld [vmem:[%s5] sm:$0xf]
    %v4184 = vld [vmem:[%s5 + $0x4] sm:$0xf]
    %v4185 = vld [vmem:[%s5 + $0x8] sm:$0xf]
    %v4186 = vld [vmem:[%s5 + $0xc] sm:$0xf]
    %v4187 = vld [vmem:[%s5 + $0x10] sm:$0xf]
    %v4188 = vld [vmem:[%s5 + $0x14] sm:$0xf]
    %v4189 = vld [vmem:[%s5 + $0x18] sm:$0xf]
    %v4190 = vld [vmem:[%s5 + $0x1c] sm:$0xf]
    %v4199 = vunpack.c.l.b16 %v4183
    %v4200 = vunpack.c.l.b16 %v4184
    %v4201 = vunpack.c.l.b16 %v4185
    %v4202 = vunpack.c.l.b16 %v4186
    %v4203 = vunpack.c.l.b16 %v4187
    %v4204 = vunpack.c.l.b16 %v4188
    %v4205 = vunpack.c.l.b16 %v4189
    %v4206 = vunpack.c.l.b16 %v4190
    %v4207 = vpack.c.b16 %v4200, %v4199
    %v4208 = vpack.c.b16 %v4202, %v4201
    %v4209 = vpack.c.b16 %v4204, %v4203
    %v4210 = vpack.c.b16 %v4206, %v4205
    %v4216 = vsel %vm48, %v4175, 0
    %v4219 = vsel %vm48, %v4176, 0
    %v4222 = vsel %vm48, %v4177, 0
    %v4225 = vsel %vm48, %v4178, 0
    %v4228 = vsel %vm48, %v4179, 0
    %v4231 = vsel %vm48, %v4180, 0
    %v4234 = vsel %vm48, %v4181, 0
    %v4237 = vsel %vm48, %v4182, 0
    %4239 = vmatprep.subr.bf16.mxu0 0
    %4240 = vmatpush1.bf16.msra.mxu0 %v4207
    %4241 = vmatprep.subr.bf16.mxu0 0
    %4242 = vmatpush1.bf16.msra.mxu0 %v4208
    %4243 = vmatprep.subr.bf16.mxu0 0
    %4244 = vmatpush1.bf16.msra.mxu0 %v4209
    %4245 = vmatprep.subr.bf16.mxu0 0
    %4246 = vmatpush1.bf16.msra.mxu0 %v4210
    %4247 = vmatprep.subr.bf16.mxu0 0
    %4248 = vmatpush1.bf16.msra.mxu0 0
    %4249 = vmatprep.subr.bf16.mxu0 0
    %4250 = vmatpush1.bf16.msra.mxu0 0
    %4251 = vmatprep.subr.bf16.mxu0 0
    %4252 = vmatpush1.bf16.msra.mxu0 0
    %4253 = vmatprep.subr.bf16.mxu0 0
    %4254 = vmatpush1.bf16.msra.mxu0 0
    %4255 = vmatprep.subr.bf16.mxu0 0
    %4256 = vmatpush1.bf16.msra.mxu0 0
    %4257 = vmatprep.subr.bf16.mxu0 0
    %4258 = vmatpush1.bf16.msra.mxu0 0
    %4259 = vmatprep.subr.bf16.mxu0 0
    %4260 = vmatpush1.bf16.msra.mxu0 0
    %4261 = vmatprep.subr.bf16.mxu0 0
    %4262 = vmatpush1.bf16.msra.mxu0 0
    %4263 = vmatprep.subr.bf16.mxu0 0
    %4264 = vmatpush1.bf16.msra.mxu0 0
    %4265 = vmatprep.subr.bf16.mxu0 0
    %4266 = vmatpush1.bf16.msra.mxu0 0
    %4267 = vmatprep.subr.bf16.mxu0 0
    %4268 = vmatpush1.bf16.msra.mxu0 0
    %4269 = vmatprep.subr.bf16.mxu0 0
    %4270 = vmatpush1.bf16.msra.mxu0 0
    %4271 = vmatprep.mubr.bf16.mxu0 0
    %4272 = vmatmul.mubr.bf16.gmra.mrb[0].mxu0 %v4216
    %v4273 = vpop.f32.mrb[0].mxu0
    %v4274 = vadd.f32 0.0, %v4273
    %v4275 = vpop.f32.mrb[0].mxu0
    %v4276 = vpop.f32.mrb[0].mxu0
    %v4277 = vadd.f32 0.0, %v4276
    %v4278 = vpop.f32.mrb[0].mxu0
    %4279 = vmatprep.mubr.bf16.mxu0 0
    %4280 = vmatmul.mubr.bf16.gmra.mrb[0].mxu0 %v4219
    %v4281 = vpop.f32.mrb[0].mxu0
    %v4282 = vadd.f32 0.0, %v4281
    %v4283 = vpop.f32.mrb[0].mxu0
    %v4284 = vpop.f32.mrb[0].mxu0
    %v4285 = vadd.f32 0.0, %v4284
    %v4286 = vpop.f32.mrb[0].mxu0
    %4287 = vmatprep.mubr.bf16.mxu0 0
    %4288 = vmatmul.mubr.bf16.gmra.mrb[0].mxu0 %v4222
    %v4289 = vpop.f32.mrb[0].mxu0
    %v4290 = vadd.f32 0.0, %v4289
    %v4291 = vpop.f32.mrb[0].mxu0
    %v4292 = vpop.f32.mrb[0].mxu0
    %v4293 = vadd.f32 0.0, %v4292
    %v4294 = vpop.f32.mrb[0].mxu0
    %4295 = vmatprep.mubr.bf16.mxu0 0
    %4296 = vmatmul.mubr.bf16.gmra.mrb[0].mxu0 %v4225
    %v4297 = vpop.f32.mrb[0].mxu0
    %v4298 = vadd.f32 0.0, %v4297
    %v4299 = vpop.f32.mrb[0].mxu0
    %v4300 = vpop.f32.mrb[0].mxu0
    %v4301 = vadd.f32 0.0, %v4300
    %v4302 = vpop.f32.mrb[0].mxu0
    %4303 = vmatprep.mubr.bf16.mxu0 0
    %4304 = vmatmul.mubr.bf16.gmra.mrb[0].mxu0 %v4228
    %v4305 = vpop.f32.mrb[0].mxu0
    %v4306 = vadd.f32 0.0, %v4305
    %v4307 = vpop.f32.mrb[0].mxu0
    %v4308 = vpop.f32.mrb[0].mxu0
    %v4309 = vadd.f32 0.0, %v4308
    %v4310 = vpop.f32.mrb[0].mxu0
    %4311 = vmatprep.mubr.bf16.mxu0 0
    %4312 = vmatmul.mubr.bf16.gmra.mrb[0].mxu0 %v4231
    %v4313 = vpop.f32.mrb[0].mxu0
    %v4314 = vadd.f32 0.0, %v4313
    %v4315 = vpop.f32.mrb[0].mxu0
    %v4316 = vpop.f32.mrb[0].mxu0
    %v4317 = vadd.f32 0.0, %v4316
    %v4318 = vpop.f32.mrb[0].mxu0
    %4319 = vmatprep.mubr.bf16.mxu0 0
    %4320 = vmatmul.mubr.bf16.gmra.mrb[0].mxu0 %v4234
    %v4321 = vpop.f32.mrb[0].mxu0
    %v4322 = vadd.f32 0.0, %v4321
    %v4323 = vpop.f32.mrb[0].mxu0
    %v4324 = vpop.f32.mrb[0].mxu0
    %v4325 = vadd.f32 0.0, %v4324
    %v4326 = vpop.f32.mrb[0].mxu0
    %4327 = vmatprep.mubr.bf16.mxu0 0
    %4328 = vmatmul.mubr.bf16.gmra.mrb[0].mxu0 %v4237
    %v4329 = vpop.f32.mrb[0].mxu0
    %v4330 = vadd.f32 0.0, %v4329
    %v4331 = vpop.f32.mrb[0].mxu0
    %v4332 = vpop.f32.mrb[0].mxu0
    %v4333 = vadd.f32 0.0, %v4332
    %v4334 = vpop.f32.mrb[0].mxu0
    %4335 = vdwg.mxu0
    %4336 = vst.msk [vmem:[#allocation3 + $0x10] sm:$0xff] %vm48, %v4274
    %4337 = vst.msk [vmem:[#allocation3 + $0x18] sm:$0xff] %vm48, %v4277
    %4338 = vst.msk [vmem:[#allocation3 + $0x20] sm:$0xff] %vm48, %v4282
    %4339 = vst.msk [vmem:[#allocation3 + $0x28] sm:$0xff] %vm48, %v4285
    %4340 = vst.msk [vmem:[#allocation3 + $0x30] sm:$0xff] %vm48, %v4290
    %4341 = vst.msk [vmem:[#allocation3 + $0x38] sm:$0xff] %vm48, %v4293
    %4342 = vst.msk [vmem:[#allocation3 + $0x40] sm:$0xff] %vm48, %v4298
    %4343 = vst.msk [vmem:[#allocation3 + $0x48] sm:$0xff] %vm48, %v4301
    %4344 = vst.msk [vmem:[%s70 + $0x10] sm:$0xff] %vm48, %v4306
    %4345 = vst.msk [vmem:[%s70 + $0x18] sm:$0xff] %vm48, %v4309
    %4346 = vst.msk [vmem:[%s70 + $0x20] sm:$0xff] %vm48, %v4314
    %4347 = vst.msk [vmem:[%s70 + $0x28] sm:$0xff] %vm48, %v4317
    %4348 = vst.msk [vmem:[%s70 + $0x30] sm:$0xff] %vm48, %v4322
    %4349 = vst.msk [vmem:[%s70 + $0x38] sm:$0xff] %vm48, %v4325
    %4350 = vst.msk [vmem:[%s70 + $0x40] sm:$0xff] %vm48, %v4330
    %4351 = vst.msk [vmem:[%s70 + $0x48] sm:$0xff] %vm48, %v4333
    %v4352 = vlaneseq
    %v4353 = vand.u32 %v4352, 127
    %vm4354 = vcmp.ge.s32.totalorder %v4353, 0
    %vm4355 = vcmp.lt.s32.totalorder %v4353, 2
    %vm4356 = vmand %vm4354, %vm4355
    %v4357 = vsel %vm4356, 1, 0
    %v4358 = vcvt.s32.f32 %v4357
    %vm4359 = vcmp.ge.s32.totalorder %v4353, 2
    %vm4360 = vcmp.lt.s32.totalorder %v4353, 4
    %vm4361 = vmand %vm4359, %vm4360
    %v4362 = vsel %vm4361, 1, 0
    %v4363 = vcvt.s32.f32 %v4362
    %vm4364 = vcmp.ge.s32.totalorder %v4353, 4
    %vm4365 = vcmp.lt.s32.totalorder %v4353, 6
    %vm4366 = vmand %vm4364, %vm4365
    %v4367 = vsel %vm4366, 1, 0
    %v4368 = vcvt.s32.f32 %v4367
    %vm4369 = vcmp.ge.s32.totalorder %v4353, 6
    %vm4370 = vcmp.lt.s32.totalorder %v4353, 8
    %vm4371 = vmand %vm4369, %vm4370
    %v4372 = vsel %vm4371, 1, 0
    %v4373 = vcvt.s32.f32 %v4372
    %vm4374 = vcmp.ge.s32.totalorder %v4353, 8
    %vm4375 = vcmp.lt.s32.totalorder %v4353, 10
    %vm4376 = vmand %vm4374, %vm4375
    %v4377 = vsel %vm4376, 1, 0
    %v4378 = vcvt.s32.f32 %v4377
    %vm4379 = vcmp.ge.s32.totalorder %v4353, 10
    %vm4380 = vcmp.lt.s32.totalorder %v4353, 12
    %vm4381 = vmand %vm4379, %vm4380
    %v4382 = vsel %vm4381, 1, 0
    %v4383 = vcvt.s32.f32 %v4382
    %vm4384 = vcmp.ge.s32.totalorder %v4353, 12
    %vm4385 = vcmp.lt.s32.totalorder %v4353, 14
    %vm4386 = vmand %vm4384, %vm4385
    %v4387 = vsel %vm4386, 1, 0
    %v4388 = vcvt.s32.f32 %v4387
    %vm4389 = vcmp.ge.s32.totalorder %v4353, 14
    %vm4390 = vcmp.lt.s32.totalorder %v4353, 16
    %vm4391 = vmand %vm4389, %vm4390
    %v4392 = vsel %vm4391, 1, 0
    %v4393 = vcvt.s32.f32 %v4392
    %vm4394 = vcmp.ge.s32.totalorder %v4353, 16
    %vm4395 = vcmp.lt.s32.totalorder %v4353, 18
    %vm4396 = vmand %vm4394, %vm4395
    %v4397 = vsel %vm4396, 1, 0
    %v4398 = vcvt.s32.f32 %v4397
    %vm4399 = vcmp.ge.s32.totalorder %v4353, 18
    %vm4400 = vcmp.lt.s32.totalorder %v4353, 20
    %vm4401 = vmand %vm4399, %vm4400
    %v4402 = vsel %vm4401, 1, 0
    %v4403 = vcvt.s32.f32 %v4402
    %vm4404 = vcmp.ge.s32.totalorder %v4353, 20
    %vm4405 = vcmp.lt.s32.totalorder %v4353, 22
    %vm4406 = vmand %vm4404, %vm4405
    %v4407 = vsel %vm4406, 1, 0
    %v4408 = vcvt.s32.f32 %v4407
    %vm4409 = vcmp.ge.s32.totalorder %v4353, 22
    %vm4410 = vcmp.lt.s32.totalorder %v4353, 24
    %vm4411 = vmand %vm4409, %vm4410
    %v4412 = vsel %vm4411, 1, 0
    %v4413 = vcvt.s32.f32 %v4412
    %vm4414 = vcmp.ge.s32.totalorder %v4353, 24
    %vm4415 = vcmp.lt.s32.totalorder %v4353, 26
    %vm4416 = vmand %vm4414, %vm4415
    %v4417 = vsel %vm4416, 1, 0
    %v4418 = vcvt.s32.f32 %v4417
    %vm4419 = vcmp.ge.s32.totalorder %v4353, 26
    %vm4420 = vcmp.lt.s32.totalorder %v4353, 28
    %vm4421 = vmand %vm4419, %vm4420
    %v4422 = vsel %vm4421, 1, 0
    %v4423 = vcvt.s32.f32 %v4422
    %vm4424 = vcmp.ge.s32.totalorder %v4353, 28
    %vm4425 = vcmp.lt.s32.totalorder %v4353, 30
    %vm4426 = vmand %vm4424, %vm4425
    %v4427 = vsel %vm4426, 1, 0
    %v4428 = vcvt.s32.f32 %v4427
    %vm4429 = vcmp.ge.s32.totalorder %v4353, 30
    %vm4430 = vcmp.lt.s32.totalorder %v4353, 32
    %vm4431 = vmand %vm4429, %vm4430
    %v4432 = vsel %vm4431, 1, 0
    %v4433 = vcvt.s32.f32 %v4432
    %vm4434 = vcmp.ge.s32.totalorder %v4353, 32
    %vm4435 = vcmp.lt.s32.totalorder %v4353, 34
    %vm4436 = vmand %vm4434, %vm4435
    %v4437 = vsel %vm4436, 1, 0
    %v4438 = vcvt.s32.f32 %v4437
    %vm4439 = vcmp.ge.s32.totalorder %v4353, 34
    %vm4440 = vcmp.lt.s32.totalorder %v4353, 36
    %vm4441 = vmand %vm4439, %vm4440
    %v4442 = vsel %vm4441, 1, 0
    %v4443 = vcvt.s32.f32 %v4442
    %vm4444 = vcmp.ge.s32.totalorder %v4353, 36
    %vm4445 = vcmp.lt.s32.totalorder %v4353, 38
    %vm4446 = vmand %vm4444, %vm4445
    %v4447 = vsel %vm4446, 1, 0
    %v4448 = vcvt.s32.f32 %v4447
    %vm4449 = vcmp.ge.s32.totalorder %v4353, 38
    %vm4450 = vcmp.lt.s32.totalorder %v4353, 40
    %vm4451 = vmand %vm4449, %vm4450
    %v4452 = vsel %vm4451, 1, 0
    %v4453 = vcvt.s32.f32 %v4452
    %vm4454 = vcmp.ge.s32.totalorder %v4353, 40
    %vm4455 = vcmp.lt.s32.totalorder %v4353, 42
    %vm4456 = vmand %vm4454, %vm4455
    %v4457 = vsel %vm4456, 1, 0
    %v4458 = vcvt.s32.f32 %v4457
    %vm4459 = vcmp.ge.s32.totalorder %v4353, 42
    %vm4460 = vcmp.lt.s32.totalorder %v4353, 44
    %vm4461 = vmand %vm4459, %vm4460
    %v4462 = vsel %vm4461, 1, 0
    %v4463 = vcvt.s32.f32 %v4462
    %vm4464 = vcmp.ge.s32.totalorder %v4353, 44
    %vm4465 = vcmp.lt.s32.totalorder %v4353, 46
    %vm4466 = vmand %vm4464, %vm4465
    %v4467 = vsel %vm4466, 1, 0
    %v4468 = vcvt.s32.f32 %v4467
    %vm4469 = vcmp.ge.s32.totalorder %v4353, 46
    %vm4470 = vcmp.lt.s32.totalorder %v4353, 48
    %vm4471 = vmand %vm4469, %vm4470
    %v4472 = vsel %vm4471, 1, 0
    %v4473 = vcvt.s32.f32 %v4472
    %vm4474 = vcmp.ge.s32.totalorder %v4353, 48
    %vm4475 = vcmp.lt.s32.totalorder %v4353, 50
    %vm4476 = vmand %vm4474, %vm4475
    %v4477 = vsel %vm4476, 1, 0
    %v4478 = vcvt.s32.f32 %v4477
    %v4479 = vlaneseq
    %v4480 = vshrl.u32 %v4479, 7
    %v4481 = vadd.s32 %v4480, 8
    %v4482 = vadd.s32 %v4480, 16
    %v4483 = vadd.s32 %v4480, 24
    %v4484 = vadd.s32 %v4480, 32
    %v4485 = vadd.s32 %v4480, 40
    %v4486 = vadd.s32 %v4480, 48
    %v4487 = vadd.s32 %v4480, 56
    %v4488 = vand.u32 %v4480, 1
    %v4489 = vand.u32 %v4481, 1
    %v4490 = vand.u32 %v4482, 1
    %v4491 = vand.u32 %v4483, 1
    %v4492 = vand.u32 %v4484, 1
    %v4493 = vand.u32 %v4485, 1
    %v4494 = vand.u32 %v4486, 1
    %v4495 = vand.u32 %v4487, 1
    %vm4496 = vcmp.eq.s32.totalorder %v4488, %v4353
    %vm4497 = vcmp.eq.s32.totalorder %v4489, %v4353
    %vm4498 = vcmp.eq.s32.totalorder %v4490, %v4353
    %vm4499 = vcmp.eq.s32.totalorder %v4491, %v4353
    %vm4500 = vcmp.eq.s32.totalorder %v4492, %v4353
    %vm4501 = vcmp.eq.s32.totalorder %v4493, %v4353
    %vm4502 = vcmp.eq.s32.totalorder %v4494, %v4353
    %vm4503 = vcmp.eq.s32.totalorder %v4495, %v4353
    %vm4504 = vcmp.lt.s32.totalorder %v4480, 50
    %vm4505 = vcmp.lt.s32.totalorder %v4481, 50
    %vm4506 = vcmp.lt.s32.totalorder %v4482, 50
    %vm4507 = vcmp.lt.s32.totalorder %v4483, 50
    %vm4508 = vcmp.lt.s32.totalorder %v4484, 50
    %vm4509 = vcmp.lt.s32.totalorder %v4485, 50
    %vm4510 = vcmp.lt.s32.totalorder %v4486, 50
    %vm4511 = vcmp.lt.s32.totalorder %v4487, 50
    %vm4512 = vmand %vm4496, %vm4504
    %vm4513 = vmand %vm4497, %vm4505
    %vm4514 = vmand %vm4498, %vm4506
    %vm4515 = vmand %vm4499, %vm4507
    %vm4516 = vmand %vm4500, %vm4508
    %vm4517 = vmand %vm4501, %vm4509
    %vm4518 = vmand %vm4502, %vm4510
    %vm4519 = vmand %vm4503, %vm4511
    %v4520 = vsel %vm4512, 1, 0
    %v4521 = vsel %vm4513, 1, 0
    %v4522 = vsel %vm4514, 1, 0
    %v4523 = vsel %vm4515, 1, 0
    %v4524 = vsel %vm4516, 1, 0
    %v4525 = vsel %vm4517, 1, 0
    %v4526 = vsel %vm4518, 1, 0
    %v4527 = vsel %vm4519, 1, 0
    %v4528 = vcvt.s32.f32 %v4520
    %v4529 = vcvt.s32.f32 %v4521
    %v4530 = vcvt.s32.f32 %v4522
    %v4531 = vcvt.s32.f32 %v4523
    %v4532 = vcvt.s32.f32 %v4524
    %v4533 = vcvt.s32.f32 %v4525
    %v4534 = vcvt.s32.f32 %v4526
    %v4535 = vcvt.s32.f32 %v4527
    %v4536 = vadd.s32 %v4353, 50
    %vm4537 = vcmp.eq.s32.totalorder %v4480, %v4536
    %vm4538 = vcmp.eq.s32.totalorder %v4481, %v4536
    %vm4539 = vcmp.eq.s32.totalorder %v4482, %v4536
    %vm4540 = vcmp.eq.s32.totalorder %v4483, %v4536
    %vm4541 = vcmp.eq.s32.totalorder %v4484, %v4536
    %vm4542 = vcmp.eq.s32.totalorder %v4485, %v4536
    %vm4543 = vcmp.eq.s32.totalorder %v4486, %v4536
    %vm4544 = vcmp.eq.s32.totalorder %v4487, %v4536
    %v4545 = vsel %vm4537, 1, 0
    %v4546 = vsel %vm4538, 1, 0
    %v4547 = vsel %vm4539, 1, 0
    %v4548 = vsel %vm4540, 1, 0
    %v4549 = vsel %vm4541, 1, 0
    %v4550 = vsel %vm4542, 1, 0
    %v4551 = vsel %vm4543, 1, 0
    %v4552 = vsel %vm4544, 1, 0
    %v4553 = vcvt.s32.f32 %v4545
    %v4554 = vcvt.s32.f32 %v4546
    %v4555 = vcvt.s32.f32 %v4547
    %v4556 = vcvt.s32.f32 %v4548
    %v4557 = vcvt.s32.f32 %v4549
    %v4558 = vcvt.s32.f32 %v4550
    %v4559 = vcvt.s32.f32 %v4551
    %v4560 = vcvt.s32.f32 %v4552
    %v4561 = vld [vmem:[#allocation3 + $0x4] sm:$0xff]
    %v4562 = vld [vmem:[#allocation3 + $0xc] sm:$0xff]
    %v4563 = vld [vmem:[#allocation3 + $0x14] sm:$0xff]
    %v4564 = vld [vmem:[#allocation3 + $0x1c] sm:$0xff]
    %v4565 = vld [vmem:[#allocation3 + $0x24] sm:$0xff]
    %v4566 = vld [vmem:[#allocation3 + $0x2c] sm:$0xff]
    %v4567 = vld [vmem:[#allocation3 + $0x34] sm:$0xff]
    %v4568 = vld [vmem:[#allocation3 + $0x3c] sm:$0xff]
    %v4569 = vmul.f32 %v4561, %v4358
    %v4570 = vmul.f32 %v4562, %v4358
    %v4571 = vmul.f32 %v4563, %v4358
    %v4572 = vmul.f32 %v4564, %v4358
    %v4573 = vmul.f32 %v4565, %v4358
    %v4574 = vmul.f32 %v4566, %v4358
    %v4575 = vmul.f32 %v4567, %v4358
    %v4576 = vmul.f32 %v4568, %v4358
    %v4577 = vld [vmem:[#allocation3 + $0x5] sm:$0xff]
    %v4578 = vld [vmem:[#allocation3 + $0xd] sm:$0xff]
    %v4579 = vld [vmem:[#allocation3 + $0x15] sm:$0xff]
    %v4580 = vld [vmem:[#allocation3 + $0x1d] sm:$0xff]
    %v4581 = vld [vmem:[#allocation3 + $0x25] sm:$0xff]
    %v4582 = vld [vmem:[#allocation3 + $0x2d] sm:$0xff]
    %v4583 = vld [vmem:[#allocation3 + $0x35] sm:$0xff]
    %v4584 = vld [vmem:[#allocation3 + $0x3d] sm:$0xff]
    %v4585 = vmul.f32 %v4577, %v4363
    %v4586 = vmul.f32 %v4578, %v4363
    %v4587 = vmul.f32 %v4579, %v4363
    %v4588 = vmul.f32 %v4580, %v4363
    %v4589 = vmul.f32 %v4581, %v4363
    %v4590 = vmul.f32 %v4582, %v4363
    %v4591 = vmul.f32 %v4583, %v4363
    %v4592 = vmul.f32 %v4584, %v4363
    %v4593 = vadd.f32 %v4569, %v4585
    %v4594 = vadd.f32 %v4570, %v4586
    %v4595 = vadd.f32 %v4571, %v4587
    %v4596 = vadd.f32 %v4572, %v4588
    %v4597 = vadd.f32 %v4573, %v4589
    %v4598 = vadd.f32 %v4574, %v4590
    %v4599 = vadd.f32 %v4575, %v4591
    %v4600 = vadd.f32 %v4576, %v4592
    %v4601 = vld [vmem:[#allocation3 + $0x6] sm:$0xff]
    %v4602 = vld [vmem:[#allocation3 + $0xe] sm:$0xff]
    %v4603 = vld [vmem:[#allocation3 + $0x16] sm:$0xff]
    %v4604 = vld [vmem:[#allocation3 + $0x1e] sm:$0xff]
    %v4605 = vld [vmem:[#allocation3 + $0x26] sm:$0xff]
    %v4606 = vld [vmem:[#allocation3 + $0x2e] sm:$0xff]
    %v4607 = vld [vmem:[#allocation3 + $0x36] sm:$0xff]
    %v4608 = vld [vmem:[#allocation3 + $0x3e] sm:$0xff]
    %v4609 = vmul.f32 %v4601, %v4368
    %v4610 = vmul.f32 %v4602, %v4368
    %v4611 = vmul.f32 %v4603, %v4368
    %v4612 = vmul.f32 %v4604, %v4368
    %v4613 = vmul.f32 %v4605, %v4368
    %v4614 = vmul.f32 %v4606, %v4368
    %v4615 = vmul.f32 %v4607, %v4368
    %v4616 = vmul.f32 %v4608, %v4368
    %v4617 = vadd.f32 %v4593, %v4609
    %v4618 = vadd.f32 %v4594, %v4610
    %v4619 = vadd.f32 %v4595, %v4611
    %v4620 = vadd.f32 %v4596, %v4612
    %v4621 = vadd.f32 %v4597, %v4613
    %v4622 = vadd.f32 %v4598, %v4614
    %v4623 = vadd.f32 %v4599, %v4615
    %v4624 = vadd.f32 %v4600, %v4616
    %v4625 = vld [vmem:[#allocation3 + $0x7] sm:$0xff]
    %v4626 = vld [vmem:[#allocation3 + $0xf] sm:$0xff]
    %v4627 = vld [vmem:[#allocation3 + $0x17] sm:$0xff]
    %v4628 = vld [vmem:[#allocation3 + $0x1f] sm:$0xff]
    %v4629 = vld [vmem:[#allocation3 + $0x27] sm:$0xff]
    %v4630 = vld [vmem:[#allocation3 + $0x2f] sm:$0xff]
    %v4631 = vld [vmem:[#allocation3 + $0x37] sm:$0xff]
    %v4632 = vld [vmem:[#allocation3 + $0x3f] sm:$0xff]
    %v4633 = vmul.f32 %v4625, %v4373
    %v4634 = vmul.f32 %v4626, %v4373
    %v4635 = vmul.f32 %v4627, %v4373
    %v4636 = vmul.f32 %v4628, %v4373
    %v4637 = vmul.f32 %v4629, %v4373
    %v4638 = vmul.f32 %v4630, %v4373
    %v4639 = vmul.f32 %v4631, %v4373
    %v4640 = vmul.f32 %v4632, %v4373
    %v4641 = vadd.f32 %v4617, %v4633
    %v4642 = vadd.f32 %v4618, %v4634
    %v4643 = vadd.f32 %v4619, %v4635
    %v4644 = vadd.f32 %v4620, %v4636
    %v4645 = vadd.f32 %v4621, %v4637
    %v4646 = vadd.f32 %v4622, %v4638
    %v4647 = vadd.f32 %v4623, %v4639
    %v4648 = vadd.f32 %v4624, %v4640
    %v4649 = vld [vmem:[#allocation3 + $0x8] sm:$0xff]
    %v4650 = vld [vmem:[#allocation3 + $0x10] sm:$0xff]
    %v4651 = vld [vmem:[#allocation3 + $0x18] sm:$0xff]
    %v4652 = vld [vmem:[#allocation3 + $0x20] sm:$0xff]
    %v4653 = vld [vmem:[#allocation3 + $0x28] sm:$0xff]
    %v4654 = vld [vmem:[#allocation3 + $0x30] sm:$0xff]
    %v4655 = vld [vmem:[#allocation3 + $0x38] sm:$0xff]
    %v4656 = vld [vmem:[#allocation3 + $0x40] sm:$0xff]
    %v4657 = vmul.f32 %v4649, %v4378
    %v4658 = vmul.f32 %v4650, %v4378
    %v4659 = vmul.f32 %v4651, %v4378
    %v4660 = vmul.f32 %v4652, %v4378
    %v4661 = vmul.f32 %v4653, %v4378
    %v4662 = vmul.f32 %v4654, %v4378
    %v4663 = vmul.f32 %v4655, %v4378
    %v4664 = vmul.f32 %v4656, %v4378
    %v4665 = vadd.f32 %v4641, %v4657
    %v4666 = vadd.f32 %v4642, %v4658
    %v4667 = vadd.f32 %v4643, %v4659
    %v4668 = vadd.f32 %v4644, %v4660
    %v4669 = vadd.f32 %v4645, %v4661
    %v4670 = vadd.f32 %v4646, %v4662
    %v4671 = vadd.f32 %v4647, %v4663
    %v4672 = vadd.f32 %v4648, %v4664
    %v4673 = vld [vmem:[#allocation3 + $0x9] sm:$0xff]
    %v4674 = vld [vmem:[#allocation3 + $0x11] sm:$0xff]
    %v4675 = vld [vmem:[#allocation3 + $0x19] sm:$0xff]
    %v4676 = vld [vmem:[#allocation3 + $0x21] sm:$0xff]
    %v4677 = vld [vmem:[#allocation3 + $0x29] sm:$0xff]
    %v4678 = vld [vmem:[#allocation3 + $0x31] sm:$0xff]
    %v4679 = vld [vmem:[#allocation3 + $0x39] sm:$0xff]
    %v4680 = vld [vmem:[#allocation3 + $0x41] sm:$0xff]
    %v4681 = vmul.f32 %v4673, %v4383
    %v4682 = vmul.f32 %v4674, %v4383
    %v4683 = vmul.f32 %v4675, %v4383
    %v4684 = vmul.f32 %v4676, %v4383
    %v4685 = vmul.f32 %v4677, %v4383
    %v4686 = vmul.f32 %v4678, %v4383
    %v4687 = vmul.f32 %v4679, %v4383
    %v4688 = vmul.f32 %v4680, %v4383
    %v4689 = vadd.f32 %v4665, %v4681
    %v4690 = vadd.f32 %v4666, %v4682
    %v4691 = vadd.f32 %v4667, %v4683
    %v4692 = vadd.f32 %v4668, %v4684
    %v4693 = vadd.f32 %v4669, %v4685
    %v4694 = vadd.f32 %v4670, %v4686
    %v4695 = vadd.f32 %v4671, %v4687
    %v4696 = vadd.f32 %v4672, %v4688
    %v4697 = vld [vmem:[#allocation3 + $0xa] sm:$0xff]
    %v4698 = vld [vmem:[#allocation3 + $0x12] sm:$0xff]
    %v4699 = vld [vmem:[#allocation3 + $0x1a] sm:$0xff]
    %v4700 = vld [vmem:[#allocation3 + $0x22] sm:$0xff]
    %v4701 = vld [vmem:[#allocation3 + $0x2a] sm:$0xff]
    %v4702 = vld [vmem:[#allocation3 + $0x32] sm:$0xff]
    %v4703 = vld [vmem:[#allocation3 + $0x3a] sm:$0xff]
    %v4704 = vld [vmem:[#allocation3 + $0x42] sm:$0xff]
    %v4705 = vmul.f32 %v4697, %v4388
    %v4706 = vmul.f32 %v4698, %v4388
    %v4707 = vmul.f32 %v4699, %v4388
    %v4708 = vmul.f32 %v4700, %v4388
    %v4709 = vmul.f32 %v4701, %v4388
    %v4710 = vmul.f32 %v4702, %v4388
    %v4711 = vmul.f32 %v4703, %v4388
    %v4712 = vmul.f32 %v4704, %v4388
    %v4713 = vadd.f32 %v4689, %v4705
    %v4714 = vadd.f32 %v4690, %v4706
    %v4715 = vadd.f32 %v4691, %v4707
    %v4716 = vadd.f32 %v4692, %v4708
    %v4717 = vadd.f32 %v4693, %v4709
    %v4718 = vadd.f32 %v4694, %v4710
    %v4719 = vadd.f32 %v4695, %v4711
    %v4720 = vadd.f32 %v4696, %v4712
    %v4721 = vld [vmem:[#allocation3 + $0xb] sm:$0xff]
    %v4722 = vld [vmem:[#allocation3 + $0x13] sm:$0xff]
    %v4723 = vld [vmem:[#allocation3 + $0x1b] sm:$0xff]
    %v4724 = vld [vmem:[#allocation3 + $0x23] sm:$0xff]
    %v4725 = vld [vmem:[#allocation3 + $0x2b] sm:$0xff]
    %v4726 = vld [vmem:[#allocation3 + $0x33] sm:$0xff]
    %v4727 = vld [vmem:[#allocation3 + $0x3b] sm:$0xff]
    %v4728 = vld [vmem:[#allocation3 + $0x43] sm:$0xff]
    %v4729 = vmul.f32 %v4721, %v4393
    %v4730 = vmul.f32 %v4722, %v4393
    %v4731 = vmul.f32 %v4723, %v4393
    %v4732 = vmul.f32 %v4724, %v4393
    %v4733 = vmul.f32 %v4725, %v4393
    %v4734 = vmul.f32 %v4726, %v4393
    %v4735 = vmul.f32 %v4727, %v4393
    %v4736 = vmul.f32 %v4728, %v4393
    %v4737 = vadd.f32 %v4713, %v4729
    %v4738 = vadd.f32 %v4714, %v4730
    %v4739 = vadd.f32 %v4715, %v4731
    %v4740 = vadd.f32 %v4716, %v4732
    %v4741 = vadd.f32 %v4717, %v4733
    %v4742 = vadd.f32 %v4718, %v4734
    %v4743 = vadd.f32 %v4719, %v4735
    %v4744 = vadd.f32 %v4720, %v4736
    %v4745 = vld [vmem:[#allocation3 + $0x44] sm:$0xff]
    %v4746 = vmul.f32 %v4562, %v4398
    %v4747 = vmul.f32 %v4563, %v4398
    %v4748 = vmul.f32 %v4564, %v4398
    %v4749 = vmul.f32 %v4565, %v4398
    %v4750 = vmul.f32 %v4566, %v4398
    %v4751 = vmul.f32 %v4567, %v4398
    %v4752 = vmul.f32 %v4568, %v4398
    %v4753 = vmul.f32 %v4745, %v4398
    %v4754 = vadd.f32 %v4737, %v4746
    %v4755 = vadd.f32 %v4738, %v4747
    %v4756 = vadd.f32 %v4739, %v4748
    %v4757 = vadd.f32 %v4740, %v4749
    %v4758 = vadd.f32 %v4741, %v4750
    %v4759 = vadd.f32 %v4742, %v4751
    %v4760 = vadd.f32 %v4743, %v4752
    %v4761 = vadd.f32 %v4744, %v4753
    %v4762 = vld [vmem:[#allocation3 + $0x45] sm:$0xff]
    %v4763 = vmul.f32 %v4578, %v4403
    %v4764 = vmul.f32 %v4579, %v4403
    %v4765 = vmul.f32 %v4580, %v4403
    %v4766 = vmul.f32 %v4581, %v4403
    %v4767 = vmul.f32 %v4582, %v4403
    %v4768 = vmul.f32 %v4583, %v4403
    %v4769 = vmul.f32 %v4584, %v4403
    %v4770 = vmul.f32 %v4762, %v4403
    %v4771 = vadd.f32 %v4754, %v4763
    %v4772 = vadd.f32 %v4755, %v4764
    %v4773 = vadd.f32 %v4756, %v4765
    %v4774 = vadd.f32 %v4757, %v4766
    %v4775 = vadd.f32 %v4758, %v4767
    %v4776 = vadd.f32 %v4759, %v4768
    %v4777 = vadd.f32 %v4760, %v4769
    %v4778 = vadd.f32 %v4761, %v4770
    %v4779 = vld [vmem:[#allocation3 + $0x46] sm:$0xff]
    %v4780 = vmul.f32 %v4602, %v4408
    %v4781 = vmul.f32 %v4603, %v4408
    %v4782 = vmul.f32 %v4604, %v4408
    %v4783 = vmul.f32 %v4605, %v4408
    %v4784 = vmul.f32 %v4606, %v4408
    %v4785 = vmul.f32 %v4607, %v4408
    %v4786 = vmul.f32 %v4608, %v4408
    %v4787 = vmul.f32 %v4779, %v4408
    %v4788 = vadd.f32 %v4771, %v4780
    %v4789 = vadd.f32 %v4772, %v4781
    %v4790 = vadd.f32 %v4773, %v4782
    %v4791 = vadd.f32 %v4774, %v4783
    %v4792 = vadd.f32 %v4775, %v4784
    %v4793 = vadd.f32 %v4776, %v4785
    %v4794 = vadd.f32 %v4777, %v4786
    %v4795 = vadd.f32 %v4778, %v4787
    %v4796 = vld [vmem:[#allocation3 + $0x47] sm:$0xff]
    %v4797 = vmul.f32 %v4626, %v4413
    %v4798 = vmul.f32 %v4627, %v4413
    %v4799 = vmul.f32 %v4628, %v4413
    %v4800 = vmul.f32 %v4629, %v4413
    %v4801 = vmul.f32 %v4630, %v4413
    %v4802 = vmul.f32 %v4631, %v4413
    %v4803 = vmul.f32 %v4632, %v4413
    %v4804 = vmul.f32 %v4796, %v4413
    %v4805 = vadd.f32 %v4788, %v4797
    %v4806 = vadd.f32 %v4789, %v4798
    %v4807 = vadd.f32 %v4790, %v4799
    %v4808 = vadd.f32 %v4791, %v4800
    %v4809 = vadd.f32 %v4792, %v4801
    %v4810 = vadd.f32 %v4793, %v4802
    %v4811 = vadd.f32 %v4794, %v4803
    %v4812 = vadd.f32 %v4795, %v4804
    %v4813 = vld [vmem:[#allocation3 + $0x48] sm:$0xff]
    %v4814 = vmul.f32 %v4650, %v4418
    %v4815 = vmul.f32 %v4651, %v4418
    %v4816 = vmul.f32 %v4652, %v4418
    %v4817 = vmul.f32 %v4653, %v4418
    %v4818 = vmul.f32 %v4654, %v4418
    %v4819 = vmul.f32 %v4655, %v4418
    %v4820 = vmul.f32 %v4656, %v4418
    %v4821 = vmul.f32 %v4813, %v4418
    %v4822 = vadd.f32 %v4805, %v4814
    %v4823 = vadd.f32 %v4806, %v4815
    %v4824 = vadd.f32 %v4807, %v4816
    %v4825 = vadd.f32 %v4808, %v4817
    %v4826 = vadd.f32 %v4809, %v4818
    %v4827 = vadd.f32 %v4810, %v4819
    %v4828 = vadd.f32 %v4811, %v4820
    %v4829 = vadd.f32 %v4812, %v4821
    %v4830 = vld [vmem:[#allocation3 + $0x49] sm:$0xff]
    %v4831 = vmul.f32 %v4674, %v4423
    %v4832 = vmul.f32 %v4675, %v4423
    %v4833 = vmul.f32 %v4676, %v4423
    %v4834 = vmul.f32 %v4677, %v4423
    %v4835 = vmul.f32 %v4678, %v4423
    %v4836 = vmul.f32 %v4679, %v4423
    %v4837 = vmul.f32 %v4680, %v4423
    %v4838 = vmul.f32 %v4830, %v4423
    %v4839 = vadd.f32 %v4822, %v4831
    %v4840 = vadd.f32 %v4823, %v4832
    %v4841 = vadd.f32 %v4824, %v4833
    %v4842 = vadd.f32 %v4825, %v4834
    %v4843 = vadd.f32 %v4826, %v4835
    %v4844 = vadd.f32 %v4827, %v4836
    %v4845 = vadd.f32 %v4828, %v4837
    %v4846 = vadd.f32 %v4829, %v4838
    %v4847 = vld [vmem:[#allocation3 + $0x4a] sm:$0xff]
    %v4848 = vmul.f32 %v4698, %v4428
    %v4849 = vmul.f32 %v4699, %v4428
    %v4850 = vmul.f32 %v4700, %v4428
    %v4851 = vmul.f32 %v4701, %v4428
    %v4852 = vmul.f32 %v4702, %v4428
    %v4853 = vmul.f32 %v4703, %v4428
    %v4854 = vmul.f32 %v4704, %v4428
    %v4855 = vmul.f32 %v4847, %v4428
    %v4856 = vadd.f32 %v4839, %v4848
    %v4857 = vadd.f32 %v4840, %v4849
    %v4858 = vadd.f32 %v4841, %v4850
    %v4859 = vadd.f32 %v4842, %v4851
    %v4860 = vadd.f32 %v4843, %v4852
    %v4861 = vadd.f32 %v4844, %v4853
    %v4862 = vadd.f32 %v4845, %v4854
    %v4863 = vadd.f32 %v4846, %v4855
    %v4864 = vld [vmem:[#allocation3 + $0x4b] sm:$0xff]
    %v4865 = vmul.f32 %v4722, %v4433
    %v4866 = vmul.f32 %v4723, %v4433
    %v4867 = vmul.f32 %v4724, %v4433
    %v4868 = vmul.f32 %v4725, %v4433
    %v4869 = vmul.f32 %v4726, %v4433
    %v4870 = vmul.f32 %v4727, %v4433
    %v4871 = vmul.f32 %v4728, %v4433
    %v4872 = vmul.f32 %v4864, %v4433
    %v4873 = vadd.f32 %v4856, %v4865
    %v4874 = vadd.f32 %v4857, %v4866
    %v4875 = vadd.f32 %v4858, %v4867
    %v4876 = vadd.f32 %v4859, %v4868
    %v4877 = vadd.f32 %v4860, %v4869
    %v4878 = vadd.f32 %v4861, %v4870
    %v4879 = vadd.f32 %v4862, %v4871
    %v4880 = vadd.f32 %v4863, %v4872
    %v4881 = vld [vmem:[#allocation3 + $0x4c] sm:$0xff]
    %v4882 = vmul.f32 %v4563, %v4438
    %v4883 = vmul.f32 %v4564, %v4438
    %v4884 = vmul.f32 %v4565, %v4438
    %v4885 = vmul.f32 %v4566, %v4438
    %v4886 = vmul.f32 %v4567, %v4438
    %v4887 = vmul.f32 %v4568, %v4438
    %v4888 = vmul.f32 %v4745, %v4438
    %v4889 = vmul.f32 %v4881, %v4438
    %v4890 = vadd.f32 %v4873, %v4882
    %v4891 = vadd.f32 %v4874, %v4883
    %v4892 = vadd.f32 %v4875, %v4884
    %v4893 = vadd.f32 %v4876, %v4885
    %v4894 = vadd.f32 %v4877, %v4886
    %v4895 = vadd.f32 %v4878, %v4887
    %v4896 = vadd.f32 %v4879, %v4888
    %v4897 = vadd.f32 %v4880, %v4889
    %v4898 = vld [vmem:[#allocation3 + $0x4d] sm:$0xff]
    %v4899 = vmul.f32 %v4579, %v4443
    %v4900 = vmul.f32 %v4580, %v4443
    %v4901 = vmul.f32 %v4581, %v4443
    %v4902 = vmul.f32 %v4582, %v4443
    %v4903 = vmul.f32 %v4583, %v4443
    %v4904 = vmul.f32 %v4584, %v4443
    %v4905 = vmul.f32 %v4762, %v4443
    %v4906 = vmul.f32 %v4898, %v4443
    %v4907 = vadd.f32 %v4890, %v4899
    %v4908 = vadd.f32 %v4891, %v4900
    %v4909 = vadd.f32 %v4892, %v4901
    %v4910 = vadd.f32 %v4893, %v4902
    %v4911 = vadd.f32 %v4894, %v4903
    %v4912 = vadd.f32 %v4895, %v4904
    %v4913 = vadd.f32 %v4896, %v4905
    %v4914 = vadd.f32 %v4897, %v4906
    %v4915 = vld [vmem:[#allocation3 + $0x4e] sm:$0xff]
    %v4916 = vmul.f32 %v4603, %v4448
    %v4917 = vmul.f32 %v4604, %v4448
    %v4918 = vmul.f32 %v4605, %v4448
    %v4919 = vmul.f32 %v4606, %v4448
    %v4920 = vmul.f32 %v4607, %v4448
    %v4921 = vmul.f32 %v4608, %v4448
    %v4922 = vmul.f32 %v4779, %v4448
    %v4923 = vmul.f32 %v4915, %v4448
    %v4924 = vadd.f32 %v4907, %v4916
    %v4925 = vadd.f32 %v4908, %v4917
    %v4926 = vadd.f32 %v4909, %v4918
    %v4927 = vadd.f32 %v4910, %v4919
    %v4928 = vadd.f32 %v4911, %v4920
    %v4929 = vadd.f32 %v4912, %v4921
    %v4930 = vadd.f32 %v4913, %v4922
    %v4931 = vadd.f32 %v4914, %v4923
    %v4932 = vld [vmem:[#allocation3 + $0x4f] sm:$0xff]
    %v4933 = vmul.f32 %v4627, %v4453
    %v4934 = vmul.f32 %v4628, %v4453
    %v4935 = vmul.f32 %v4629, %v4453
    %v4936 = vmul.f32 %v4630, %v4453
    %v4937 = vmul.f32 %v4631, %v4453
    %v4938 = vmul.f32 %v4632, %v4453
    %v4939 = vmul.f32 %v4796, %v4453
    %v4940 = vmul.f32 %v4932, %v4453
    %v4941 = vadd.f32 %v4924, %v4933
    %v4942 = vadd.f32 %v4925, %v4934
    %v4943 = vadd.f32 %v4926, %v4935
    %v4944 = vadd.f32 %v4927, %v4936
    %v4945 = vadd.f32 %v4928, %v4937
    %v4946 = vadd.f32 %v4929, %v4938
    %v4947 = vadd.f32 %v4930, %v4939
    %v4948 = vadd.f32 %v4931, %v4940
    %v4949 = vld [vmem:[#allocation3 + $0x50] sm:$0xff]
    %v4950 = vmul.f32 %v4651, %v4458
    %v4951 = vmul.f32 %v4652, %v4458
    %v4952 = vmul.f32 %v4653, %v4458
    %v4953 = vmul.f32 %v4654, %v4458
    %v4954 = vmul.f32 %v4655, %v4458
    %v4955 = vmul.f32 %v4656, %v4458
    %v4956 = vmul.f32 %v4813, %v4458
    %v4957 = vmul.f32 %v4949, %v4458
    %v4958 = vadd.f32 %v4941, %v4950
    %v4959 = vadd.f32 %v4942, %v4951
    %v4960 = vadd.f32 %v4943, %v4952
    %v4961 = vadd.f32 %v4944, %v4953
    %v4962 = vadd.f32 %v4945, %v4954
    %v4963 = vadd.f32 %v4946, %v4955
    %v4964 = vadd.f32 %v4947, %v4956
    %v4965 = vadd.f32 %v4948, %v4957
    %v4966 = vld [vmem:[#allocation3 + $0x51] sm:$0xff]
    %v4967 = vmul.f32 %v4675, %v4463
    %v4968 = vmul.f32 %v4676, %v4463
    %v4969 = vmul.f32 %v4677, %v4463
    %v4970 = vmul.f32 %v4678, %v4463
    %v4971 = vmul.f32 %v4679, %v4463
    %v4972 = vmul.f32 %v4680, %v4463
    %v4973 = vmul.f32 %v4830, %v4463
    %v4974 = vmul.f32 %v4966, %v4463
    %v4975 = vadd.f32 %v4958, %v4967
    %v4976 = vadd.f32 %v4959, %v4968
    %v4977 = vadd.f32 %v4960, %v4969
    %v4978 = vadd.f32 %v4961, %v4970
    %v4979 = vadd.f32 %v4962, %v4971
    %v4980 = vadd.f32 %v4963, %v4972
    %v4981 = vadd.f32 %v4964, %v4973
    %v4982 = vadd.f32 %v4965, %v4974
    %v4983 = vld [vmem:[#allocation3 + $0x52] sm:$0xff]
    %v4984 = vmul.f32 %v4699, %v4468
    %v4985 = vmul.f32 %v4700, %v4468
    %v4986 = vmul.f32 %v4701, %v4468
    %v4987 = vmul.f32 %v4702, %v4468
    %v4988 = vmul.f32 %v4703, %v4468
    %v4989 = vmul.f32 %v4704, %v4468
    %v4990 = vmul.f32 %v4847, %v4468
    %v4991 = vmul.f32 %v4983, %v4468
    %v4992 = vadd.f32 %v4975, %v4984
    %v4993 = vadd.f32 %v4976, %v4985
    %v4994 = vadd.f32 %v4977, %v4986
    %v4995 = vadd.f32 %v4978, %v4987
    %v4996 = vadd.f32 %v4979, %v4988
    %v4997 = vadd.f32 %v4980, %v4989
    %v4998 = vadd.f32 %v4981, %v4990
    %v4999 = vadd.f32 %v4982, %v4991
    %v5000 = vld [vmem:[#allocation3 + $0x53] sm:$0xff]
    %v5001 = vmul.f32 %v4723, %v4473
    %v5002 = vmul.f32 %v4724, %v4473
    %v5003 = vmul.f32 %v4725, %v4473
    %v5004 = vmul.f32 %v4726, %v4473
    %v5005 = vmul.f32 %v4727, %v4473
    %v5006 = vmul.f32 %v4728, %v4473
    %v5007 = vmul.f32 %v4864, %v4473
    %v5008 = vmul.f32 %v5000, %v4473
    %v5009 = vadd.f32 %v4992, %v5001
    %v5010 = vadd.f32 %v4993, %v5002
    %v5011 = vadd.f32 %v4994, %v5003
    %v5012 = vadd.f32 %v4995, %v5004
    %v5013 = vadd.f32 %v4996, %v5005
    %v5014 = vadd.f32 %v4997, %v5006
    %v5015 = vadd.f32 %v4998, %v5007
    %v5016 = vadd.f32 %v4999, %v5008
    %v5017 = vld [vmem:[#allocation3 + $0x54] sm:$0xff]
    %v5018 = vmul.f32 %v4564, %v4478
    %v5019 = vmul.f32 %v4565, %v4478
    %v5020 = vmul.f32 %v4566, %v4478
    %v5021 = vmul.f32 %v4567, %v4478
    %v5022 = vmul.f32 %v4568, %v4478
    %v5023 = vmul.f32 %v4745, %v4478
    %v5024 = vmul.f32 %v4881, %v4478
    %v5025 = vmul.f32 %v5017, %v4478
    %v5026 = vadd.f32 %v5009, %v5018
    %v5027 = vadd.f32 %v5010, %v5019
    %v5028 = vadd.f32 %v5011, %v5020
    %v5029 = vadd.f32 %v5012, %v5021
    %v5030 = vadd.f32 %v5013, %v5022
    %v5031 = vadd.f32 %v5014, %v5023
    %v5032 = vadd.f32 %v5015, %v5024
    %v5033 = vadd.f32 %v5016, %v5025
    %v5034 = vsel %vm48, %v4650, 0.0
    %v5035 = vsel %vm48, %v4651, 0.0
    %v5036 = vadd.f32 %v5034, %v5035
    %v5037 = vsel %vm48, %v4652, 0.0
    %v5038 = vadd.f32 %v5036, %v5037
    %v5039 = vsel %vm48, %v4653, 0.0
    %v5040 = vadd.f32 %v5038, %v5039
    %v5041 = vsel %vm48, %v4654, 0.0
    %v5042 = vadd.f32 %v5040, %v5041
    %v5043 = vsel %vm48, %v4655, 0.0
    %v5044 = vadd.f32 %v5042, %v5043
    %v5045 = vsel %vm48, %v4656, 0.0
    %v5046 = vadd.f32 %v5044, %v5045
    %v5047 = vsel %vm48, %v4813, 0.0
    %v5048 = vadd.f32 %v5046, %v5047
    %v5049 = vrot.slane %v5048, 4
    %v5050 = vadd.f32 %v5048, %v5049
    %v5051 = vrot.slane %v5050, 2
    %v5052 = vadd.f32 %v5050, %v5051
    %v5053 = vrot.slane %v5052, 1
    %v5054 = vadd.f32 %v5052, %v5053
    %v5056 = vsel %vm48, %v5054, 0
    %5058 = vmatprep.subr.mxu0 0.0
    %5059 = vmatpush1.msra.mxu0 %v4553
    %5060 = vmatprep.subr.mxu0 0.0
    %5061 = vmatpush1.msra.mxu0 %v4554
    %5062 = vmatprep.subr.mxu0 0.0
    %5063 = vmatpush1.msra.mxu0 %v4555
    %5064 = vmatprep.subr.mxu0 0.0
    %5065 = vmatpush1.msra.mxu0 %v4556
    %5066 = vmatprep.subr.mxu0 0.0
    %5067 = vmatpush1.msra.mxu0 %v4557
    %5068 = vmatprep.subr.mxu0 0.0
    %5069 = vmatpush1.msra.mxu0 %v4558
    %5070 = vmatprep.subr.mxu0 0.0
    %5071 = vmatpush1.msra.mxu0 %v4559
    %5072 = vmatprep.subr.mxu0 0.0
    %5073 = vmatpush1.msra.mxu0 %v4560
    %5074 = vmatprep.subr.mxu0 0.0
    %5075 = vmatpush1.msra.mxu0 0.0
    %5076 = vmatprep.subr.mxu0 0.0
    %5077 = vmatpush1.msra.mxu0 0.0
    %5078 = vmatprep.subr.mxu0 0.0
    %5079 = vmatpush1.msra.mxu0 0.0
    %5080 = vmatprep.subr.mxu0 0.0
    %5081 = vmatpush1.msra.mxu0 0.0
    %5082 = vmatprep.subr.mxu0 0.0
    %5083 = vmatpush1.msra.mxu0 0.0
    %5084 = vmatprep.subr.mxu0 0.0
    %5085 = vmatpush1.msra.mxu0 0.0
    %5086 = vmatprep.subr.mxu0 0.0
    %5087 = vmatpush1.msra.mxu0 0.0
    %5088 = vmatprep.subr.mxu0 0.0
    %5089 = vmatpush1.msra.mxu0 0.0
    %5090 = vmatprep.subr.mxu0 0.0
    %5091 = vmatpush1.msra.mxu0 0.0
    %5092 = vmatprep.subr.mxu0 0.0
    %5093 = vmatpush1.msra.mxu0 0.0
    %5094 = vmatprep.subr.mxu0 0.0
    %5095 = vmatpush1.msra.mxu0 0.0
    %5096 = vmatprep.subr.mxu0 0.0
    %5097 = vmatpush1.msra.mxu0 0.0
    %5098 = vmatprep.subr.mxu0 0.0
    %5099 = vmatpush1.msra.mxu0 0.0
    %5100 = vmatprep.subr.mxu0 0.0
    %5101 = vmatpush1.msra.mxu0 0.0
    %5102 = vmatprep.subr.mxu0 0.0
    %5103 = vmatpush1.msra.mxu0 0.0
    %5104 = vmatprep.subr.mxu0 0.0
    %5105 = vmatpush1.msra.mxu0 0.0
    %5106 = vmatprep.subr.mxu0 0.0
    %5107 = vmatpush1.msra.mxu0 0.0
    %5108 = vmatprep.subr.mxu0 0.0
    %5109 = vmatpush1.msra.mxu0 0.0
    %5110 = vmatprep.subr.mxu0 0.0
    %5111 = vmatpush1.msra.mxu0 0.0
    %5112 = vmatprep.subr.mxu0 0.0
    %5113 = vmatpush1.msra.mxu0 0.0
    %5114 = vmatprep.subr.mxu0 0.0
    %5115 = vmatpush1.msra.mxu0 0.0
    %5116 = vmatprep.subr.mxu0 0.0
    %5117 = vmatpush1.msra.mxu0 0.0
    %5118 = vmatprep.subr.mxu0 0.0
    %5119 = vmatpush1.msra.mxu0 0.0
    %5120 = vmatprep.subr.mxu0 0.0
    %5121 = vmatpush1.msra.mxu0 0.0
    %5122 = vmatprep.mubr.f32.mxu0 0.0
    %5123 = vmatmul.mubr.f32.gmra.mrb[0].mxu0 %v5056
    %v5124 = vpop.f32.mrb[0].mxu0
    %v5125 = vadd.f32 0.0, %v5124
    %v5126 = vpop.f32.mrb[0].mxu0
    %5127 = vdwg.mxu0
    %v5128 = vmul.f32 %v5125, 0.015625
    %v5129 = vld [vmem:[%s7] sm:$0x1]
    %v5130 = vadd.f32 %v5128, %v5129
    %vm5131 = vcmask 8192
    %5132 = vst.msk [vmem:[#allocation7] sm:$0x1] %vm5131, %v5130
    %v5133 = vld [vmem:[%s70 + $0x4] sm:$0xff]
    %v5134 = vld [vmem:[%s70 + $0xc] sm:$0xff]
    %v5135 = vld [vmem:[%s70 + $0x14] sm:$0xff]
    %v5136 = vld [vmem:[%s70 + $0x1c] sm:$0xff]
    %v5137 = vld [vmem:[%s70 + $0x24] sm:$0xff]
    %v5138 = vld [vmem:[%s70 + $0x2c] sm:$0xff]
    %v5139 = vld [vmem:[%s70 + $0x34] sm:$0xff]
    %v5140 = vld [vmem:[%s70 + $0x3c] sm:$0xff]
    %v5141 = vmul.f32 %v5133, %v4358
    %v5142 = vmul.f32 %v5134, %v4358
    %v5143 = vmul.f32 %v5135, %v4358
    %v5144 = vmul.f32 %v5136, %v4358
    %v5145 = vmul.f32 %v5137, %v4358
    %v5146 = vmul.f32 %v5138, %v4358
    %v5147 = vmul.f32 %v5139, %v4358
    %v5148 = vmul.f32 %v5140, %v4358
    %v5149 = vld [vmem:[%s70 + $0x5] sm:$0xff]
    %v5150 = vld [vmem:[%s70 + $0xd] sm:$0xff]
    %v5151 = vld [vmem:[%s70 + $0x15] sm:$0xff]
    %v5152 = vld [vmem:[%s70 + $0x1d] sm:$0xff]
    %v5153 = vld [vmem:[%s70 + $0x25] sm:$0xff]
    %v5154 = vld [vmem:[%s70 + $0x2d] sm:$0xff]
    %v5155 = vld [vmem:[%s70 + $0x35] sm:$0xff]
    %v5156 = vld [vmem:[%s70 + $0x3d] sm:$0xff]
    %v5157 = vmul.f32 %v5149, %v4363
    %v5158 = vmul.f32 %v5150, %v4363
    %v5159 = vmul.f32 %v5151, %v4363
    %v5160 = vmul.f32 %v5152, %v4363
    %v5161 = vmul.f32 %v5153, %v4363
    %v5162 = vmul.f32 %v5154, %v4363
    %v5163 = vmul.f32 %v5155, %v4363
    %v5164 = vmul.f32 %v5156, %v4363
    %v5165 = vadd.f32 %v5141, %v5157
    %v5166 = vadd.f32 %v5142, %v5158
    %v5167 = vadd.f32 %v5143, %v5159
    %v5168 = vadd.f32 %v5144, %v5160
    %v5169 = vadd.f32 %v5145, %v5161
    %v5170 = vadd.f32 %v5146, %v5162
    %v5171 = vadd.f32 %v5147, %v5163
    %v5172 = vadd.f32 %v5148, %v5164
    %v5173 = vld [vmem:[%s70 + $0x6] sm:$0xff]
    %v5174 = vld [vmem:[%s70 + $0xe] sm:$0xff]
    %v5175 = vld [vmem:[%s70 + $0x16] sm:$0xff]
    %v5176 = vld [vmem:[%s70 + $0x1e] sm:$0xff]
    %v5177 = vld [vmem:[%s70 + $0x26] sm:$0xff]
    %v5178 = vld [vmem:[%s70 + $0x2e] sm:$0xff]
    %v5179 = vld [vmem:[%s70 + $0x36] sm:$0xff]
    %v5180 = vld [vmem:[%s70 + $0x3e] sm:$0xff]
    %v5181 = vmul.f32 %v5173, %v4368
    %v5182 = vmul.f32 %v5174, %v4368
    %v5183 = vmul.f32 %v5175, %v4368
    %v5184 = vmul.f32 %v5176, %v4368
    %v5185 = vmul.f32 %v5177, %v4368
    %v5186 = vmul.f32 %v5178, %v4368
    %v5187 = vmul.f32 %v5179, %v4368
    %v5188 = vmul.f32 %v5180, %v4368
    %v5189 = vadd.f32 %v5165, %v5181
    %v5190 = vadd.f32 %v5166, %v5182
    %v5191 = vadd.f32 %v5167, %v5183
    %v5192 = vadd.f32 %v5168, %v5184
    %v5193 = vadd.f32 %v5169, %v5185
    %v5194 = vadd.f32 %v5170, %v5186
    %v5195 = vadd.f32 %v5171, %v5187
    %v5196 = vadd.f32 %v5172, %v5188
    %v5197 = vld [vmem:[%s70 + $0x7] sm:$0xff]
    %v5198 = vld [vmem:[%s70 + $0xf] sm:$0xff]
    %v5199 = vld [vmem:[%s70 + $0x17] sm:$0xff]
    %v5200 = vld [vmem:[%s70 + $0x1f] sm:$0xff]
    %v5201 = vld [vmem:[%s70 + $0x27] sm:$0xff]
    %v5202 = vld [vmem:[%s70 + $0x2f] sm:$0xff]
    %v5203 = vld [vmem:[%s70 + $0x37] sm:$0xff]
    %v5204 = vld [vmem:[%s70 + $0x3f] sm:$0xff]
    %v5205 = vmul.f32 %v5197, %v4373
    %v5206 = vmul.f32 %v5198, %v4373
    %v5207 = vmul.f32 %v5199, %v4373
    %v5208 = vmul.f32 %v5200, %v4373
    %v5209 = vmul.f32 %v5201, %v4373
    %v5210 = vmul.f32 %v5202, %v4373
    %v5211 = vmul.f32 %v5203, %v4373
    %v5212 = vmul.f32 %v5204, %v4373
    %v5213 = vadd.f32 %v5189, %v5205
    %v5214 = vadd.f32 %v5190, %v5206
    %v5215 = vadd.f32 %v5191, %v5207
    %v5216 = vadd.f32 %v5192, %v5208
    %v5217 = vadd.f32 %v5193, %v5209
    %v5218 = vadd.f32 %v5194, %v5210
    %v5219 = vadd.f32 %v5195, %v5211
    %v5220 = vadd.f32 %v5196, %v5212
    %v5221 = vld [vmem:[%s70 + $0x8] sm:$0xff]
    %v5222 = vld [vmem:[%s70 + $0x10] sm:$0xff]
    %v5223 = vld [vmem:[%s70 + $0x18] sm:$0xff]
    %v5224 = vld [vmem:[%s70 + $0x20] sm:$0xff]
    %v5225 = vld [vmem:[%s70 + $0x28] sm:$0xff]
    %v5226 = vld [vmem:[%s70 + $0x30] sm:$0xff]
    %v5227 = vld [vmem:[%s70 + $0x38] sm:$0xff]
    %v5228 = vld [vmem:[%s70 + $0x40] sm:$0xff]
    %v5229 = vmul.f32 %v5221, %v4378
    %v5230 = vmul.f32 %v5222, %v4378
    %v5231 = vmul.f32 %v5223, %v4378
    %v5232 = vmul.f32 %v5224, %v4378
    %v5233 = vmul.f32 %v5225, %v4378
    %v5234 = vmul.f32 %v5226, %v4378
    %v5235 = vmul.f32 %v5227, %v4378
    %v5236 = vmul.f32 %v5228, %v4378
    %v5237 = vadd.f32 %v5213, %v5229
    %v5238 = vadd.f32 %v5214, %v5230
    %v5239 = vadd.f32 %v5215, %v5231
    %v5240 = vadd.f32 %v5216, %v5232
    %v5241 = vadd.f32 %v5217, %v5233
    %v5242 = vadd.f32 %v5218, %v5234
    %v5243 = vadd.f32 %v5219, %v5235
    %v5244 = vadd.f32 %v5220, %v5236
    %v5245 = vld [vmem:[%s70 + $0x9] sm:$0xff]
    %v5246 = vld [vmem:[%s70 + $0x11] sm:$0xff]
    %v5247 = vld [vmem:[%s70 + $0x19] sm:$0xff]
    %v5248 = vld [vmem:[%s70 + $0x21] sm:$0xff]
    %v5249 = vld [vmem:[%s70 + $0x29] sm:$0xff]
    %v5250 = vld [vmem:[%s70 + $0x31] sm:$0xff]
    %v5251 = vld [vmem:[%s70 + $0x39] sm:$0xff]
    %v5252 = vld [vmem:[%s70 + $0x41] sm:$0xff]
    %v5253 = vmul.f32 %v5245, %v4383
    %v5254 = vmul.f32 %v5246, %v4383
    %v5255 = vmul.f32 %v5247, %v4383
    %v5256 = vmul.f32 %v5248, %v4383
    %v5257 = vmul.f32 %v5249, %v4383
    %v5258 = vmul.f32 %v5250, %v4383
    %v5259 = vmul.f32 %v5251, %v4383
    %v5260 = vmul.f32 %v5252, %v4383
    %v5261 = vadd.f32 %v5237, %v5253
    %v5262 = vadd.f32 %v5238, %v5254
    %v5263 = vadd.f32 %v5239, %v5255
    %v5264 = vadd.f32 %v5240, %v5256
    %v5265 = vadd.f32 %v5241, %v5257
    %v5266 = vadd.f32 %v5242, %v5258
    %v5267 = vadd.f32 %v5243, %v5259
    %v5268 = vadd.f32 %v5244, %v5260
    %v5269 = vld [vmem:[%s70 + $0xa] sm:$0xff]
    %v5270 = vld [vmem:[%s70 + $0x12] sm:$0xff]
    %v5271 = vld [vmem:[%s70 + $0x1a] sm:$0xff]
    %v5272 = vld [vmem:[%s70 + $0x22] sm:$0xff]
    %v5273 = vld [vmem:[%s70 + $0x2a] sm:$0xff]
    %v5274 = vld [vmem:[%s70 + $0x32] sm:$0xff]
    %v5275 = vld [vmem:[%s70 + $0x3a] sm:$0xff]
    %v5276 = vld [vmem:[%s70 + $0x42] sm:$0xff]
    %v5277 = vmul.f32 %v5269, %v4388
    %v5278 = vmul.f32 %v5270, %v4388
    %v5279 = vmul.f32 %v5271, %v4388
    %v5280 = vmul.f32 %v5272, %v4388
    %v5281 = vmul.f32 %v5273, %v4388
    %v5282 = vmul.f32 %v5274, %v4388
    %v5283 = vmul.f32 %v5275, %v4388
    %v5284 = vmul.f32 %v5276, %v4388
    %v5285 = vadd.f32 %v5261, %v5277
    %v5286 = vadd.f32 %v5262, %v5278
    %v5287 = vadd.f32 %v5263, %v5279
    %v5288 = vadd.f32 %v5264, %v5280
    %v5289 = vadd.f32 %v5265, %v5281
    %v5290 = vadd.f32 %v5266, %v5282
    %v5291 = vadd.f32 %v5267, %v5283
    %v5292 = vadd.f32 %v5268, %v5284
    %v5293 = vld [vmem:[%s70 + $0xb] sm:$0xff]
    %v5294 = vld [vmem:[%s70 + $0x13] sm:$0xff]
    %v5295 = vld [vmem:[%s70 + $0x1b] sm:$0xff]
    %v5296 = vld [vmem:[%s70 + $0x23] sm:$0xff]
    %v5297 = vld [vmem:[%s70 + $0x2b] sm:$0xff]
    %v5298 = vld [vmem:[%s70 + $0x33] sm:$0xff]
    %v5299 = vld [vmem:[%s70 + $0x3b] sm:$0xff]
    %v5300 = vld [vmem:[%s70 + $0x43] sm:$0xff]
    %v5301 = vmul.f32 %v5293, %v4393
    %v5302 = vmul.f32 %v5294, %v4393
    %v5303 = vmul.f32 %v5295, %v4393
    %v5304 = vmul.f32 %v5296, %v4393
    %v5305 = vmul.f32 %v5297, %v4393
    %v5306 = vmul.f32 %v5298, %v4393
    %v5307 = vmul.f32 %v5299, %v4393
    %v5308 = vmul.f32 %v5300, %v4393
    %v5309 = vadd.f32 %v5285, %v5301
    %v5310 = vadd.f32 %v5286, %v5302
    %v5311 = vadd.f32 %v5287, %v5303
    %v5312 = vadd.f32 %v5288, %v5304
    %v5313 = vadd.f32 %v5289, %v5305
    %v5314 = vadd.f32 %v5290, %v5306
    %v5315 = vadd.f32 %v5291, %v5307
    %v5316 = vadd.f32 %v5292, %v5308
    %v5317 = vld [vmem:[%s70 + $0x44] sm:$0xff]
    %v5318 = vmul.f32 %v5134, %v4398
    %v5319 = vmul.f32 %v5135, %v4398
    %v5320 = vmul.f32 %v5136, %v4398
    %v5321 = vmul.f32 %v5137, %v4398
    %v5322 = vmul.f32 %v5138, %v4398
    %v5323 = vmul.f32 %v5139, %v4398
    %v5324 = vmul.f32 %v5140, %v4398
    %v5325 = vmul.f32 %v5317, %v4398
    %v5326 = vadd.f32 %v5309, %v5318
    %v5327 = vadd.f32 %v5310, %v5319
    %v5328 = vadd.f32 %v5311, %v5320
    %v5329 = vadd.f32 %v5312, %v5321
    %v5330 = vadd.f32 %v5313, %v5322
    %v5331 = vadd.f32 %v5314, %v5323
    %v5332 = vadd.f32 %v5315, %v5324
    %v5333 = vadd.f32 %v5316, %v5325
    %v5334 = vld [vmem:[%s70 + $0x45] sm:$0xff]
    %v5335 = vmul.f32 %v5150, %v4403
    %v5336 = vmul.f32 %v5151, %v4403
    %v5337 = vmul.f32 %v5152, %v4403
    %v5338 = vmul.f32 %v5153, %v4403
    %v5339 = vmul.f32 %v5154, %v4403
    %v5340 = vmul.f32 %v5155, %v4403
    %v5341 = vmul.f32 %v5156, %v4403
    %v5342 = vmul.f32 %v5334, %v4403
    %v5343 = vadd.f32 %v5326, %v5335
    %v5344 = vadd.f32 %v5327, %v5336
    %v5345 = vadd.f32 %v5328, %v5337
    %v5346 = vadd.f32 %v5329, %v5338
    %v5347 = vadd.f32 %v5330, %v5339
    %v5348 = vadd.f32 %v5331, %v5340
    %v5349 = vadd.f32 %v5332, %v5341
    %v5350 = vadd.f32 %v5333, %v5342
    %v5351 = vld [vmem:[%s70 + $0x46] sm:$0xff]
    %v5352 = vmul.f32 %v5174, %v4408
    %v5353 = vmul.f32 %v5175, %v4408
    %v5354 = vmul.f32 %v5176, %v4408
    %v5355 = vmul.f32 %v5177, %v4408
    %v5356 = vmul.f32 %v5178, %v4408
    %v5357 = vmul.f32 %v5179, %v4408
    %v5358 = vmul.f32 %v5180, %v4408
    %v5359 = vmul.f32 %v5351, %v4408
    %v5360 = vadd.f32 %v5343, %v5352
    %v5361 = vadd.f32 %v5344, %v5353
    %v5362 = vadd.f32 %v5345, %v5354
    %v5363 = vadd.f32 %v5346, %v5355
    %v5364 = vadd.f32 %v5347, %v5356
    %v5365 = vadd.f32 %v5348, %v5357
    %v5366 = vadd.f32 %v5349, %v5358
    %v5367 = vadd.f32 %v5350, %v5359
    %v5368 = vld [vmem:[%s70 + $0x47] sm:$0xff]
    %v5369 = vmul.f32 %v5198, %v4413
    %v5370 = vmul.f32 %v5199, %v4413
    %v5371 = vmul.f32 %v5200, %v4413
    %v5372 = vmul.f32 %v5201, %v4413
    %v5373 = vmul.f32 %v5202, %v4413
    %v5374 = vmul.f32 %v5203, %v4413
    %v5375 = vmul.f32 %v5204, %v4413
    %v5376 = vmul.f32 %v5368, %v4413
    %v5377 = vadd.f32 %v5360, %v5369
    %v5378 = vadd.f32 %v5361, %v5370
    %v5379 = vadd.f32 %v5362, %v5371
    %v5380 = vadd.f32 %v5363, %v5372
    %v5381 = vadd.f32 %v5364, %v5373
    %v5382 = vadd.f32 %v5365, %v5374
    %v5383 = vadd.f32 %v5366, %v5375
    %v5384 = vadd.f32 %v5367, %v5376
    %v5385 = vld [vmem:[%s70 + $0x48] sm:$0xff]
    %v5386 = vmul.f32 %v5222, %v4418
    %v5387 = vmul.f32 %v5223, %v4418
    %v5388 = vmul.f32 %v5224, %v4418
    %v5389 = vmul.f32 %v5225, %v4418
    %v5390 = vmul.f32 %v5226, %v4418
    %v5391 = vmul.f32 %v5227, %v4418
    %v5392 = vmul.f32 %v5228, %v4418
    %v5393 = vmul.f32 %v5385, %v4418
    %v5394 = vadd.f32 %v5377, %v5386
    %v5395 = vadd.f32 %v5378, %v5387
    %v5396 = vadd.f32 %v5379, %v5388
    %v5397 = vadd.f32 %v5380, %v5389
    %v5398 = vadd.f32 %v5381, %v5390
    %v5399 = vadd.f32 %v5382, %v5391
    %v5400 = vadd.f32 %v5383, %v5392
    %v5401 = vadd.f32 %v5384, %v5393
    %v5402 = vld [vmem:[%s70 + $0x49] sm:$0xff]
    %v5403 = vmul.f32 %v5246, %v4423
    %v5404 = vmul.f32 %v5247, %v4423
    %v5405 = vmul.f32 %v5248, %v4423
    %v5406 = vmul.f32 %v5249, %v4423
    %v5407 = vmul.f32 %v5250, %v4423
    %v5408 = vmul.f32 %v5251, %v4423
    %v5409 = vmul.f32 %v5252, %v4423
    %v5410 = vmul.f32 %v5402, %v4423
    %v5411 = vadd.f32 %v5394, %v5403
    %v5412 = vadd.f32 %v5395, %v5404
    %v5413 = vadd.f32 %v5396, %v5405
    %v5414 = vadd.f32 %v5397, %v5406
    %v5415 = vadd.f32 %v5398, %v5407
    %v5416 = vadd.f32 %v5399, %v5408
    %v5417 = vadd.f32 %v5400, %v5409
    %v5418 = vadd.f32 %v5401, %v5410
    %v5419 = vld [vmem:[%s70 + $0x4a] sm:$0xff]
    %v5420 = vmul.f32 %v5270, %v4428
    %v5421 = vmul.f32 %v5271, %v4428
    %v5422 = vmul.f32 %v5272, %v4428
    %v5423 = vmul.f32 %v5273, %v4428
    %v5424 = vmul.f32 %v5274, %v4428
    %v5425 = vmul.f32 %v5275, %v4428
    %v5426 = vmul.f32 %v5276, %v4428
    %v5427 = vmul.f32 %v5419, %v4428
    %v5428 = vadd.f32 %v5411, %v5420
    %v5429 = vadd.f32 %v5412, %v5421
    %v5430 = vadd.f32 %v5413, %v5422
    %v5431 = vadd.f32 %v5414, %v5423
    %v5432 = vadd.f32 %v5415, %v5424
    %v5433 = vadd.f32 %v5416, %v5425
    %v5434 = vadd.f32 %v5417, %v5426
    %v5435 = vadd.f32 %v5418, %v5427
    %v5436 = vld [vmem:[%s70 + $0x4b] sm:$0xff]
    %v5437 = vmul.f32 %v5294, %v4433
    %v5438 = vmul.f32 %v5295, %v4433
    %v5439 = vmul.f32 %v5296, %v4433
    %v5440 = vmul.f32 %v5297, %v4433
    %v5441 = vmul.f32 %v5298, %v4433
    %v5442 = vmul.f32 %v5299, %v4433
    %v5443 = vmul.f32 %v5300, %v4433
    %v5444 = vmul.f32 %v5436, %v4433
    %v5445 = vadd.f32 %v5428, %v5437
    %v5446 = vadd.f32 %v5429, %v5438
    %v5447 = vadd.f32 %v5430, %v5439
    %v5448 = vadd.f32 %v5431, %v5440
    %v5449 = vadd.f32 %v5432, %v5441
    %v5450 = vadd.f32 %v5433, %v5442
    %v5451 = vadd.f32 %v5434, %v5443
    %v5452 = vadd.f32 %v5435, %v5444
    %v5453 = vld [vmem:[%s70 + $0x4c] sm:$0xff]
    %v5454 = vmul.f32 %v5135, %v4438
    %v5455 = vmul.f32 %v5136, %v4438
    %v5456 = vmul.f32 %v5137, %v4438
    %v5457 = vmul.f32 %v5138, %v4438
    %v5458 = vmul.f32 %v5139, %v4438
    %v5459 = vmul.f32 %v5140, %v4438
    %v5460 = vmul.f32 %v5317, %v4438
    %v5461 = vmul.f32 %v5453, %v4438
    %v5462 = vadd.f32 %v5445, %v5454
    %v5463 = vadd.f32 %v5446, %v5455
    %v5464 = vadd.f32 %v5447, %v5456
    %v5465 = vadd.f32 %v5448, %v5457
    %v5466 = vadd.f32 %v5449, %v5458
    %v5467 = vadd.f32 %v5450, %v5459
    %v5468 = vadd.f32 %v5451, %v5460
    %v5469 = vadd.f32 %v5452, %v5461
    %v5470 = vld [vmem:[%s70 + $0x4d] sm:$0xff]
    %v5471 = vmul.f32 %v5151, %v4443
    %v5472 = vmul.f32 %v5152, %v4443
    %v5473 = vmul.f32 %v5153, %v4443
    %v5474 = vmul.f32 %v5154, %v4443
    %v5475 = vmul.f32 %v5155, %v4443
    %v5476 = vmul.f32 %v5156, %v4443
    %v5477 = vmul.f32 %v5334, %v4443
    %v5478 = vmul.f32 %v5470, %v4443
    %v5479 = vadd.f32 %v5462, %v5471
    %v5480 = vadd.f32 %v5463, %v5472
    %v5481 = vadd.f32 %v5464, %v5473
    %v5482 = vadd.f32 %v5465, %v5474
    %v5483 = vadd.f32 %v5466, %v5475
    %v5484 = vadd.f32 %v5467, %v5476
    %v5485 = vadd.f32 %v5468, %v5477
    %v5486 = vadd.f32 %v5469, %v5478
    %v5487 = vld [vmem:[%s70 + $0x4e] sm:$0xff]
    %v5488 = vmul.f32 %v5175, %v4448
    %v5489 = vmul.f32 %v5176, %v4448
    %v5490 = vmul.f32 %v5177, %v4448
    %v5491 = vmul.f32 %v5178, %v4448
    %v5492 = vmul.f32 %v5179, %v4448
    %v5493 = vmul.f32 %v5180, %v4448
    %v5494 = vmul.f32 %v5351, %v4448
    %v5495 = vmul.f32 %v5487, %v4448
    %v5496 = vadd.f32 %v5479, %v5488
    %v5497 = vadd.f32 %v5480, %v5489
    %v5498 = vadd.f32 %v5481, %v5490
    %v5499 = vadd.f32 %v5482, %v5491
    %v5500 = vadd.f32 %v5483, %v5492
    %v5501 = vadd.f32 %v5484, %v5493
    %v5502 = vadd.f32 %v5485, %v5494
    %v5503 = vadd.f32 %v5486, %v5495
    %v5504 = vld [vmem:[%s70 + $0x4f] sm:$0xff]
    %v5505 = vmul.f32 %v5199, %v4453
    %v5506 = vmul.f32 %v5200, %v4453
    %v5507 = vmul.f32 %v5201, %v4453
    %v5508 = vmul.f32 %v5202, %v4453
    %v5509 = vmul.f32 %v5203, %v4453
    %v5510 = vmul.f32 %v5204, %v4453
    %v5511 = vmul.f32 %v5368, %v4453
    %v5512 = vmul.f32 %v5504, %v4453
    %v5513 = vadd.f32 %v5496, %v5505
    %v5514 = vadd.f32 %v5497, %v5506
    %v5515 = vadd.f32 %v5498, %v5507
    %v5516 = vadd.f32 %v5499, %v5508
    %v5517 = vadd.f32 %v5500, %v5509
    %v5518 = vadd.f32 %v5501, %v5510
    %v5519 = vadd.f32 %v5502, %v5511
    %v5520 = vadd.f32 %v5503, %v5512
    %v5521 = vld [vmem:[%s70 + $0x50] sm:$0xff]
    %v5522 = vmul.f32 %v5223, %v4458
    %v5523 = vmul.f32 %v5224, %v4458
    %v5524 = vmul.f32 %v5225, %v4458
    %v5525 = vmul.f32 %v5226, %v4458
    %v5526 = vmul.f32 %v5227, %v4458
    %v5527 = vmul.f32 %v5228, %v4458
    %v5528 = vmul.f32 %v5385, %v4458
    %v5529 = vmul.f32 %v5521, %v4458
    %v5530 = vadd.f32 %v5513, %v5522
    %v5531 = vadd.f32 %v5514, %v5523
    %v5532 = vadd.f32 %v5515, %v5524
    %v5533 = vadd.f32 %v5516, %v5525
    %v5534 = vadd.f32 %v5517, %v5526
    %v5535 = vadd.f32 %v5518, %v5527
    %v5536 = vadd.f32 %v5519, %v5528
    %v5537 = vadd.f32 %v5520, %v5529
    %v5538 = vld [vmem:[%s70 + $0x51] sm:$0xff]
    %v5539 = vmul.f32 %v5247, %v4463
    %v5540 = vmul.f32 %v5248, %v4463
    %v5541 = vmul.f32 %v5249, %v4463
    %v5542 = vmul.f32 %v5250, %v4463
    %v5543 = vmul.f32 %v5251, %v4463
    %v5544 = vmul.f32 %v5252, %v4463
    %v5545 = vmul.f32 %v5402, %v4463
    %v5546 = vmul.f32 %v5538, %v4463
    %v5547 = vadd.f32 %v5530, %v5539
    %v5548 = vadd.f32 %v5531, %v5540
    %v5549 = vadd.f32 %v5532, %v5541
    %v5550 = vadd.f32 %v5533, %v5542
    %v5551 = vadd.f32 %v5534, %v5543
    %v5552 = vadd.f32 %v5535, %v5544
    %v5553 = vadd.f32 %v5536, %v5545
    %v5554 = vadd.f32 %v5537, %v5546
    %v5555 = vld [vmem:[%s70 + $0x52] sm:$0xff]
    %v5556 = vmul.f32 %v5271, %v4468
    %v5557 = vmul.f32 %v5272, %v4468
    %v5558 = vmul.f32 %v5273, %v4468
    %v5559 = vmul.f32 %v5274, %v4468
    %v5560 = vmul.f32 %v5275, %v4468
    %v5561 = vmul.f32 %v5276, %v4468
    %v5562 = vmul.f32 %v5419, %v4468
    %v5563 = vmul.f32 %v5555, %v4468
    %v5564 = vadd.f32 %v5547, %v5556
    %v5565 = vadd.f32 %v5548, %v5557
    %v5566 = vadd.f32 %v5549, %v5558
    %v5567 = vadd.f32 %v5550, %v5559
    %v5568 = vadd.f32 %v5551, %v5560
    %v5569 = vadd.f32 %v5552, %v5561
    %v5570 = vadd.f32 %v5553, %v5562
    %v5571 = vadd.f32 %v5554, %v5563
    %v5572 = vld [vmem:[%s70 + $0x53] sm:$0xff]
    %v5573 = vmul.f32 %v5295, %v4473
    %v5574 = vmul.f32 %v5296, %v4473
    %v5575 = vmul.f32 %v5297, %v4473
    %v5576 = vmul.f32 %v5298, %v4473
    %v5577 = vmul.f32 %v5299, %v4473
    %v5578 = vmul.f32 %v5300, %v4473
    %v5579 = vmul.f32 %v5436, %v4473
    %v5580 = vmul.f32 %v5572, %v4473
    %v5581 = vadd.f32 %v5564, %v5573
    %v5582 = vadd.f32 %v5565, %v5574
    %v5583 = vadd.f32 %v5566, %v5575
    %v5584 = vadd.f32 %v5567, %v5576
    %v5585 = vadd.f32 %v5568, %v5577
    %v5586 = vadd.f32 %v5569, %v5578
    %v5587 = vadd.f32 %v5570, %v5579
    %v5588 = vadd.f32 %v5571, %v5580
    %v5589 = vld [vmem:[%s70 + $0x54] sm:$0xff]
    %v5590 = vmul.f32 %v5136, %v4478
    %v5591 = vmul.f32 %v5137, %v4478
    %v5592 = vmul.f32 %v5138, %v4478
    %v5593 = vmul.f32 %v5139, %v4478
    %v5594 = vmul.f32 %v5140, %v4478
    %v5595 = vmul.f32 %v5317, %v4478
    %v5596 = vmul.f32 %v5453, %v4478
    %v5597 = vmul.f32 %v5589, %v4478
    %v5598 = vadd.f32 %v5581, %v5590
    %v5599 = vadd.f32 %v5582, %v5591
    %v5600 = vadd.f32 %v5583, %v5592
    %v5601 = vadd.f32 %v5584, %v5593
    %v5602 = vadd.f32 %v5585, %v5594
    %v5603 = vadd.f32 %v5586, %v5595
    %v5604 = vadd.f32 %v5587, %v5596
    %v5605 = vadd.f32 %v5588, %v5597
    %v5606 = vsel %vm48, %v5222, 0.0
    %v5607 = vsel %vm48, %v5223, 0.0
    %v5608 = vadd.f32 %v5606, %v5607
    %v5609 = vsel %vm48, %v5224, 0.0
    %v5610 = vadd.f32 %v5608, %v5609
    %v5611 = vsel %vm48, %v5225, 0.0
    %v5612 = vadd.f32 %v5610, %v5611
    %v5613 = vsel %vm48, %v5226, 0.0
    %v5614 = vadd.f32 %v5612, %v5613
    %v5615 = vsel %vm48, %v5227, 0.0
    %v5616 = vadd.f32 %v5614, %v5615
    %v5617 = vsel %vm48, %v5228, 0.0
    %v5618 = vadd.f32 %v5616, %v5617
    %v5619 = vsel %vm48, %v5385, 0.0
    %v5620 = vadd.f32 %v5618, %v5619
    %v5621 = vrot.slane %v5620, 4
    %v5622 = vadd.f32 %v5620, %v5621
    %v5623 = vrot.slane %v5622, 2
    %v5624 = vadd.f32 %v5622, %v5623
    %v5625 = vrot.slane %v5624, 1
    %v5626 = vadd.f32 %v5624, %v5625
    %v5628 = vsel %vm48, %v5626, 0
    %5630 = vmatprep.subr.mxu0 0.0
    %5631 = vmatpush1.msra.mxu0 %v4553
    %5632 = vmatprep.subr.mxu0 0.0
    %5633 = vmatpush1.msra.mxu0 %v4554
    %5634 = vmatprep.subr.mxu0 0.0
    %5635 = vmatpush1.msra.mxu0 %v4555
    %5636 = vmatprep.subr.mxu0 0.0
    %5637 = vmatpush1.msra.mxu0 %v4556
    %5638 = vmatprep.subr.mxu0 0.0
    %5639 = vmatpush1.msra.mxu0 %v4557
    %5640 = vmatprep.subr.mxu0 0.0
    %5641 = vmatpush1.msra.mxu0 %v4558
    %5642 = vmatprep.subr.mxu0 0.0
    %5643 = vmatpush1.msra.mxu0 %v4559
    %5644 = vmatprep.subr.mxu0 0.0
    %5645 = vmatpush1.msra.mxu0 %v4560
    %5646 = vmatprep.subr.mxu0 0.0
    %5647 = vmatpush1.msra.mxu0 0.0
    %5648 = vmatprep.subr.mxu0 0.0
    %5649 = vmatpush1.msra.mxu0 0.0
    %5650 = vmatprep.subr.mxu0 0.0
    %5651 = vmatpush1.msra.mxu0 0.0
    %5652 = vmatprep.subr.mxu0 0.0
    %5653 = vmatpush1.msra.mxu0 0.0
    %5654 = vmatprep.subr.mxu0 0.0
    %5655 = vmatpush1.msra.mxu0 0.0
    %5656 = vmatprep.subr.mxu0 0.0
    %5657 = vmatpush1.msra.mxu0 0.0
    %5658 = vmatprep.subr.mxu0 0.0
    %5659 = vmatpush1.msra.mxu0 0.0
    %5660 = vmatprep.subr.mxu0 0.0
    %5661 = vmatpush1.msra.mxu0 0.0
    %5662 = vmatprep.subr.mxu0 0.0
    %5663 = vmatpush1.msra.mxu0 0.0
    %5664 = vmatprep.subr.mxu0 0.0
    %5665 = vmatpush1.msra.mxu0 0.0
    %5666 = vmatprep.subr.mxu0 0.0
    %5667 = vmatpush1.msra.mxu0 0.0
    %5668 = vmatprep.subr.mxu0 0.0
    %5669 = vmatpush1.msra.mxu0 0.0
    %5670 = vmatprep.subr.mxu0 0.0
    %5671 = vmatpush1.msra.mxu0 0.0
    %5672 = vmatprep.subr.mxu0 0.0
    %5673 = vmatpush1.msra.mxu0 0.0
    %5674 = vmatprep.subr.mxu0 0.0
    %5675 = vmatpush1.msra.mxu0 0.0
    %5676 = vmatprep.subr.mxu0 0.0
    %5677 = vmatpush1.msra.mxu0 0.0
    %5678 = vmatprep.subr.mxu0 0.0
    %5679 = vmatpush1.msra.mxu0 0.0
    %5680 = vmatprep.subr.mxu0 0.0
    %5681 = vmatpush1.msra.mxu0 0.0
    %5682 = vmatprep.subr.mxu0 0.0
    %5683 = vmatpush1.msra.mxu0 0.0
    %5684 = vmatprep.subr.mxu0 0.0
    %5685 = vmatpush1.msra.mxu0 0.0
    %5686 = vmatprep.subr.mxu0 0.0
    %5687 = vmatpush1.msra.mxu0 0.0
    %5688 = vmatprep.subr.mxu0 0.0
    %5689 = vmatpush1.msra.mxu0 0.0
    %5690 = vmatprep.subr.mxu0 0.0
    %5691 = vmatpush1.msra.mxu0 0.0
    %5692 = vmatprep.subr.mxu0 0.0
    %5693 = vmatpush1.msra.mxu0 0.0
    %5694 = vmatprep.mubr.f32.mxu0 0.0
    %5695 = vmatmul.mubr.f32.gmra.mrb[0].mxu0 %v5628
    %v5696 = vpop.f32.mrb[0].mxu0
    %v5697 = vadd.f32 0.0, %v5696
    %v5698 = vpop.f32.mrb[0].mxu0
    %5699 = vdwg.mxu0
    %v5700 = vmul.f32 %v5697, 0.015625
    %v5701 = vld [vmem:[%s7] sm:$0x1]
    %v5702 = vadd.f32 %v5700, %v5701
    %s5703 = scalar_lea.vmem [#allocation7], 1
    %5704 = vst.msk [vmem:[%s5703] sm:$0x1] %vm5131, %v5702
    %v5705 = vld [vmem:[%s6] sm:$0x1]
    %v5707 = vlaneseq
    %v5708 = vshrl.u32 %v5707, 7
    %v5709 = vsub.s32 0, %v5708
    %v5710 = vrot.slane %v5705, %v5709
    %v5713 = vsel %vm48, %v5026, 0
    %v5716 = vsel %vm48, %v5027, 0
    %v5719 = vsel %vm48, %v5028, 0
    %v5722 = vsel %vm48, %v5029, 0
    %v5725 = vsel %vm48, %v5030, 0
    %v5728 = vsel %vm48, %v5031, 0
    %v5731 = vsel %vm48, %v5032, 0
    %v5734 = vsel %vm48, %v5033, 0
    %v5737 = vsel %vm48, %v5598, 0
    %v5740 = vsel %vm48, %v5599, 0
    %v5743 = vsel %vm48, %v5600, 0
    %v5746 = vsel %vm48, %v5601, 0
    %v5749 = vsel %vm48, %v5602, 0
    %v5752 = vsel %vm48, %v5603, 0
    %v5755 = vsel %vm48, %v5604, 0
    %v5758 = vsel %vm48, %v5605, 0
    %5760 = vmatprep.subr.mxu0 0.0
    %5761 = vmatpush1.msra.mxu0 %v4528
    %5762 = vmatprep.subr.mxu0 0.0
    %5763 = vmatpush1.msra.mxu0 %v4529
    %5764 = vmatprep.subr.mxu0 0.0
    %5765 = vmatpush1.msra.mxu0 %v4530
    %5766 = vmatprep.subr.mxu0 0.0
    %5767 = vmatpush1.msra.mxu0 %v4531
    %5768 = vmatprep.subr.mxu0 0.0
    %5769 = vmatpush1.msra.mxu0 %v4532
    %5770 = vmatprep.subr.mxu0 0.0
    %5771 = vmatpush1.msra.mxu0 %v4533
    %5772 = vmatprep.subr.mxu0 0.0
    %5773 = vmatpush1.msra.mxu0 %v4534
    %5774 = vmatprep.subr.mxu0 0.0
    %5775 = vmatpush1.msra.mxu0 %v4535
    %5776 = vmatprep.subr.mxu0 0.0
    %5777 = vmatpush1.msra.mxu0 0.0
    %5778 = vmatprep.subr.mxu0 0.0
    %5779 = vmatpush1.msra.mxu0 0.0
    %5780 = vmatprep.subr.mxu0 0.0
    %5781 = vmatpush1.msra.mxu0 0.0
    %5782 = vmatprep.subr.mxu0 0.0
    %5783 = vmatpush1.msra.mxu0 0.0
    %5784 = vmatprep.subr.mxu0 0.0
    %5785 = vmatpush1.msra.mxu0 0.0
    %5786 = vmatprep.subr.mxu0 0.0
    %5787 = vmatpush1.msra.mxu0 0.0
    %5788 = vmatprep.subr.mxu0 0.0
    %5789 = vmatpush1.msra.mxu0 0.0
    %5790 = vmatprep.subr.mxu0 0.0
    %5791 = vmatpush1.msra.mxu0 0.0
    %5792 = vmatprep.subr.mxu0 0.0
    %5793 = vmatpush1.msra.mxu0 0.0
    %5794 = vmatprep.subr.mxu0 0.0
    %5795 = vmatpush1.msra.mxu0 0.0
    %5796 = vmatprep.subr.mxu0 0.0
    %5797 = vmatpush1.msra.mxu0 0.0
    %5798 = vmatprep.subr.mxu0 0.0
    %5799 = vmatpush1.msra.mxu0 0.0
    %5800 = vmatprep.subr.mxu0 0.0
    %5801 = vmatpush1.msra.mxu0 0.0
    %5802 = vmatprep.subr.mxu0 0.0
    %5803 = vmatpush1.msra.mxu0 0.0
    %5804 = vmatprep.subr.mxu0 0.0
    %5805 = vmatpush1.msra.mxu0 0.0
    %5806 = vmatprep.subr.mxu0 0.0
    %5807 = vmatpush1.msra.mxu0 0.0
    %5808 = vmatprep.subr.mxu0 0.0
    %5809 = vmatpush1.msra.mxu0 0.0
    %5810 = vmatprep.subr.mxu0 0.0
    %5811 = vmatpush1.msra.mxu0 0.0
    %5812 = vmatprep.subr.mxu0 0.0
    %5813 = vmatpush1.msra.mxu0 0.0
    %5814 = vmatprep.subr.mxu0 0.0
    %5815 = vmatpush1.msra.mxu0 0.0
    %5816 = vmatprep.subr.mxu0 0.0
    %5817 = vmatpush1.msra.mxu0 0.0
    %5818 = vmatprep.subr.mxu0 0.0
    %5819 = vmatpush1.msra.mxu0 0.0
    %5820 = vmatprep.subr.mxu0 0.0
    %5821 = vmatpush1.msra.mxu0 0.0
    %5822 = vmatprep.subr.mxu0 0.0
    %5823 = vmatpush1.msra.mxu0 0.0
    %5824 = vmatprep.mubr.f32.mxu0 0.0
    %5825 = vmatmul.mubr.f32.gmra.mrb[0].mxu0 %v5713
    %v5826 = vpop.f32.mrb[0].mxu0
    %v5827 = vadd.f32 %v5710, %v5826
    %v5828 = vpop.f32.mrb[0].mxu0
    %5829 = vmatprep.mubr.f32.mxu0 0.0
    %5830 = vmatmul.mubr.f32.gmra.mrb[0].mxu0 %v5716
    %v5831 = vpop.f32.mrb[0].mxu0
    %v5832 = vadd.f32 %v5710, %v5831
    %v5833 = vpop.f32.mrb[0].mxu0
    %5834 = vmatprep.mubr.f32.mxu0 0.0
    %5835 = vmatmul.mubr.f32.gmra.mrb[0].mxu0 %v5719
    %v5836 = vpop.f32.mrb[0].mxu0
    %v5837 = vadd.f32 %v5710, %v5836
    %v5838 = vpop.f32.mrb[0].mxu0
    %5839 = vmatprep.mubr.f32.mxu0 0.0
    %5840 = vmatmul.mubr.f32.gmra.mrb[0].mxu0 %v5722
    %v5841 = vpop.f32.mrb[0].mxu0
    %v5842 = vadd.f32 %v5710, %v5841
    %v5843 = vpop.f32.mrb[0].mxu0
    %5844 = vmatprep.mubr.f32.mxu0 0.0
    %5845 = vmatmul.mubr.f32.gmra.mrb[0].mxu0 %v5725
    %v5846 = vpop.f32.mrb[0].mxu0
    %v5847 = vadd.f32 %v5710, %v5846
    %v5848 = vpop.f32.mrb[0].mxu0
    %5849 = vmatprep.mubr.f32.mxu0 0.0
    %5850 = vmatmul.mubr.f32.gmra.mrb[0].mxu0 %v5728
    %v5851 = vpop.f32.mrb[0].mxu0
    %v5852 = vadd.f32 %v5710, %v5851
    %v5853 = vpop.f32.mrb[0].mxu0
    %5854 = vmatprep.mubr.f32.mxu0 0.0
    %5855 = vmatmul.mubr.f32.gmra.mrb[0].mxu0 %v5731
    %v5856 = vpop.f32.mrb[0].mxu0
    %v5857 = vadd.f32 %v5710, %v5856
    %v5858 = vpop.f32.mrb[0].mxu0
    %5859 = vmatprep.mubr.f32.mxu0 0.0
    %5860 = vmatmul.mubr.f32.gmra.mrb[0].mxu0 %v5734
    %v5861 = vpop.f32.mrb[0].mxu0
    %v5862 = vadd.f32 %v5710, %v5861
    %v5863 = vpop.f32.mrb[0].mxu0
    %5864 = vmatprep.mubr.f32.mxu0 0.0
    %5865 = vmatmul.mubr.f32.gmra.mrb[0].mxu0 %v5737
    %v5866 = vpop.f32.mrb[0].mxu0
    %v5867 = vadd.f32 %v5710, %v5866
    %v5868 = vpop.f32.mrb[0].mxu0
    %5869 = vmatprep.mubr.f32.mxu0 0.0
    %5870 = vmatmul.mubr.f32.gmra.mrb[0].mxu0 %v5740
    %v5871 = vpop.f32.mrb[0].mxu0
    %v5872 = vadd.f32 %v5710, %v5871
    %v5873 = vpop.f32.mrb[0].mxu0
    %5874 = vmatprep.mubr.f32.mxu0 0.0
    %5875 = vmatmul.mubr.f32.gmra.mrb[0].mxu0 %v5743
    %v5876 = vpop.f32.mrb[0].mxu0
    %v5877 = vadd.f32 %v5710, %v5876
    %v5878 = vpop.f32.mrb[0].mxu0
    %5879 = vmatprep.mubr.f32.mxu0 0.0
    %5880 = vmatmul.mubr.f32.gmra.mrb[0].mxu0 %v5746
    %v5881 = vpop.f32.mrb[0].mxu0
    %v5882 = vadd.f32 %v5710, %v5881
    %v5883 = vpop.f32.mrb[0].mxu0
    %5884 = vmatprep.mubr.f32.mxu0 0.0
    %5885 = vmatmul.mubr.f32.gmra.mrb[0].mxu0 %v5749
    %v5886 = vpop.f32.mrb[0].mxu0
    %v5887 = vadd.f32 %v5710, %v5886
    %v5888 = vpop.f32.mrb[0].mxu0
    %5889 = vmatprep.mubr.f32.mxu0 0.0
    %5890 = vmatmul.mubr.f32.gmra.mrb[0].mxu0 %v5752
    %v5891 = vpop.f32.mrb[0].mxu0
    %v5892 = vadd.f32 %v5710, %v5891
    %v5893 = vpop.f32.mrb[0].mxu0
    %5894 = vmatprep.mubr.f32.mxu0 0.0
    %5895 = vmatmul.mubr.f32.gmra.mrb[0].mxu0 %v5755
    %v5896 = vpop.f32.mrb[0].mxu0
    %v5897 = vadd.f32 %v5710, %v5896
    %v5898 = vpop.f32.mrb[0].mxu0
    %5899 = vmatprep.mubr.f32.mxu0 0.0
    %5900 = vmatmul.mubr.f32.gmra.mrb[0].mxu0 %v5758
    %v5901 = vpop.f32.mrb[0].mxu0
    %v5902 = vadd.f32 %v5710, %v5901
    %v5903 = vpop.f32.mrb[0].mxu0
    %5904 = vdwg.mxu0
    %vm5905 = vcmask 15360
    %5906 = vst.msk [vmem:[%s9] sm:$0xff] %vm5905, %v5827
    %5907 = vst.msk [vmem:[%s9 + $0x8] sm:$0xff] %vm5905, %v5832
    %5908 = vst.msk [vmem:[%s9 + $0x10] sm:$0xff] %vm5905, %v5837
    %5909 = vst.msk [vmem:[%s9 + $0x18] sm:$0xff] %vm5905, %v5842
    %5910 = vst.msk [vmem:[%s9 + $0x20] sm:$0xff] %vm5905, %v5847
    %5911 = vst.msk [vmem:[%s9 + $0x28] sm:$0xff] %vm5905, %v5852
    %5912 = vst.msk [vmem:[%s9 + $0x30] sm:$0xff] %vm5905, %v5857
    %5913 = vst.msk [vmem:[%s9 + $0x38] sm:$0xff] %vm5905, %v5862
    %5914 = vst.msk [vmem:[%s9 + $0x40] sm:$0xff] %vm5905, %v5867
    %5915 = vst.msk [vmem:[%s9 + $0x48] sm:$0xff] %vm5905, %v5872
    %5916 = vst.msk [vmem:[%s9 + $0x50] sm:$0xff] %vm5905, %v5877
    %5917 = vst.msk [vmem:[%s9 + $0x58] sm:$0xff] %vm5905, %v5882
    %5918 = vst.msk [vmem:[%s9 + $0x60] sm:$0xff] %vm5905, %v5887
    %5919 = vst.msk [vmem:[%s9 + $0x68] sm:$0xff] %vm5905, %v5892
    %5920 = vst.msk [vmem:[%s9 + $0x70] sm:$0xff] %vm5905, %v5897
    %5921 = vst.msk [vmem:[%s9 + $0x78] sm:$0xff] %vm5905, %v5902
    // Predicated region
    $region38: #{tpu_custom_call.1} parent=1 // pred_check
      _
    $region39: #{tpu_custom_call.1} parent=1 // pred_check_branch
      %5923 = sbr.rel (0) target = $region41
    $region40: #{tpu_custom_call.1} parent=1 // pred_region
      _
    $region41: #{tpu_custom_call.1} parent=1 // pred_fallthru
      _
    // Predicated region
    $region42: #{tpu_custom_call.1} parent=1 // pred_check
      _
    $region43: #{tpu_custom_call.1} parent=1 // pred_check_branch
      %5925 = sbr.rel (0) target = $region45
    $region44: #{tpu_custom_call.1} parent=1 // pred_region
      _
    $region45: #{tpu_custom_call.1} parent=1 // pred_fallthru
      _
    // Predicated region
    $region46: #{tpu_custom_call.1} parent=1 // pred_check
      _
    $region47: #{tpu_custom_call.1} parent=1 // pred_check_branch
      %5927 = sbr.rel (0) target = $region49
    $region48: #{tpu_custom_call.1} parent=1 // pred_region
      %s5929 = ssub.s32 32, 32
      %5930 = vsyncadd [#allocation6], %s5929
      %s5931 = sshll.u32 [#allocation7], 4
      %s5932 = int_to_ptr.vmem [resolvable:$true] %s5931
      %5937 = dma.vmem_to_hbm [thread:$0]  %s5932, 32, %s10, [#allocation6], 16, 16, 1
    $region49: #{tpu_custom_call.1} parent=1 // pred_fallthru
      _
    // Predicated region
    $region50: #{tpu_custom_call.1} parent=1 // pred_check
      _
    $region51: #{tpu_custom_call.1} parent=1 // pred_check_branch
      %5939 = sbr.rel (0) target = $region53
    $region52: #{tpu_custom_call.1} parent=1 // pred_region
      _
    $region53: #{tpu_custom_call.1} parent=1 // pred_fallthru
      _
    // Predicated region
    $region54: #{tpu_custom_call.1} parent=1 // pred_check
      _
    $region55: #{tpu_custom_call.1} parent=1 // pred_check_branch
      %5941 = sbr.rel (0) target = $region57
    $region56: #{tpu_custom_call.1} parent=1 // pred_region
      _
    $region57: #{tpu_custom_call.1} parent=1 // pred_fallthru
      _
    // Predicated region
    $region58: #{tpu_custom_call.1} parent=1 // pred_check
      _
    $region59: #{tpu_custom_call.1} parent=1 // pred_check_branch
      %5943 = sbr.rel (0) target = $region61
    $region60: #{tpu_custom_call.1} parent=1 // pred_region
      %5944 = dma.done [#allocation6], 32
    $region61: #{tpu_custom_call.1} parent=1 // pred_fallthru
      _
    %5945 = vsyncpa [#allocation5], 1
    %5946 = vsyncpa [#allocation6], 1

</llo_original>
